<compile_context>
chip_gen: v7x
topology: tpu7x:2x2x1
jax: 0.10.0
libtpu: 0.0.40
codegen_flags: <defaults>
</compile_context>

<pallas_src>
import jax
import jax.numpy as jnp
import numpy as np
from jax.experimental import pallas as pl
from jax.experimental.pallas import tpu as pltpu

OUTPUT_DIM = 768                        # module default
MAX_FREQ = 10
POS_ENC_DIM = OUTPUT_DIM // 2 // 3      # 128
ENC_DIM = 6 * POS_ENC_DIM               # == OUTPUT_DIM when OUTPUT_DIM % 6 == 0
ROT_HIDDEN = 512
BATCH = 8
LN_EPS = 1e-5

# --- row offsets inside the packed bf16 weight slab (lane dim = OUTPUT_DIM) ---
_O_W2 = 0
_O_PSIN = _O_W2 + ROT_HIDDEN                 # 512   : wpe rows feeding sin(A)
_O_PCOS = _O_PSIN + 3 * POS_ENC_DIM          # 896   : wpe rows feeding cos(A)
_O_W3 = _O_PCOS + 3 * POS_ENC_DIM            # 1280
_O_W4 = _O_W3 + OUTPUT_DIM                   # 2048
_O_W5R = _O_W4 + OUTPUT_DIM                  # 2816  : w5 rows hit by rot_emb
_O_W5T = _O_W5R + OUTPUT_DIM                 # 3584  : w5 rows hit by trans_emb
_WSLAB_ROWS = _O_W5T + OUTPUT_DIM            # 4352  (multiple of 16 -> clean bf16 tiles)

# DMA chunks (row_start, row_count): started at kernel entry, waited per-layer.
_W_CHUNKS = (
    (_O_W2, _O_W3 - _O_W2),                  # w2 + psin + pcos (1280 rows, ~1.9 MB)
    (_O_W3, OUTPUT_DIM),                     # w3               (768 rows,  ~1.1 MB)
    (_O_W4, OUTPUT_DIM),                     # w4               (768 rows,  ~1.1 MB)
    (_O_W5R, 2 * OUTPUT_DIM),                # w5 (rot + trans) (1536 rows, ~2.3 MB)
)

# --- row layout of the single packed f32 vector slab (lane dim = OUTPUT_DIM) ---
_V_B1, _V_G1, _V_BE1 = 0, 1, 2               # 512-wide rows (cols 0:512)
_V_EF = 3          # rows 3..5 : per-axis frequency rows (cols 0:3P, rest zero)
_V_W1 = 6          # rows 6..14: rotation Linear(9, 512) weight (f32, tiny)
_V_D0 = 15         # rows 15..24: D-wide vectors, order below
_VD_NAMES = ("b2", "b3", "g2", "be2", "b4", "b5", "g3", "be3", "g4", "be4")
_V_ROWS = 32


def _layernorm(x, g, b):
    # One-pass: var = E[x^2] - mu^2 (two independent lane reductions).
    mu = jnp.mean(x, axis=-1, keepdims=True)
    ms = jnp.mean(x * x, axis=-1, keepdims=True)
    var = jnp.maximum(ms - mu * mu, 0.0)
    return (x - mu) * jax.lax.rsqrt(var + LN_EPS) * g + b


def camera_encoder_kernel(inp_ref, vec_ref, w_hbm, out_ref, wbuf, sem):
    f32, bf16 = jnp.float32, jnp.bfloat16
    D, H, P3 = OUTPUT_DIM, ROT_HIDDEN, 3 * POS_ENC_DIM

    # ---- kick off all weight-slab chunk DMAs (HBM -> VMEM scratch) ----
    copies = []
    for i, (r0, nr) in enumerate(_W_CHUNKS):
        cp = pltpu.make_async_copy(
            w_hbm.at[pl.ds(r0, nr)], wbuf.at[pl.ds(r0, nr)], sem.at[i])
        cp.start()
        copies.append(cp)
    cp_front, cp_w3, cp_w4, cp_w5 = copies

    # ---- small vectors: static slices of the packed f32 slab ----
    b1 = vec_ref[_V_B1:_V_B1 + 1, 0:H]
    g1 = vec_ref[_V_G1:_V_G1 + 1, 0:H]
    be1 = vec_ref[_V_BE1:_V_BE1 + 1, 0:H]
    ef = vec_ref[_V_EF:_V_EF + 3, 0:P3]                    # (3, 3P) zero-padded freqs
    w1 = vec_ref[_V_W1:_V_W1 + 9, 0:H]                     # (9, 512)
    (b2, b3, g2, be2, b4, b5, g3, be3, g4, be4) = (
        vec_ref[_V_D0 + i:_V_D0 + i + 1, :] for i in range(len(_VD_NAMES)))

    r = inp_ref[:, 0:9]                                    # (B, 9)
    t = inp_ref[:, 9:12]                                   # (B, 3)

    # ---- weight-free work first (overlaps with the slab DMAs) ----
    # rotation branch front half: K=9 -> nine VPU broadcast-FMAs, LN, ReLU.
    h = b1
    for j in range(9):
        h = h + r[:, j:j + 1] * w1[j:j + 1, :]
    h = jnp.maximum(_layernorm(h, g1, be1), 0.0)           # (B, 512)

    # translation positional-encoding angles, concat-free:
    # A[:, j*P:(j+1)*P] = t_j * freqs via 3 broadcast-FMAs on zero-padded rows.
    a = (t[:, 0:1] * ef[0:1, :]
         + t[:, 1:2] * ef[1:2, :]
         + t[:, 2:3] * ef[2:3, :])                         # (B, 3P)
    sa = jnp.sin(a).astype(bf16)
    ca = jnp.cos(a).astype(bf16)

    # ---- rotation tail + positional projection (needs front chunk) ----
    cp_front.wait()
    rot = jnp.dot(h.astype(bf16), wbuf[_O_W2:_O_W2 + H, :],
                  preferred_element_type=f32) + b2          # (B, D)
    enc = (jnp.dot(sa, wbuf[_O_PSIN:_O_PSIN + P3, :], preferred_element_type=f32)
           + jnp.dot(ca, wbuf[_O_PCOS:_O_PCOS + P3, :], preferred_element_type=f32))

    # ---- translation encoder: Linear(D,D) -> LN -> ReLU -> Linear(D,D) ----
    cp_w3.wait()
    h2 = jnp.dot(enc.astype(bf16), wbuf[_O_W3:_O_W3 + D, :],
                 preferred_element_type=f32) + b3
    h2 = jnp.maximum(_layernorm(h2, g2, be2), 0.0)

    cp_w4.wait()
    trans = jnp.dot(h2.astype(bf16), wbuf[_O_W4:_O_W4 + D, :],
                    preferred_element_type=f32) + b4        # (B, D)

    # ---- final projection on concat([rot, trans]) via split weight ----
    cp_w5.wait()
    comb = (jnp.dot(rot.astype(bf16), wbuf[_O_W5R:_O_W5R + D, :],
                    preferred_element_type=f32)
            + jnp.dot(trans.astype(bf16), wbuf[_O_W5T:_O_W5T + D, :],
                      preferred_element_type=f32)
            + b5)
    comb = _layernorm(comb, g3, be3)

    # ---- output norm ----
    out_ref[...] = _layernorm(comb, g4, be4)


def pack_params(p):
    """One-time host-side packing of all parameters into 2 kernel operands."""
    D, H, P = OUTPUT_DIM, ROT_HIDDEN, POS_ENC_DIM

    vecs = np.zeros((_V_ROWS, D), np.float32)
    vecs[_V_B1, 0:H] = np.asarray(p["b1"], np.float32)
    vecs[_V_G1, 0:H] = np.asarray(p["g1"], np.float32)
    vecs[_V_BE1, 0:H] = np.asarray(p["be1"], np.float32)
    freqs = np.asarray(p["freqs"], np.float32)
    for j in range(3):                                   # E_f[j, j*P:(j+1)*P] = freqs
        vecs[_V_EF + j, j * P:(j + 1) * P] = freqs
    vecs[_V_W1:_V_W1 + 9, 0:H] = np.asarray(p["w1"], np.float32)
    for i, name in enumerate(_VD_NAMES):
        vecs[_V_D0 + i, :] = np.asarray(p[name], np.float32)

    # Permute wpe rows into [sin-rows | cos-rows] blocks matching A's layout.
    wpe = p["wpe"]                                       # (6P, D) bf16
    sin_rows = jnp.concatenate([wpe[2 * j * P:(2 * j + 1) * P] for j in range(3)], 0)
    cos_rows = jnp.concatenate([wpe[(2 * j + 1) * P:(2 * j + 2) * P] for j in range(3)], 0)
    wslab = jnp.concatenate(
        [p["w2"], sin_rows, cos_rows, p["w3"], p["w4"], p["w5"]], axis=0)
    assert wslab.shape == (_WSLAB_ROWS, D)

    return {"vecs": jnp.asarray(vecs),
            "wslab": wslab.astype(jnp.bfloat16)}


def camera_encoder_forward(R, T, packed):
    """R: (B, 3, 3), T: (B, 3) -> (B, OUTPUT_DIM) float32."""
    B = R.shape[0]
    # Pack R_flat and T into one lane-dense-ish (B, 16) operand (1 DMA, not 2).
    inp = jnp.zeros((B, 16), jnp.float32)
    inp = inp.at[:, 0:9].set(R.reshape(B, 9).astype(jnp.float32))
    inp = inp.at[:, 9:12].set(T.astype(jnp.float32))

    vmem = pl.BlockSpec(memory_space=pltpu.MemorySpace.VMEM)
    # TODO(synk): if many cameras/frames per step, batch them here (B=64-256)
    #             and add a parallel grid axis to use both v7x TensorCores.
    return pl.pallas_call(
        camera_encoder_kernel,
        out_shape=jax.ShapeDtypeStruct((B, OUTPUT_DIM), jnp.float32),
        in_specs=[vmem, vmem, pl.BlockSpec(memory_space=pl.ANY)],
        out_specs=vmem,
        scratch_shapes=[pltpu.VMEM((_WSLAB_ROWS, OUTPUT_DIM), jnp.bfloat16),
                        pltpu.SemaphoreType.DMA((len(_W_CHUNKS),))],
        compiler_params=pltpu.CompilerParams(
            vmem_limit_bytes=16 * 1024 * 1024),
    )(inp, packed["vecs"], packed["wslab"])


def init_params(key):
    """Deterministic synthetic parameters (shapes follow CameraEncoder.__init__).

    Large matmul weights are stored in bfloat16 (kernel consumes them as bf16;
    the f32 reference upcasts the same values); everything else stays f32.
    """
    keys = jax.random.split(key, 16)
    f32, bf16 = jnp.float32, jnp.bfloat16

    def linear(kw, kb, fan_in, fan_out):
        w = jax.random.normal(kw, (fan_in, fan_out), f32) / np.sqrt(fan_in)
        b = 0.01 * jax.random.normal(kb, (fan_out,), f32)
        return w, b

    p = {}
    # rotation_encoder: Linear(9, 512), LN(512), ReLU, Linear(512, D)
    p["w1"], p["b1"] = linear(keys[0], keys[1], 9, ROT_HIDDEN)   # w1 stays f32 (tiny)
    p["g1"] = jnp.ones((ROT_HIDDEN,), f32)
    p["be1"] = jnp.zeros((ROT_HIDDEN,), f32)
    w2, p["b2"] = linear(keys[2], keys[3], ROT_HIDDEN, OUTPUT_DIM)
    p["w2"] = w2.astype(bf16)

    # positional-encoding projection (frozen; torch re-samples per call) + freqs
    p["wpe"] = (jax.random.normal(keys[4], (ENC_DIM, OUTPUT_DIM), f32)
                / np.sqrt(ENC_DIM)).astype(bf16)
    p["freqs"] = jnp.exp(jnp.linspace(0.0, np.log(MAX_FREQ), POS_ENC_DIM)).astype(f32)

    # translation_encoder: Linear(D, D), LN(D), ReLU, Linear(D, D)
    w3, p["b3"] = linear(keys[5], keys[6], OUTPUT_DIM, OUTPUT_DIM)
    p["w3"] = w3.astype(bf16)
    p["g2"] = jnp.ones((OUTPUT_DIM,), f32)
    p["be2"] = jnp.zeros((OUTPUT_DIM,), f32)
    w4, p["b4"] = linear(keys[7], keys[8], OUTPUT_DIM, OUTPUT_DIM)
    p["w4"] = w4.astype(bf16)

    # final_projection: Linear(2D, D), LN(D)
    w5, p["b5"] = linear(keys[9], keys[10], 2 * OUTPUT_DIM, OUTPUT_DIM)
    p["w5"] = w5.astype(bf16)
    p["g3"] = jnp.ones((OUTPUT_DIM,), f32)
    p["be3"] = jnp.zeros((OUTPUT_DIM,), f32)

    # output_norm: LN(D)
    p["g4"] = jnp.ones((OUTPUT_DIM,), f32)
    p["be4"] = jnp.zeros((OUTPUT_DIM,), f32)
    return p


def reference_forward(R, T, p):
    """Pure-JAX f32 reference mirroring the torch forward pass (combined wpe/w5,
    explicit concats) so the kernel's restructuring is verified independently."""
    f32 = jnp.float32

    def ln(x, g, b):
        mu = x.mean(-1, keepdims=True)
        var = ((x - mu) ** 2).mean(-1, keepdims=True)
        return (x - mu) / jnp.sqrt(var + LN_EPS) * g + b

    B = R.shape[0]
    r = R.reshape(B, 9)
    h = r @ p["w1"] + p["b1"]
    h = jnp.maximum(ln(h, p["g1"], p["be1"]), 0.0)
    rot = h @ p["w2"].astype(f32) + p["b2"]

    ang = T[:, :, None] * p["freqs"][None, None, :]
    enc = jnp.concatenate([jnp.sin(ang), jnp.cos(ang)], axis=-1).reshape(B, -1)
    enc = enc @ p["wpe"].astype(f32)

    h2 = enc @ p["w3"].astype(f32) + p["b3"]
    h2 = jnp.maximum(ln(h2, p["g2"], p["be2"]), 0.0)
    trans = h2 @ p["w4"].astype(f32) + p["b4"]

    comb = jnp.concatenate([rot, trans], axis=-1) @ p["w5"].astype(f32) + p["b5"]
    comb = ln(comb, p["g3"], p["be3"])
    return ln(comb, p["g4"], p["be4"])


if __name__ == "__main__":
    key = jax.random.PRNGKey(0)
    k_param, k_r, k_t = jax.random.split(key, 3)

    params = init_params(k_param)
    packed = pack_params(params)        # one-time host-side packing

    # Synthetic "relative camera" inputs: R (B,3,3), T (B,3).
    R = jax.random.normal(k_r, (BATCH, 3, 3), jnp.float32)
    T = jax.random.normal(k_t, (BATCH, 3), jnp.float32)

    out = jax.block_until_ready(camera_encoder_forward(R, T, packed))
    ref = jax.block_until_ready(reference_forward(R, T, params))

    # Tolerance sized for bf16 activation rounding inside the kernel
    # (weights are shared bf16 values between kernel and reference).
    np.testing.assert_allclose(np.asarray(out), np.asarray(ref), rtol=2e-2, atol=2e-2)
    assert out.shape == (BATCH, OUTPUT_DIM)
    print("KERNEL_OK")
</pallas_src>

<mosaic_0001>
module attributes {stable_mosaic.version = 11 : i64} {
  func.func @camera_encoder_kernel(%arg0: memref<8x16xf32, #tpu.memory_space<vmem>>, %arg1: memref<32x768xf32, #tpu.memory_space<vmem>>, %arg2: memref<4352x768xbf16, #tpu.memory_space<any>>, %arg3: memref<8x768xf32, #tpu.memory_space<vmem>>, %arg4: memref<4352x768xbf16, #tpu.memory_space<vmem>>, %arg5: memref<4x!tpu.dma_semaphore, #tpu.memory_space<semaphore_mem>>) attributes {dimension_semantics = [], scalar_prefetch = 0 : i64, scratch_operands = 2 : i64, tpu.core_type = #tpu.core_type<tc>} {
    %c0_i32 = arith.constant 0 : i32
    %c0_i32_0 = arith.constant 0 : i32
    %c0_i32_1 = arith.constant 0 : i32
    %0 = tpu.memref_slice %arg2[%c0_i32_0, %c0_i32_1] : memref<4352x768xbf16, #tpu.memory_space<any>> -> memref<1280x768xbf16, #tpu.memory_space<any>>
    %c0_i32_2 = arith.constant 0 : i32
    %c0_i32_3 = arith.constant 0 : i32
    %1 = tpu.memref_slice %arg4[%c0_i32_2, %c0_i32_3] : memref<4352x768xbf16, #tpu.memory_space<vmem>> -> memref<1280x768xbf16, #tpu.memory_space<vmem>>
    %2 = tpu.memref_slice %arg5[%c0_i32] : memref<4x!tpu.dma_semaphore, #tpu.memory_space<semaphore_mem>> -> memref<1x!tpu.dma_semaphore, #tpu.memory_space<semaphore_mem>>
    %3 = tpu.memref_squeeze %2 : memref<1x!tpu.dma_semaphore, #tpu.memory_space<semaphore_mem>> -> memref<!tpu.dma_semaphore, #tpu.memory_space<semaphore_mem>>
    tpu.enqueue_dma source(%0 : memref<1280x768xbf16, #tpu.memory_space<any>>) target(%1 : memref<1280x768xbf16, #tpu.memory_space<vmem>>) target_semaphore(%3 : memref<!tpu.dma_semaphore, #tpu.memory_space<semaphore_mem>>)
    %c1_i32 = arith.constant 1 : i32
    %c1280_i32 = arith.constant 1280 : i32
    %c0_i32_4 = arith.constant 0 : i32
    %4 = tpu.memref_slice %arg2[%c1280_i32, %c0_i32_4] : memref<4352x768xbf16, #tpu.memory_space<any>> -> memref<768x768xbf16, #tpu.memory_space<any>>
    %c1280_i32_5 = arith.constant 1280 : i32
    %c0_i32_6 = arith.constant 0 : i32
    %5 = tpu.memref_slice %arg4[%c1280_i32_5, %c0_i32_6] : memref<4352x768xbf16, #tpu.memory_space<vmem>> -> memref<768x768xbf16, #tpu.memory_space<vmem>>
    %6 = tpu.memref_slice %arg5[%c1_i32] : memref<4x!tpu.dma_semaphore, #tpu.memory_space<semaphore_mem>> -> memref<1x!tpu.dma_semaphore, #tpu.memory_space<semaphore_mem>>
    %7 = tpu.memref_squeeze %6 : memref<1x!tpu.dma_semaphore, #tpu.memory_space<semaphore_mem>> -> memref<!tpu.dma_semaphore, #tpu.memory_space<semaphore_mem>>
    tpu.enqueue_dma source(%4 : memref<768x768xbf16, #tpu.memory_space<any>>) target(%5 : memref<768x768xbf16, #tpu.memory_space<vmem>>) target_semaphore(%7 : memref<!tpu.dma_semaphore, #tpu.memory_space<semaphore_mem>>)
    %c2_i32 = arith.constant 2 : i32
    %c2048_i32 = arith.constant 2048 : i32
    %c0_i32_7 = arith.constant 0 : i32
    %8 = tpu.memref_slice %arg2[%c2048_i32, %c0_i32_7] : memref<4352x768xbf16, #tpu.memory_space<any>> -> memref<768x768xbf16, #tpu.memory_space<any>>
    %c2048_i32_8 = arith.constant 2048 : i32
    %c0_i32_9 = arith.constant 0 : i32
    %9 = tpu.memref_slice %arg4[%c2048_i32_8, %c0_i32_9] : memref<4352x768xbf16, #tpu.memory_space<vmem>> -> memref<768x768xbf16, #tpu.memory_space<vmem>>
    %10 = tpu.memref_slice %arg5[%c2_i32] : memref<4x!tpu.dma_semaphore, #tpu.memory_space<semaphore_mem>> -> memref<1x!tpu.dma_semaphore, #tpu.memory_space<semaphore_mem>>
    %11 = tpu.memref_squeeze %10 : memref<1x!tpu.dma_semaphore, #tpu.memory_space<semaphore_mem>> -> memref<!tpu.dma_semaphore, #tpu.memory_space<semaphore_mem>>
    tpu.enqueue_dma source(%8 : memref<768x768xbf16, #tpu.memory_space<any>>) target(%9 : memref<768x768xbf16, #tpu.memory_space<vmem>>) target_semaphore(%11 : memref<!tpu.dma_semaphore, #tpu.memory_space<semaphore_mem>>)
    %c3_i32 = arith.constant 3 : i32
    %c2816_i32 = arith.constant 2816 : i32
    %c0_i32_10 = arith.constant 0 : i32
    %12 = tpu.memref_slice %arg2[%c2816_i32, %c0_i32_10] : memref<4352x768xbf16, #tpu.memory_space<any>> -> memref<1536x768xbf16, #tpu.memory_space<any>>
    %c2816_i32_11 = arith.constant 2816 : i32
    %c0_i32_12 = arith.constant 0 : i32
    %13 = tpu.memref_slice %arg4[%c2816_i32_11, %c0_i32_12] : memref<4352x768xbf16, #tpu.memory_space<vmem>> -> memref<1536x768xbf16, #tpu.memory_space<vmem>>
    %14 = tpu.memref_slice %arg5[%c3_i32] : memref<4x!tpu.dma_semaphore, #tpu.memory_space<semaphore_mem>> -> memref<1x!tpu.dma_semaphore, #tpu.memory_space<semaphore_mem>>
    %15 = tpu.memref_squeeze %14 : memref<1x!tpu.dma_semaphore, #tpu.memory_space<semaphore_mem>> -> memref<!tpu.dma_semaphore, #tpu.memory_space<semaphore_mem>>
    tpu.enqueue_dma source(%12 : memref<1536x768xbf16, #tpu.memory_space<any>>) target(%13 : memref<1536x768xbf16, #tpu.memory_space<vmem>>) target_semaphore(%15 : memref<!tpu.dma_semaphore, #tpu.memory_space<semaphore_mem>>)
    %c0 = arith.constant 0 : index
    %c0_13 = arith.constant 0 : index
    %16 = vector.load %arg1[%c0, %c0_13] : memref<32x768xf32, #tpu.memory_space<vmem>>, vector<1x512xf32>
    %c1 = arith.constant 1 : index
    %c0_14 = arith.constant 0 : index
    %17 = vector.load %arg1[%c1, %c0_14] : memref<32x768xf32, #tpu.memory_space<vmem>>, vector<1x512xf32>
    %c2 = arith.constant 2 : index
    %c0_15 = arith.constant 0 : index
    %18 = vector.load %arg1[%c2, %c0_15] : memref<32x768xf32, #tpu.memory_space<vmem>>, vector<1x512xf32>
    %c3 = arith.constant 3 : index
    %c0_16 = arith.constant 0 : index
    %19 = vector.load %arg1[%c3, %c0_16] : memref<32x768xf32, #tpu.memory_space<vmem>>, vector<3x384xf32>
    %c6 = arith.constant 6 : index
    %c0_17 = arith.constant 0 : index
    %20 = vector.load %arg1[%c6, %c0_17] : memref<32x768xf32, #tpu.memory_space<vmem>>, vector<9x512xf32>
    %c15 = arith.constant 15 : index
    %c0_18 = arith.constant 0 : index
    %21 = vector.load %arg1[%c15, %c0_18] : memref<32x768xf32, #tpu.memory_space<vmem>>, vector<1x768xf32>
    %c16 = arith.constant 16 : index
    %c0_19 = arith.constant 0 : index
    %22 = vector.load %arg1[%c16, %c0_19] : memref<32x768xf32, #tpu.memory_space<vmem>>, vector<1x768xf32>
    %c17 = arith.constant 17 : index
    %c0_20 = arith.constant 0 : index
    %23 = vector.load %arg1[%c17, %c0_20] : memref<32x768xf32, #tpu.memory_space<vmem>>, vector<1x768xf32>
    %c18 = arith.constant 18 : index
    %c0_21 = arith.constant 0 : index
    %24 = vector.load %arg1[%c18, %c0_21] : memref<32x768xf32, #tpu.memory_space<vmem>>, vector<1x768xf32>
    %c19 = arith.constant 19 : index
    %c0_22 = arith.constant 0 : index
    %25 = vector.load %arg1[%c19, %c0_22] : memref<32x768xf32, #tpu.memory_space<vmem>>, vector<1x768xf32>
    %c20 = arith.constant 20 : index
    %c0_23 = arith.constant 0 : index
    %26 = vector.load %arg1[%c20, %c0_23] : memref<32x768xf32, #tpu.memory_space<vmem>>, vector<1x768xf32>
    %c21 = arith.constant 21 : index
    %c0_24 = arith.constant 0 : index
    %27 = vector.load %arg1[%c21, %c0_24] : memref<32x768xf32, #tpu.memory_space<vmem>>, vector<1x768xf32>
    %c22 = arith.constant 22 : index
    %c0_25 = arith.constant 0 : index
    %28 = vector.load %arg1[%c22, %c0_25] : memref<32x768xf32, #tpu.memory_space<vmem>>, vector<1x768xf32>
    %c23 = arith.constant 23 : index
    %c0_26 = arith.constant 0 : index
    %29 = vector.load %arg1[%c23, %c0_26] : memref<32x768xf32, #tpu.memory_space<vmem>>, vector<1x768xf32>
    %c24 = arith.constant 24 : index
    %c0_27 = arith.constant 0 : index
    %30 = vector.load %arg1[%c24, %c0_27] : memref<32x768xf32, #tpu.memory_space<vmem>>, vector<1x768xf32>
    %c0_28 = arith.constant 0 : index
    %c0_29 = arith.constant 0 : index
    %31 = vector.load %arg0[%c0_28, %c0_29] : memref<8x16xf32, #tpu.memory_space<vmem>>, vector<8x9xf32>
    %c0_30 = arith.constant 0 : index
    %c9 = arith.constant 9 : index
    %32 = vector.load %arg0[%c0_30, %c9] : memref<8x16xf32, #tpu.memory_space<vmem>>, vector<8x3xf32>
    %33 = vector.extract_strided_slice %31 {offsets = [0, 0], sizes = [8, 1], strides = [1, 1]} : vector<8x9xf32> to vector<8x1xf32>
    %34 = vector.extract_strided_slice %20 {offsets = [0, 0], sizes = [1, 512], strides = [1, 1]} : vector<9x512xf32> to vector<1x512xf32>
    %35 = vector.broadcast %33 : vector<8x1xf32> to vector<8x512xf32>
    %36 = vector.broadcast %34 : vector<1x512xf32> to vector<8x512xf32>
    %37 = arith.mulf %35, %36 : vector<8x512xf32>
    %38 = vector.broadcast %16 : vector<1x512xf32> to vector<8x512xf32>
    %39 = arith.addf %38, %37 : vector<8x512xf32>
    %40 = vector.extract_strided_slice %31 {offsets = [0, 1], sizes = [8, 1], strides = [1, 1]} : vector<8x9xf32> to vector<8x1xf32>
    %41 = vector.extract_strided_slice %20 {offsets = [1, 0], sizes = [1, 512], strides = [1, 1]} : vector<9x512xf32> to vector<1x512xf32>
    %42 = vector.broadcast %40 : vector<8x1xf32> to vector<8x512xf32>
    %43 = vector.broadcast %41 : vector<1x512xf32> to vector<8x512xf32>
    %44 = arith.mulf %42, %43 : vector<8x512xf32>
    %45 = arith.addf %39, %44 : vector<8x512xf32>
    %46 = vector.extract_strided_slice %31 {offsets = [0, 2], sizes = [8, 1], strides = [1, 1]} : vector<8x9xf32> to vector<8x1xf32>
    %47 = vector.extract_strided_slice %20 {offsets = [2, 0], sizes = [1, 512], strides = [1, 1]} : vector<9x512xf32> to vector<1x512xf32>
    %48 = vector.broadcast %46 : vector<8x1xf32> to vector<8x512xf32>
    %49 = vector.broadcast %47 : vector<1x512xf32> to vector<8x512xf32>
    %50 = arith.mulf %48, %49 : vector<8x512xf32>
    %51 = arith.addf %45, %50 : vector<8x512xf32>
    %52 = vector.extract_strided_slice %31 {offsets = [0, 3], sizes = [8, 1], strides = [1, 1]} : vector<8x9xf32> to vector<8x1xf32>
    %53 = vector.extract_strided_slice %20 {offsets = [3, 0], sizes = [1, 512], strides = [1, 1]} : vector<9x512xf32> to vector<1x512xf32>
    %54 = vector.broadcast %52 : vector<8x1xf32> to vector<8x512xf32>
    %55 = vector.broadcast %53 : vector<1x512xf32> to vector<8x512xf32>
    %56 = arith.mulf %54, %55 : vector<8x512xf32>
    %57 = arith.addf %51, %56 : vector<8x512xf32>
    %58 = vector.extract_strided_slice %31 {offsets = [0, 4], sizes = [8, 1], strides = [1, 1]} : vector<8x9xf32> to vector<8x1xf32>
    %59 = vector.extract_strided_slice %20 {offsets = [4, 0], sizes = [1, 512], strides = [1, 1]} : vector<9x512xf32> to vector<1x512xf32>
    %60 = vector.broadcast %58 : vector<8x1xf32> to vector<8x512xf32>
    %61 = vector.broadcast %59 : vector<1x512xf32> to vector<8x512xf32>
    %62 = arith.mulf %60, %61 : vector<8x512xf32>
    %63 = arith.addf %57, %62 : vector<8x512xf32>
    %64 = vector.extract_strided_slice %31 {offsets = [0, 5], sizes = [8, 1], strides = [1, 1]} : vector<8x9xf32> to vector<8x1xf32>
    %65 = vector.extract_strided_slice %20 {offsets = [5, 0], sizes = [1, 512], strides = [1, 1]} : vector<9x512xf32> to vector<1x512xf32>
    %66 = vector.broadcast %64 : vector<8x1xf32> to vector<8x512xf32>
    %67 = vector.broadcast %65 : vector<1x512xf32> to vector<8x512xf32>
    %68 = arith.mulf %66, %67 : vector<8x512xf32>
    %69 = arith.addf %63, %68 : vector<8x512xf32>
    %70 = vector.extract_strided_slice %31 {offsets = [0, 6], sizes = [8, 1], strides = [1, 1]} : vector<8x9xf32> to vector<8x1xf32>
    %71 = vector.extract_strided_slice %20 {offsets = [6, 0], sizes = [1, 512], strides = [1, 1]} : vector<9x512xf32> to vector<1x512xf32>
    %72 = vector.broadcast %70 : vector<8x1xf32> to vector<8x512xf32>
    %73 = vector.broadcast %71 : vector<1x512xf32> to vector<8x512xf32>
    %74 = arith.mulf %72, %73 : vector<8x512xf32>
    %75 = arith.addf %69, %74 : vector<8x512xf32>
    %76 = vector.extract_strided_slice %31 {offsets = [0, 7], sizes = [8, 1], strides = [1, 1]} : vector<8x9xf32> to vector<8x1xf32>
    %77 = vector.extract_strided_slice %20 {offsets = [7, 0], sizes = [1, 512], strides = [1, 1]} : vector<9x512xf32> to vector<1x512xf32>
    %78 = vector.broadcast %76 : vector<8x1xf32> to vector<8x512xf32>
    %79 = vector.broadcast %77 : vector<1x512xf32> to vector<8x512xf32>
    %80 = arith.mulf %78, %79 : vector<8x512xf32>
    %81 = arith.addf %75, %80 : vector<8x512xf32>
    %82 = vector.extract_strided_slice %31 {offsets = [0, 8], sizes = [8, 1], strides = [1, 1]} : vector<8x9xf32> to vector<8x1xf32>
    %83 = vector.extract_strided_slice %20 {offsets = [8, 0], sizes = [1, 512], strides = [1, 1]} : vector<9x512xf32> to vector<1x512xf32>
    %84 = vector.broadcast %82 : vector<8x1xf32> to vector<8x512xf32>
    %85 = vector.broadcast %83 : vector<1x512xf32> to vector<8x512xf32>
    %86 = arith.mulf %84, %85 : vector<8x512xf32>
    %87 = arith.addf %81, %86 : vector<8x512xf32>
    %cst = arith.constant dense<0.000000e+00> : vector<8xf32>
    %88 = vector.multi_reduction <add>, %87, %cst [1] : vector<8x512xf32> to vector<8xf32>
    %89 = vector.shape_cast %88 : vector<8xf32> to vector<8x1xf32>
    %cst_31 = arith.constant 5.120000e+02 : f32
    %90 = vector.broadcast %cst_31 : f32 to vector<8x1xf32>
    %91 = arith.divf %89, %90 : vector<8x1xf32>
    %92 = arith.mulf %87, %87 : vector<8x512xf32>
    %cst_32 = arith.constant dense<0.000000e+00> : vector<8xf32>
    %93 = vector.multi_reduction <add>, %92, %cst_32 [1] : vector<8x512xf32> to vector<8xf32>
    %94 = vector.shape_cast %93 : vector<8xf32> to vector<8x1xf32>
    %cst_33 = arith.constant 5.120000e+02 : f32
    %95 = vector.broadcast %cst_33 : f32 to vector<8x1xf32>
    %96 = arith.divf %94, %95 : vector<8x1xf32>
    %97 = arith.mulf %91, %91 : vector<8x1xf32>
    %98 = arith.subf %96, %97 : vector<8x1xf32>
    %cst_34 = arith.constant 0.000000e+00 : f32
    %99 = vector.broadcast %cst_34 : f32 to vector<8x1xf32>
    %100 = arith.maximumf %98, %99 : vector<8x1xf32>
    %101 = vector.broadcast %91 : vector<8x1xf32> to vector<8x512xf32>
    %102 = arith.subf %87, %101 : vector<8x512xf32>
    %cst_35 = arith.constant 9.99999974E-6 : f32
    %103 = vector.broadcast %cst_35 : f32 to vector<8x1xf32>
    %104 = arith.addf %100, %103 : vector<8x1xf32>
    %105 = math.rsqrt %104 : vector<8x1xf32>
    %106 = vector.broadcast %105 : vector<8x1xf32> to vector<8x512xf32>
    %107 = arith.mulf %102, %106 : vector<8x512xf32>
    %108 = vector.broadcast %17 : vector<1x512xf32> to vector<8x512xf32>
    %109 = arith.mulf %107, %108 : vector<8x512xf32>
    %110 = vector.broadcast %18 : vector<1x512xf32> to vector<8x512xf32>
    %111 = arith.addf %109, %110 : vector<8x512xf32>
    %cst_36 = arith.constant 0.000000e+00 : f32
    %112 = vector.broadcast %cst_36 : f32 to vector<8x512xf32>
    %113 = arith.maximumf %111, %112 : vector<8x512xf32>
    %114 = vector.extract_strided_slice %32 {offsets = [0, 0], sizes = [8, 1], strides = [1, 1]} : vector<8x3xf32> to vector<8x1xf32>
    %115 = vector.extract_strided_slice %19 {offsets = [0, 0], sizes = [1, 384], strides = [1, 1]} : vector<3x384xf32> to vector<1x384xf32>
    %116 = vector.broadcast %114 : vector<8x1xf32> to vector<8x384xf32>
    %117 = vector.broadcast %115 : vector<1x384xf32> to vector<8x384xf32>
    %118 = arith.mulf %116, %117 : vector<8x384xf32>
    %119 = vector.extract_strided_slice %32 {offsets = [0, 1], sizes = [8, 1], strides = [1, 1]} : vector<8x3xf32> to vector<8x1xf32>
    %120 = vector.extract_strided_slice %19 {offsets = [1, 0], sizes = [1, 384], strides = [1, 1]} : vector<3x384xf32> to vector<1x384xf32>
    %121 = vector.broadcast %119 : vector<8x1xf32> to vector<8x384xf32>
    %122 = vector.broadcast %120 : vector<1x384xf32> to vector<8x384xf32>
    %123 = arith.mulf %121, %122 : vector<8x384xf32>
    %124 = arith.addf %118, %123 : vector<8x384xf32>
    %125 = vector.extract_strided_slice %32 {offsets = [0, 2], sizes = [8, 1], strides = [1, 1]} : vector<8x3xf32> to vector<8x1xf32>
    %126 = vector.extract_strided_slice %19 {offsets = [2, 0], sizes = [1, 384], strides = [1, 1]} : vector<3x384xf32> to vector<1x384xf32>
    %127 = vector.broadcast %125 : vector<8x1xf32> to vector<8x384xf32>
    %128 = vector.broadcast %126 : vector<1x384xf32> to vector<8x384xf32>
    %129 = arith.mulf %127, %128 : vector<8x384xf32>
    %130 = arith.addf %124, %129 : vector<8x384xf32>
    %131 = math.sin %130 : vector<8x384xf32>
    %132 = arith.truncf %131 : vector<8x384xf32> to vector<8x384xbf16>
    %133 = math.cos %130 : vector<8x384xf32>
    %134 = arith.truncf %133 : vector<8x384xf32> to vector<8x384xbf16>
    %c0_i32_37 = arith.constant 0 : i32
    %c0_i32_38 = arith.constant 0 : i32
    %c0_i32_39 = arith.constant 0 : i32
    %135 = tpu.memref_slice %arg2[%c0_i32_38, %c0_i32_39] : memref<4352x768xbf16, #tpu.memory_space<any>> -> memref<1280x768xbf16, #tpu.memory_space<any>>
    %c0_i32_40 = arith.constant 0 : i32
    %c0_i32_41 = arith.constant 0 : i32
    %136 = tpu.memref_slice %arg4[%c0_i32_40, %c0_i32_41] : memref<4352x768xbf16, #tpu.memory_space<vmem>> -> memref<1280x768xbf16, #tpu.memory_space<vmem>>
    %137 = tpu.memref_slice %arg5[%c0_i32_37] : memref<4x!tpu.dma_semaphore, #tpu.memory_space<semaphore_mem>> -> memref<1x!tpu.dma_semaphore, #tpu.memory_space<semaphore_mem>>
    %138 = tpu.memref_squeeze %137 : memref<1x!tpu.dma_semaphore, #tpu.memory_space<semaphore_mem>> -> memref<!tpu.dma_semaphore, #tpu.memory_space<semaphore_mem>>
    tpu.wait_dma2 semaphore(%138 : memref<!tpu.dma_semaphore, #tpu.memory_space<semaphore_mem>>) src(%135 : memref<1280x768xbf16, #tpu.memory_space<any>>) dst(%136 : memref<1280x768xbf16, #tpu.memory_space<vmem>>)
    %139 = arith.truncf %113 : vector<8x512xf32> to vector<8x512xbf16>
    %c0_42 = arith.constant 0 : index
    %c0_43 = arith.constant 0 : index
    %140 = vector.load %arg4[%c0_42, %c0_43] : memref<4352x768xbf16, #tpu.memory_space<vmem>>, vector<512x768xbf16>
    %cst_44 = arith.constant dense<0.000000e+00> : vector<8x768xf32>
    %141 = tpu.matmul %139, %140, %cst_44 {dimension_numbers = #tpu.dot_dimension_numbers<[1], [0], [0], [1], [0, 0, 1, 1], [], []>} : vector<8x512xbf16>, vector<512x768xbf16>, vector<8x768xf32> -> vector<8x768xf32>
    %142 = vector.broadcast %21 : vector<1x768xf32> to vector<8x768xf32>
    %143 = arith.addf %141, %142 : vector<8x768xf32>
    %c512 = arith.constant 512 : index
    %c0_45 = arith.constant 0 : index
    %144 = vector.load %arg4[%c512, %c0_45] : memref<4352x768xbf16, #tpu.memory_space<vmem>>, vector<384x768xbf16>
    %cst_46 = arith.constant dense<0.000000e+00> : vector<8x768xf32>
    %145 = tpu.matmul %132, %144, %cst_46 {dimension_numbers = #tpu.dot_dimension_numbers<[1], [0], [0], [1], [0, 0, 1, 1], [], []>} : vector<8x384xbf16>, vector<384x768xbf16>, vector<8x768xf32> -> vector<8x768xf32>
    %c896 = arith.constant 896 : index
    %c0_47 = arith.constant 0 : index
    %146 = vector.load %arg4[%c896, %c0_47] : memref<4352x768xbf16, #tpu.memory_space<vmem>>, vector<384x768xbf16>
    %cst_48 = arith.constant dense<0.000000e+00> : vector<8x768xf32>
    %147 = tpu.matmul %134, %146, %cst_48 {dimension_numbers = #tpu.dot_dimension_numbers<[1], [0], [0], [1], [0, 0, 1, 1], [], []>} : vector<8x384xbf16>, vector<384x768xbf16>, vector<8x768xf32> -> vector<8x768xf32>
    %148 = arith.addf %145, %147 : vector<8x768xf32>
    %c1_i32_49 = arith.constant 1 : i32
    %c1280_i32_50 = arith.constant 1280 : i32
    %c0_i32_51 = arith.constant 0 : i32
    %149 = tpu.memref_slice %arg2[%c1280_i32_50, %c0_i32_51] : memref<4352x768xbf16, #tpu.memory_space<any>> -> memref<768x768xbf16, #tpu.memory_space<any>>
    %c1280_i32_52 = arith.constant 1280 : i32
    %c0_i32_53 = arith.constant 0 : i32
    %150 = tpu.memref_slice %arg4[%c1280_i32_52, %c0_i32_53] : memref<4352x768xbf16, #tpu.memory_space<vmem>> -> memref<768x768xbf16, #tpu.memory_space<vmem>>
    %151 = tpu.memref_slice %arg5[%c1_i32_49] : memref<4x!tpu.dma_semaphore, #tpu.memory_space<semaphore_mem>> -> memref<1x!tpu.dma_semaphore, #tpu.memory_space<semaphore_mem>>
    %152 = tpu.memref_squeeze %151 : memref<1x!tpu.dma_semaphore, #tpu.memory_space<semaphore_mem>> -> memref<!tpu.dma_semaphore, #tpu.memory_space<semaphore_mem>>
    tpu.wait_dma2 semaphore(%152 : memref<!tpu.dma_semaphore, #tpu.memory_space<semaphore_mem>>) src(%149 : memref<768x768xbf16, #tpu.memory_space<any>>) dst(%150 : memref<768x768xbf16, #tpu.memory_space<vmem>>)
    %153 = arith.truncf %148 : vector<8x768xf32> to vector<8x768xbf16>
    %c1280 = arith.constant 1280 : index
    %c0_54 = arith.constant 0 : index
    %154 = vector.load %arg4[%c1280, %c0_54] : memref<4352x768xbf16, #tpu.memory_space<vmem>>, vector<768x768xbf16>
    %cst_55 = arith.constant dense<0.000000e+00> : vector<8x768xf32>
    %155 = tpu.matmul %153, %154, %cst_55 {dimension_numbers = #tpu.dot_dimension_numbers<[1], [0], [0], [1], [0, 0, 1, 1], [], []>} : vector<8x768xbf16>, vector<768x768xbf16>, vector<8x768xf32> -> vector<8x768xf32>
    %156 = vector.broadcast %22 : vector<1x768xf32> to vector<8x768xf32>
    %157 = arith.addf %155, %156 : vector<8x768xf32>
    %cst_56 = arith.constant dense<0.000000e+00> : vector<8xf32>
    %158 = vector.multi_reduction <add>, %157, %cst_56 [1] : vector<8x768xf32> to vector<8xf32>
    %159 = vector.shape_cast %158 : vector<8xf32> to vector<8x1xf32>
    %cst_57 = arith.constant 7.680000e+02 : f32
    %160 = vector.broadcast %cst_57 : f32 to vector<8x1xf32>
    %161 = arith.divf %159, %160 : vector<8x1xf32>
    %162 = arith.mulf %157, %157 : vector<8x768xf32>
    %cst_58 = arith.constant dense<0.000000e+00> : vector<8xf32>
    %163 = vector.multi_reduction <add>, %162, %cst_58 [1] : vector<8x768xf32> to vector<8xf32>
    %164 = vector.shape_cast %163 : vector<8xf32> to vector<8x1xf32>
    %cst_59 = arith.constant 7.680000e+02 : f32
    %165 = vector.broadcast %cst_59 : f32 to vector<8x1xf32>
    %166 = arith.divf %164, %165 : vector<8x1xf32>
    %167 = arith.mulf %161, %161 : vector<8x1xf32>
    %168 = arith.subf %166, %167 : vector<8x1xf32>
    %cst_60 = arith.constant 0.000000e+00 : f32
    %169 = vector.broadcast %cst_60 : f32 to vector<8x1xf32>
    %170 = arith.maximumf %168, %169 : vector<8x1xf32>
    %171 = vector.broadcast %161 : vector<8x1xf32> to vector<8x768xf32>
    %172 = arith.subf %157, %171 : vector<8x768xf32>
    %cst_61 = arith.constant 9.99999974E-6 : f32
    %173 = vector.broadcast %cst_61 : f32 to vector<8x1xf32>
    %174 = arith.addf %170, %173 : vector<8x1xf32>
    %175 = math.rsqrt %174 : vector<8x1xf32>
    %176 = vector.broadcast %175 : vector<8x1xf32> to vector<8x768xf32>
    %177 = arith.mulf %172, %176 : vector<8x768xf32>
    %178 = vector.broadcast %23 : vector<1x768xf32> to vector<8x768xf32>
    %179 = arith.mulf %177, %178 : vector<8x768xf32>
    %180 = vector.broadcast %24 : vector<1x768xf32> to vector<8x768xf32>
    %181 = arith.addf %179, %180 : vector<8x768xf32>
    %cst_62 = arith.constant 0.000000e+00 : f32
    %182 = vector.broadcast %cst_62 : f32 to vector<8x768xf32>
    %183 = arith.maximumf %181, %182 : vector<8x768xf32>
    %c2_i32_63 = arith.constant 2 : i32
    %c2048_i32_64 = arith.constant 2048 : i32
    %c0_i32_65 = arith.constant 0 : i32
    %184 = tpu.memref_slice %arg2[%c2048_i32_64, %c0_i32_65] : memref<4352x768xbf16, #tpu.memory_space<any>> -> memref<768x768xbf16, #tpu.memory_space<any>>
    %c2048_i32_66 = arith.constant 2048 : i32
    %c0_i32_67 = arith.constant 0 : i32
    %185 = tpu.memref_slice %arg4[%c2048_i32_66, %c0_i32_67] : memref<4352x768xbf16, #tpu.memory_space<vmem>> -> memref<768x768xbf16, #tpu.memory_space<vmem>>
    %186 = tpu.memref_slice %arg5[%c2_i32_63] : memref<4x!tpu.dma_semaphore, #tpu.memory_space<semaphore_mem>> -> memref<1x!tpu.dma_semaphore, #tpu.memory_space<semaphore_mem>>
    %187 = tpu.memref_squeeze %186 : memref<1x!tpu.dma_semaphore, #tpu.memory_space<semaphore_mem>> -> memref<!tpu.dma_semaphore, #tpu.memory_space<semaphore_mem>>
    tpu.wait_dma2 semaphore(%187 : memref<!tpu.dma_semaphore, #tpu.memory_space<semaphore_mem>>) src(%184 : memref<768x768xbf16, #tpu.memory_space<any>>) dst(%185 : memref<768x768xbf16, #tpu.memory_space<vmem>>)
    %188 = arith.truncf %183 : vector<8x768xf32> to vector<8x768xbf16>
    %c2048 = arith.constant 2048 : index
    %c0_68 = arith.constant 0 : index
    %189 = vector.load %arg4[%c2048, %c0_68] : memref<4352x768xbf16, #tpu.memory_space<vmem>>, vector<768x768xbf16>
    %cst_69 = arith.constant dense<0.000000e+00> : vector<8x768xf32>
    %190 = tpu.matmul %188, %189, %cst_69 {dimension_numbers = #tpu.dot_dimension_numbers<[1], [0], [0], [1], [0, 0, 1, 1], [], []>} : vector<8x768xbf16>, vector<768x768xbf16>, vector<8x768xf32> -> vector<8x768xf32>
    %191 = vector.broadcast %25 : vector<1x768xf32> to vector<8x768xf32>
    %192 = arith.addf %190, %191 : vector<8x768xf32>
    %c3_i32_70 = arith.constant 3 : i32
    %c2816_i32_71 = arith.constant 2816 : i32
    %c0_i32_72 = arith.constant 0 : i32
    %193 = tpu.memref_slice %arg2[%c2816_i32_71, %c0_i32_72] : memref<4352x768xbf16, #tpu.memory_space<any>> -> memref<1536x768xbf16, #tpu.memory_space<any>>
    %c2816_i32_73 = arith.constant 2816 : i32
    %c0_i32_74 = arith.constant 0 : i32
    %194 = tpu.memref_slice %arg4[%c2816_i32_73, %c0_i32_74] : memref<4352x768xbf16, #tpu.memory_space<vmem>> -> memref<1536x768xbf16, #tpu.memory_space<vmem>>
    %195 = tpu.memref_slice %arg5[%c3_i32_70] : memref<4x!tpu.dma_semaphore, #tpu.memory_space<semaphore_mem>> -> memref<1x!tpu.dma_semaphore, #tpu.memory_space<semaphore_mem>>
    %196 = tpu.memref_squeeze %195 : memref<1x!tpu.dma_semaphore, #tpu.memory_space<semaphore_mem>> -> memref<!tpu.dma_semaphore, #tpu.memory_space<semaphore_mem>>
    tpu.wait_dma2 semaphore(%196 : memref<!tpu.dma_semaphore, #tpu.memory_space<semaphore_mem>>) src(%193 : memref<1536x768xbf16, #tpu.memory_space<any>>) dst(%194 : memref<1536x768xbf16, #tpu.memory_space<vmem>>)
    %197 = arith.truncf %143 : vector<8x768xf32> to vector<8x768xbf16>
    %c2816 = arith.constant 2816 : index
    %c0_75 = arith.constant 0 : index
    %198 = vector.load %arg4[%c2816, %c0_75] : memref<4352x768xbf16, #tpu.memory_space<vmem>>, vector<768x768xbf16>
    %cst_76 = arith.constant dense<0.000000e+00> : vector<8x768xf32>
    %199 = tpu.matmul %197, %198, %cst_76 {dimension_numbers = #tpu.dot_dimension_numbers<[1], [0], [0], [1], [0, 0, 1, 1], [], []>} : vector<8x768xbf16>, vector<768x768xbf16>, vector<8x768xf32> -> vector<8x768xf32>
    %200 = arith.truncf %192 : vector<8x768xf32> to vector<8x768xbf16>
    %c3584 = arith.constant 3584 : index
    %c0_77 = arith.constant 0 : index
    %201 = vector.load %arg4[%c3584, %c0_77] : memref<4352x768xbf16, #tpu.memory_space<vmem>>, vector<768x768xbf16>
    %cst_78 = arith.constant dense<0.000000e+00> : vector<8x768xf32>
    %202 = tpu.matmul %200, %201, %cst_78 {dimension_numbers = #tpu.dot_dimension_numbers<[1], [0], [0], [1], [0, 0, 1, 1], [], []>} : vector<8x768xbf16>, vector<768x768xbf16>, vector<8x768xf32> -> vector<8x768xf32>
    %203 = arith.addf %199, %202 : vector<8x768xf32>
    %204 = vector.broadcast %26 : vector<1x768xf32> to vector<8x768xf32>
    %205 = arith.addf %203, %204 : vector<8x768xf32>
    %cst_79 = arith.constant dense<0.000000e+00> : vector<8xf32>
    %206 = vector.multi_reduction <add>, %205, %cst_79 [1] : vector<8x768xf32> to vector<8xf32>
    %207 = vector.shape_cast %206 : vector<8xf32> to vector<8x1xf32>
    %cst_80 = arith.constant 7.680000e+02 : f32
    %208 = vector.broadcast %cst_80 : f32 to vector<8x1xf32>
    %209 = arith.divf %207, %208 : vector<8x1xf32>
    %210 = arith.mulf %205, %205 : vector<8x768xf32>
    %cst_81 = arith.constant dense<0.000000e+00> : vector<8xf32>
    %211 = vector.multi_reduction <add>, %210, %cst_81 [1] : vector<8x768xf32> to vector<8xf32>
    %212 = vector.shape_cast %211 : vector<8xf32> to vector<8x1xf32>
    %cst_82 = arith.constant 7.680000e+02 : f32
    %213 = vector.broadcast %cst_82 : f32 to vector<8x1xf32>
    %214 = arith.divf %212, %213 : vector<8x1xf32>
    %215 = arith.mulf %209, %209 : vector<8x1xf32>
    %216 = arith.subf %214, %215 : vector<8x1xf32>
    %cst_83 = arith.constant 0.000000e+00 : f32
    %217 = vector.broadcast %cst_83 : f32 to vector<8x1xf32>
    %218 = arith.maximumf %216, %217 : vector<8x1xf32>
    %219 = vector.broadcast %209 : vector<8x1xf32> to vector<8x768xf32>
    %220 = arith.subf %205, %219 : vector<8x768xf32>
    %cst_84 = arith.constant 9.99999974E-6 : f32
    %221 = vector.broadcast %cst_84 : f32 to vector<8x1xf32>
    %222 = arith.addf %218, %221 : vector<8x1xf32>
    %223 = math.rsqrt %222 : vector<8x1xf32>
    %224 = vector.broadcast %223 : vector<8x1xf32> to vector<8x768xf32>
    %225 = arith.mulf %220, %224 : vector<8x768xf32>
    %226 = vector.broadcast %27 : vector<1x768xf32> to vector<8x768xf32>
    %227 = arith.mulf %225, %226 : vector<8x768xf32>
    %228 = vector.broadcast %28 : vector<1x768xf32> to vector<8x768xf32>
    %229 = arith.addf %227, %228 : vector<8x768xf32>
    %cst_85 = arith.constant dense<0.000000e+00> : vector<8xf32>
    %230 = vector.multi_reduction <add>, %229, %cst_85 [1] : vector<8x768xf32> to vector<8xf32>
    %231 = vector.shape_cast %230 : vector<8xf32> to vector<8x1xf32>
    %cst_86 = arith.constant 7.680000e+02 : f32
    %232 = vector.broadcast %cst_86 : f32 to vector<8x1xf32>
    %233 = arith.divf %231, %232 : vector<8x1xf32>
    %234 = arith.mulf %229, %229 : vector<8x768xf32>
    %cst_87 = arith.constant dense<0.000000e+00> : vector<8xf32>
    %235 = vector.multi_reduction <add>, %234, %cst_87 [1] : vector<8x768xf32> to vector<8xf32>
    %236 = vector.shape_cast %235 : vector<8xf32> to vector<8x1xf32>
    %cst_88 = arith.constant 7.680000e+02 : f32
    %237 = vector.broadcast %cst_88 : f32 to vector<8x1xf32>
    %238 = arith.divf %236, %237 : vector<8x1xf32>
    %239 = arith.mulf %233, %233 : vector<8x1xf32>
    %240 = arith.subf %238, %239 : vector<8x1xf32>
    %cst_89 = arith.constant 0.000000e+00 : f32
    %241 = vector.broadcast %cst_89 : f32 to vector<8x1xf32>
    %242 = arith.maximumf %240, %241 : vector<8x1xf32>
    %243 = vector.broadcast %233 : vector<8x1xf32> to vector<8x768xf32>
    %244 = arith.subf %229, %243 : vector<8x768xf32>
    %cst_90 = arith.constant 9.99999974E-6 : f32
    %245 = vector.broadcast %cst_90 : f32 to vector<8x1xf32>
    %246 = arith.addf %242, %245 : vector<8x1xf32>
    %247 = math.rsqrt %246 : vector<8x1xf32>
    %248 = vector.broadcast %247 : vector<8x1xf32> to vector<8x768xf32>
    %249 = arith.mulf %244, %248 : vector<8x768xf32>
    %250 = vector.broadcast %29 : vector<1x768xf32> to vector<8x768xf32>
    %251 = arith.mulf %249, %250 : vector<8x768xf32>
    %252 = vector.broadcast %30 : vector<1x768xf32> to vector<8x768xf32>
    %253 = arith.addf %251, %252 : vector<8x768xf32>
    %c0_91 = arith.constant 0 : index
    %c0_92 = arith.constant 0 : index
    %254 = vector.load %arg3[%c0_91, %c0_92] : memref<8x768xf32, #tpu.memory_space<vmem>>, vector<8x768xf32>
    tpu.vector_store %arg3[%c0_91, %c0_92], %253 {strides = array<i32>} : memref<8x768xf32, #tpu.memory_space<vmem>>, vector<8x768xf32>,
    return
  }
}

</mosaic_0001>

<llo_original>
// kernel: tpu_custom_call.1
$region0: #{tpu_custom_call.1}
  #allocation0 [shape = 'u32[]', space=smem, size = 0x4, offset = 0x4, fixed_abs, tag = 'smem constant byte address 0x4 - core index']
  #allocation1 [shape = 'u32[144,128]{1,0:T(1,128)}', space=vmem, size = 0x12000, scoped, tag = 'internal scratch']
  #allocation2 [shape = 'bf16[4352,768]{1,0:T(16,128)(2,1)}', space=vmem, size = 0x660000, scoped, tag = 'scratch operand']
  #allocation3 [shape = 's32[4]{0}', space=sflag, size = 0x10, scoped, tag = 'scratch operand']
  #allocation10 [shape = 's32[]', space=sflag, size = 0x4, offset = 0, fixed_abs, tag = 'sflag constant byte address 0x0 - dummy sync flag']
  #allocation12 [shape = 's32[]', space=sflag, size = 0x4, offset = 0, fixed_abs, tag = 'sflag constant byte address 0x0 - dummy sync flag']
  #allocation14 [shape = 's32[]', space=sflag, size = 0x4, offset = 0, fixed_abs, tag = 'sflag constant byte address 0x0 - dummy sync flag']
  #allocation16 [shape = 's32[]', space=sflag, size = 0x4, offset = 0, fixed_abs, tag = 'sflag constant byte address 0x0 - dummy sync flag']
  %s0 = inlined_call_operand.hbm [shape: f32[8,16], index: 0, kind: input, shape index: {}]
  %s1 = inlined_call_operand.hbm [shape: f32[32,768], index: 1, kind: input, shape index: {}]
  %s2 = inlined_call_operand.hbm [shape: bf16[4352,768], index: 2, kind: input, shape index: {}]
  %s3 = inlined_call_operand.hbm [shape: f32[8,768], index: 3, kind: output, shape index: {}]
  %s4 = sld [smem:[#allocation0]]
  $region26: #{tpu_custom_call.1} parent=0
    _
  %s6 = ssub.s32 1, %s4
  %s7 = scalar_select 0, %s6, %s4
  $region1: #{tpu_custom_call.1} parent=0
    #allocation4 [shape = 'u8[4096]{0}', space=vmem, size = 0x1000, scoped, tag = 'input window, operand 0, single buffered']
    #allocation5 [shape = 's32[1]{0}', space=sflag, size = 0x4, scoped, tag = 'scoped memory for tpu_custom_call.1']
    #allocation6 [shape = 's32[1]{0}', space=sflag, size = 0x4, scoped, tag = 'scoped memory for tpu_custom_call.1']
    #allocation7 [shape = 'u8[98304]{0}', space=vmem, size = 0x18000, scoped, tag = 'input window, operand 1, single buffered']
    #allocation8 [shape = 's32[1]{0}', space=sflag, size = 0x4, scoped, tag = 'scoped memory for tpu_custom_call.1']
    #allocation9 [shape = 'u8[24576]{0}', space=vmem, size = 0x6000, scoped, tag = 'output window, operand 0, single buffered']
    #allocation11 [shape = 'u32[9]{0}', space=smem, size = 0x24, scoped, tag = 'DMA stride descriptor']
    #allocation13 [shape = 'u32[9]{0}', space=smem, size = 0x24, scoped, tag = 'DMA stride descriptor']
    #allocation15 [shape = 'u32[9]{0}', space=smem, size = 0x24, scoped, tag = 'DMA stride descriptor']
    #allocation17 [shape = 'u32[9]{0}', space=smem, size = 0x24, scoped, tag = 'DMA stride descriptor']
    %8 = vsyncpa [#allocation5], 0
    %9 = vsyncpa [#allocation8], 0
    %10 = vsyncpa [#allocation6], 0
    // Predicated region
    $region2: #{tpu_custom_call.1} parent=1 // pred_check
      _
    $region3: #{tpu_custom_call.1} parent=1 // pred_check_branch
      %12 = sbr.rel (0) target = $region5
    $region4: #{tpu_custom_call.1} parent=1 // pred_region
      %s14 = ssub.s32 128, 128
      %15 = vsyncadd [#allocation5], %s14
      %s17 = sshll.u32 [#allocation4], 4
      %s18 = int_to_ptr.vmem [resolvable:$true] %s17
      %20 = dma.hbm_to_vmem [thread:$0]  %s0, 128, %s18, [#allocation5]
    $region5: #{tpu_custom_call.1} parent=1 // pred_fallthru
      _
    // Predicated region
    $region6: #{tpu_custom_call.1} parent=1 // pred_check
      _
    $region7: #{tpu_custom_call.1} parent=1 // pred_check_branch
      %22 = sbr.rel (0) target = $region9
    $region8: #{tpu_custom_call.1} parent=1 // pred_region
      %s24 = ssub.s32 3072, 3072
      %25 = vsyncadd [#allocation8], %s24
      %s26 = sshll.u32 [#allocation7], 4
      %s27 = int_to_ptr.vmem [resolvable:$true] %s26
      %32 = dma.hbm_to_vmem [thread:$0]  %s1, 3072, %s27, [#allocation8], 768, 768, 48
    $region9: #{tpu_custom_call.1} parent=1 // pred_fallthru
      _
    // Predicated region
    $region10: #{tpu_custom_call.1} parent=1 // pred_check
      _
    $region11: #{tpu_custom_call.1} parent=1 // pred_check_branch
      %34 = sbr.rel (0) target = $region13
    $region12: #{tpu_custom_call.1} parent=1 // pred_region
      %35 = dma.done [#allocation5], 128
    $region13: #{tpu_custom_call.1} parent=1 // pred_fallthru
      _
    // Predicated region
    $region14: #{tpu_custom_call.1} parent=1 // pred_check
      _
    $region15: #{tpu_custom_call.1} parent=1 // pred_check_branch
      %37 = sbr.rel (0) target = $region17
    $region16: #{tpu_custom_call.1} parent=1 // pred_region
      %38 = dma.done [#allocation8], 3072
    $region17: #{tpu_custom_call.1} parent=1 // pred_fallthru
      _
    %s41 = sshll.u32 1, 14
    %s42 = sxor.u32 4294967295, %s41
    %s44 = sld [smem:[#allocation0]]
    %s45 = sadd.s32 2, %s44
    %s47 = sshll.u32 7, 26
    %s48 = sxor.u32 4294967295, %s47
    %s49 = sand.u32 0, %s48
    %s50 = sshll.u32 %s45, 26
    %s51 = sor.u32 %s49, %s50
    %s52 = sshll.u32 [#allocation2], 4
    %s53 = int_to_ptr.vmem [resolvable:$true] %s52
    %56 = sst [smem:[#allocation11]] 768
    %s57 = scalar_lea.smem [#allocation11], 1
    %58 = sst [smem:[%s57]] 768
    %s59 = scalar_lea.smem [#allocation11], 2
    %60 = sst [smem:[%s59]] 6
    %s61 = scalar_lea.smem [#allocation11], 3
    %62 = sst [smem:[%s61]] 64
    %s63 = scalar_lea.smem [#allocation11], 4
    %64 = sst [smem:[%s63]] 128
    %s65 = scalar_lea.smem [#allocation11], 5
    %66 = sst [smem:[%s65]] 2
    %s67 = scalar_lea.smem [#allocation11], 6
    %68 = sst [smem:[%s67]] 384
    %s69 = scalar_lea.smem [#allocation11], 7
    %70 = sst [smem:[%s69]] 64
    %s71 = scalar_lea.smem [#allocation11], 8
    %72 = sst [smem:[%s71]] 4
    %74 = dma.general %s2, 61440, %s53, [#allocation3], [#allocation10], [#allocation11], %s51, 0
    %s75 = scalar_lea.hbm %s2, 61440
    %s76 = scalar_lea.vmem [#allocation2], 3840
    %s77 = scalar_lea.sflag [#allocation3], 1
    %s79 = sshll.u32 1, 14
    %s80 = sxor.u32 4294967295, %s79
    %s82 = sadd.s32 2, %s44
    %s84 = sshll.u32 7, 26
    %s85 = sxor.u32 4294967295, %s84
    %s86 = sand.u32 0, %s85
    %s87 = sshll.u32 %s82, 26
    %s88 = sor.u32 %s86, %s87
    %s89 = sshll.u32 %s76, 4
    %s90 = int_to_ptr.vmem [resolvable:$true] %s89
    %93 = sst [smem:[#allocation13]] 768
    %s94 = scalar_lea.smem [#allocation13], 1
    %95 = sst [smem:[%s94]] 768
    %s96 = scalar_lea.smem [#allocation13], 2
    %97 = sst [smem:[%s96]] 6
    %s98 = scalar_lea.smem [#allocation13], 3
    %99 = sst [smem:[%s98]] 64
    %s100 = scalar_lea.smem [#allocation13], 4
    %101 = sst [smem:[%s100]] 128
    %s102 = scalar_lea.smem [#allocation13], 5
    %103 = sst [smem:[%s102]] 2
    %s104 = scalar_lea.smem [#allocation13], 6
    %105 = sst [smem:[%s104]] 384
    %s106 = scalar_lea.smem [#allocation13], 7
    %107 = sst [smem:[%s106]] 64
    %s108 = scalar_lea.smem [#allocation13], 8
    %109 = sst [smem:[%s108]] 4
    %111 = dma.general %s75, 36864, %s90, %s77, [#allocation12], [#allocation13], %s88, 0
    %s112 = scalar_lea.hbm %s2, 98304
    %s113 = scalar_lea.vmem [#allocation2], 6144
    %s114 = scalar_lea.sflag [#allocation3], 2
    %s116 = sshll.u32 1, 14
    %s117 = sxor.u32 4294967295, %s116
    %s119 = sadd.s32 2, %s44
    %s121 = sshll.u32 7, 26
    %s122 = sxor.u32 4294967295, %s121
    %s123 = sand.u32 0, %s122
    %s124 = sshll.u32 %s119, 26
    %s125 = sor.u32 %s123, %s124
    %s126 = sshll.u32 %s113, 4
    %s127 = int_to_ptr.vmem [resolvable:$true] %s126
    %130 = sst [smem:[#allocation15]] 768
    %s131 = scalar_lea.smem [#allocation15], 1
    %132 = sst [smem:[%s131]] 768
    %s133 = scalar_lea.smem [#allocation15], 2
    %134 = sst [smem:[%s133]] 6
    %s135 = scalar_lea.smem [#allocation15], 3
    %136 = sst [smem:[%s135]] 64
    %s137 = scalar_lea.smem [#allocation15], 4
    %138 = sst [smem:[%s137]] 128
    %s139 = scalar_lea.smem [#allocation15], 5
    %140 = sst [smem:[%s139]] 2
    %s141 = scalar_lea.smem [#allocation15], 6
    %142 = sst [smem:[%s141]] 384
    %s143 = scalar_lea.smem [#allocation15], 7
    %144 = sst [smem:[%s143]] 64
    %s145 = scalar_lea.smem [#allocation15], 8
    %146 = sst [smem:[%s145]] 4
    %148 = dma.general %s112, 36864, %s127, %s114, [#allocation14], [#allocation15], %s125, 0
    %s149 = scalar_lea.hbm %s2, 135168
    %s150 = scalar_lea.vmem [#allocation2], 8448
    %s151 = scalar_lea.sflag [#allocation3], 3
    %s153 = sshll.u32 1, 14
    %s154 = sxor.u32 4294967295, %s153
    %s156 = sadd.s32 2, %s44
    %s158 = sshll.u32 7, 26
    %s159 = sxor.u32 4294967295, %s158
    %s160 = sand.u32 0, %s159
    %s161 = sshll.u32 %s156, 26
    %s162 = sor.u32 %s160, %s161
    %s163 = sshll.u32 %s150, 4
    %s164 = int_to_ptr.vmem [resolvable:$true] %s163
    %167 = sst [smem:[#allocation17]] 768
    %s168 = scalar_lea.smem [#allocation17], 1
    %169 = sst [smem:[%s168]] 768
    %s170 = scalar_lea.smem [#allocation17], 2
    %171 = sst [smem:[%s170]] 6
    %s172 = scalar_lea.smem [#allocation17], 3
    %173 = sst [smem:[%s172]] 64
    %s174 = scalar_lea.smem [#allocation17], 4
    %175 = sst [smem:[%s174]] 128
    %s176 = scalar_lea.smem [#allocation17], 5
    %177 = sst [smem:[%s176]] 2
    %s178 = scalar_lea.smem [#allocation17], 6
    %179 = sst [smem:[%s178]] 384
    %s180 = scalar_lea.smem [#allocation17], 7
    %181 = sst [smem:[%s180]] 64
    %s182 = scalar_lea.smem [#allocation17], 8
    %183 = sst [smem:[%s182]] 4
    %185 = dma.general %s149, 73728, %s164, %s151, [#allocation16], [#allocation17], %s162, 0
    %v186 = vld [vmem:[#allocation7] ss:$8 sm:$0xf]
    %s187 = scalar_lea.vmem [#allocation7], 1
    %v188 = vld [vmem:[%s187] ss:$8 sm:$0xf]
    %s189 = scalar_lea.vmem [#allocation7], 2
    %v190 = vld [vmem:[%s189] ss:$8 sm:$0xf]
    %v191 = vld [vmem:[#allocation7] sm:$0x38]
    %v192 = vld [vmem:[#allocation7 + $0x8] sm:$0x38]
    %v193 = vld [vmem:[#allocation7 + $0x10] sm:$0x38]
    %v194 = vld [vmem:[#allocation7] sm:$0xc0]
    %v195 = vld [vmem:[#allocation7 + $0x8] sm:$0xc0]
    %v196 = vld [vmem:[#allocation7 + $0x10] sm:$0xc0]
    %v197 = vld [vmem:[#allocation7 + $0x18] sm:$0xc0]
    %v198 = vld [vmem:[#allocation7 + $0x30] sm:$0x7f]
    %v199 = vld [vmem:[#allocation7 + $0x38] sm:$0x7f]
    %v200 = vld [vmem:[#allocation7 + $0x40] sm:$0x7f]
    %v201 = vld [vmem:[#allocation7 + $0x48] sm:$0x7f]
    %s202 = scalar_lea.vmem [#allocation7], 55
    %v203 = vld [vmem:[%s202] ss:$8 sm:$0xf]
    %v204 = vld [vmem:[%s202] ss:$8 sm:$0x30]
    %v205 = vor.u32 %v203, %v204
    %s206 = scalar_lea.vmem [#allocation7], 96
    %v207 = vld [vmem:[%s206] ss:$8 sm:$0xf]
    %v208 = vld [vmem:[%s206] ss:$8 sm:$0x30]
    %v209 = vor.u32 %v207, %v208
    %s210 = scalar_lea.vmem [#allocation7], 97
    %v211 = vld [vmem:[%s210] ss:$8 sm:$0xf]
    %v212 = vld [vmem:[%s210] ss:$8 sm:$0x30]
    %v213 = vor.u32 %v211, %v212
    %s214 = scalar_lea.vmem [#allocation7], 98
    %v215 = vld [vmem:[%s214] ss:$8 sm:$0xf]
    %v216 = vld [vmem:[%s214] ss:$8 sm:$0x30]
    %v217 = vor.u32 %v215, %v216
    %s218 = scalar_lea.vmem [#allocation7], 99
    %v219 = vld [vmem:[%s218] ss:$8 sm:$0xf]
    %v220 = vld [vmem:[%s218] ss:$8 sm:$0x30]
    %v221 = vor.u32 %v219, %v220
    %s222 = scalar_lea.vmem [#allocation7], 100
    %v223 = vld [vmem:[%s222] ss:$8 sm:$0xf]
    %v224 = vld [vmem:[%s222] ss:$8 sm:$0x30]
    %v225 = vor.u32 %v223, %v224
    %s226 = scalar_lea.vmem [#allocation7], 101
    %v227 = vld [vmem:[%s226] ss:$8 sm:$0xf]
    %v228 = vld [vmem:[%s226] ss:$8 sm:$0x30]
    %v229 = vor.u32 %v227, %v228
    %s230 = scalar_lea.vmem [#allocation7], 102
    %v231 = vld [vmem:[%s230] ss:$8 sm:$0xf]
    %v232 = vld [vmem:[%s230] ss:$8 sm:$0x30]
    %v233 = vor.u32 %v231, %v232
    %s234 = scalar_lea.vmem [#allocation7], 103
    %v235 = vld [vmem:[%s234] ss:$8 sm:$0xf]
    %v236 = vld [vmem:[%s234] ss:$8 sm:$0x30]
    %v237 = vor.u32 %v235, %v236
    %s238 = scalar_lea.vmem [#allocation7], 144
    %v239 = vld [vmem:[%s238] ss:$8 sm:$0xf]
    %v240 = vld [vmem:[%s238] ss:$8 sm:$0x30]
    %v241 = vor.u32 %v239, %v240
    %v242 = vld [vmem:[#allocation4] sm:$0xff]
    %244 = vset.pattern.permute.xlu0 0
    %245 = vperm.xlu0 %244, %v242
    %v246 = vpop.permute.xlu0 %245
    %v248 = vlaneseq
    %v249 = vshrl.u32 %v248, 7
    %v250 = vsub.s32 6, %v249
    %v251 = vrot.slane %v194, %v250
    %v252 = vlaneseq
    %v253 = vshrl.u32 %v252, 7
    %v254 = vsub.s32 6, %v253
    %v255 = vrot.slane %v195, %v254
    %v256 = vlaneseq
    %v257 = vshrl.u32 %v256, 7
    %v258 = vsub.s32 6, %v257
    %v259 = vrot.slane %v196, %v258
    %v260 = vlaneseq
    %v261 = vshrl.u32 %v260, 7
    %v262 = vsub.s32 6, %v261
    %v263 = vrot.slane %v197, %v262
    %v264 = vmul.f32 %v246, %v251
    %v265 = vmul.f32 %v246, %v255
    %v266 = vmul.f32 %v246, %v259
    %v267 = vmul.f32 %v246, %v263
    %v269 = vlaneseq
    %v270 = vshrl.u32 %v269, 7
    %v271 = vsub.s32 0, %v270
    %v272 = vrot.slane %v186, %v271
    %v273 = vlaneseq
    %v274 = vshrl.u32 %v273, 7
    %v275 = vsub.s32 1, %v274
    %v276 = vrot.slane %v186, %v275
    %v277 = vlaneseq
    %v278 = vshrl.u32 %v277, 7
    %v279 = vsub.s32 2, %v278
    %v280 = vrot.slane %v186, %v279
    %v281 = vlaneseq
    %v282 = vshrl.u32 %v281, 7
    %v283 = vsub.s32 3, %v282
    %v284 = vrot.slane %v186, %v283
    %v289 = vadd.f32 %v272, %v264
    %v290 = vadd.f32 %v276, %v265
    %v291 = vadd.f32 %v280, %v266
    %v292 = vadd.f32 %v284, %v267
    %293 = vset.pattern.permute.xlu0 1
    %294 = vperm.xlu0 %293, %v242
    %v295 = vpop.permute.xlu0 %294
    %v297 = vlaneseq
    %v298 = vshrl.u32 %v297, 7
    %v299 = vsub.s32 7, %v298
    %v300 = vrot.slane %v194, %v299
    %v301 = vlaneseq
    %v302 = vshrl.u32 %v301, 7
    %v303 = vsub.s32 7, %v302
    %v304 = vrot.slane %v195, %v303
    %v305 = vlaneseq
    %v306 = vshrl.u32 %v305, 7
    %v307 = vsub.s32 7, %v306
    %v308 = vrot.slane %v196, %v307
    %v309 = vlaneseq
    %v310 = vshrl.u32 %v309, 7
    %v311 = vsub.s32 7, %v310
    %v312 = vrot.slane %v197, %v311
    %v313 = vmul.f32 %v295, %v300
    %v314 = vmul.f32 %v295, %v304
    %v315 = vmul.f32 %v295, %v308
    %v316 = vmul.f32 %v295, %v312
    %v317 = vadd.f32 %v289, %v313
    %v318 = vadd.f32 %v290, %v314
    %v319 = vadd.f32 %v291, %v315
    %v320 = vadd.f32 %v292, %v316
    %321 = vset.pattern.permute.xlu0 2
    %322 = vperm.xlu0 %321, %v242
    %v323 = vpop.permute.xlu0 %322
    %v325 = vlaneseq
    %v326 = vshrl.u32 %v325, 7
    %v327 = vsub.s32 0, %v326
    %v328 = vrot.slane %v198, %v327
    %v329 = vlaneseq
    %v330 = vshrl.u32 %v329, 7
    %v331 = vsub.s32 0, %v330
    %v332 = vrot.slane %v199, %v331
    %v333 = vlaneseq
    %v334 = vshrl.u32 %v333, 7
    %v335 = vsub.s32 0, %v334
    %v336 = vrot.slane %v200, %v335
    %v337 = vlaneseq
    %v338 = vshrl.u32 %v337, 7
    %v339 = vsub.s32 0, %v338
    %v340 = vrot.slane %v201, %v339
    %v341 = vmul.f32 %v323, %v328
    %v342 = vmul.f32 %v323, %v332
    %v343 = vmul.f32 %v323, %v336
    %v344 = vmul.f32 %v323, %v340
    %v345 = vadd.f32 %v317, %v341
    %v346 = vadd.f32 %v318, %v342
    %v347 = vadd.f32 %v319, %v343
    %v348 = vadd.f32 %v320, %v344
    %349 = vset.pattern.permute.xlu0 3
    %350 = vperm.xlu0 %349, %v242
    %v351 = vpop.permute.xlu0 %350
    %v353 = vlaneseq
    %v354 = vshrl.u32 %v353, 7
    %v355 = vsub.s32 1, %v354
    %v356 = vrot.slane %v198, %v355
    %v357 = vlaneseq
    %v358 = vshrl.u32 %v357, 7
    %v359 = vsub.s32 1, %v358
    %v360 = vrot.slane %v199, %v359
    %v361 = vlaneseq
    %v362 = vshrl.u32 %v361, 7
    %v363 = vsub.s32 1, %v362
    %v364 = vrot.slane %v200, %v363
    %v365 = vlaneseq
    %v366 = vshrl.u32 %v365, 7
    %v367 = vsub.s32 1, %v366
    %v368 = vrot.slane %v201, %v367
    %v369 = vmul.f32 %v351, %v356
    %v370 = vmul.f32 %v351, %v360
    %v371 = vmul.f32 %v351, %v364
    %v372 = vmul.f32 %v351, %v368
    %v373 = vadd.f32 %v345, %v369
    %v374 = vadd.f32 %v346, %v370
    %v375 = vadd.f32 %v347, %v371
    %v376 = vadd.f32 %v348, %v372
    %377 = vset.pattern.permute.xlu0 4
    %378 = vperm.xlu0 %377, %v242
    %v379 = vpop.permute.xlu0 %378
    %v381 = vlaneseq
    %v382 = vshrl.u32 %v381, 7
    %v383 = vsub.s32 2, %v382
    %v384 = vrot.slane %v198, %v383
    %v385 = vlaneseq
    %v386 = vshrl.u32 %v385, 7
    %v387 = vsub.s32 2, %v386
    %v388 = vrot.slane %v199, %v387
    %v389 = vlaneseq
    %v390 = vshrl.u32 %v389, 7
    %v391 = vsub.s32 2, %v390
    %v392 = vrot.slane %v200, %v391
    %v393 = vlaneseq
    %v394 = vshrl.u32 %v393, 7
    %v395 = vsub.s32 2, %v394
    %v396 = vrot.slane %v201, %v395
    %v397 = vmul.f32 %v379, %v384
    %v398 = vmul.f32 %v379, %v388
    %v399 = vmul.f32 %v379, %v392
    %v400 = vmul.f32 %v379, %v396
    %v401 = vadd.f32 %v373, %v397
    %v402 = vadd.f32 %v374, %v398
    %v403 = vadd.f32 %v375, %v399
    %v404 = vadd.f32 %v376, %v400
    %405 = vset.pattern.permute.xlu0 5
    %406 = vperm.xlu0 %405, %v242
    %v407 = vpop.permute.xlu0 %406
    %v409 = vlaneseq
    %v410 = vshrl.u32 %v409, 7
    %v411 = vsub.s32 3, %v410
    %v412 = vrot.slane %v198, %v411
    %v413 = vlaneseq
    %v414 = vshrl.u32 %v413, 7
    %v415 = vsub.s32 3, %v414
    %v416 = vrot.slane %v199, %v415
    %v417 = vlaneseq
    %v418 = vshrl.u32 %v417, 7
    %v419 = vsub.s32 3, %v418
    %v420 = vrot.slane %v200, %v419
    %v421 = vlaneseq
    %v422 = vshrl.u32 %v421, 7
    %v423 = vsub.s32 3, %v422
    %v424 = vrot.slane %v201, %v423
    %v425 = vmul.f32 %v407, %v412
    %v426 = vmul.f32 %v407, %v416
    %v427 = vmul.f32 %v407, %v420
    %v428 = vmul.f32 %v407, %v424
    %v429 = vadd.f32 %v401, %v425
    %v430 = vadd.f32 %v402, %v426
    %v431 = vadd.f32 %v403, %v427
    %v432 = vadd.f32 %v404, %v428
    %433 = vset.pattern.permute.xlu0 6
    %434 = vperm.xlu0 %433, %v242
    %v435 = vpop.permute.xlu0 %434
    %v437 = vlaneseq
    %v438 = vshrl.u32 %v437, 7
    %v439 = vsub.s32 4, %v438
    %v440 = vrot.slane %v198, %v439
    %v441 = vlaneseq
    %v442 = vshrl.u32 %v441, 7
    %v443 = vsub.s32 4, %v442
    %v444 = vrot.slane %v199, %v443
    %v445 = vlaneseq
    %v446 = vshrl.u32 %v445, 7
    %v447 = vsub.s32 4, %v446
    %v448 = vrot.slane %v200, %v447
    %v449 = vlaneseq
    %v450 = vshrl.u32 %v449, 7
    %v451 = vsub.s32 4, %v450
    %v452 = vrot.slane %v201, %v451
    %v453 = vmul.f32 %v435, %v440
    %v454 = vmul.f32 %v435, %v444
    %v455 = vmul.f32 %v435, %v448
    %v456 = vmul.f32 %v435, %v452
    %v457 = vadd.f32 %v429, %v453
    %v458 = vadd.f32 %v430, %v454
    %v459 = vadd.f32 %v431, %v455
    %v460 = vadd.f32 %v432, %v456
    %461 = vset.pattern.permute.xlu0 7
    %462 = vperm.xlu0 %461, %v242
    %v463 = vpop.permute.xlu0 %462
    %v465 = vlaneseq
    %v466 = vshrl.u32 %v465, 7
    %v467 = vsub.s32 5, %v466
    %v468 = vrot.slane %v198, %v467
    %v469 = vlaneseq
    %v470 = vshrl.u32 %v469, 7
    %v471 = vsub.s32 5, %v470
    %v472 = vrot.slane %v199, %v471
    %v473 = vlaneseq
    %v474 = vshrl.u32 %v473, 7
    %v475 = vsub.s32 5, %v474
    %v476 = vrot.slane %v200, %v475
    %v477 = vlaneseq
    %v478 = vshrl.u32 %v477, 7
    %v479 = vsub.s32 5, %v478
    %v480 = vrot.slane %v201, %v479
    %v481 = vmul.f32 %v463, %v468
    %v482 = vmul.f32 %v463, %v472
    %v483 = vmul.f32 %v463, %v476
    %v484 = vmul.f32 %v463, %v480
    %v485 = vadd.f32 %v457, %v481
    %v486 = vadd.f32 %v458, %v482
    %v487 = vadd.f32 %v459, %v483
    %v488 = vadd.f32 %v460, %v484
    %489 = vset.pattern.permute.xlu0 8
    %490 = vperm.xlu0 %489, %v242
    %v491 = vpop.permute.xlu0 %490
    %v493 = vlaneseq
    %v494 = vshrl.u32 %v493, 7
    %v495 = vsub.s32 6, %v494
    %v496 = vrot.slane %v198, %v495
    %v497 = vlaneseq
    %v498 = vshrl.u32 %v497, 7
    %v499 = vsub.s32 6, %v498
    %v500 = vrot.slane %v199, %v499
    %v501 = vlaneseq
    %v502 = vshrl.u32 %v501, 7
    %v503 = vsub.s32 6, %v502
    %v504 = vrot.slane %v200, %v503
    %v505 = vlaneseq
    %v506 = vshrl.u32 %v505, 7
    %v507 = vsub.s32 6, %v506
    %v508 = vrot.slane %v201, %v507
    %v509 = vmul.f32 %v491, %v496
    %v510 = vmul.f32 %v491, %v500
    %v511 = vmul.f32 %v491, %v504
    %v512 = vmul.f32 %v491, %v508
    %v513 = vadd.f32 %v485, %v509
    %v514 = vadd.f32 %v486, %v510
    %v515 = vadd.f32 %v487, %v511
    %v516 = vadd.f32 %v488, %v512
    %v517 = vadd.f32 %v513, %v514
    %v518 = vadd.f32 %v517, %v515
    %v519 = vadd.f32 %v518, %v516
    %520 = vadd.xlane.f32.xlu0 %v519
    %v521 = vpop.xlane.xlu0 %520
    %v522 = vrcp.pop 512.0
    %v523 = vmul.f32 %v521, %v522
    %v524 = vmul.f32 %v513, %v513
    %v525 = vmul.f32 %v514, %v514
    %v526 = vmul.f32 %v515, %v515
    %v527 = vmul.f32 %v516, %v516
    %v528 = vadd.f32 %v524, %v525
    %v529 = vadd.f32 %v528, %v526
    %v530 = vadd.f32 %v529, %v527
    %531 = vadd.xlane.f32.xlu0 %v530
    %v532 = vpop.xlane.xlu0 %531
    %v533 = vmul.f32 %v532, %v522
    %v534 = vmul.f32 %v523, %v523
    %v535 = vsub.f32 %v533, %v534
    %v536 = vmax.f32 %v535, 0.0
    %v537 = vsub.f32 %v513, %v523
    %v538 = vsub.f32 %v514, %v523
    %v539 = vsub.f32 %v515, %v523
    %v540 = vsub.f32 %v516, %v523
    %v541 = vadd.f32 %v536, 1e-05
    %v542 = vrsqrt.pop %v541
    %v543 = vmul.f32 %v537, %v542
    %v544 = vmul.f32 %v538, %v542
    %v545 = vmul.f32 %v539, %v542
    %v546 = vmul.f32 %v540, %v542
    %v548 = vlaneseq
    %v549 = vshrl.u32 %v548, 7
    %v550 = vsub.s32 0, %v549
    %v551 = vrot.slane %v188, %v550
    %v552 = vlaneseq
    %v553 = vshrl.u32 %v552, 7
    %v554 = vsub.s32 1, %v553
    %v555 = vrot.slane %v188, %v554
    %v556 = vlaneseq
    %v557 = vshrl.u32 %v556, 7
    %v558 = vsub.s32 2, %v557
    %v559 = vrot.slane %v188, %v558
    %v560 = vlaneseq
    %v561 = vshrl.u32 %v560, 7
    %v562 = vsub.s32 3, %v561
    %v563 = vrot.slane %v188, %v562
    %v568 = vmul.f32 %v543, %v551
    %v569 = vmul.f32 %v544, %v555
    %v570 = vmul.f32 %v545, %v559
    %v571 = vmul.f32 %v546, %v563
    %v573 = vlaneseq
    %v574 = vshrl.u32 %v573, 7
    %v575 = vsub.s32 0, %v574
    %v576 = vrot.slane %v190, %v575
    %v577 = vlaneseq
    %v578 = vshrl.u32 %v577, 7
    %v579 = vsub.s32 1, %v578
    %v580 = vrot.slane %v190, %v579
    %v581 = vlaneseq
    %v582 = vshrl.u32 %v581, 7
    %v583 = vsub.s32 2, %v582
    %v584 = vrot.slane %v190, %v583
    %v585 = vlaneseq
    %v586 = vshrl.u32 %v585, 7
    %v587 = vsub.s32 3, %v586
    %v588 = vrot.slane %v190, %v587
    %v593 = vadd.f32 %v568, %v576
    %v594 = vadd.f32 %v569, %v580
    %v595 = vadd.f32 %v570, %v584
    %v596 = vadd.f32 %v571, %v588
    %v597 = vmax.f32 %v593, 0.0
    %v598 = vmax.f32 %v594, 0.0
    %v599 = vmax.f32 %v595, 0.0
    %v600 = vmax.f32 %v596, 0.0
    %601 = vset.pattern.permute.xlu0 9
    %602 = vperm.xlu0 %601, %v242
    %v603 = vpop.permute.xlu0 %602
    %v605 = vlaneseq
    %v606 = vshrl.u32 %v605, 7
    %v607 = vsub.s32 3, %v606
    %v608 = vrot.slane %v191, %v607
    %v609 = vlaneseq
    %v610 = vshrl.u32 %v609, 7
    %v611 = vsub.s32 3, %v610
    %v612 = vrot.slane %v192, %v611
    %v613 = vlaneseq
    %v614 = vshrl.u32 %v613, 7
    %v615 = vsub.s32 3, %v614
    %v616 = vrot.slane %v193, %v615
    %v617 = vmul.f32 %v603, %v608
    %v618 = vmul.f32 %v603, %v612
    %v619 = vmul.f32 %v603, %v616
    %620 = vset.pattern.permute.xlu0 10
    %621 = vperm.xlu0 %620, %v242
    %v622 = vpop.permute.xlu0 %621
    %v624 = vlaneseq
    %v625 = vshrl.u32 %v624, 7
    %v626 = vsub.s32 4, %v625
    %v627 = vrot.slane %v191, %v626
    %v628 = vlaneseq
    %v629 = vshrl.u32 %v628, 7
    %v630 = vsub.s32 4, %v629
    %v631 = vrot.slane %v192, %v630
    %v632 = vlaneseq
    %v633 = vshrl.u32 %v632, 7
    %v634 = vsub.s32 4, %v633
    %v635 = vrot.slane %v193, %v634
    %v636 = vmul.f32 %v622, %v627
    %v637 = vmul.f32 %v622, %v631
    %v638 = vmul.f32 %v622, %v635
    %v639 = vadd.f32 %v617, %v636
    %v640 = vadd.f32 %v618, %v637
    %v641 = vadd.f32 %v619, %v638
    %642 = vset.pattern.permute.xlu0 11
    %643 = vperm.xlu0 %642, %v242
    %v644 = vpop.permute.xlu0 %643
    %v646 = vlaneseq
    %v647 = vshrl.u32 %v646, 7
    %v648 = vsub.s32 5, %v647
    %v649 = vrot.slane %v191, %v648
    %v650 = vlaneseq
    %v651 = vshrl.u32 %v650, 7
    %v652 = vsub.s32 5, %v651
    %v653 = vrot.slane %v192, %v652
    %v654 = vlaneseq
    %v655 = vshrl.u32 %v654, 7
    %v656 = vsub.s32 5, %v655
    %v657 = vrot.slane %v193, %v656
    %v658 = vmul.f32 %v644, %v649
    %v659 = vmul.f32 %v644, %v653
    %v660 = vmul.f32 %v644, %v657
    %v661 = vadd.f32 %v639, %v658
    %v662 = vadd.f32 %v640, %v659
    %v663 = vadd.f32 %v641, %v660
    %v664 = vand.u32 2147483647, %v661
    %vm665 = vcmp.le.f32.partialorder %v664, 0.7853982
    %vm666 = vcmp.lt.s32.totalorder %v661, 0
    %v667 = vand.u32 %v661, 2139095040
    %v668 = vshrl.u32 %v667, 23
    %v669 = vsub.s32 %v668, 127
    %v670 = vand.u32 2147483647, %v661
    %v671 = vand.u32 %v670, 8388607
    %v672 = vor.u32 %v671, 8388608
    %v673 = vsub.s32 0, %v672
    %v674 = vadd.s32 %v669, 1
    %vm675 = vcmp.gt.s32.totalorder %v674, 0
    %v676 = vsel %vm675, %v674, 0
    %v677 = vshrl.u32 %v676, 5
    %v678 = vand.u32 %v676, 31
    %v679 = vsub.s32 32, %v678
    %v680 = vshrl.u32 683565275, %v679
    %v681 = vshll.u32 683565275, %v678
    %v682 = vshrl.u32 2475754826, %v679
    %v683 = vor.u32 %v681, %v682
    %v684 = vshll.u32 2475754826, %v678
    %v685 = vshrl.u32 2131351028, %v679
    %v686 = vor.u32 %v684, %v685
    %v687 = vshll.u32 2131351028, %v678
    %v688 = vshrl.u32 2102212464, %v679
    %v689 = vor.u32 %v687, %v688
    %v690 = vshll.u32 2102212464, %v678
    %v691 = vshrl.u32 920167782, %v679
    %v692 = vor.u32 %v690, %v691
    %v693 = vshll.u32 920167782, %v678
    %v694 = vshrl.u32 1326507024, %v679
    %v695 = vor.u32 %v693, %v694
    %vm696 = vcmp.lt.s32.totalorder %v677, 1
    %vm697 = vcmp.lt.s32.totalorder %v677, 2
    %vm698 = vcmp.lt.s32.totalorder %v677, 3
    %vm699 = vcmp.lt.s32.totalorder %v677, 4
    %v700 = vsel %vm696, %v680, %v683
    %v701 = vsel %vm699, %v689, 2102212464
    %v702 = vsel %vm698, %v686, %v701
    %v703 = vsel %vm697, %v700, %v702
    %v704 = vsel %vm696, %v683, %v686
    %v705 = vsel %vm699, %v692, 920167782
    %v706 = vsel %vm698, %v689, %v705
    %v707 = vsel %vm697, %v704, %v706
    %v708 = vsel %vm696, %v686, %v689
    %v709 = vsel %vm699, %v695, 1326507024
    %v710 = vsel %vm698, %v692, %v709
    %v711 = vsel %vm697, %v708, %v710
    %v712 = vshll.u32 %v672, 8
    %v713 = vmul.u32.u64.compose %v712, %v711
    %v714 = vextract.low.u32 %v713
    %v715 = vextract.high.u32 %v713
    %v716 = vmul.u32.u64.compose %v712, %v707
    %v717 = vextract.low.u32 %v716
    %v718 = vextract.high.u32 %v716
    %v719 = vmul.u32 %v712, %v703
    %v720 = vadd.s32 %v715, %v717
    %vm721 = vc.u32 %v715, %v717
    %v722 = vadd.s32 %v718, 1
    %v723 = vsel %vm721, %v722, %v718
    %v724 = vadd.s32 %v719, %v723
    %v725 = vadd.s32 %v724, 536870912
    %v726 = vshrl.u32 %v725, 30
    %v727 = vshll.u32 %v726, 30
    %v728 = vsub.s32 %v724, %v727
    %vm729 = vcmp.lt.s32.totalorder %v728, 0
    %v730 = vsub.s32 0, %v728
    %v731 = vsel %vm729, %v730, %v728
    %v732 = vclz %v731
    %v733 = vsub.s32 %v732, 2
    %vm734 = vcmp.gt.s32.totalorder 0, %v733
    %v735 = vsel %vm734, 0, %v733
    %v736 = vsub.s32 32, %v735
    %v737 = vshll.u32 %v728, %v735
    %v738 = vshrl.u32 %v720, %v736
    %v739 = vor.u32 %v737, %v738
    %v740 = vsub.s32 4294967266, %v735
    %v741 = vadd.s32 %v740, 127
    %v742 = vshll.u32 %v741, 23
    %v743 = vor.u32 4788187, %v742
    %v744 = vand.u32 2147483647, %v743
    %v746 = vcvt.s32.f32 %v739
    %v747 = vmul.f32 %v746, %v744
    %v748 = vxor.u32 %v747, 2147483648
    %v749 = vsel %vm666, %v748, %v747
    %v750 = vsub.s32 4, %v726
    %v751 = vsel %vm666, %v750, %v726
    %v752 = vsel %vm665, %v661, %v749
    %v753 = vsel %vm665, 0, %v751
    %v754 = vcosq.f32.pop %v752
    %v755 = vsinq.f32.pop %v752
    %vm756 = vweird.f32 %v661
    %v757 = vadd.s32 %v753, 3
    %v758 = vand.u32 %v757, 3
    %vm759 = vcmp.lt.s32.totalorder %v758, 2
    %vm760 = vcmp.eq.s32.totalorder %v758, 0
    %v761 = vxor.u32 %v755, 2147483648
    %v762 = vsel %vm760, %v754, %v761
    %vm763 = vcmp.eq.s32.totalorder %v758, 2
    %v764 = vxor.u32 %v754, 2147483648
    %v765 = vsel %vm763, %v764, %v755
    %v766 = vsel %vm759, %v762, %v765
    %v767 = vsel %vm756, nan, %v766
    %v768 = vand.u32 2147483647, %v662
    %vm769 = vcmp.le.f32.partialorder %v768, 0.7853982
    %vm770 = vcmp.lt.s32.totalorder %v662, 0
    %v771 = vand.u32 %v662, 2139095040
    %v772 = vshrl.u32 %v771, 23
    %v773 = vsub.s32 %v772, 127
    %v774 = vand.u32 2147483647, %v662
    %v775 = vand.u32 %v774, 8388607
    %v776 = vor.u32 %v775, 8388608
    %v777 = vsub.s32 0, %v776
    %v778 = vadd.s32 %v773, 1
    %vm779 = vcmp.gt.s32.totalorder %v778, 0
    %v780 = vsel %vm779, %v778, 0
    %v781 = vshrl.u32 %v780, 5
    %v782 = vand.u32 %v780, 31
    %v783 = vsub.s32 32, %v782
    %v784 = vshrl.u32 683565275, %v783
    %v785 = vshll.u32 683565275, %v782
    %v786 = vshrl.u32 2475754826, %v783
    %v787 = vor.u32 %v785, %v786
    %v788 = vshll.u32 2475754826, %v782
    %v789 = vshrl.u32 2131351028, %v783
    %v790 = vor.u32 %v788, %v789
    %v791 = vshll.u32 2131351028, %v782
    %v792 = vshrl.u32 2102212464, %v783
    %v793 = vor.u32 %v791, %v792
    %v794 = vshll.u32 2102212464, %v782
    %v795 = vshrl.u32 920167782, %v783
    %v796 = vor.u32 %v794, %v795
    %v797 = vshll.u32 920167782, %v782
    %v798 = vshrl.u32 1326507024, %v783
    %v799 = vor.u32 %v797, %v798
    %vm800 = vcmp.lt.s32.totalorder %v781, 1
    %vm801 = vcmp.lt.s32.totalorder %v781, 2
    %vm802 = vcmp.lt.s32.totalorder %v781, 3
    %vm803 = vcmp.lt.s32.totalorder %v781, 4
    %v804 = vsel %vm800, %v784, %v787
    %v805 = vsel %vm803, %v793, 2102212464
    %v806 = vsel %vm802, %v790, %v805
    %v807 = vsel %vm801, %v804, %v806
    %v808 = vsel %vm800, %v787, %v790
    %v809 = vsel %vm803, %v796, 920167782
    %v810 = vsel %vm802, %v793, %v809
    %v811 = vsel %vm801, %v808, %v810
    %v812 = vsel %vm800, %v790, %v793
    %v813 = vsel %vm803, %v799, 1326507024
    %v814 = vsel %vm802, %v796, %v813
    %v815 = vsel %vm801, %v812, %v814
    %v816 = vshll.u32 %v776, 8
    %v817 = vmul.u32.u64.compose %v816, %v815
    %v818 = vextract.low.u32 %v817
    %v819 = vextract.high.u32 %v817
    %v820 = vmul.u32.u64.compose %v816, %v811
    %v821 = vextract.low.u32 %v820
    %v822 = vextract.high.u32 %v820
    %v823 = vmul.u32 %v816, %v807
    %v824 = vadd.s32 %v819, %v821
    %vm825 = vc.u32 %v819, %v821
    %v826 = vadd.s32 %v822, 1
    %v827 = vsel %vm825, %v826, %v822
    %v828 = vadd.s32 %v823, %v827
    %v829 = vadd.s32 %v828, 536870912
    %v830 = vshrl.u32 %v829, 30
    %v831 = vshll.u32 %v830, 30
    %v832 = vsub.s32 %v828, %v831
    %vm833 = vcmp.lt.s32.totalorder %v832, 0
    %v834 = vsub.s32 0, %v832
    %v835 = vsel %vm833, %v834, %v832
    %v836 = vclz %v835
    %v837 = vsub.s32 %v836, 2
    %vm838 = vcmp.gt.s32.totalorder 0, %v837
    %v839 = vsel %vm838, 0, %v837
    %v840 = vsub.s32 32, %v839
    %v841 = vshll.u32 %v832, %v839
    %v842 = vshrl.u32 %v824, %v840
    %v843 = vor.u32 %v841, %v842
    %v844 = vsub.s32 4294967266, %v839
    %v845 = vadd.s32 %v844, 127
    %v846 = vshll.u32 %v845, 23
    %v847 = vor.u32 4788187, %v846
    %v848 = vand.u32 2147483647, %v847
    %v850 = vcvt.s32.f32 %v843
    %v851 = vmul.f32 %v850, %v848
    %v852 = vxor.u32 %v851, 2147483648
    %v853 = vsel %vm770, %v852, %v851
    %v854 = vsub.s32 4, %v830
    %v855 = vsel %vm770, %v854, %v830
    %v856 = vsel %vm769, %v662, %v853
    %v857 = vsel %vm769, 0, %v855
    %v858 = vcosq.f32.pop %v856
    %v859 = vsinq.f32.pop %v856
    %vm860 = vweird.f32 %v662
    %v861 = vadd.s32 %v857, 3
    %v862 = vand.u32 %v861, 3
    %vm863 = vcmp.lt.s32.totalorder %v862, 2
    %vm864 = vcmp.eq.s32.totalorder %v862, 0
    %v865 = vxor.u32 %v859, 2147483648
    %v866 = vsel %vm864, %v858, %v865
    %vm867 = vcmp.eq.s32.totalorder %v862, 2
    %v868 = vxor.u32 %v858, 2147483648
    %v869 = vsel %vm867, %v868, %v859
    %v870 = vsel %vm863, %v866, %v869
    %v871 = vsel %vm860, nan, %v870
    %v872 = vand.u32 2147483647, %v663
    %vm873 = vcmp.le.f32.partialorder %v872, 0.7853982
    %vm874 = vcmp.lt.s32.totalorder %v663, 0
    %v875 = vand.u32 %v663, 2139095040
    %v876 = vshrl.u32 %v875, 23
    %v877 = vsub.s32 %v876, 127
    %v878 = vand.u32 2147483647, %v663
    %v879 = vand.u32 %v878, 8388607
    %v880 = vor.u32 %v879, 8388608
    %v881 = vsub.s32 0, %v880
    %v882 = vadd.s32 %v877, 1
    %vm883 = vcmp.gt.s32.totalorder %v882, 0
    %v884 = vsel %vm883, %v882, 0
    %v885 = vshrl.u32 %v884, 5
    %v886 = vand.u32 %v884, 31
    %v887 = vsub.s32 32, %v886
    %v888 = vshrl.u32 683565275, %v887
    %v889 = vshll.u32 683565275, %v886
    %v890 = vshrl.u32 2475754826, %v887
    %v891 = vor.u32 %v889, %v890
    %v892 = vshll.u32 2475754826, %v886
    %v893 = vshrl.u32 2131351028, %v887
    %v894 = vor.u32 %v892, %v893
    %v895 = vshll.u32 2131351028, %v886
    %v896 = vshrl.u32 2102212464, %v887
    %v897 = vor.u32 %v895, %v896
    %v898 = vshll.u32 2102212464, %v886
    %v899 = vshrl.u32 920167782, %v887
    %v900 = vor.u32 %v898, %v899
    %v901 = vshll.u32 920167782, %v886
    %v902 = vshrl.u32 1326507024, %v887
    %v903 = vor.u32 %v901, %v902
    %vm904 = vcmp.lt.s32.totalorder %v885, 1
    %vm905 = vcmp.lt.s32.totalorder %v885, 2
    %vm906 = vcmp.lt.s32.totalorder %v885, 3
    %vm907 = vcmp.lt.s32.totalorder %v885, 4
    %v908 = vsel %vm904, %v888, %v891
    %v909 = vsel %vm907, %v897, 2102212464
    %v910 = vsel %vm906, %v894, %v909
    %v911 = vsel %vm905, %v908, %v910
    %v912 = vsel %vm904, %v891, %v894
    %v913 = vsel %vm907, %v900, 920167782
    %v914 = vsel %vm906, %v897, %v913
    %v915 = vsel %vm905, %v912, %v914
    %v916 = vsel %vm904, %v894, %v897
    %v917 = vsel %vm907, %v903, 1326507024
    %v918 = vsel %vm906, %v900, %v917
    %v919 = vsel %vm905, %v916, %v918
    %v920 = vshll.u32 %v880, 8
    %v921 = vmul.u32.u64.compose %v920, %v919
    %v922 = vextract.low.u32 %v921
    %v923 = vextract.high.u32 %v921
    %v924 = vmul.u32.u64.compose %v920, %v915
    %v925 = vextract.low.u32 %v924
    %v926 = vextract.high.u32 %v924
    %v927 = vmul.u32 %v920, %v911
    %v928 = vadd.s32 %v923, %v925
    %vm929 = vc.u32 %v923, %v925
    %v930 = vadd.s32 %v926, 1
    %v931 = vsel %vm929, %v930, %v926
    %v932 = vadd.s32 %v927, %v931
    %v933 = vadd.s32 %v932, 536870912
    %v934 = vshrl.u32 %v933, 30
    %v935 = vshll.u32 %v934, 30
    %v936 = vsub.s32 %v932, %v935
    %vm937 = vcmp.lt.s32.totalorder %v936, 0
    %v938 = vsub.s32 0, %v936
    %v939 = vsel %vm937, %v938, %v936
    %v940 = vclz %v939
    %v941 = vsub.s32 %v940, 2
    %vm942 = vcmp.gt.s32.totalorder 0, %v941
    %v943 = vsel %vm942, 0, %v941
    %v944 = vsub.s32 32, %v943
    %v945 = vshll.u32 %v936, %v943
    %v946 = vshrl.u32 %v928, %v944
    %v947 = vor.u32 %v945, %v946
    %v948 = vsub.s32 4294967266, %v943
    %v949 = vadd.s32 %v948, 127
    %v950 = vshll.u32 %v949, 23
    %v951 = vor.u32 4788187, %v950
    %v952 = vand.u32 2147483647, %v951
    %v954 = vcvt.s32.f32 %v947
    %v955 = vmul.f32 %v954, %v952
    %v956 = vxor.u32 %v955, 2147483648
    %v957 = vsel %vm874, %v956, %v955
    %v958 = vsub.s32 4, %v934
    %v959 = vsel %vm874, %v958, %v934
    %v960 = vsel %vm873, %v663, %v957
    %v961 = vsel %vm873, 0, %v959
    %v962 = vcosq.f32.pop %v960
    %v963 = vsinq.f32.pop %v960
    %vm964 = vweird.f32 %v663
    %v965 = vadd.s32 %v961, 3
    %v966 = vand.u32 %v965, 3
    %vm967 = vcmp.lt.s32.totalorder %v966, 2
    %vm968 = vcmp.eq.s32.totalorder %v966, 0
    %v969 = vxor.u32 %v963, 2147483648
    %v970 = vsel %vm968, %v962, %v969
    %vm971 = vcmp.eq.s32.totalorder %v966, 2
    %v972 = vxor.u32 %v962, 2147483648
    %v973 = vsel %vm971, %v972, %v963
    %v974 = vsel %vm967, %v970, %v973
    %v975 = vsel %vm964, nan, %v974
    %v976 = vpack.c.bf16 %v767, %v767
    %v977 = vpack.c.bf16 %v871, %v871
    %v978 = vpack.c.bf16 %v975, %v975
    %v979 = vand.u32 2147483647, %v661
    %vm980 = vcmp.le.f32.partialorder %v979, 0.7853982
    %vm981 = vcmp.lt.s32.totalorder %v661, 0
    %v982 = vand.u32 %v661, 2139095040
    %v983 = vshrl.u32 %v982, 23
    %v984 = vsub.s32 %v983, 127
    %v985 = vand.u32 2147483647, %v661
    %v986 = vand.u32 %v985, 8388607
    %v987 = vor.u32 %v986, 8388608
    %v988 = vsub.s32 0, %v987
    %v989 = vadd.s32 %v984, 1
    %vm990 = vcmp.gt.s32.totalorder %v989, 0
    %v991 = vsel %vm990, %v989, 0
    %v992 = vshrl.u32 %v991, 5
    %v993 = vand.u32 %v991, 31
    %v994 = vsub.s32 32, %v993
    %v995 = vshrl.u32 683565275, %v994
    %v996 = vshll.u32 683565275, %v993
    %v997 = vshrl.u32 2475754826, %v994
    %v998 = vor.u32 %v996, %v997
    %v999 = vshll.u32 2475754826, %v993
    %v1000 = vshrl.u32 2131351028, %v994
    %v1001 = vor.u32 %v999, %v1000
    %v1002 = vshll.u32 2131351028, %v993
    %v1003 = vshrl.u32 2102212464, %v994
    %v1004 = vor.u32 %v1002, %v1003
    %v1005 = vshll.u32 2102212464, %v993
    %v1006 = vshrl.u32 920167782, %v994
    %v1007 = vor.u32 %v1005, %v1006
    %v1008 = vshll.u32 920167782, %v993
    %v1009 = vshrl.u32 1326507024, %v994
    %v1010 = vor.u32 %v1008, %v1009
    %vm1011 = vcmp.lt.s32.totalorder %v992, 1
    %vm1012 = vcmp.lt.s32.totalorder %v992, 2
    %vm1013 = vcmp.lt.s32.totalorder %v992, 3
    %vm1014 = vcmp.lt.s32.totalorder %v992, 4
    %v1015 = vsel %vm1011, %v995, %v998
    %v1016 = vsel %vm1014, %v1004, 2102212464
    %v1017 = vsel %vm1013, %v1001, %v1016
    %v1018 = vsel %vm1012, %v1015, %v1017
    %v1019 = vsel %vm1011, %v998, %v1001
    %v1020 = vsel %vm1014, %v1007, 920167782
    %v1021 = vsel %vm1013, %v1004, %v1020
    %v1022 = vsel %vm1012, %v1019, %v1021
    %v1023 = vsel %vm1011, %v1001, %v1004
    %v1024 = vsel %vm1014, %v1010, 1326507024
    %v1025 = vsel %vm1013, %v1007, %v1024
    %v1026 = vsel %vm1012, %v1023, %v1025
    %v1027 = vshll.u32 %v987, 8
    %v1028 = vmul.u32.u64.compose %v1027, %v1026
    %v1029 = vextract.low.u32 %v1028
    %v1030 = vextract.high.u32 %v1028
    %v1031 = vmul.u32.u64.compose %v1027, %v1022
    %v1032 = vextract.low.u32 %v1031
    %v1033 = vextract.high.u32 %v1031
    %v1034 = vmul.u32 %v1027, %v1018
    %v1035 = vadd.s32 %v1030, %v1032
    %vm1036 = vc.u32 %v1030, %v1032
    %v1037 = vadd.s32 %v1033, 1
    %v1038 = vsel %vm1036, %v1037, %v1033
    %v1039 = vadd.s32 %v1034, %v1038
    %v1040 = vadd.s32 %v1039, 536870912
    %v1041 = vshrl.u32 %v1040, 30
    %v1042 = vshll.u32 %v1041, 30
    %v1043 = vsub.s32 %v1039, %v1042
    %vm1044 = vcmp.lt.s32.totalorder %v1043, 0
    %v1045 = vsub.s32 0, %v1043
    %v1046 = vsel %vm1044, %v1045, %v1043
    %v1047 = vclz %v1046
    %v1048 = vsub.s32 %v1047, 2
    %vm1049 = vcmp.gt.s32.totalorder 0, %v1048
    %v1050 = vsel %vm1049, 0, %v1048
    %v1051 = vsub.s32 32, %v1050
    %v1052 = vshll.u32 %v1043, %v1050
    %v1053 = vshrl.u32 %v1035, %v1051
    %v1054 = vor.u32 %v1052, %v1053
    %v1055 = vsub.s32 4294967266, %v1050
    %v1056 = vadd.s32 %v1055, 127
    %v1057 = vshll.u32 %v1056, 23
    %v1058 = vor.u32 4788187, %v1057
    %v1059 = vand.u32 2147483647, %v1058
    %v1061 = vcvt.s32.f32 %v1054
    %v1062 = vmul.f32 %v1061, %v1059
    %v1063 = vxor.u32 %v1062, 2147483648
    %v1064 = vsel %vm981, %v1063, %v1062
    %v1065 = vsub.s32 4, %v1041
    %v1066 = vsel %vm981, %v1065, %v1041
    %v1067 = vsel %vm980, %v661, %v1064
    %v1068 = vsel %vm980, 0, %v1066
    %v1069 = vcosq.f32.pop %v1067
    %v1070 = vsinq.f32.pop %v1067
    %vm1071 = vweird.f32 %v661
    %v1072 = vand.u32 %v1068, 3
    %vm1073 = vcmp.lt.s32.totalorder %v1072, 2
    %vm1074 = vcmp.eq.s32.totalorder %v1072, 0
    %v1075 = vxor.u32 %v1070, 2147483648
    %v1076 = vsel %vm1074, %v1069, %v1075
    %vm1077 = vcmp.eq.s32.totalorder %v1072, 2
    %v1078 = vxor.u32 %v1069, 2147483648
    %v1079 = vsel %vm1077, %v1078, %v1070
    %v1080 = vsel %vm1073, %v1076, %v1079
    %v1081 = vsel %vm1071, nan, %v1080
    %v1082 = vand.u32 2147483647, %v662
    %vm1083 = vcmp.le.f32.partialorder %v1082, 0.7853982
    %vm1084 = vcmp.lt.s32.totalorder %v662, 0
    %v1085 = vand.u32 %v662, 2139095040
    %v1086 = vshrl.u32 %v1085, 23
    %v1087 = vsub.s32 %v1086, 127
    %v1088 = vand.u32 2147483647, %v662
    %v1089 = vand.u32 %v1088, 8388607
    %v1090 = vor.u32 %v1089, 8388608
    %v1091 = vsub.s32 0, %v1090
    %v1092 = vadd.s32 %v1087, 1
    %vm1093 = vcmp.gt.s32.totalorder %v1092, 0
    %v1094 = vsel %vm1093, %v1092, 0
    %v1095 = vshrl.u32 %v1094, 5
    %v1096 = vand.u32 %v1094, 31
    %v1097 = vsub.s32 32, %v1096
    %v1098 = vshrl.u32 683565275, %v1097
    %v1099 = vshll.u32 683565275, %v1096
    %v1100 = vshrl.u32 2475754826, %v1097
    %v1101 = vor.u32 %v1099, %v1100
    %v1102 = vshll.u32 2475754826, %v1096
    %v1103 = vshrl.u32 2131351028, %v1097
    %v1104 = vor.u32 %v1102, %v1103
    %v1105 = vshll.u32 2131351028, %v1096
    %v1106 = vshrl.u32 2102212464, %v1097
    %v1107 = vor.u32 %v1105, %v1106
    %v1108 = vshll.u32 2102212464, %v1096
    %v1109 = vshrl.u32 920167782, %v1097
    %v1110 = vor.u32 %v1108, %v1109
    %v1111 = vshll.u32 920167782, %v1096
    %v1112 = vshrl.u32 1326507024, %v1097
    %v1113 = vor.u32 %v1111, %v1112
    %vm1114 = vcmp.lt.s32.totalorder %v1095, 1
    %vm1115 = vcmp.lt.s32.totalorder %v1095, 2
    %vm1116 = vcmp.lt.s32.totalorder %v1095, 3
    %vm1117 = vcmp.lt.s32.totalorder %v1095, 4
    %v1118 = vsel %vm1114, %v1098, %v1101
    %v1119 = vsel %vm1117, %v1107, 2102212464
    %v1120 = vsel %vm1116, %v1104, %v1119
    %v1121 = vsel %vm1115, %v1118, %v1120
    %v1122 = vsel %vm1114, %v1101, %v1104
    %v1123 = vsel %vm1117, %v1110, 920167782
    %v1124 = vsel %vm1116, %v1107, %v1123
    %v1125 = vsel %vm1115, %v1122, %v1124
    %v1126 = vsel %vm1114, %v1104, %v1107
    %v1127 = vsel %vm1117, %v1113, 1326507024
    %v1128 = vsel %vm1116, %v1110, %v1127
    %v1129 = vsel %vm1115, %v1126, %v1128
    %v1130 = vshll.u32 %v1090, 8
    %v1131 = vmul.u32.u64.compose %v1130, %v1129
    %v1132 = vextract.low.u32 %v1131
    %v1133 = vextract.high.u32 %v1131
    %v1134 = vmul.u32.u64.compose %v1130, %v1125
    %v1135 = vextract.low.u32 %v1134
    %v1136 = vextract.high.u32 %v1134
    %v1137 = vmul.u32 %v1130, %v1121
    %v1138 = vadd.s32 %v1133, %v1135
    %vm1139 = vc.u32 %v1133, %v1135
    %v1140 = vadd.s32 %v1136, 1
    %v1141 = vsel %vm1139, %v1140, %v1136
    %v1142 = vadd.s32 %v1137, %v1141
    %v1143 = vadd.s32 %v1142, 536870912
    %v1144 = vshrl.u32 %v1143, 30
    %v1145 = vshll.u32 %v1144, 30
    %v1146 = vsub.s32 %v1142, %v1145
    %vm1147 = vcmp.lt.s32.totalorder %v1146, 0
    %v1148 = vsub.s32 0, %v1146
    %v1149 = vsel %vm1147, %v1148, %v1146
    %v1150 = vclz %v1149
    %v1151 = vsub.s32 %v1150, 2
    %vm1152 = vcmp.gt.s32.totalorder 0, %v1151
    %v1153 = vsel %vm1152, 0, %v1151
    %v1154 = vsub.s32 32, %v1153
    %v1155 = vshll.u32 %v1146, %v1153
    %v1156 = vshrl.u32 %v1138, %v1154
    %v1157 = vor.u32 %v1155, %v1156
    %v1158 = vsub.s32 4294967266, %v1153
    %v1159 = vadd.s32 %v1158, 127
    %v1160 = vshll.u32 %v1159, 23
    %v1161 = vor.u32 4788187, %v1160
    %v1162 = vand.u32 2147483647, %v1161
    %v1164 = vcvt.s32.f32 %v1157
    %v1165 = vmul.f32 %v1164, %v1162
    %v1166 = vxor.u32 %v1165, 2147483648
    %v1167 = vsel %vm1084, %v1166, %v1165
    %v1168 = vsub.s32 4, %v1144
    %v1169 = vsel %vm1084, %v1168, %v1144
    %v1170 = vsel %vm1083, %v662, %v1167
    %v1171 = vsel %vm1083, 0, %v1169
    %v1172 = vcosq.f32.pop %v1170
    %v1173 = vsinq.f32.pop %v1170
    %vm1174 = vweird.f32 %v662
    %v1175 = vand.u32 %v1171, 3
    %vm1176 = vcmp.lt.s32.totalorder %v1175, 2
    %vm1177 = vcmp.eq.s32.totalorder %v1175, 0
    %v1178 = vxor.u32 %v1173, 2147483648
    %v1179 = vsel %vm1177, %v1172, %v1178
    %vm1180 = vcmp.eq.s32.totalorder %v1175, 2
    %v1181 = vxor.u32 %v1172, 2147483648
    %v1182 = vsel %vm1180, %v1181, %v1173
    %v1183 = vsel %vm1176, %v1179, %v1182
    %v1184 = vsel %vm1174, nan, %v1183
    %v1185 = vand.u32 2147483647, %v663
    %vm1186 = vcmp.le.f32.partialorder %v1185, 0.7853982
    %vm1187 = vcmp.lt.s32.totalorder %v663, 0
    %v1188 = vand.u32 %v663, 2139095040
    %v1189 = vshrl.u32 %v1188, 23
    %v1190 = vsub.s32 %v1189, 127
    %v1191 = vand.u32 2147483647, %v663
    %v1192 = vand.u32 %v1191, 8388607
    %v1193 = vor.u32 %v1192, 8388608
    %v1194 = vsub.s32 0, %v1193
    %v1195 = vadd.s32 %v1190, 1
    %vm1196 = vcmp.gt.s32.totalorder %v1195, 0
    %v1197 = vsel %vm1196, %v1195, 0
    %v1198 = vshrl.u32 %v1197, 5
    %v1199 = vand.u32 %v1197, 31
    %v1200 = vsub.s32 32, %v1199
    %v1201 = vshrl.u32 683565275, %v1200
    %v1202 = vshll.u32 683565275, %v1199
    %v1203 = vshrl.u32 2475754826, %v1200
    %v1204 = vor.u32 %v1202, %v1203
    %v1205 = vshll.u32 2475754826, %v1199
    %v1206 = vshrl.u32 2131351028, %v1200
    %v1207 = vor.u32 %v1205, %v1206
    %v1208 = vshll.u32 2131351028, %v1199
    %v1209 = vshrl.u32 2102212464, %v1200
    %v1210 = vor.u32 %v1208, %v1209
    %v1211 = vshll.u32 2102212464, %v1199
    %v1212 = vshrl.u32 920167782, %v1200
    %v1213 = vor.u32 %v1211, %v1212
    %v1214 = vshll.u32 920167782, %v1199
    %v1215 = vshrl.u32 1326507024, %v1200
    %v1216 = vor.u32 %v1214, %v1215
    %vm1217 = vcmp.lt.s32.totalorder %v1198, 1
    %vm1218 = vcmp.lt.s32.totalorder %v1198, 2
    %vm1219 = vcmp.lt.s32.totalorder %v1198, 3
    %vm1220 = vcmp.lt.s32.totalorder %v1198, 4
    %v1221 = vsel %vm1217, %v1201, %v1204
    %v1222 = vsel %vm1220, %v1210, 2102212464
    %v1223 = vsel %vm1219, %v1207, %v1222
    %v1224 = vsel %vm1218, %v1221, %v1223
    %v1225 = vsel %vm1217, %v1204, %v1207
    %v1226 = vsel %vm1220, %v1213, 920167782
    %v1227 = vsel %vm1219, %v1210, %v1226
    %v1228 = vsel %vm1218, %v1225, %v1227
    %v1229 = vsel %vm1217, %v1207, %v1210
    %v1230 = vsel %vm1220, %v1216, 1326507024
    %v1231 = vsel %vm1219, %v1213, %v1230
    %v1232 = vsel %vm1218, %v1229, %v1231
    %v1233 = vshll.u32 %v1193, 8
    %v1234 = vmul.u32.u64.compose %v1233, %v1232
    %v1235 = vextract.low.u32 %v1234
    %v1236 = vextract.high.u32 %v1234
    %v1237 = vmul.u32.u64.compose %v1233, %v1228
    %v1238 = vextract.low.u32 %v1237
    %v1239 = vextract.high.u32 %v1237
    %v1240 = vmul.u32 %v1233, %v1224
    %v1241 = vadd.s32 %v1236, %v1238
    %vm1242 = vc.u32 %v1236, %v1238
    %v1243 = vadd.s32 %v1239, 1
    %v1244 = vsel %vm1242, %v1243, %v1239
    %v1245 = vadd.s32 %v1240, %v1244
    %v1246 = vadd.s32 %v1245, 536870912
    %v1247 = vshrl.u32 %v1246, 30
    %v1248 = vshll.u32 %v1247, 30
    %v1249 = vsub.s32 %v1245, %v1248
    %vm1250 = vcmp.lt.s32.totalorder %v1249, 0
    %v1251 = vsub.s32 0, %v1249
    %v1252 = vsel %vm1250, %v1251, %v1249
    %v1253 = vclz %v1252
    %v1254 = vsub.s32 %v1253, 2
    %vm1255 = vcmp.gt.s32.totalorder 0, %v1254
    %v1256 = vsel %vm1255, 0, %v1254
    %v1257 = vsub.s32 32, %v1256
    %v1258 = vshll.u32 %v1249, %v1256
    %v1259 = vshrl.u32 %v1241, %v1257
    %v1260 = vor.u32 %v1258, %v1259
    %v1261 = vsub.s32 4294967266, %v1256
    %v1262 = vadd.s32 %v1261, 127
    %v1263 = vshll.u32 %v1262, 23
    %v1264 = vor.u32 4788187, %v1263
    %v1265 = vand.u32 2147483647, %v1264
    %v1267 = vcvt.s32.f32 %v1260
    %v1268 = vmul.f32 %v1267, %v1265
    %v1269 = vxor.u32 %v1268, 2147483648
    %v1270 = vsel %vm1187, %v1269, %v1268
    %v1271 = vsub.s32 4, %v1247
    %v1272 = vsel %vm1187, %v1271, %v1247
    %v1273 = vsel %vm1186, %v663, %v1270
    %v1274 = vsel %vm1186, 0, %v1272
    %v1275 = vcosq.f32.pop %v1273
    %v1276 = vsinq.f32.pop %v1273
    %vm1277 = vweird.f32 %v663
    %v1278 = vand.u32 %v1274, 3
    %vm1279 = vcmp.lt.s32.totalorder %v1278, 2
    %vm1280 = vcmp.eq.s32.totalorder %v1278, 0
    %v1281 = vxor.u32 %v1276, 2147483648
    %v1282 = vsel %vm1280, %v1275, %v1281
    %vm1283 = vcmp.eq.s32.totalorder %v1278, 2
    %v1284 = vxor.u32 %v1275, 2147483648
    %v1285 = vsel %vm1283, %v1284, %v1276
    %v1286 = vsel %vm1279, %v1282, %v1285
    %v1287 = vsel %vm1277, nan, %v1286
    %v1288 = vpack.c.bf16 %v1081, %v1081
    %v1289 = vpack.c.bf16 %v1184, %v1184
    %v1290 = vpack.c.bf16 %v1287, %v1287
    %s1291 = smul.u32 4, 160
    %s1292 = smul.u32 %s1291, 6
    %s1293 = sshll.u32 %s1292, 4
    %1294 = dma.done [#allocation3], %s1293
    %v1295 = vpack.c.bf16 %v597, %v597
    %v1296 = vpack.c.bf16 %v598, %v598
    %v1297 = vpack.c.bf16 %v599, %v599
    %v1298 = vpack.c.bf16 %v600, %v600
    %v1299 = vld [vmem:[#allocation2] sm:$0xff]
    %v1300 = vld [vmem:[#allocation2 + $0x8] sm:$0xff]
    %v1301 = vld [vmem:[#allocation2 + $0x10] sm:$0xff]
    %v1302 = vld [vmem:[#allocation2 + $0x18] sm:$0xff]
    %v1303 = vld [vmem:[#allocation2 + $0x20] sm:$0xff]
    %v1304 = vld [vmem:[#allocation2 + $0x28] sm:$0xff]
    %v1305 = vld [vmem:[#allocation2 + $0x30] sm:$0xff]
    %v1306 = vld [vmem:[#allocation2 + $0x38] sm:$0xff]
    %v1307 = vld [vmem:[#allocation2 + $0x40] sm:$0xff]
    %v1308 = vld [vmem:[#allocation2 + $0x48] sm:$0xff]
    %v1309 = vld [vmem:[#allocation2 + $0x50] sm:$0xff]
    %v1310 = vld [vmem:[#allocation2 + $0x58] sm:$0xff]
    %v1311 = vld [vmem:[#allocation2 + $0x60] sm:$0xff]
    %v1312 = vld [vmem:[#allocation2 + $0x68] sm:$0xff]
    %v1313 = vld [vmem:[#allocation2 + $0x70] sm:$0xff]
    %v1314 = vld [vmem:[#allocation2 + $0x78] sm:$0xff]
    %v1315 = vld [vmem:[#allocation2 + $0x80] sm:$0xff]
    %v1316 = vld [vmem:[#allocation2 + $0x88] sm:$0xff]
    %v1317 = vld [vmem:[#allocation2 + $0x90] sm:$0xff]
    %v1318 = vld [vmem:[#allocation2 + $0x98] sm:$0xff]
    %v1319 = vld [vmem:[#allocation2 + $0xa0] sm:$0xff]
    %v1320 = vld [vmem:[#allocation2 + $0xa8] sm:$0xff]
    %v1321 = vld [vmem:[#allocation2 + $0xb0] sm:$0xff]
    %v1322 = vld [vmem:[#allocation2 + $0xb8] sm:$0xff]
    %v1323 = vld [vmem:[#allocation2 + $0xc0] sm:$0xff]
    %v1324 = vld [vmem:[#allocation2 + $0xc8] sm:$0xff]
    %v1325 = vld [vmem:[#allocation2 + $0xd0] sm:$0xff]
    %v1326 = vld [vmem:[#allocation2 + $0xd8] sm:$0xff]
    %v1327 = vld [vmem:[#allocation2 + $0xe0] sm:$0xff]
    %v1328 = vld [vmem:[#allocation2 + $0xe8] sm:$0xff]
    %v1329 = vld [vmem:[#allocation2 + $0xf0] sm:$0xff]
    %v1330 = vld [vmem:[#allocation2 + $0xf8] sm:$0xff]
    %v1331 = vld [vmem:[#allocation2 + $0x100] sm:$0xff]
    %v1332 = vld [vmem:[#allocation2 + $0x108] sm:$0xff]
    %v1333 = vld [vmem:[#allocation2 + $0x110] sm:$0xff]
    %v1334 = vld [vmem:[#allocation2 + $0x118] sm:$0xff]
    %v1335 = vld [vmem:[#allocation2 + $0x120] sm:$0xff]
    %v1336 = vld [vmem:[#allocation2 + $0x128] sm:$0xff]
    %v1337 = vld [vmem:[#allocation2 + $0x130] sm:$0xff]
    %v1338 = vld [vmem:[#allocation2 + $0x138] sm:$0xff]
    %v1339 = vld [vmem:[#allocation2 + $0x140] sm:$0xff]
    %v1340 = vld [vmem:[#allocation2 + $0x148] sm:$0xff]
    %v1341 = vld [vmem:[#allocation2 + $0x150] sm:$0xff]
    %v1342 = vld [vmem:[#allocation2 + $0x158] sm:$0xff]
    %v1343 = vld [vmem:[#allocation2 + $0x160] sm:$0xff]
    %v1344 = vld [vmem:[#allocation2 + $0x168] sm:$0xff]
    %v1345 = vld [vmem:[#allocation2 + $0x170] sm:$0xff]
    %v1346 = vld [vmem:[#allocation2 + $0x178] sm:$0xff]
    %v1347 = vld [vmem:[#allocation2 + $0x180] sm:$0xff]
    %v1348 = vld [vmem:[#allocation2 + $0x188] sm:$0xff]
    %v1349 = vld [vmem:[#allocation2 + $0x190] sm:$0xff]
    %v1350 = vld [vmem:[#allocation2 + $0x198] sm:$0xff]
    %v1351 = vld [vmem:[#allocation2 + $0x1a0] sm:$0xff]
    %v1352 = vld [vmem:[#allocation2 + $0x1a8] sm:$0xff]
    %v1353 = vld [vmem:[#allocation2 + $0x1b0] sm:$0xff]
    %v1354 = vld [vmem:[#allocation2 + $0x1b8] sm:$0xff]
    %v1355 = vld [vmem:[#allocation2 + $0x1c0] sm:$0xff]
    %v1356 = vld [vmem:[#allocation2 + $0x1c8] sm:$0xff]
    %v1357 = vld [vmem:[#allocation2 + $0x1d0] sm:$0xff]
    %v1358 = vld [vmem:[#allocation2 + $0x1d8] sm:$0xff]
    %v1359 = vld [vmem:[#allocation2 + $0x1e0] sm:$0xff]
    %v1360 = vld [vmem:[#allocation2 + $0x1e8] sm:$0xff]
    %v1361 = vld [vmem:[#allocation2 + $0x1f0] sm:$0xff]
    %v1362 = vld [vmem:[#allocation2 + $0x1f8] sm:$0xff]
    %v1363 = vld [vmem:[#allocation2 + $0x200] sm:$0xff]
    %v1364 = vld [vmem:[#allocation2 + $0x208] sm:$0xff]
    %v1365 = vld [vmem:[#allocation2 + $0x210] sm:$0xff]
    %v1366 = vld [vmem:[#allocation2 + $0x218] sm:$0xff]
    %v1367 = vld [vmem:[#allocation2 + $0x220] sm:$0xff]
    %v1368 = vld [vmem:[#allocation2 + $0x228] sm:$0xff]
    %v1369 = vld [vmem:[#allocation2 + $0x230] sm:$0xff]
    %v1370 = vld [vmem:[#allocation2 + $0x238] sm:$0xff]
    %v1371 = vld [vmem:[#allocation2 + $0x240] sm:$0xff]
    %v1372 = vld [vmem:[#allocation2 + $0x248] sm:$0xff]
    %v1373 = vld [vmem:[#allocation2 + $0x250] sm:$0xff]
    %v1374 = vld [vmem:[#allocation2 + $0x258] sm:$0xff]
    %v1375 = vld [vmem:[#allocation2 + $0x260] sm:$0xff]
    %v1376 = vld [vmem:[#allocation2 + $0x268] sm:$0xff]
    %v1377 = vld [vmem:[#allocation2 + $0x270] sm:$0xff]
    %v1378 = vld [vmem:[#allocation2 + $0x278] sm:$0xff]
    %v1379 = vld [vmem:[#allocation2 + $0x280] sm:$0xff]
    %v1380 = vld [vmem:[#allocation2 + $0x288] sm:$0xff]
    %v1381 = vld [vmem:[#allocation2 + $0x290] sm:$0xff]
    %v1382 = vld [vmem:[#allocation2 + $0x298] sm:$0xff]
    %v1383 = vld [vmem:[#allocation2 + $0x2a0] sm:$0xff]
    %v1384 = vld [vmem:[#allocation2 + $0x2a8] sm:$0xff]
    %v1385 = vld [vmem:[#allocation2 + $0x2b0] sm:$0xff]
    %v1386 = vld [vmem:[#allocation2 + $0x2b8] sm:$0xff]
    %v1387 = vld [vmem:[#allocation2 + $0x2c0] sm:$0xff]
    %v1388 = vld [vmem:[#allocation2 + $0x2c8] sm:$0xff]
    %v1389 = vld [vmem:[#allocation2 + $0x2d0] sm:$0xff]
    %v1390 = vld [vmem:[#allocation2 + $0x2d8] sm:$0xff]
    %v1391 = vld [vmem:[#allocation2 + $0x2e0] sm:$0xff]
    %v1392 = vld [vmem:[#allocation2 + $0x2e8] sm:$0xff]
    %v1393 = vld [vmem:[#allocation2 + $0x2f0] sm:$0xff]
    %v1394 = vld [vmem:[#allocation2 + $0x2f8] sm:$0xff]
    %v1395 = vld [vmem:[#allocation2 + $0x300] sm:$0xff]
    %v1396 = vld [vmem:[#allocation2 + $0x308] sm:$0xff]
    %v1397 = vld [vmem:[#allocation2 + $0x310] sm:$0xff]
    %v1398 = vld [vmem:[#allocation2 + $0x318] sm:$0xff]
    %v1399 = vld [vmem:[#allocation2 + $0x320] sm:$0xff]
    %v1400 = vld [vmem:[#allocation2 + $0x328] sm:$0xff]
    %v1401 = vld [vmem:[#allocation2 + $0x330] sm:$0xff]
    %v1402 = vld [vmem:[#allocation2 + $0x338] sm:$0xff]
    %v1403 = vld [vmem:[#allocation2 + $0x340] sm:$0xff]
    %v1404 = vld [vmem:[#allocation2 + $0x348] sm:$0xff]
    %v1405 = vld [vmem:[#allocation2 + $0x350] sm:$0xff]
    %v1406 = vld [vmem:[#allocation2 + $0x358] sm:$0xff]
    %v1407 = vld [vmem:[#allocation2 + $0x360] sm:$0xff]
    %v1408 = vld [vmem:[#allocation2 + $0x368] sm:$0xff]
    %v1409 = vld [vmem:[#allocation2 + $0x370] sm:$0xff]
    %v1410 = vld [vmem:[#allocation2 + $0x378] sm:$0xff]
    %v1411 = vld [vmem:[#allocation2 + $0x380] sm:$0xff]
    %v1412 = vld [vmem:[#allocation2 + $0x388] sm:$0xff]
    %v1413 = vld [vmem:[#allocation2 + $0x390] sm:$0xff]
    %v1414 = vld [vmem:[#allocation2 + $0x398] sm:$0xff]
    %v1415 = vld [vmem:[#allocation2 + $0x3a0] sm:$0xff]
    %v1416 = vld [vmem:[#allocation2 + $0x3a8] sm:$0xff]
    %v1417 = vld [vmem:[#allocation2 + $0x3b0] sm:$0xff]
    %v1418 = vld [vmem:[#allocation2 + $0x3b8] sm:$0xff]
    %v1419 = vld [vmem:[#allocation2 + $0x3c0] sm:$0xff]
    %v1420 = vld [vmem:[#allocation2 + $0x3c8] sm:$0xff]
    %v1421 = vld [vmem:[#allocation2 + $0x3d0] sm:$0xff]
    %v1422 = vld [vmem:[#allocation2 + $0x3d8] sm:$0xff]
    %v1423 = vld [vmem:[#allocation2 + $0x3e0] sm:$0xff]
    %v1424 = vld [vmem:[#allocation2 + $0x3e8] sm:$0xff]
    %v1425 = vld [vmem:[#allocation2 + $0x3f0] sm:$0xff]
    %v1426 = vld [vmem:[#allocation2 + $0x3f8] sm:$0xff]
    %v1427 = vld [vmem:[#allocation2 + $0x400] sm:$0xff]
    %v1428 = vld [vmem:[#allocation2 + $0x408] sm:$0xff]
    %v1429 = vld [vmem:[#allocation2 + $0x410] sm:$0xff]
    %v1430 = vld [vmem:[#allocation2 + $0x418] sm:$0xff]
    %v1431 = vld [vmem:[#allocation2 + $0x420] sm:$0xff]
    %v1432 = vld [vmem:[#allocation2 + $0x428] sm:$0xff]
    %v1433 = vld [vmem:[#allocation2 + $0x430] sm:$0xff]
    %v1434 = vld [vmem:[#allocation2 + $0x438] sm:$0xff]
    %v1435 = vld [vmem:[#allocation2 + $0x440] sm:$0xff]
    %v1436 = vld [vmem:[#allocation2 + $0x448] sm:$0xff]
    %v1437 = vld [vmem:[#allocation2 + $0x450] sm:$0xff]
    %v1438 = vld [vmem:[#allocation2 + $0x458] sm:$0xff]
    %v1439 = vld [vmem:[#allocation2 + $0x460] sm:$0xff]
    %v1440 = vld [vmem:[#allocation2 + $0x468] sm:$0xff]
    %v1441 = vld [vmem:[#allocation2 + $0x470] sm:$0xff]
    %v1442 = vld [vmem:[#allocation2 + $0x478] sm:$0xff]
    %v1443 = vld [vmem:[#allocation2 + $0x480] sm:$0xff]
    %v1444 = vld [vmem:[#allocation2 + $0x488] sm:$0xff]
    %v1445 = vld [vmem:[#allocation2 + $0x490] sm:$0xff]
    %v1446 = vld [vmem:[#allocation2 + $0x498] sm:$0xff]
    %v1447 = vld [vmem:[#allocation2 + $0x4a0] sm:$0xff]
    %v1448 = vld [vmem:[#allocation2 + $0x4a8] sm:$0xff]
    %v1449 = vld [vmem:[#allocation2 + $0x4b0] sm:$0xff]
    %v1450 = vld [vmem:[#allocation2 + $0x4b8] sm:$0xff]
    %v1451 = vld [vmem:[#allocation2 + $0x4c0] sm:$0xff]
    %v1452 = vld [vmem:[#allocation2 + $0x4c8] sm:$0xff]
    %v1453 = vld [vmem:[#allocation2 + $0x4d0] sm:$0xff]
    %v1454 = vld [vmem:[#allocation2 + $0x4d8] sm:$0xff]
    %v1455 = vld [vmem:[#allocation2 + $0x4e0] sm:$0xff]
    %v1456 = vld [vmem:[#allocation2 + $0x4e8] sm:$0xff]
    %v1457 = vld [vmem:[#allocation2 + $0x4f0] sm:$0xff]
    %v1458 = vld [vmem:[#allocation2 + $0x4f8] sm:$0xff]
    %v1459 = vld [vmem:[#allocation2 + $0x500] sm:$0xff]
    %v1460 = vld [vmem:[#allocation2 + $0x508] sm:$0xff]
    %v1461 = vld [vmem:[#allocation2 + $0x510] sm:$0xff]
    %v1462 = vld [vmem:[#allocation2 + $0x518] sm:$0xff]
    %v1463 = vld [vmem:[#allocation2 + $0x520] sm:$0xff]
    %v1464 = vld [vmem:[#allocation2 + $0x528] sm:$0xff]
    %v1465 = vld [vmem:[#allocation2 + $0x530] sm:$0xff]
    %v1466 = vld [vmem:[#allocation2 + $0x538] sm:$0xff]
    %v1467 = vld [vmem:[#allocation2 + $0x540] sm:$0xff]
    %v1468 = vld [vmem:[#allocation2 + $0x548] sm:$0xff]
    %v1469 = vld [vmem:[#allocation2 + $0x550] sm:$0xff]
    %v1470 = vld [vmem:[#allocation2 + $0x558] sm:$0xff]
    %v1471 = vld [vmem:[#allocation2 + $0x560] sm:$0xff]
    %v1472 = vld [vmem:[#allocation2 + $0x568] sm:$0xff]
    %v1473 = vld [vmem:[#allocation2 + $0x570] sm:$0xff]
    %v1474 = vld [vmem:[#allocation2 + $0x578] sm:$0xff]
    %v1475 = vld [vmem:[#allocation2 + $0x580] sm:$0xff]
    %v1476 = vld [vmem:[#allocation2 + $0x588] sm:$0xff]
    %v1477 = vld [vmem:[#allocation2 + $0x590] sm:$0xff]
    %v1478 = vld [vmem:[#allocation2 + $0x598] sm:$0xff]
    %v1479 = vld [vmem:[#allocation2 + $0x5a0] sm:$0xff]
    %v1480 = vld [vmem:[#allocation2 + $0x5a8] sm:$0xff]
    %v1481 = vld [vmem:[#allocation2 + $0x5b0] sm:$0xff]
    %v1482 = vld [vmem:[#allocation2 + $0x5b8] sm:$0xff]
    %v1483 = vld [vmem:[#allocation2 + $0x5c0] sm:$0xff]
    %v1484 = vld [vmem:[#allocation2 + $0x5c8] sm:$0xff]
    %v1485 = vld [vmem:[#allocation2 + $0x5d0] sm:$0xff]
    %v1486 = vld [vmem:[#allocation2 + $0x5d8] sm:$0xff]
    %v1487 = vld [vmem:[#allocation2 + $0x5e0] sm:$0xff]
    %v1488 = vld [vmem:[#allocation2 + $0x5e8] sm:$0xff]
    %v1489 = vld [vmem:[#allocation2 + $0x5f0] sm:$0xff]
    %v1490 = vld [vmem:[#allocation2 + $0x5f8] sm:$0xff]
    %v1492 = vlaneseq
    %v1493 = vshrl.u32 %v1492, 7
    %v1494 = vsub.s32 0, %v1493
    %v1495 = vrot.slane %v205, %v1494
    %v1496 = vlaneseq
    %v1497 = vshrl.u32 %v1496, 7
    %v1498 = vsub.s32 1, %v1497
    %v1499 = vrot.slane %v205, %v1498
    %v1500 = vlaneseq
    %v1501 = vshrl.u32 %v1500, 7
    %v1502 = vsub.s32 2, %v1501
    %v1503 = vrot.slane %v205, %v1502
    %v1504 = vlaneseq
    %v1505 = vshrl.u32 %v1504, 7
    %v1506 = vsub.s32 3, %v1505
    %v1507 = vrot.slane %v205, %v1506
    %v1508 = vlaneseq
    %v1509 = vshrl.u32 %v1508, 7
    %v1510 = vsub.s32 4, %v1509
    %v1511 = vrot.slane %v205, %v1510
    %v1512 = vlaneseq
    %v1513 = vshrl.u32 %v1512, 7
    %v1514 = vsub.s32 5, %v1513
    %v1515 = vrot.slane %v205, %v1514
    %1522 = vmatprep.subr.bf16.mxu0 %v1300
    %1523 = vmatpush1.bf16.msra.mxu0 %v1299
    %1524 = vmatprep.subr.bf16.mxu0 %v1306
    %1525 = vmatpush1.bf16.msra.mxu0 %v1305
    %1526 = vmatprep.subr.bf16.mxu0 %v1312
    %1527 = vmatpush1.bf16.msra.mxu0 %v1311
    %1528 = vmatprep.subr.bf16.mxu0 %v1318
    %1529 = vmatpush1.bf16.msra.mxu0 %v1317
    %1530 = vmatprep.subr.bf16.mxu0 %v1324
    %1531 = vmatpush1.bf16.msra.mxu0 %v1323
    %1532 = vmatprep.subr.bf16.mxu0 %v1330
    %1533 = vmatpush1.bf16.msra.mxu0 %v1329
    %1534 = vmatprep.subr.bf16.mxu0 %v1336
    %1535 = vmatpush1.bf16.msra.mxu0 %v1335
    %1536 = vmatprep.subr.bf16.mxu0 %v1342
    %1537 = vmatpush1.bf16.msra.mxu0 %v1341
    %1538 = vmatprep.subr.bf16.mxu0 %v1348
    %1539 = vmatpush1.bf16.msra.mxu0 %v1347
    %1540 = vmatprep.subr.bf16.mxu0 %v1354
    %1541 = vmatpush1.bf16.msra.mxu0 %v1353
    %1542 = vmatprep.subr.bf16.mxu0 %v1360
    %1543 = vmatpush1.bf16.msra.mxu0 %v1359
    %1544 = vmatprep.subr.bf16.mxu0 %v1366
    %1545 = vmatpush1.bf16.msra.mxu0 %v1365
    %1546 = vmatprep.subr.bf16.mxu0 %v1372
    %1547 = vmatpush1.bf16.msra.mxu0 %v1371
    %1548 = vmatprep.subr.bf16.mxu0 %v1378
    %1549 = vmatpush1.bf16.msra.mxu0 %v1377
    %1550 = vmatprep.subr.bf16.mxu0 %v1384
    %1551 = vmatpush1.bf16.msra.mxu0 %v1383
    %1552 = vmatprep.subr.bf16.mxu0 %v1390
    %1553 = vmatpush1.bf16.msra.mxu0 %v1389
    %1554 = vmatprep.mubr.bf16.mxu0 %v1296
    %1555 = vmatmul.mubr.bf16.gmra.mrb[0].mxu0 %v1295
    %v1556 = vpop.f32.mrb[0].mxu0
    %v1557 = vadd.f32 %v1495, %v1556
    %v1558 = vpop.f32.mrb[0].mxu0
    %v1559 = vadd.f32 %v1499, %v1558
    %v1560 = vpop.f32.mrb[0].mxu0
    %v1561 = vpop.f32.mrb[0].mxu0
    %1562 = vdwg.mxu0
    %1563 = vmatprep.subr.bf16.mxu0 %v1396
    %1564 = vmatpush1.bf16.msra.mxu0 %v1395
    %1565 = vmatprep.subr.bf16.mxu0 %v1402
    %1566 = vmatpush1.bf16.msra.mxu0 %v1401
    %1567 = vmatprep.subr.bf16.mxu0 %v1408
    %1568 = vmatpush1.bf16.msra.mxu0 %v1407
    %1569 = vmatprep.subr.bf16.mxu0 %v1414
    %1570 = vmatpush1.bf16.msra.mxu0 %v1413
    %1571 = vmatprep.subr.bf16.mxu0 %v1420
    %1572 = vmatpush1.bf16.msra.mxu0 %v1419
    %1573 = vmatprep.subr.bf16.mxu0 %v1426
    %1574 = vmatpush1.bf16.msra.mxu0 %v1425
    %1575 = vmatprep.subr.bf16.mxu0 %v1432
    %1576 = vmatpush1.bf16.msra.mxu0 %v1431
    %1577 = vmatprep.subr.bf16.mxu0 %v1438
    %1578 = vmatpush1.bf16.msra.mxu0 %v1437
    %1579 = vmatprep.subr.bf16.mxu0 %v1444
    %1580 = vmatpush1.bf16.msra.mxu0 %v1443
    %1581 = vmatprep.subr.bf16.mxu0 %v1450
    %1582 = vmatpush1.bf16.msra.mxu0 %v1449
    %1583 = vmatprep.subr.bf16.mxu0 %v1456
    %1584 = vmatpush1.bf16.msra.mxu0 %v1455
    %1585 = vmatprep.subr.bf16.mxu0 %v1462
    %1586 = vmatpush1.bf16.msra.mxu0 %v1461
    %1587 = vmatprep.subr.bf16.mxu0 %v1468
    %1588 = vmatpush1.bf16.msra.mxu0 %v1467
    %1589 = vmatprep.subr.bf16.mxu0 %v1474
    %1590 = vmatpush1.bf16.msra.mxu0 %v1473
    %1591 = vmatprep.subr.bf16.mxu0 %v1480
    %1592 = vmatpush1.bf16.msra.mxu0 %v1479
    %1593 = vmatprep.subr.bf16.mxu0 %v1486
    %1594 = vmatpush1.bf16.msra.mxu0 %v1485
    %1595 = vmatprep.mubr.bf16.mxu0 %v1298
    %1596 = vmatmul.mubr.bf16.gmra.mrb[0].mxu0 %v1297
    %v1597 = vpop.f32.mrb[0].mxu0
    %v1598 = vadd.f32 %v1557, %v1597
    %v1599 = vpop.f32.mrb[0].mxu0
    %v1600 = vadd.f32 %v1559, %v1599
    %v1601 = vpop.f32.mrb[0].mxu0
    %v1602 = vpop.f32.mrb[0].mxu0
    %1603 = vdwg.mxu0
    %1604 = vmatprep.subr.bf16.mxu0 %v1302
    %1605 = vmatpush1.bf16.msra.mxu0 %v1301
    %1606 = vmatprep.subr.bf16.mxu0 %v1308
    %1607 = vmatpush1.bf16.msra.mxu0 %v1307
    %1608 = vmatprep.subr.bf16.mxu0 %v1314
    %1609 = vmatpush1.bf16.msra.mxu0 %v1313
    %1610 = vmatprep.subr.bf16.mxu0 %v1320
    %1611 = vmatpush1.bf16.msra.mxu0 %v1319
    %1612 = vmatprep.subr.bf16.mxu0 %v1326
    %1613 = vmatpush1.bf16.msra.mxu0 %v1325
    %1614 = vmatprep.subr.bf16.mxu0 %v1332
    %1615 = vmatpush1.bf16.msra.mxu0 %v1331
    %1616 = vmatprep.subr.bf16.mxu0 %v1338
    %1617 = vmatpush1.bf16.msra.mxu0 %v1337
    %1618 = vmatprep.subr.bf16.mxu0 %v1344
    %1619 = vmatpush1.bf16.msra.mxu0 %v1343
    %1620 = vmatprep.subr.bf16.mxu0 %v1350
    %1621 = vmatpush1.bf16.msra.mxu0 %v1349
    %1622 = vmatprep.subr.bf16.mxu0 %v1356
    %1623 = vmatpush1.bf16.msra.mxu0 %v1355
    %1624 = vmatprep.subr.bf16.mxu0 %v1362
    %1625 = vmatpush1.bf16.msra.mxu0 %v1361
    %1626 = vmatprep.subr.bf16.mxu0 %v1368
    %1627 = vmatpush1.bf16.msra.mxu0 %v1367
    %1628 = vmatprep.subr.bf16.mxu0 %v1374
    %1629 = vmatpush1.bf16.msra.mxu0 %v1373
    %1630 = vmatprep.subr.bf16.mxu0 %v1380
    %1631 = vmatpush1.bf16.msra.mxu0 %v1379
    %1632 = vmatprep.subr.bf16.mxu0 %v1386
    %1633 = vmatpush1.bf16.msra.mxu0 %v1385
    %1634 = vmatprep.subr.bf16.mxu0 %v1392
    %1635 = vmatpush1.bf16.msra.mxu0 %v1391
    %1636 = vmatprep.mubr.bf16.mxu0 %v1296
    %1637 = vmatmul.mubr.bf16.gmra.mrb[0].mxu0 %v1295
    %v1638 = vpop.f32.mrb[0].mxu0
    %v1639 = vadd.f32 %v1503, %v1638
    %v1640 = vpop.f32.mrb[0].mxu0
    %v1641 = vadd.f32 %v1507, %v1640
    %v1642 = vpop.f32.mrb[0].mxu0
    %v1643 = vpop.f32.mrb[0].mxu0
    %1644 = vdwg.mxu0
    %1645 = vmatprep.subr.bf16.mxu0 %v1398
    %1646 = vmatpush1.bf16.msra.mxu0 %v1397
    %1647 = vmatprep.subr.bf16.mxu0 %v1404
    %1648 = vmatpush1.bf16.msra.mxu0 %v1403
    %1649 = vmatprep.subr.bf16.mxu0 %v1410
    %1650 = vmatpush1.bf16.msra.mxu0 %v1409
    %1651 = vmatprep.subr.bf16.mxu0 %v1416
    %1652 = vmatpush1.bf16.msra.mxu0 %v1415
    %1653 = vmatprep.subr.bf16.mxu0 %v1422
    %1654 = vmatpush1.bf16.msra.mxu0 %v1421
    %1655 = vmatprep.subr.bf16.mxu0 %v1428
    %1656 = vmatpush1.bf16.msra.mxu0 %v1427
    %1657 = vmatprep.subr.bf16.mxu0 %v1434
    %1658 = vmatpush1.bf16.msra.mxu0 %v1433
    %1659 = vmatprep.subr.bf16.mxu0 %v1440
    %1660 = vmatpush1.bf16.msra.mxu0 %v1439
    %1661 = vmatprep.subr.bf16.mxu0 %v1446
    %1662 = vmatpush1.bf16.msra.mxu0 %v1445
    %1663 = vmatprep.subr.bf16.mxu0 %v1452
    %1664 = vmatpush1.bf16.msra.mxu0 %v1451
    %1665 = vmatprep.subr.bf16.mxu0 %v1458
    %1666 = vmatpush1.bf16.msra.mxu0 %v1457
    %1667 = vmatprep.subr.bf16.mxu0 %v1464
    %1668 = vmatpush1.bf16.msra.mxu0 %v1463
    %1669 = vmatprep.subr.bf16.mxu0 %v1470
    %1670 = vmatpush1.bf16.msra.mxu0 %v1469
    %1671 = vmatprep.subr.bf16.mxu0 %v1476
    %1672 = vmatpush1.bf16.msra.mxu0 %v1475
    %1673 = vmatprep.subr.bf16.mxu0 %v1482
    %1674 = vmatpush1.bf16.msra.mxu0 %v1481
    %1675 = vmatprep.subr.bf16.mxu0 %v1488
    %1676 = vmatpush1.bf16.msra.mxu0 %v1487
    %1677 = vmatprep.mubr.bf16.mxu0 %v1298
    %1678 = vmatmul.mubr.bf16.gmra.mrb[0].mxu0 %v1297
    %v1679 = vpop.f32.mrb[0].mxu0
    %v1680 = vadd.f32 %v1639, %v1679
    %v1681 = vpop.f32.mrb[0].mxu0
    %v1682 = vadd.f32 %v1641, %v1681
    %v1683 = vpop.f32.mrb[0].mxu0
    %v1684 = vpop.f32.mrb[0].mxu0
    %1685 = vdwg.mxu0
    %1686 = vmatprep.subr.bf16.mxu0 %v1304
    %1687 = vmatpush1.bf16.msra.mxu0 %v1303
    %1688 = vmatprep.subr.bf16.mxu0 %v1310
    %1689 = vmatpush1.bf16.msra.mxu0 %v1309
    %1690 = vmatprep.subr.bf16.mxu0 %v1316
    %1691 = vmatpush1.bf16.msra.mxu0 %v1315
    %1692 = vmatprep.subr.bf16.mxu0 %v1322
    %1693 = vmatpush1.bf16.msra.mxu0 %v1321
    %1694 = vmatprep.subr.bf16.mxu0 %v1328
    %1695 = vmatpush1.bf16.msra.mxu0 %v1327
    %1696 = vmatprep.subr.bf16.mxu0 %v1334
    %1697 = vmatpush1.bf16.msra.mxu0 %v1333
    %1698 = vmatprep.subr.bf16.mxu0 %v1340
    %1699 = vmatpush1.bf16.msra.mxu0 %v1339
    %1700 = vmatprep.subr.bf16.mxu0 %v1346
    %1701 = vmatpush1.bf16.msra.mxu0 %v1345
    %1702 = vmatprep.subr.bf16.mxu0 %v1352
    %1703 = vmatpush1.bf16.msra.mxu0 %v1351
    %1704 = vmatprep.subr.bf16.mxu0 %v1358
    %1705 = vmatpush1.bf16.msra.mxu0 %v1357
    %1706 = vmatprep.subr.bf16.mxu0 %v1364
    %1707 = vmatpush1.bf16.msra.mxu0 %v1363
    %1708 = vmatprep.subr.bf16.mxu0 %v1370
    %1709 = vmatpush1.bf16.msra.mxu0 %v1369
    %1710 = vmatprep.subr.bf16.mxu0 %v1376
    %1711 = vmatpush1.bf16.msra.mxu0 %v1375
    %1712 = vmatprep.subr.bf16.mxu0 %v1382
    %1713 = vmatpush1.bf16.msra.mxu0 %v1381
    %1714 = vmatprep.subr.bf16.mxu0 %v1388
    %1715 = vmatpush1.bf16.msra.mxu0 %v1387
    %1716 = vmatprep.subr.bf16.mxu0 %v1394
    %1717 = vmatpush1.bf16.msra.mxu0 %v1393
    %1718 = vmatprep.mubr.bf16.mxu0 %v1296
    %1719 = vmatmul.mubr.bf16.gmra.mrb[0].mxu0 %v1295
    %v1720 = vpop.f32.mrb[0].mxu0
    %v1721 = vadd.f32 %v1511, %v1720
    %v1722 = vpop.f32.mrb[0].mxu0
    %v1723 = vadd.f32 %v1515, %v1722
    %v1724 = vpop.f32.mrb[0].mxu0
    %v1725 = vpop.f32.mrb[0].mxu0
    %1726 = vdwg.mxu0
    %1727 = vmatprep.subr.bf16.mxu0 %v1400
    %1728 = vmatpush1.bf16.msra.mxu0 %v1399
    %1729 = vmatprep.subr.bf16.mxu0 %v1406
    %1730 = vmatpush1.bf16.msra.mxu0 %v1405
    %1731 = vmatprep.subr.bf16.mxu0 %v1412
    %1732 = vmatpush1.bf16.msra.mxu0 %v1411
    %1733 = vmatprep.subr.bf16.mxu0 %v1418
    %1734 = vmatpush1.bf16.msra.mxu0 %v1417
    %1735 = vmatprep.subr.bf16.mxu0 %v1424
    %1736 = vmatpush1.bf16.msra.mxu0 %v1423
    %1737 = vmatprep.subr.bf16.mxu0 %v1430
    %1738 = vmatpush1.bf16.msra.mxu0 %v1429
    %1739 = vmatprep.subr.bf16.mxu0 %v1436
    %1740 = vmatpush1.bf16.msra.mxu0 %v1435
    %1741 = vmatprep.subr.bf16.mxu0 %v1442
    %1742 = vmatpush1.bf16.msra.mxu0 %v1441
    %1743 = vmatprep.subr.bf16.mxu0 %v1448
    %1744 = vmatpush1.bf16.msra.mxu0 %v1447
    %1745 = vmatprep.subr.bf16.mxu0 %v1454
    %1746 = vmatpush1.bf16.msra.mxu0 %v1453
    %1747 = vmatprep.subr.bf16.mxu0 %v1460
    %1748 = vmatpush1.bf16.msra.mxu0 %v1459
    %1749 = vmatprep.subr.bf16.mxu0 %v1466
    %1750 = vmatpush1.bf16.msra.mxu0 %v1465
    %1751 = vmatprep.subr.bf16.mxu0 %v1472
    %1752 = vmatpush1.bf16.msra.mxu0 %v1471
    %1753 = vmatprep.subr.bf16.mxu0 %v1478
    %1754 = vmatpush1.bf16.msra.mxu0 %v1477
    %1755 = vmatprep.subr.bf16.mxu0 %v1484
    %1756 = vmatpush1.bf16.msra.mxu0 %v1483
    %1757 = vmatprep.subr.bf16.mxu0 %v1490
    %1758 = vmatpush1.bf16.msra.mxu0 %v1489
    %1759 = vmatprep.mubr.bf16.mxu0 %v1298
    %1760 = vmatmul.mubr.bf16.gmra.mrb[0].mxu0 %v1297
    %v1761 = vpop.f32.mrb[0].mxu0
    %v1762 = vadd.f32 %v1721, %v1761
    %v1763 = vpop.f32.mrb[0].mxu0
    %v1764 = vadd.f32 %v1723, %v1763
    %v1765 = vpop.f32.mrb[0].mxu0
    %v1766 = vpop.f32.mrb[0].mxu0
    %1767 = vdwg.mxu0
    %v1768 = vld [vmem:[#allocation2 + $0x600] sm:$0xff]
    %v1769 = vld [vmem:[#allocation2 + $0x608] sm:$0xff]
    %v1770 = vld [vmem:[#allocation2 + $0x610] sm:$0xff]
    %v1771 = vld [vmem:[#allocation2 + $0x618] sm:$0xff]
    %v1772 = vld [vmem:[#allocation2 + $0x620] sm:$0xff]
    %v1773 = vld [vmem:[#allocation2 + $0x628] sm:$0xff]
    %v1774 = vld [vmem:[#allocation2 + $0x630] sm:$0xff]
    %v1775 = vld [vmem:[#allocation2 + $0x638] sm:$0xff]
    %v1776 = vld [vmem:[#allocation2 + $0x640] sm:$0xff]
    %v1777 = vld [vmem:[#allocation2 + $0x648] sm:$0xff]
    %v1778 = vld [vmem:[#allocation2 + $0x650] sm:$0xff]
    %v1779 = vld [vmem:[#allocation2 + $0x658] sm:$0xff]
    %v1780 = vld [vmem:[#allocation2 + $0x660] sm:$0xff]
    %v1781 = vld [vmem:[#allocation2 + $0x668] sm:$0xff]
    %v1782 = vld [vmem:[#allocation2 + $0x670] sm:$0xff]
    %v1783 = vld [vmem:[#allocation2 + $0x678] sm:$0xff]
    %v1784 = vld [vmem:[#allocation2 + $0x680] sm:$0xff]
    %v1785 = vld [vmem:[#allocation2 + $0x688] sm:$0xff]
    %v1786 = vld [vmem:[#allocation2 + $0x690] sm:$0xff]
    %v1787 = vld [vmem:[#allocation2 + $0x698] sm:$0xff]
    %v1788 = vld [vmem:[#allocation2 + $0x6a0] sm:$0xff]
    %v1789 = vld [vmem:[#allocation2 + $0x6a8] sm:$0xff]
    %v1790 = vld [vmem:[#allocation2 + $0x6b0] sm:$0xff]
    %v1791 = vld [vmem:[#allocation2 + $0x6b8] sm:$0xff]
    %v1792 = vld [vmem:[#allocation2 + $0x6c0] sm:$0xff]
    %v1793 = vld [vmem:[#allocation2 + $0x6c8] sm:$0xff]
    %v1794 = vld [vmem:[#allocation2 + $0x6d0] sm:$0xff]
    %v1795 = vld [vmem:[#allocation2 + $0x6d8] sm:$0xff]
    %v1796 = vld [vmem:[#allocation2 + $0x6e0] sm:$0xff]
    %v1797 = vld [vmem:[#allocation2 + $0x6e8] sm:$0xff]
    %v1798 = vld [vmem:[#allocation2 + $0x6f0] sm:$0xff]
    %v1799 = vld [vmem:[#allocation2 + $0x6f8] sm:$0xff]
    %v1800 = vld [vmem:[#allocation2 + $0x700] sm:$0xff]
    %v1801 = vld [vmem:[#allocation2 + $0x708] sm:$0xff]
    %v1802 = vld [vmem:[#allocation2 + $0x710] sm:$0xff]
    %v1803 = vld [vmem:[#allocation2 + $0x718] sm:$0xff]
    %v1804 = vld [vmem:[#allocation2 + $0x720] sm:$0xff]
    %v1805 = vld [vmem:[#allocation2 + $0x728] sm:$0xff]
    %v1806 = vld [vmem:[#allocation2 + $0x730] sm:$0xff]
    %v1807 = vld [vmem:[#allocation2 + $0x738] sm:$0xff]
    %v1808 = vld [vmem:[#allocation2 + $0x740] sm:$0xff]
    %v1809 = vld [vmem:[#allocation2 + $0x748] sm:$0xff]
    %v1810 = vld [vmem:[#allocation2 + $0x750] sm:$0xff]
    %v1811 = vld [vmem:[#allocation2 + $0x758] sm:$0xff]
    %v1812 = vld [vmem:[#allocation2 + $0x760] sm:$0xff]
    %v1813 = vld [vmem:[#allocation2 + $0x768] sm:$0xff]
    %v1814 = vld [vmem:[#allocation2 + $0x770] sm:$0xff]
    %v1815 = vld [vmem:[#allocation2 + $0x778] sm:$0xff]
    %v1816 = vld [vmem:[#allocation2 + $0x780] sm:$0xff]
    %v1817 = vld [vmem:[#allocation2 + $0x788] sm:$0xff]
    %v1818 = vld [vmem:[#allocation2 + $0x790] sm:$0xff]
    %v1819 = vld [vmem:[#allocation2 + $0x798] sm:$0xff]
    %v1820 = vld [vmem:[#allocation2 + $0x7a0] sm:$0xff]
    %v1821 = vld [vmem:[#allocation2 + $0x7a8] sm:$0xff]
    %v1822 = vld [vmem:[#allocation2 + $0x7b0] sm:$0xff]
    %v1823 = vld [vmem:[#allocation2 + $0x7b8] sm:$0xff]
    %v1824 = vld [vmem:[#allocation2 + $0x7c0] sm:$0xff]
    %v1825 = vld [vmem:[#allocation2 + $0x7c8] sm:$0xff]
    %v1826 = vld [vmem:[#allocation2 + $0x7d0] sm:$0xff]
    %v1827 = vld [vmem:[#allocation2 + $0x7d8] sm:$0xff]
    %v1828 = vld [vmem:[#allocation2 + $0x7e0] sm:$0xff]
    %v1829 = vld [vmem:[#allocation2 + $0x7e8] sm:$0xff]
    %v1830 = vld [vmem:[#allocation2 + $0x7f0] sm:$0xff]
    %v1831 = vld [vmem:[#allocation2 + $0x7f8] sm:$0xff]
    %v1832 = vld [vmem:[#allocation2 + $0x800] sm:$0xff]
    %v1833 = vld [vmem:[#allocation2 + $0x808] sm:$0xff]
    %v1834 = vld [vmem:[#allocation2 + $0x810] sm:$0xff]
    %v1835 = vld [vmem:[#allocation2 + $0x818] sm:$0xff]
    %v1836 = vld [vmem:[#allocation2 + $0x820] sm:$0xff]
    %v1837 = vld [vmem:[#allocation2 + $0x828] sm:$0xff]
    %v1838 = vld [vmem:[#allocation2 + $0x830] sm:$0xff]
    %v1839 = vld [vmem:[#allocation2 + $0x838] sm:$0xff]
    %v1840 = vld [vmem:[#allocation2 + $0x840] sm:$0xff]
    %v1841 = vld [vmem:[#allocation2 + $0x848] sm:$0xff]
    %v1842 = vld [vmem:[#allocation2 + $0x850] sm:$0xff]
    %v1843 = vld [vmem:[#allocation2 + $0x858] sm:$0xff]
    %v1844 = vld [vmem:[#allocation2 + $0x860] sm:$0xff]
    %v1845 = vld [vmem:[#allocation2 + $0x868] sm:$0xff]
    %v1846 = vld [vmem:[#allocation2 + $0x870] sm:$0xff]
    %v1847 = vld [vmem:[#allocation2 + $0x878] sm:$0xff]
    %v1848 = vld [vmem:[#allocation2 + $0x880] sm:$0xff]
    %v1849 = vld [vmem:[#allocation2 + $0x888] sm:$0xff]
    %v1850 = vld [vmem:[#allocation2 + $0x890] sm:$0xff]
    %v1851 = vld [vmem:[#allocation2 + $0x898] sm:$0xff]
    %v1852 = vld [vmem:[#allocation2 + $0x8a0] sm:$0xff]
    %v1853 = vld [vmem:[#allocation2 + $0x8a8] sm:$0xff]
    %v1854 = vld [vmem:[#allocation2 + $0x8b0] sm:$0xff]
    %v1855 = vld [vmem:[#allocation2 + $0x8b8] sm:$0xff]
    %v1856 = vld [vmem:[#allocation2 + $0x8c0] sm:$0xff]
    %v1857 = vld [vmem:[#allocation2 + $0x8c8] sm:$0xff]
    %v1858 = vld [vmem:[#allocation2 + $0x8d0] sm:$0xff]
    %v1859 = vld [vmem:[#allocation2 + $0x8d8] sm:$0xff]
    %v1860 = vld [vmem:[#allocation2 + $0x8e0] sm:$0xff]
    %v1861 = vld [vmem:[#allocation2 + $0x8e8] sm:$0xff]
    %v1862 = vld [vmem:[#allocation2 + $0x8f0] sm:$0xff]
    %v1863 = vld [vmem:[#allocation2 + $0x8f8] sm:$0xff]
    %v1864 = vld [vmem:[#allocation2 + $0x900] sm:$0xff]
    %v1865 = vld [vmem:[#allocation2 + $0x908] sm:$0xff]
    %v1866 = vld [vmem:[#allocation2 + $0x910] sm:$0xff]
    %v1867 = vld [vmem:[#allocation2 + $0x918] sm:$0xff]
    %v1868 = vld [vmem:[#allocation2 + $0x920] sm:$0xff]
    %v1869 = vld [vmem:[#allocation2 + $0x928] sm:$0xff]
    %v1870 = vld [vmem:[#allocation2 + $0x930] sm:$0xff]
    %v1871 = vld [vmem:[#allocation2 + $0x938] sm:$0xff]
    %v1872 = vld [vmem:[#allocation2 + $0x940] sm:$0xff]
    %v1873 = vld [vmem:[#allocation2 + $0x948] sm:$0xff]
    %v1874 = vld [vmem:[#allocation2 + $0x950] sm:$0xff]
    %v1875 = vld [vmem:[#allocation2 + $0x958] sm:$0xff]
    %v1876 = vld [vmem:[#allocation2 + $0x960] sm:$0xff]
    %v1877 = vld [vmem:[#allocation2 + $0x968] sm:$0xff]
    %v1878 = vld [vmem:[#allocation2 + $0x970] sm:$0xff]
    %v1879 = vld [vmem:[#allocation2 + $0x978] sm:$0xff]
    %v1880 = vld [vmem:[#allocation2 + $0x980] sm:$0xff]
    %v1881 = vld [vmem:[#allocation2 + $0x988] sm:$0xff]
    %v1882 = vld [vmem:[#allocation2 + $0x990] sm:$0xff]
    %v1883 = vld [vmem:[#allocation2 + $0x998] sm:$0xff]
    %v1884 = vld [vmem:[#allocation2 + $0x9a0] sm:$0xff]
    %v1885 = vld [vmem:[#allocation2 + $0x9a8] sm:$0xff]
    %v1886 = vld [vmem:[#allocation2 + $0x9b0] sm:$0xff]
    %v1887 = vld [vmem:[#allocation2 + $0x9b8] sm:$0xff]
    %v1888 = vld [vmem:[#allocation2 + $0x9c0] sm:$0xff]
    %v1889 = vld [vmem:[#allocation2 + $0x9c8] sm:$0xff]
    %v1890 = vld [vmem:[#allocation2 + $0x9d0] sm:$0xff]
    %v1891 = vld [vmem:[#allocation2 + $0x9d8] sm:$0xff]
    %v1892 = vld [vmem:[#allocation2 + $0x9e0] sm:$0xff]
    %v1893 = vld [vmem:[#allocation2 + $0x9e8] sm:$0xff]
    %v1894 = vld [vmem:[#allocation2 + $0x9f0] sm:$0xff]
    %v1895 = vld [vmem:[#allocation2 + $0x9f8] sm:$0xff]
    %v1896 = vld [vmem:[#allocation2 + $0xa00] sm:$0xff]
    %v1897 = vld [vmem:[#allocation2 + $0xa08] sm:$0xff]
    %v1898 = vld [vmem:[#allocation2 + $0xa10] sm:$0xff]
    %v1899 = vld [vmem:[#allocation2 + $0xa18] sm:$0xff]
    %v1900 = vld [vmem:[#allocation2 + $0xa20] sm:$0xff]
    %v1901 = vld [vmem:[#allocation2 + $0xa28] sm:$0xff]
    %v1902 = vld [vmem:[#allocation2 + $0xa30] sm:$0xff]
    %v1903 = vld [vmem:[#allocation2 + $0xa38] sm:$0xff]
    %v1904 = vld [vmem:[#allocation2 + $0xa40] sm:$0xff]
    %v1905 = vld [vmem:[#allocation2 + $0xa48] sm:$0xff]
    %v1906 = vld [vmem:[#allocation2 + $0xa50] sm:$0xff]
    %v1907 = vld [vmem:[#allocation2 + $0xa58] sm:$0xff]
    %v1908 = vld [vmem:[#allocation2 + $0xa60] sm:$0xff]
    %v1909 = vld [vmem:[#allocation2 + $0xa68] sm:$0xff]
    %v1910 = vld [vmem:[#allocation2 + $0xa70] sm:$0xff]
    %v1911 = vld [vmem:[#allocation2 + $0xa78] sm:$0xff]
    %v1912 = vld [vmem:[#allocation2 + $0xa80] sm:$0xff]
    %v1913 = vld [vmem:[#allocation2 + $0xa88] sm:$0xff]
    %v1914 = vld [vmem:[#allocation2 + $0xa90] sm:$0xff]
    %v1915 = vld [vmem:[#allocation2 + $0xa98] sm:$0xff]
    %v1916 = vld [vmem:[#allocation2 + $0xaa0] sm:$0xff]
    %v1917 = vld [vmem:[#allocation2 + $0xaa8] sm:$0xff]
    %v1918 = vld [vmem:[#allocation2 + $0xab0] sm:$0xff]
    %v1919 = vld [vmem:[#allocation2 + $0xab8] sm:$0xff]
    %v1920 = vld [vmem:[#allocation2 + $0xac0] sm:$0xff]
    %v1921 = vld [vmem:[#allocation2 + $0xac8] sm:$0xff]
    %v1922 = vld [vmem:[#allocation2 + $0xad0] sm:$0xff]
    %v1923 = vld [vmem:[#allocation2 + $0xad8] sm:$0xff]
    %v1924 = vld [vmem:[#allocation2 + $0xae0] sm:$0xff]
    %v1925 = vld [vmem:[#allocation2 + $0xae8] sm:$0xff]
    %v1926 = vld [vmem:[#allocation2 + $0xaf0] sm:$0xff]
    %v1927 = vld [vmem:[#allocation2 + $0xaf8] sm:$0xff]
    %v1928 = vld [vmem:[#allocation2 + $0xb00] sm:$0xff]
    %v1929 = vld [vmem:[#allocation2 + $0xb08] sm:$0xff]
    %v1930 = vld [vmem:[#allocation2 + $0xb10] sm:$0xff]
    %v1931 = vld [vmem:[#allocation2 + $0xb18] sm:$0xff]
    %v1932 = vld [vmem:[#allocation2 + $0xb20] sm:$0xff]
    %v1933 = vld [vmem:[#allocation2 + $0xb28] sm:$0xff]
    %v1934 = vld [vmem:[#allocation2 + $0xb30] sm:$0xff]
    %v1935 = vld [vmem:[#allocation2 + $0xb38] sm:$0xff]
    %v1936 = vld [vmem:[#allocation2 + $0xb40] sm:$0xff]
    %v1937 = vld [vmem:[#allocation2 + $0xb48] sm:$0xff]
    %v1938 = vld [vmem:[#allocation2 + $0xb50] sm:$0xff]
    %v1939 = vld [vmem:[#allocation2 + $0xb58] sm:$0xff]
    %v1940 = vld [vmem:[#allocation2 + $0xb60] sm:$0xff]
    %v1941 = vld [vmem:[#allocation2 + $0xb68] sm:$0xff]
    %v1942 = vld [vmem:[#allocation2 + $0xb70] sm:$0xff]
    %v1943 = vld [vmem:[#allocation2 + $0xb78] sm:$0xff]
    %v1944 = vld [vmem:[#allocation2 + $0xb80] sm:$0xff]
    %v1945 = vld [vmem:[#allocation2 + $0xb88] sm:$0xff]
    %v1946 = vld [vmem:[#allocation2 + $0xb90] sm:$0xff]
    %v1947 = vld [vmem:[#allocation2 + $0xb98] sm:$0xff]
    %v1948 = vld [vmem:[#allocation2 + $0xba0] sm:$0xff]
    %v1949 = vld [vmem:[#allocation2 + $0xba8] sm:$0xff]
    %v1950 = vld [vmem:[#allocation2 + $0xbb0] sm:$0xff]
    %v1951 = vld [vmem:[#allocation2 + $0xbb8] sm:$0xff]
    %v1952 = vld [vmem:[#allocation2 + $0xbc0] sm:$0xff]
    %v1953 = vld [vmem:[#allocation2 + $0xbc8] sm:$0xff]
    %v1954 = vld [vmem:[#allocation2 + $0xbd0] sm:$0xff]
    %v1955 = vld [vmem:[#allocation2 + $0xbd8] sm:$0xff]
    %v1956 = vld [vmem:[#allocation2 + $0xbe0] sm:$0xff]
    %v1957 = vld [vmem:[#allocation2 + $0xbe8] sm:$0xff]
    %v1958 = vld [vmem:[#allocation2 + $0xbf0] sm:$0xff]
    %v1959 = vld [vmem:[#allocation2 + $0xbf8] sm:$0xff]
    %v1960 = vld [vmem:[#allocation2 + $0xc00] sm:$0xff]
    %v1961 = vld [vmem:[#allocation2 + $0xc08] sm:$0xff]
    %v1962 = vld [vmem:[#allocation2 + $0xc10] sm:$0xff]
    %v1963 = vld [vmem:[#allocation2 + $0xc18] sm:$0xff]
    %v1964 = vld [vmem:[#allocation2 + $0xc20] sm:$0xff]
    %v1965 = vld [vmem:[#allocation2 + $0xc28] sm:$0xff]
    %v1966 = vld [vmem:[#allocation2 + $0xc30] sm:$0xff]
    %v1967 = vld [vmem:[#allocation2 + $0xc38] sm:$0xff]
    %v1968 = vld [vmem:[#allocation2 + $0xc40] sm:$0xff]
    %v1969 = vld [vmem:[#allocation2 + $0xc48] sm:$0xff]
    %v1970 = vld [vmem:[#allocation2 + $0xc50] sm:$0xff]
    %v1971 = vld [vmem:[#allocation2 + $0xc58] sm:$0xff]
    %v1972 = vld [vmem:[#allocation2 + $0xc60] sm:$0xff]
    %v1973 = vld [vmem:[#allocation2 + $0xc68] sm:$0xff]
    %v1974 = vld [vmem:[#allocation2 + $0xc70] sm:$0xff]
    %v1975 = vld [vmem:[#allocation2 + $0xc78] sm:$0xff]
    %v1976 = vld [vmem:[#allocation2 + $0xc80] sm:$0xff]
    %v1977 = vld [vmem:[#allocation2 + $0xc88] sm:$0xff]
    %v1978 = vld [vmem:[#allocation2 + $0xc90] sm:$0xff]
    %v1979 = vld [vmem:[#allocation2 + $0xc98] sm:$0xff]
    %v1980 = vld [vmem:[#allocation2 + $0xca0] sm:$0xff]
    %v1981 = vld [vmem:[#allocation2 + $0xca8] sm:$0xff]
    %v1982 = vld [vmem:[#allocation2 + $0xcb0] sm:$0xff]
    %v1983 = vld [vmem:[#allocation2 + $0xcb8] sm:$0xff]
    %v1984 = vld [vmem:[#allocation2 + $0xcc0] sm:$0xff]
    %v1985 = vld [vmem:[#allocation2 + $0xcc8] sm:$0xff]
    %v1986 = vld [vmem:[#allocation2 + $0xcd0] sm:$0xff]
    %v1987 = vld [vmem:[#allocation2 + $0xcd8] sm:$0xff]
    %v1988 = vld [vmem:[#allocation2 + $0xce0] sm:$0xff]
    %v1989 = vld [vmem:[#allocation2 + $0xce8] sm:$0xff]
    %v1990 = vld [vmem:[#allocation2 + $0xcf0] sm:$0xff]
    %v1991 = vld [vmem:[#allocation2 + $0xcf8] sm:$0xff]
    %v1992 = vld [vmem:[#allocation2 + $0xd00] sm:$0xff]
    %v1993 = vld [vmem:[#allocation2 + $0xd08] sm:$0xff]
    %v1994 = vld [vmem:[#allocation2 + $0xd10] sm:$0xff]
    %v1995 = vld [vmem:[#allocation2 + $0xd18] sm:$0xff]
    %v1996 = vld [vmem:[#allocation2 + $0xd20] sm:$0xff]
    %v1997 = vld [vmem:[#allocation2 + $0xd28] sm:$0xff]
    %v1998 = vld [vmem:[#allocation2 + $0xd30] sm:$0xff]
    %v1999 = vld [vmem:[#allocation2 + $0xd38] sm:$0xff]
    %v2000 = vld [vmem:[#allocation2 + $0xd40] sm:$0xff]
    %v2001 = vld [vmem:[#allocation2 + $0xd48] sm:$0xff]
    %v2002 = vld [vmem:[#allocation2 + $0xd50] sm:$0xff]
    %v2003 = vld [vmem:[#allocation2 + $0xd58] sm:$0xff]
    %v2004 = vld [vmem:[#allocation2 + $0xd60] sm:$0xff]
    %v2005 = vld [vmem:[#allocation2 + $0xd68] sm:$0xff]
    %v2006 = vld [vmem:[#allocation2 + $0xd70] sm:$0xff]
    %v2007 = vld [vmem:[#allocation2 + $0xd78] sm:$0xff]
    %v2008 = vld [vmem:[#allocation2 + $0xd80] sm:$0xff]
    %v2009 = vld [vmem:[#allocation2 + $0xd88] sm:$0xff]
    %v2010 = vld [vmem:[#allocation2 + $0xd90] sm:$0xff]
    %v2011 = vld [vmem:[#allocation2 + $0xd98] sm:$0xff]
    %v2012 = vld [vmem:[#allocation2 + $0xda0] sm:$0xff]
    %v2013 = vld [vmem:[#allocation2 + $0xda8] sm:$0xff]
    %v2014 = vld [vmem:[#allocation2 + $0xdb0] sm:$0xff]
    %v2015 = vld [vmem:[#allocation2 + $0xdb8] sm:$0xff]
    %v2016 = vld [vmem:[#allocation2 + $0xdc0] sm:$0xff]
    %v2017 = vld [vmem:[#allocation2 + $0xdc8] sm:$0xff]
    %v2018 = vld [vmem:[#allocation2 + $0xdd0] sm:$0xff]
    %v2019 = vld [vmem:[#allocation2 + $0xdd8] sm:$0xff]
    %v2020 = vld [vmem:[#allocation2 + $0xde0] sm:$0xff]
    %v2021 = vld [vmem:[#allocation2 + $0xde8] sm:$0xff]
    %v2022 = vld [vmem:[#allocation2 + $0xdf0] sm:$0xff]
    %v2023 = vld [vmem:[#allocation2 + $0xdf8] sm:$0xff]
    %v2024 = vld [vmem:[#allocation2 + $0xe00] sm:$0xff]
    %v2025 = vld [vmem:[#allocation2 + $0xe08] sm:$0xff]
    %v2026 = vld [vmem:[#allocation2 + $0xe10] sm:$0xff]
    %v2027 = vld [vmem:[#allocation2 + $0xe18] sm:$0xff]
    %v2028 = vld [vmem:[#allocation2 + $0xe20] sm:$0xff]
    %v2029 = vld [vmem:[#allocation2 + $0xe28] sm:$0xff]
    %v2030 = vld [vmem:[#allocation2 + $0xe30] sm:$0xff]
    %v2031 = vld [vmem:[#allocation2 + $0xe38] sm:$0xff]
    %v2032 = vld [vmem:[#allocation2 + $0xe40] sm:$0xff]
    %v2033 = vld [vmem:[#allocation2 + $0xe48] sm:$0xff]
    %v2034 = vld [vmem:[#allocation2 + $0xe50] sm:$0xff]
    %v2035 = vld [vmem:[#allocation2 + $0xe58] sm:$0xff]
    %v2036 = vld [vmem:[#allocation2 + $0xe60] sm:$0xff]
    %v2037 = vld [vmem:[#allocation2 + $0xe68] sm:$0xff]
    %v2038 = vld [vmem:[#allocation2 + $0xe70] sm:$0xff]
    %v2039 = vld [vmem:[#allocation2 + $0xe78] sm:$0xff]
    %v2040 = vld [vmem:[#allocation2 + $0xe80] sm:$0xff]
    %v2041 = vld [vmem:[#allocation2 + $0xe88] sm:$0xff]
    %v2042 = vld [vmem:[#allocation2 + $0xe90] sm:$0xff]
    %v2043 = vld [vmem:[#allocation2 + $0xe98] sm:$0xff]
    %v2044 = vld [vmem:[#allocation2 + $0xea0] sm:$0xff]
    %v2045 = vld [vmem:[#allocation2 + $0xea8] sm:$0xff]
    %v2046 = vld [vmem:[#allocation2 + $0xeb0] sm:$0xff]
    %v2047 = vld [vmem:[#allocation2 + $0xeb8] sm:$0xff]
    %v2048 = vld [vmem:[#allocation2 + $0xec0] sm:$0xff]
    %v2049 = vld [vmem:[#allocation2 + $0xec8] sm:$0xff]
    %v2050 = vld [vmem:[#allocation2 + $0xed0] sm:$0xff]
    %v2051 = vld [vmem:[#allocation2 + $0xed8] sm:$0xff]
    %v2052 = vld [vmem:[#allocation2 + $0xee0] sm:$0xff]
    %v2053 = vld [vmem:[#allocation2 + $0xee8] sm:$0xff]
    %v2054 = vld [vmem:[#allocation2 + $0xef0] sm:$0xff]
    %v2055 = vld [vmem:[#allocation2 + $0xef8] sm:$0xff]
    %2056 = vmatprep.subr.bf16.mxu0 %v1913
    %2057 = vmatpush1.bf16.msra.mxu0 %v1912
    %2058 = vmatprep.subr.bf16.mxu0 %v1919
    %2059 = vmatpush1.bf16.msra.mxu0 %v1918
    %2060 = vmatprep.subr.bf16.mxu0 %v1925
    %2061 = vmatpush1.bf16.msra.mxu0 %v1924
    %2062 = vmatprep.subr.bf16.mxu0 %v1931
    %2063 = vmatpush1.bf16.msra.mxu0 %v1930
    %2064 = vmatprep.subr.bf16.mxu0 %v1937
    %2065 = vmatpush1.bf16.msra.mxu0 %v1936
    %2066 = vmatprep.subr.bf16.mxu0 %v1943
    %2067 = vmatpush1.bf16.msra.mxu0 %v1942
    %2068 = vmatprep.subr.bf16.mxu0 %v1949
    %2069 = vmatpush1.bf16.msra.mxu0 %v1948
    %2070 = vmatprep.subr.bf16.mxu0 %v1955
    %2071 = vmatpush1.bf16.msra.mxu0 %v1954
    %2072 = vmatprep.subr.bf16.mxu0 %v1961
    %2073 = vmatpush1.bf16.msra.mxu0 %v1960
    %2074 = vmatprep.subr.bf16.mxu0 %v1967
    %2075 = vmatpush1.bf16.msra.mxu0 %v1966
    %2076 = vmatprep.subr.bf16.mxu0 %v1973
    %2077 = vmatpush1.bf16.msra.mxu0 %v1972
    %2078 = vmatprep.subr.bf16.mxu0 %v1979
    %2079 = vmatpush1.bf16.msra.mxu0 %v1978
    %2080 = vmatprep.subr.bf16.mxu0 %v1985
    %2081 = vmatpush1.bf16.msra.mxu0 %v1984
    %2082 = vmatprep.subr.bf16.mxu0 %v1991
    %2083 = vmatpush1.bf16.msra.mxu0 %v1990
    %2084 = vmatprep.subr.bf16.mxu0 %v1997
    %2085 = vmatpush1.bf16.msra.mxu0 %v1996
    %2086 = vmatprep.subr.bf16.mxu0 %v2003
    %2087 = vmatpush1.bf16.msra.mxu0 %v2002
    %2088 = vmatprep.mubr.bf16.mxu0 %v1289
    %2089 = vmatmul.mubr.bf16.gmra.mrb[0].mxu0 %v1288
    %v2090 = vpop.f32.mrb[0].mxu0
    %v2091 = vadd.f32 0.0, %v2090
    %v2092 = vpop.f32.mrb[0].mxu0
    %v2093 = vadd.f32 0.0, %v2092
    %v2094 = vpop.f32.mrb[0].mxu0
    %v2095 = vpop.f32.mrb[0].mxu0
    %2096 = vdwg.mxu0
    %2097 = vmatprep.subr.bf16.mxu0 %v2009
    %2098 = vmatpush1.bf16.msra.mxu0 %v2008
    %2099 = vmatprep.subr.bf16.mxu0 %v2015
    %2100 = vmatpush1.bf16.msra.mxu0 %v2014
    %2101 = vmatprep.subr.bf16.mxu0 %v2021
    %2102 = vmatpush1.bf16.msra.mxu0 %v2020
    %2103 = vmatprep.subr.bf16.mxu0 %v2027
    %2104 = vmatpush1.bf16.msra.mxu0 %v2026
    %2105 = vmatprep.subr.bf16.mxu0 %v2033
    %2106 = vmatpush1.bf16.msra.mxu0 %v2032
    %2107 = vmatprep.subr.bf16.mxu0 %v2039
    %2108 = vmatpush1.bf16.msra.mxu0 %v2038
    %2109 = vmatprep.subr.bf16.mxu0 %v2045
    %2110 = vmatpush1.bf16.msra.mxu0 %v2044
    %2111 = vmatprep.subr.bf16.mxu0 %v2051
    %2112 = vmatpush1.bf16.msra.mxu0 %v2050
    %2113 = vmatprep.subr.bf16.mxu0 0
    %2114 = vmatpush1.bf16.msra.mxu0 0
    %2115 = vmatprep.subr.bf16.mxu0 0
    %2116 = vmatpush1.bf16.msra.mxu0 0
    %2117 = vmatprep.subr.bf16.mxu0 0
    %2118 = vmatpush1.bf16.msra.mxu0 0
    %2119 = vmatprep.subr.bf16.mxu0 0
    %2120 = vmatpush1.bf16.msra.mxu0 0
    %2121 = vmatprep.subr.bf16.mxu0 0
    %2122 = vmatpush1.bf16.msra.mxu0 0
    %2123 = vmatprep.subr.bf16.mxu0 0
    %2124 = vmatpush1.bf16.msra.mxu0 0
    %2125 = vmatprep.subr.bf16.mxu0 0
    %2126 = vmatpush1.bf16.msra.mxu0 0
    %2127 = vmatprep.subr.bf16.mxu0 0
    %2128 = vmatpush1.bf16.msra.mxu0 0
    %2129 = vmatprep.mubr.bf16.mxu0 0
    %2130 = vmatmul.mubr.bf16.gmra.mrb[0].mxu0 %v1290
    %v2131 = vpop.f32.mrb[0].mxu0
    %v2132 = vadd.f32 %v2091, %v2131
    %v2133 = vpop.f32.mrb[0].mxu0
    %v2134 = vadd.f32 %v2093, %v2133
    %v2135 = vpop.f32.mrb[0].mxu0
    %v2136 = vpop.f32.mrb[0].mxu0
    %2137 = vdwg.mxu0
    %2138 = vmatprep.subr.bf16.mxu0 %v1915
    %2139 = vmatpush1.bf16.msra.mxu0 %v1914
    %2140 = vmatprep.subr.bf16.mxu0 %v1921
    %2141 = vmatpush1.bf16.msra.mxu0 %v1920
    %2142 = vmatprep.subr.bf16.mxu0 %v1927
    %2143 = vmatpush1.bf16.msra.mxu0 %v1926
    %2144 = vmatprep.subr.bf16.mxu0 %v1933
    %2145 = vmatpush1.bf16.msra.mxu0 %v1932
    %2146 = vmatprep.subr.bf16.mxu0 %v1939
    %2147 = vmatpush1.bf16.msra.mxu0 %v1938
    %2148 = vmatprep.subr.bf16.mxu0 %v1945
    %2149 = vmatpush1.bf16.msra.mxu0 %v1944
    %2150 = vmatprep.subr.bf16.mxu0 %v1951
    %2151 = vmatpush1.bf16.msra.mxu0 %v1950
    %2152 = vmatprep.subr.bf16.mxu0 %v1957
    %2153 = vmatpush1.bf16.msra.mxu0 %v1956
    %2154 = vmatprep.subr.bf16.mxu0 %v1963
    %2155 = vmatpush1.bf16.msra.mxu0 %v1962
    %2156 = vmatprep.subr.bf16.mxu0 %v1969
    %2157 = vmatpush1.bf16.msra.mxu0 %v1968
    %2158 = vmatprep.subr.bf16.mxu0 %v1975
    %2159 = vmatpush1.bf16.msra.mxu0 %v1974
    %2160 = vmatprep.subr.bf16.mxu0 %v1981
    %2161 = vmatpush1.bf16.msra.mxu0 %v1980
    %2162 = vmatprep.subr.bf16.mxu0 %v1987
    %2163 = vmatpush1.bf16.msra.mxu0 %v1986
    %2164 = vmatprep.subr.bf16.mxu0 %v1993
    %2165 = vmatpush1.bf16.msra.mxu0 %v1992
    %2166 = vmatprep.subr.bf16.mxu0 %v1999
    %2167 = vmatpush1.bf16.msra.mxu0 %v1998
    %2168 = vmatprep.subr.bf16.mxu0 %v2005
    %2169 = vmatpush1.bf16.msra.mxu0 %v2004
    %2170 = vmatprep.mubr.bf16.mxu0 %v1289
    %2171 = vmatmul.mubr.bf16.gmra.mrb[0].mxu0 %v1288
    %v2172 = vpop.f32.mrb[0].mxu0
    %v2173 = vadd.f32 0.0, %v2172
    %v2174 = vpop.f32.mrb[0].mxu0
    %v2175 = vadd.f32 0.0, %v2174
    %v2176 = vpop.f32.mrb[0].mxu0
    %v2177 = vpop.f32.mrb[0].mxu0
    %2178 = vdwg.mxu0
    %2179 = vmatprep.subr.bf16.mxu0 %v2011
    %2180 = vmatpush1.bf16.msra.mxu0 %v2010
    %2181 = vmatprep.subr.bf16.mxu0 %v2017
    %2182 = vmatpush1.bf16.msra.mxu0 %v2016
    %2183 = vmatprep.subr.bf16.mxu0 %v2023
    %2184 = vmatpush1.bf16.msra.mxu0 %v2022
    %2185 = vmatprep.subr.bf16.mxu0 %v2029
    %2186 = vmatpush1.bf16.msra.mxu0 %v2028
    %2187 = vmatprep.subr.bf16.mxu0 %v2035
    %2188 = vmatpush1.bf16.msra.mxu0 %v2034
    %2189 = vmatprep.subr.bf16.mxu0 %v2041
    %2190 = vmatpush1.bf16.msra.mxu0 %v2040
    %2191 = vmatprep.subr.bf16.mxu0 %v2047
    %2192 = vmatpush1.bf16.msra.mxu0 %v2046
    %2193 = vmatprep.subr.bf16.mxu0 %v2053
    %2194 = vmatpush1.bf16.msra.mxu0 %v2052
    %2195 = vmatprep.subr.bf16.mxu0 0
    %2196 = vmatpush1.bf16.msra.mxu0 0
    %2197 = vmatprep.subr.bf16.mxu0 0
    %2198 = vmatpush1.bf16.msra.mxu0 0
    %2199 = vmatprep.subr.bf16.mxu0 0
    %2200 = vmatpush1.bf16.msra.mxu0 0
    %2201 = vmatprep.subr.bf16.mxu0 0
    %2202 = vmatpush1.bf16.msra.mxu0 0
    %2203 = vmatprep.subr.bf16.mxu0 0
    %2204 = vmatpush1.bf16.msra.mxu0 0
    %2205 = vmatprep.subr.bf16.mxu0 0
    %2206 = vmatpush1.bf16.msra.mxu0 0
    %2207 = vmatprep.subr.bf16.mxu0 0
    %2208 = vmatpush1.bf16.msra.mxu0 0
    %2209 = vmatprep.subr.bf16.mxu0 0
    %2210 = vmatpush1.bf16.msra.mxu0 0
    %2211 = vmatprep.mubr.bf16.mxu0 0
    %2212 = vmatmul.mubr.bf16.gmra.mrb[0].mxu0 %v1290
    %v2213 = vpop.f32.mrb[0].mxu0
    %v2214 = vadd.f32 %v2173, %v2213
    %v2215 = vpop.f32.mrb[0].mxu0
    %v2216 = vadd.f32 %v2175, %v2215
    %v2217 = vpop.f32.mrb[0].mxu0
    %v2218 = vpop.f32.mrb[0].mxu0
    %2219 = vdwg.mxu0
    %2220 = vmatprep.subr.bf16.mxu0 %v1917
    %2221 = vmatpush1.bf16.msra.mxu0 %v1916
    %2222 = vmatprep.subr.bf16.mxu0 %v1923
    %2223 = vmatpush1.bf16.msra.mxu0 %v1922
    %2224 = vmatprep.subr.bf16.mxu0 %v1929
    %2225 = vmatpush1.bf16.msra.mxu0 %v1928
    %2226 = vmatprep.subr.bf16.mxu0 %v1935
    %2227 = vmatpush1.bf16.msra.mxu0 %v1934
    %2228 = vmatprep.subr.bf16.mxu0 %v1941
    %2229 = vmatpush1.bf16.msra.mxu0 %v1940
    %2230 = vmatprep.subr.bf16.mxu0 %v1947
    %2231 = vmatpush1.bf16.msra.mxu0 %v1946
    %2232 = vmatprep.subr.bf16.mxu0 %v1953
    %2233 = vmatpush1.bf16.msra.mxu0 %v1952
    %2234 = vmatprep.subr.bf16.mxu0 %v1959
    %2235 = vmatpush1.bf16.msra.mxu0 %v1958
    %2236 = vmatprep.subr.bf16.mxu0 %v1965
    %2237 = vmatpush1.bf16.msra.mxu0 %v1964
    %2238 = vmatprep.subr.bf16.mxu0 %v1971
    %2239 = vmatpush1.bf16.msra.mxu0 %v1970
    %2240 = vmatprep.subr.bf16.mxu0 %v1977
    %2241 = vmatpush1.bf16.msra.mxu0 %v1976
    %2242 = vmatprep.subr.bf16.mxu0 %v1983
    %2243 = vmatpush1.bf16.msra.mxu0 %v1982
    %2244 = vmatprep.subr.bf16.mxu0 %v1989
    %2245 = vmatpush1.bf16.msra.mxu0 %v1988
    %2246 = vmatprep.subr.bf16.mxu0 %v1995
    %2247 = vmatpush1.bf16.msra.mxu0 %v1994
    %2248 = vmatprep.subr.bf16.mxu0 %v2001
    %2249 = vmatpush1.bf16.msra.mxu0 %v2000
    %2250 = vmatprep.subr.bf16.mxu0 %v2007
    %2251 = vmatpush1.bf16.msra.mxu0 %v2006
    %2252 = vmatprep.mubr.bf16.mxu0 %v1289
    %2253 = vmatmul.mubr.bf16.gmra.mrb[0].mxu0 %v1288
    %v2254 = vpop.f32.mrb[0].mxu0
    %v2255 = vadd.f32 0.0, %v2254
    %v2256 = vpop.f32.mrb[0].mxu0
    %v2257 = vadd.f32 0.0, %v2256
    %v2258 = vpop.f32.mrb[0].mxu0
    %v2259 = vpop.f32.mrb[0].mxu0
    %2260 = vdwg.mxu0
    %2261 = vmatprep.subr.bf16.mxu0 %v2013
    %2262 = vmatpush1.bf16.msra.mxu0 %v2012
    %2263 = vmatprep.subr.bf16.mxu0 %v2019
    %2264 = vmatpush1.bf16.msra.mxu0 %v2018
    %2265 = vmatprep.subr.bf16.mxu0 %v2025
    %2266 = vmatpush1.bf16.msra.mxu0 %v2024
    %2267 = vmatprep.subr.bf16.mxu0 %v2031
    %2268 = vmatpush1.bf16.msra.mxu0 %v2030
    %2269 = vmatprep.subr.bf16.mxu0 %v2037
    %2270 = vmatpush1.bf16.msra.mxu0 %v2036
    %2271 = vmatprep.subr.bf16.mxu0 %v2043
    %2272 = vmatpush1.bf16.msra.mxu0 %v2042
    %2273 = vmatprep.subr.bf16.mxu0 %v2049
    %2274 = vmatpush1.bf16.msra.mxu0 %v2048
    %2275 = vmatprep.subr.bf16.mxu0 %v2055
    %2276 = vmatpush1.bf16.msra.mxu0 %v2054
    %2277 = vmatprep.subr.bf16.mxu0 0
    %2278 = vmatpush1.bf16.msra.mxu0 0
    %2279 = vmatprep.subr.bf16.mxu0 0
    %2280 = vmatpush1.bf16.msra.mxu0 0
    %2281 = vmatprep.subr.bf16.mxu0 0
    %2282 = vmatpush1.bf16.msra.mxu0 0
    %2283 = vmatprep.subr.bf16.mxu0 0
    %2284 = vmatpush1.bf16.msra.mxu0 0
    %2285 = vmatprep.subr.bf16.mxu0 0
    %2286 = vmatpush1.bf16.msra.mxu0 0
    %2287 = vmatprep.subr.bf16.mxu0 0
    %2288 = vmatpush1.bf16.msra.mxu0 0
    %2289 = vmatprep.subr.bf16.mxu0 0
    %2290 = vmatpush1.bf16.msra.mxu0 0
    %2291 = vmatprep.subr.bf16.mxu0 0
    %2292 = vmatpush1.bf16.msra.mxu0 0
    %2293 = vmatprep.mubr.bf16.mxu0 0
    %2294 = vmatmul.mubr.bf16.gmra.mrb[0].mxu0 %v1290
    %v2295 = vpop.f32.mrb[0].mxu0
    %v2296 = vadd.f32 %v2255, %v2295
    %v2297 = vpop.f32.mrb[0].mxu0
    %v2298 = vadd.f32 %v2257, %v2297
    %v2299 = vpop.f32.mrb[0].mxu0
    %v2300 = vpop.f32.mrb[0].mxu0
    %2301 = vdwg.mxu0
    %2302 = vmatprep.subr.bf16.mxu0 %v1769
    %2303 = vmatpush1.bf16.msra.mxu0 %v1768
    %2304 = vmatprep.subr.bf16.mxu0 %v1775
    %2305 = vmatpush1.bf16.msra.mxu0 %v1774
    %2306 = vmatprep.subr.bf16.mxu0 %v1781
    %2307 = vmatpush1.bf16.msra.mxu0 %v1780
    %2308 = vmatprep.subr.bf16.mxu0 %v1787
    %2309 = vmatpush1.bf16.msra.mxu0 %v1786
    %2310 = vmatprep.subr.bf16.mxu0 %v1793
    %2311 = vmatpush1.bf16.msra.mxu0 %v1792
    %2312 = vmatprep.subr.bf16.mxu0 %v1799
    %2313 = vmatpush1.bf16.msra.mxu0 %v1798
    %2314 = vmatprep.subr.bf16.mxu0 %v1805
    %2315 = vmatpush1.bf16.msra.mxu0 %v1804
    %2316 = vmatprep.subr.bf16.mxu0 %v1811
    %2317 = vmatpush1.bf16.msra.mxu0 %v1810
    %2318 = vmatprep.subr.bf16.mxu0 %v1817
    %2319 = vmatpush1.bf16.msra.mxu0 %v1816
    %2320 = vmatprep.subr.bf16.mxu0 %v1823
    %2321 = vmatpush1.bf16.msra.mxu0 %v1822
    %2322 = vmatprep.subr.bf16.mxu0 %v1829
    %2323 = vmatpush1.bf16.msra.mxu0 %v1828
    %2324 = vmatprep.subr.bf16.mxu0 %v1835
    %2325 = vmatpush1.bf16.msra.mxu0 %v1834
    %2326 = vmatprep.subr.bf16.mxu0 %v1841
    %2327 = vmatpush1.bf16.msra.mxu0 %v1840
    %2328 = vmatprep.subr.bf16.mxu0 %v1847
    %2329 = vmatpush1.bf16.msra.mxu0 %v1846
    %2330 = vmatprep.subr.bf16.mxu0 %v1853
    %2331 = vmatpush1.bf16.msra.mxu0 %v1852
    %2332 = vmatprep.subr.bf16.mxu0 %v1859
    %2333 = vmatpush1.bf16.msra.mxu0 %v1858
    %2334 = vmatprep.mubr.bf16.mxu0 %v977
    %2335 = vmatmul.mubr.bf16.gmra.mrb[0].mxu0 %v976
    %v2336 = vpop.f32.mrb[0].mxu0
    %v2337 = vadd.f32 %v2132, %v2336
    %v2338 = vpop.f32.mrb[0].mxu0
    %v2339 = vadd.f32 %v2134, %v2338
    %v2340 = vpop.f32.mrb[0].mxu0
    %v2341 = vpop.f32.mrb[0].mxu0
    %2342 = vdwg.mxu0
    %2343 = vmatprep.subr.bf16.mxu0 %v1865
    %2344 = vmatpush1.bf16.msra.mxu0 %v1864
    %2345 = vmatprep.subr.bf16.mxu0 %v1871
    %2346 = vmatpush1.bf16.msra.mxu0 %v1870
    %2347 = vmatprep.subr.bf16.mxu0 %v1877
    %2348 = vmatpush1.bf16.msra.mxu0 %v1876
    %2349 = vmatprep.subr.bf16.mxu0 %v1883
    %2350 = vmatpush1.bf16.msra.mxu0 %v1882
    %2351 = vmatprep.subr.bf16.mxu0 %v1889
    %2352 = vmatpush1.bf16.msra.mxu0 %v1888
    %2353 = vmatprep.subr.bf16.mxu0 %v1895
    %2354 = vmatpush1.bf16.msra.mxu0 %v1894
    %2355 = vmatprep.subr.bf16.mxu0 %v1901
    %2356 = vmatpush1.bf16.msra.mxu0 %v1900
    %2357 = vmatprep.subr.bf16.mxu0 %v1907
    %2358 = vmatpush1.bf16.msra.mxu0 %v1906
    %2359 = vmatprep.subr.bf16.mxu0 0
    %2360 = vmatpush1.bf16.msra.mxu0 0
    %2361 = vmatprep.subr.bf16.mxu0 0
    %2362 = vmatpush1.bf16.msra.mxu0 0
    %2363 = vmatprep.subr.bf16.mxu0 0
    %2364 = vmatpush1.bf16.msra.mxu0 0
    %2365 = vmatprep.subr.bf16.mxu0 0
    %2366 = vmatpush1.bf16.msra.mxu0 0
    %2367 = vmatprep.subr.bf16.mxu0 0
    %2368 = vmatpush1.bf16.msra.mxu0 0
    %2369 = vmatprep.subr.bf16.mxu0 0
    %2370 = vmatpush1.bf16.msra.mxu0 0
    %2371 = vmatprep.subr.bf16.mxu0 0
    %2372 = vmatpush1.bf16.msra.mxu0 0
    %2373 = vmatprep.subr.bf16.mxu0 0
    %2374 = vmatpush1.bf16.msra.mxu0 0
    %2375 = vmatprep.mubr.bf16.mxu0 0
    %2376 = vmatmul.mubr.bf16.gmra.mrb[0].mxu0 %v978
    %v2377 = vpop.f32.mrb[0].mxu0
    %v2378 = vadd.f32 %v2337, %v2377
    %v2379 = vpop.f32.mrb[0].mxu0
    %v2380 = vadd.f32 %v2339, %v2379
    %v2381 = vpop.f32.mrb[0].mxu0
    %v2382 = vpop.f32.mrb[0].mxu0
    %2383 = vdwg.mxu0
    %2384 = vmatprep.subr.bf16.mxu0 %v1771
    %2385 = vmatpush1.bf16.msra.mxu0 %v1770
    %2386 = vmatprep.subr.bf16.mxu0 %v1777
    %2387 = vmatpush1.bf16.msra.mxu0 %v1776
    %2388 = vmatprep.subr.bf16.mxu0 %v1783
    %2389 = vmatpush1.bf16.msra.mxu0 %v1782
    %2390 = vmatprep.subr.bf16.mxu0 %v1789
    %2391 = vmatpush1.bf16.msra.mxu0 %v1788
    %2392 = vmatprep.subr.bf16.mxu0 %v1795
    %2393 = vmatpush1.bf16.msra.mxu0 %v1794
    %2394 = vmatprep.subr.bf16.mxu0 %v1801
    %2395 = vmatpush1.bf16.msra.mxu0 %v1800
    %2396 = vmatprep.subr.bf16.mxu0 %v1807
    %2397 = vmatpush1.bf16.msra.mxu0 %v1806
    %2398 = vmatprep.subr.bf16.mxu0 %v1813
    %2399 = vmatpush1.bf16.msra.mxu0 %v1812
    %2400 = vmatprep.subr.bf16.mxu0 %v1819
    %2401 = vmatpush1.bf16.msra.mxu0 %v1818
    %2402 = vmatprep.subr.bf16.mxu0 %v1825
    %2403 = vmatpush1.bf16.msra.mxu0 %v1824
    %2404 = vmatprep.subr.bf16.mxu0 %v1831
    %2405 = vmatpush1.bf16.msra.mxu0 %v1830
    %2406 = vmatprep.subr.bf16.mxu0 %v1837
    %2407 = vmatpush1.bf16.msra.mxu0 %v1836
    %2408 = vmatprep.subr.bf16.mxu0 %v1843
    %2409 = vmatpush1.bf16.msra.mxu0 %v1842
    %2410 = vmatprep.subr.bf16.mxu0 %v1849
    %2411 = vmatpush1.bf16.msra.mxu0 %v1848
    %2412 = vmatprep.subr.bf16.mxu0 %v1855
    %2413 = vmatpush1.bf16.msra.mxu0 %v1854
    %2414 = vmatprep.subr.bf16.mxu0 %v1861
    %2415 = vmatpush1.bf16.msra.mxu0 %v1860
    %2416 = vmatprep.mubr.bf16.mxu0 %v977
    %2417 = vmatmul.mubr.bf16.gmra.mrb[0].mxu0 %v976
    %v2418 = vpop.f32.mrb[0].mxu0
    %v2419 = vadd.f32 %v2214, %v2418
    %v2420 = vpop.f32.mrb[0].mxu0
    %v2421 = vadd.f32 %v2216, %v2420
    %v2422 = vpop.f32.mrb[0].mxu0
    %v2423 = vpop.f32.mrb[0].mxu0
    %2424 = vdwg.mxu0
    %2425 = vmatprep.subr.bf16.mxu0 %v1867
    %2426 = vmatpush1.bf16.msra.mxu0 %v1866
    %2427 = vmatprep.subr.bf16.mxu0 %v1873
    %2428 = vmatpush1.bf16.msra.mxu0 %v1872
    %2429 = vmatprep.subr.bf16.mxu0 %v1879
    %2430 = vmatpush1.bf16.msra.mxu0 %v1878
    %2431 = vmatprep.subr.bf16.mxu0 %v1885
    %2432 = vmatpush1.bf16.msra.mxu0 %v1884
    %2433 = vmatprep.subr.bf16.mxu0 %v1891
    %2434 = vmatpush1.bf16.msra.mxu0 %v1890
    %2435 = vmatprep.subr.bf16.mxu0 %v1897
    %2436 = vmatpush1.bf16.msra.mxu0 %v1896
    %2437 = vmatprep.subr.bf16.mxu0 %v1903
    %2438 = vmatpush1.bf16.msra.mxu0 %v1902
    %2439 = vmatprep.subr.bf16.mxu0 %v1909
    %2440 = vmatpush1.bf16.msra.mxu0 %v1908
    %2441 = vmatprep.subr.bf16.mxu0 0
    %2442 = vmatpush1.bf16.msra.mxu0 0
    %2443 = vmatprep.subr.bf16.mxu0 0
    %2444 = vmatpush1.bf16.msra.mxu0 0
    %2445 = vmatprep.subr.bf16.mxu0 0
    %2446 = vmatpush1.bf16.msra.mxu0 0
    %2447 = vmatprep.subr.bf16.mxu0 0
    %2448 = vmatpush1.bf16.msra.mxu0 0
    %2449 = vmatprep.subr.bf16.mxu0 0
    %2450 = vmatpush1.bf16.msra.mxu0 0
    %2451 = vmatprep.subr.bf16.mxu0 0
    %2452 = vmatpush1.bf16.msra.mxu0 0
    %2453 = vmatprep.subr.bf16.mxu0 0
    %2454 = vmatpush1.bf16.msra.mxu0 0
    %2455 = vmatprep.subr.bf16.mxu0 0
    %2456 = vmatpush1.bf16.msra.mxu0 0
    %2457 = vmatprep.mubr.bf16.mxu0 0
    %2458 = vmatmul.mubr.bf16.gmra.mrb[0].mxu0 %v978
    %v2459 = vpop.f32.mrb[0].mxu0
    %v2460 = vadd.f32 %v2419, %v2459
    %v2461 = vpop.f32.mrb[0].mxu0
    %v2462 = vadd.f32 %v2421, %v2461
    %v2463 = vpop.f32.mrb[0].mxu0
    %v2464 = vpop.f32.mrb[0].mxu0
    %2465 = vdwg.mxu0
    %2466 = vmatprep.subr.bf16.mxu0 %v1773
    %2467 = vmatpush1.bf16.msra.mxu0 %v1772
    %2468 = vmatprep.subr.bf16.mxu0 %v1779
    %2469 = vmatpush1.bf16.msra.mxu0 %v1778
    %2470 = vmatprep.subr.bf16.mxu0 %v1785
    %2471 = vmatpush1.bf16.msra.mxu0 %v1784
    %2472 = vmatprep.subr.bf16.mxu0 %v1791
    %2473 = vmatpush1.bf16.msra.mxu0 %v1790
    %2474 = vmatprep.subr.bf16.mxu0 %v1797
    %2475 = vmatpush1.bf16.msra.mxu0 %v1796
    %2476 = vmatprep.subr.bf16.mxu0 %v1803
    %2477 = vmatpush1.bf16.msra.mxu0 %v1802
    %2478 = vmatprep.subr.bf16.mxu0 %v1809
    %2479 = vmatpush1.bf16.msra.mxu0 %v1808
    %2480 = vmatprep.subr.bf16.mxu0 %v1815
    %2481 = vmatpush1.bf16.msra.mxu0 %v1814
    %2482 = vmatprep.subr.bf16.mxu0 %v1821
    %2483 = vmatpush1.bf16.msra.mxu0 %v1820
    %2484 = vmatprep.subr.bf16.mxu0 %v1827
    %2485 = vmatpush1.bf16.msra.mxu0 %v1826
    %2486 = vmatprep.subr.bf16.mxu0 %v1833
    %2487 = vmatpush1.bf16.msra.mxu0 %v1832
    %2488 = vmatprep.subr.bf16.mxu0 %v1839
    %2489 = vmatpush1.bf16.msra.mxu0 %v1838
    %2490 = vmatprep.subr.bf16.mxu0 %v1845
    %2491 = vmatpush1.bf16.msra.mxu0 %v1844
    %2492 = vmatprep.subr.bf16.mxu0 %v1851
    %2493 = vmatpush1.bf16.msra.mxu0 %v1850
    %2494 = vmatprep.subr.bf16.mxu0 %v1857
    %2495 = vmatpush1.bf16.msra.mxu0 %v1856
    %2496 = vmatprep.subr.bf16.mxu0 %v1863
    %2497 = vmatpush1.bf16.msra.mxu0 %v1862
    %2498 = vmatprep.mubr.bf16.mxu0 %v977
    %2499 = vmatmul.mubr.bf16.gmra.mrb[0].mxu0 %v976
    %v2500 = vpop.f32.mrb[0].mxu0
    %v2501 = vadd.f32 %v2296, %v2500
    %v2502 = vpop.f32.mrb[0].mxu0
    %v2503 = vadd.f32 %v2298, %v2502
    %v2504 = vpop.f32.mrb[0].mxu0
    %v2505 = vpop.f32.mrb[0].mxu0
    %2506 = vdwg.mxu0
    %2507 = vmatprep.subr.bf16.mxu0 %v1869
    %2508 = vmatpush1.bf16.msra.mxu0 %v1868
    %2509 = vmatprep.subr.bf16.mxu0 %v1875
    %2510 = vmatpush1.bf16.msra.mxu0 %v1874
    %2511 = vmatprep.subr.bf16.mxu0 %v1881
    %2512 = vmatpush1.bf16.msra.mxu0 %v1880
    %2513 = vmatprep.subr.bf16.mxu0 %v1887
    %2514 = vmatpush1.bf16.msra.mxu0 %v1886
    %2515 = vmatprep.subr.bf16.mxu0 %v1893
    %2516 = vmatpush1.bf16.msra.mxu0 %v1892
    %2517 = vmatprep.subr.bf16.mxu0 %v1899
    %2518 = vmatpush1.bf16.msra.mxu0 %v1898
    %2519 = vmatprep.subr.bf16.mxu0 %v1905
    %2520 = vmatpush1.bf16.msra.mxu0 %v1904
    %2521 = vmatprep.subr.bf16.mxu0 %v1911
    %2522 = vmatpush1.bf16.msra.mxu0 %v1910
    %2523 = vmatprep.subr.bf16.mxu0 0
    %2524 = vmatpush1.bf16.msra.mxu0 0
    %2525 = vmatprep.subr.bf16.mxu0 0
    %2526 = vmatpush1.bf16.msra.mxu0 0
    %2527 = vmatprep.subr.bf16.mxu0 0
    %2528 = vmatpush1.bf16.msra.mxu0 0
    %2529 = vmatprep.subr.bf16.mxu0 0
    %2530 = vmatpush1.bf16.msra.mxu0 0
    %2531 = vmatprep.subr.bf16.mxu0 0
    %2532 = vmatpush1.bf16.msra.mxu0 0
    %2533 = vmatprep.subr.bf16.mxu0 0
    %2534 = vmatpush1.bf16.msra.mxu0 0
    %2535 = vmatprep.subr.bf16.mxu0 0
    %2536 = vmatpush1.bf16.msra.mxu0 0
    %2537 = vmatprep.subr.bf16.mxu0 0
    %2538 = vmatpush1.bf16.msra.mxu0 0
    %2539 = vmatprep.mubr.bf16.mxu0 0
    %2540 = vmatmul.mubr.bf16.gmra.mrb[0].mxu0 %v978
    %v2541 = vpop.f32.mrb[0].mxu0
    %v2542 = vadd.f32 %v2501, %v2541
    %v2543 = vpop.f32.mrb[0].mxu0
    %v2544 = vadd.f32 %v2503, %v2543
    %v2545 = vpop.f32.mrb[0].mxu0
    %v2546 = vpop.f32.mrb[0].mxu0
    %2547 = vdwg.mxu0
    %s2548 = smul.u32 4, 96
    %s2549 = smul.u32 %s2548, 6
    %s2550 = sshll.u32 %s2549, 4
    %2551 = dma.done %s77, %s2550
    %v2552 = vpack.c.bf16 %v2378, %v2378
    %v2553 = vpack.c.bf16 %v2380, %v2380
    %v2554 = vpack.c.bf16 %v2460, %v2460
    %v2555 = vpack.c.bf16 %v2462, %v2462
    %v2556 = vpack.c.bf16 %v2542, %v2542
    %v2557 = vpack.c.bf16 %v2544, %v2544
    %v2558 = vld [vmem:[#allocation2 + $0xf00] sm:$0xff]
    %v2559 = vld [vmem:[#allocation2 + $0xf08] sm:$0xff]
    %v2560 = vld [vmem:[#allocation2 + $0xf10] sm:$0xff]
    %v2561 = vld [vmem:[#allocation2 + $0xf18] sm:$0xff]
    %v2562 = vld [vmem:[#allocation2 + $0xf20] sm:$0xff]
    %v2563 = vld [vmem:[#allocation2 + $0xf28] sm:$0xff]
    %v2564 = vld [vmem:[#allocation2 + $0xf30] sm:$0xff]
    %v2565 = vld [vmem:[#allocation2 + $0xf38] sm:$0xff]
    %v2566 = vld [vmem:[#allocation2 + $0xf40] sm:$0xff]
    %v2567 = vld [vmem:[#allocation2 + $0xf48] sm:$0xff]
    %v2568 = vld [vmem:[#allocation2 + $0xf50] sm:$0xff]
    %v2569 = vld [vmem:[#allocation2 + $0xf58] sm:$0xff]
    %v2570 = vld [vmem:[#allocation2 + $0xf60] sm:$0xff]
    %v2571 = vld [vmem:[#allocation2 + $0xf68] sm:$0xff]
    %v2572 = vld [vmem:[#allocation2 + $0xf70] sm:$0xff]
    %v2573 = vld [vmem:[#allocation2 + $0xf78] sm:$0xff]
    %v2574 = vld [vmem:[#allocation2 + $0xf80] sm:$0xff]
    %v2575 = vld [vmem:[#allocation2 + $0xf88] sm:$0xff]
    %v2576 = vld [vmem:[#allocation2 + $0xf90] sm:$0xff]
    %v2577 = vld [vmem:[#allocation2 + $0xf98] sm:$0xff]
    %v2578 = vld [vmem:[#allocation2 + $0xfa0] sm:$0xff]
    %v2579 = vld [vmem:[#allocation2 + $0xfa8] sm:$0xff]
    %v2580 = vld [vmem:[#allocation2 + $0xfb0] sm:$0xff]
    %v2581 = vld [vmem:[#allocation2 + $0xfb8] sm:$0xff]
    %v2582 = vld [vmem:[#allocation2 + $0xfc0] sm:$0xff]
    %v2583 = vld [vmem:[#allocation2 + $0xfc8] sm:$0xff]
    %v2584 = vld [vmem:[#allocation2 + $0xfd0] sm:$0xff]
    %v2585 = vld [vmem:[#allocation2 + $0xfd8] sm:$0xff]
    %v2586 = vld [vmem:[#allocation2 + $0xfe0] sm:$0xff]
    %v2587 = vld [vmem:[#allocation2 + $0xfe8] sm:$0xff]
    %v2588 = vld [vmem:[#allocation2 + $0xff0] sm:$0xff]
    %v2589 = vld [vmem:[#allocation2 + $0xff8] sm:$0xff]
    %v2590 = vld [vmem:[#allocation2 + $0x1000] sm:$0xff]
    %v2591 = vld [vmem:[#allocation2 + $0x1008] sm:$0xff]
    %v2592 = vld [vmem:[#allocation2 + $0x1010] sm:$0xff]
    %v2593 = vld [vmem:[#allocation2 + $0x1018] sm:$0xff]
    %v2594 = vld [vmem:[#allocation2 + $0x1020] sm:$0xff]
    %v2595 = vld [vmem:[#allocation2 + $0x1028] sm:$0xff]
    %v2596 = vld [vmem:[#allocation2 + $0x1030] sm:$0xff]
    %v2597 = vld [vmem:[#allocation2 + $0x1038] sm:$0xff]
    %v2598 = vld [vmem:[#allocation2 + $0x1040] sm:$0xff]
    %v2599 = vld [vmem:[#allocation2 + $0x1048] sm:$0xff]
    %v2600 = vld [vmem:[#allocation2 + $0x1050] sm:$0xff]
    %v2601 = vld [vmem:[#allocation2 + $0x1058] sm:$0xff]
    %v2602 = vld [vmem:[#allocation2 + $0x1060] sm:$0xff]
    %v2603 = vld [vmem:[#allocation2 + $0x1068] sm:$0xff]
    %v2604 = vld [vmem:[#allocation2 + $0x1070] sm:$0xff]
    %v2605 = vld [vmem:[#allocation2 + $0x1078] sm:$0xff]
    %v2606 = vld [vmem:[#allocation2 + $0x1080] sm:$0xff]
    %v2607 = vld [vmem:[#allocation2 + $0x1088] sm:$0xff]
    %v2608 = vld [vmem:[#allocation2 + $0x1090] sm:$0xff]
    %v2609 = vld [vmem:[#allocation2 + $0x1098] sm:$0xff]
    %v2610 = vld [vmem:[#allocation2 + $0x10a0] sm:$0xff]
    %v2611 = vld [vmem:[#allocation2 + $0x10a8] sm:$0xff]
    %v2612 = vld [vmem:[#allocation2 + $0x10b0] sm:$0xff]
    %v2613 = vld [vmem:[#allocation2 + $0x10b8] sm:$0xff]
    %v2614 = vld [vmem:[#allocation2 + $0x10c0] sm:$0xff]
    %v2615 = vld [vmem:[#allocation2 + $0x10c8] sm:$0xff]
    %v2616 = vld [vmem:[#allocation2 + $0x10d0] sm:$0xff]
    %v2617 = vld [vmem:[#allocation2 + $0x10d8] sm:$0xff]
    %v2618 = vld [vmem:[#allocation2 + $0x10e0] sm:$0xff]
    %v2619 = vld [vmem:[#allocation2 + $0x10e8] sm:$0xff]
    %v2620 = vld [vmem:[#allocation2 + $0x10f0] sm:$0xff]
    %v2621 = vld [vmem:[#allocation2 + $0x10f8] sm:$0xff]
    %v2622 = vld [vmem:[#allocation2 + $0x1100] sm:$0xff]
    %v2623 = vld [vmem:[#allocation2 + $0x1108] sm:$0xff]
    %v2624 = vld [vmem:[#allocation2 + $0x1110] sm:$0xff]
    %v2625 = vld [vmem:[#allocation2 + $0x1118] sm:$0xff]
    %v2626 = vld [vmem:[#allocation2 + $0x1120] sm:$0xff]
    %v2627 = vld [vmem:[#allocation2 + $0x1128] sm:$0xff]
    %v2628 = vld [vmem:[#allocation2 + $0x1130] sm:$0xff]
    %v2629 = vld [vmem:[#allocation2 + $0x1138] sm:$0xff]
    %v2630 = vld [vmem:[#allocation2 + $0x1140] sm:$0xff]
    %v2631 = vld [vmem:[#allocation2 + $0x1148] sm:$0xff]
    %v2632 = vld [vmem:[#allocation2 + $0x1150] sm:$0xff]
    %v2633 = vld [vmem:[#allocation2 + $0x1158] sm:$0xff]
    %v2634 = vld [vmem:[#allocation2 + $0x1160] sm:$0xff]
    %v2635 = vld [vmem:[#allocation2 + $0x1168] sm:$0xff]
    %v2636 = vld [vmem:[#allocation2 + $0x1170] sm:$0xff]
    %v2637 = vld [vmem:[#allocation2 + $0x1178] sm:$0xff]
    %v2638 = vld [vmem:[#allocation2 + $0x1180] sm:$0xff]
    %v2639 = vld [vmem:[#allocation2 + $0x1188] sm:$0xff]
    %v2640 = vld [vmem:[#allocation2 + $0x1190] sm:$0xff]
    %v2641 = vld [vmem:[#allocation2 + $0x1198] sm:$0xff]
    %v2642 = vld [vmem:[#allocation2 + $0x11a0] sm:$0xff]
    %v2643 = vld [vmem:[#allocation2 + $0x11a8] sm:$0xff]
    %v2644 = vld [vmem:[#allocation2 + $0x11b0] sm:$0xff]
    %v2645 = vld [vmem:[#allocation2 + $0x11b8] sm:$0xff]
    %v2646 = vld [vmem:[#allocation2 + $0x11c0] sm:$0xff]
    %v2647 = vld [vmem:[#allocation2 + $0x11c8] sm:$0xff]
    %v2648 = vld [vmem:[#allocation2 + $0x11d0] sm:$0xff]
    %v2649 = vld [vmem:[#allocation2 + $0x11d8] sm:$0xff]
    %v2650 = vld [vmem:[#allocation2 + $0x11e0] sm:$0xff]
    %v2651 = vld [vmem:[#allocation2 + $0x11e8] sm:$0xff]
    %v2652 = vld [vmem:[#allocation2 + $0x11f0] sm:$0xff]
    %v2653 = vld [vmem:[#allocation2 + $0x11f8] sm:$0xff]
    %v2654 = vld [vmem:[#allocation2 + $0x1200] sm:$0xff]
    %v2655 = vld [vmem:[#allocation2 + $0x1208] sm:$0xff]
    %v2656 = vld [vmem:[#allocation2 + $0x1210] sm:$0xff]
    %v2657 = vld [vmem:[#allocation2 + $0x1218] sm:$0xff]
    %v2658 = vld [vmem:[#allocation2 + $0x1220] sm:$0xff]
    %v2659 = vld [vmem:[#allocation2 + $0x1228] sm:$0xff]
    %v2660 = vld [vmem:[#allocation2 + $0x1230] sm:$0xff]
    %v2661 = vld [vmem:[#allocation2 + $0x1238] sm:$0xff]
    %v2662 = vld [vmem:[#allocation2 + $0x1240] sm:$0xff]
    %v2663 = vld [vmem:[#allocation2 + $0x1248] sm:$0xff]
    %v2664 = vld [vmem:[#allocation2 + $0x1250] sm:$0xff]
    %v2665 = vld [vmem:[#allocation2 + $0x1258] sm:$0xff]
    %v2666 = vld [vmem:[#allocation2 + $0x1260] sm:$0xff]
    %v2667 = vld [vmem:[#allocation2 + $0x1268] sm:$0xff]
    %v2668 = vld [vmem:[#allocation2 + $0x1270] sm:$0xff]
    %v2669 = vld [vmem:[#allocation2 + $0x1278] sm:$0xff]
    %v2670 = vld [vmem:[#allocation2 + $0x1280] sm:$0xff]
    %v2671 = vld [vmem:[#allocation2 + $0x1288] sm:$0xff]
    %v2672 = vld [vmem:[#allocation2 + $0x1290] sm:$0xff]
    %v2673 = vld [vmem:[#allocation2 + $0x1298] sm:$0xff]
    %v2674 = vld [vmem:[#allocation2 + $0x12a0] sm:$0xff]
    %v2675 = vld [vmem:[#allocation2 + $0x12a8] sm:$0xff]
    %v2676 = vld [vmem:[#allocation2 + $0x12b0] sm:$0xff]
    %v2677 = vld [vmem:[#allocation2 + $0x12b8] sm:$0xff]
    %v2678 = vld [vmem:[#allocation2 + $0x12c0] sm:$0xff]
    %v2679 = vld [vmem:[#allocation2 + $0x12c8] sm:$0xff]
    %v2680 = vld [vmem:[#allocation2 + $0x12d0] sm:$0xff]
    %v2681 = vld [vmem:[#allocation2 + $0x12d8] sm:$0xff]
    %v2682 = vld [vmem:[#allocation2 + $0x12e0] sm:$0xff]
    %v2683 = vld [vmem:[#allocation2 + $0x12e8] sm:$0xff]
    %v2684 = vld [vmem:[#allocation2 + $0x12f0] sm:$0xff]
    %v2685 = vld [vmem:[#allocation2 + $0x12f8] sm:$0xff]
    %v2686 = vld [vmem:[#allocation2 + $0x1300] sm:$0xff]
    %v2687 = vld [vmem:[#allocation2 + $0x1308] sm:$0xff]
    %v2688 = vld [vmem:[#allocation2 + $0x1310] sm:$0xff]
    %v2689 = vld [vmem:[#allocation2 + $0x1318] sm:$0xff]
    %v2690 = vld [vmem:[#allocation2 + $0x1320] sm:$0xff]
    %v2691 = vld [vmem:[#allocation2 + $0x1328] sm:$0xff]
    %v2692 = vld [vmem:[#allocation2 + $0x1330] sm:$0xff]
    %v2693 = vld [vmem:[#allocation2 + $0x1338] sm:$0xff]
    %v2694 = vld [vmem:[#allocation2 + $0x1340] sm:$0xff]
    %v2695 = vld [vmem:[#allocation2 + $0x1348] sm:$0xff]
    %v2696 = vld [vmem:[#allocation2 + $0x1350] sm:$0xff]
    %v2697 = vld [vmem:[#allocation2 + $0x1358] sm:$0xff]
    %v2698 = vld [vmem:[#allocation2 + $0x1360] sm:$0xff]
    %v2699 = vld [vmem:[#allocation2 + $0x1368] sm:$0xff]
    %v2700 = vld [vmem:[#allocation2 + $0x1370] sm:$0xff]
    %v2701 = vld [vmem:[#allocation2 + $0x1378] sm:$0xff]
    %v2702 = vld [vmem:[#allocation2 + $0x1380] sm:$0xff]
    %v2703 = vld [vmem:[#allocation2 + $0x1388] sm:$0xff]
    %v2704 = vld [vmem:[#allocation2 + $0x1390] sm:$0xff]
    %v2705 = vld [vmem:[#allocation2 + $0x1398] sm:$0xff]
    %v2706 = vld [vmem:[#allocation2 + $0x13a0] sm:$0xff]
    %v2707 = vld [vmem:[#allocation2 + $0x13a8] sm:$0xff]
    %v2708 = vld [vmem:[#allocation2 + $0x13b0] sm:$0xff]
    %v2709 = vld [vmem:[#allocation2 + $0x13b8] sm:$0xff]
    %v2710 = vld [vmem:[#allocation2 + $0x13c0] sm:$0xff]
    %v2711 = vld [vmem:[#allocation2 + $0x13c8] sm:$0xff]
    %v2712 = vld [vmem:[#allocation2 + $0x13d0] sm:$0xff]
    %v2713 = vld [vmem:[#allocation2 + $0x13d8] sm:$0xff]
    %v2714 = vld [vmem:[#allocation2 + $0x13e0] sm:$0xff]
    %v2715 = vld [vmem:[#allocation2 + $0x13e8] sm:$0xff]
    %v2716 = vld [vmem:[#allocation2 + $0x13f0] sm:$0xff]
    %v2717 = vld [vmem:[#allocation2 + $0x13f8] sm:$0xff]
    %v2718 = vld [vmem:[#allocation2 + $0x1400] sm:$0xff]
    %v2719 = vld [vmem:[#allocation2 + $0x1408] sm:$0xff]
    %v2720 = vld [vmem:[#allocation2 + $0x1410] sm:$0xff]
    %v2721 = vld [vmem:[#allocation2 + $0x1418] sm:$0xff]
    %v2722 = vld [vmem:[#allocation2 + $0x1420] sm:$0xff]
    %v2723 = vld [vmem:[#allocation2 + $0x1428] sm:$0xff]
    %v2724 = vld [vmem:[#allocation2 + $0x1430] sm:$0xff]
    %v2725 = vld [vmem:[#allocation2 + $0x1438] sm:$0xff]
    %v2726 = vld [vmem:[#allocation2 + $0x1440] sm:$0xff]
    %v2727 = vld [vmem:[#allocation2 + $0x1448] sm:$0xff]
    %v2728 = vld [vmem:[#allocation2 + $0x1450] sm:$0xff]
    %v2729 = vld [vmem:[#allocation2 + $0x1458] sm:$0xff]
    %v2730 = vld [vmem:[#allocation2 + $0x1460] sm:$0xff]
    %v2731 = vld [vmem:[#allocation2 + $0x1468] sm:$0xff]
    %v2732 = vld [vmem:[#allocation2 + $0x1470] sm:$0xff]
    %v2733 = vld [vmem:[#allocation2 + $0x1478] sm:$0xff]
    %v2734 = vld [vmem:[#allocation2 + $0x1480] sm:$0xff]
    %v2735 = vld [vmem:[#allocation2 + $0x1488] sm:$0xff]
    %v2736 = vld [vmem:[#allocation2 + $0x1490] sm:$0xff]
    %v2737 = vld [vmem:[#allocation2 + $0x1498] sm:$0xff]
    %v2738 = vld [vmem:[#allocation2 + $0x14a0] sm:$0xff]
    %v2739 = vld [vmem:[#allocation2 + $0x14a8] sm:$0xff]
    %v2740 = vld [vmem:[#allocation2 + $0x14b0] sm:$0xff]
    %v2741 = vld [vmem:[#allocation2 + $0x14b8] sm:$0xff]
    %v2742 = vld [vmem:[#allocation2 + $0x14c0] sm:$0xff]
    %v2743 = vld [vmem:[#allocation2 + $0x14c8] sm:$0xff]
    %v2744 = vld [vmem:[#allocation2 + $0x14d0] sm:$0xff]
    %v2745 = vld [vmem:[#allocation2 + $0x14d8] sm:$0xff]
    %v2746 = vld [vmem:[#allocation2 + $0x14e0] sm:$0xff]
    %v2747 = vld [vmem:[#allocation2 + $0x14e8] sm:$0xff]
    %v2748 = vld [vmem:[#allocation2 + $0x14f0] sm:$0xff]
    %v2749 = vld [vmem:[#allocation2 + $0x14f8] sm:$0xff]
    %v2750 = vld [vmem:[#allocation2 + $0x1500] sm:$0xff]
    %v2751 = vld [vmem:[#allocation2 + $0x1508] sm:$0xff]
    %v2752 = vld [vmem:[#allocation2 + $0x1510] sm:$0xff]
    %v2753 = vld [vmem:[#allocation2 + $0x1518] sm:$0xff]
    %v2754 = vld [vmem:[#allocation2 + $0x1520] sm:$0xff]
    %v2755 = vld [vmem:[#allocation2 + $0x1528] sm:$0xff]
    %v2756 = vld [vmem:[#allocation2 + $0x1530] sm:$0xff]
    %v2757 = vld [vmem:[#allocation2 + $0x1538] sm:$0xff]
    %v2758 = vld [vmem:[#allocation2 + $0x1540] sm:$0xff]
    %v2759 = vld [vmem:[#allocation2 + $0x1548] sm:$0xff]
    %v2760 = vld [vmem:[#allocation2 + $0x1550] sm:$0xff]
    %v2761 = vld [vmem:[#allocation2 + $0x1558] sm:$0xff]
    %v2762 = vld [vmem:[#allocation2 + $0x1560] sm:$0xff]
    %v2763 = vld [vmem:[#allocation2 + $0x1568] sm:$0xff]
    %v2764 = vld [vmem:[#allocation2 + $0x1570] sm:$0xff]
    %v2765 = vld [vmem:[#allocation2 + $0x1578] sm:$0xff]
    %v2766 = vld [vmem:[#allocation2 + $0x1580] sm:$0xff]
    %v2767 = vld [vmem:[#allocation2 + $0x1588] sm:$0xff]
    %v2768 = vld [vmem:[#allocation2 + $0x1590] sm:$0xff]
    %v2769 = vld [vmem:[#allocation2 + $0x1598] sm:$0xff]
    %v2770 = vld [vmem:[#allocation2 + $0x15a0] sm:$0xff]
    %v2771 = vld [vmem:[#allocation2 + $0x15a8] sm:$0xff]
    %v2772 = vld [vmem:[#allocation2 + $0x15b0] sm:$0xff]
    %v2773 = vld [vmem:[#allocation2 + $0x15b8] sm:$0xff]
    %v2774 = vld [vmem:[#allocation2 + $0x15c0] sm:$0xff]
    %v2775 = vld [vmem:[#allocation2 + $0x15c8] sm:$0xff]
    %v2776 = vld [vmem:[#allocation2 + $0x15d0] sm:$0xff]
    %v2777 = vld [vmem:[#allocation2 + $0x15d8] sm:$0xff]
    %v2778 = vld [vmem:[#allocation2 + $0x15e0] sm:$0xff]
    %v2779 = vld [vmem:[#allocation2 + $0x15e8] sm:$0xff]
    %v2780 = vld [vmem:[#allocation2 + $0x15f0] sm:$0xff]
    %v2781 = vld [vmem:[#allocation2 + $0x15f8] sm:$0xff]
    %v2782 = vld [vmem:[#allocation2 + $0x1600] sm:$0xff]
    %v2783 = vld [vmem:[#allocation2 + $0x1608] sm:$0xff]
    %v2784 = vld [vmem:[#allocation2 + $0x1610] sm:$0xff]
    %v2785 = vld [vmem:[#allocation2 + $0x1618] sm:$0xff]
    %v2786 = vld [vmem:[#allocation2 + $0x1620] sm:$0xff]
    %v2787 = vld [vmem:[#allocation2 + $0x1628] sm:$0xff]
    %v2788 = vld [vmem:[#allocation2 + $0x1630] sm:$0xff]
    %v2789 = vld [vmem:[#allocation2 + $0x1638] sm:$0xff]
    %v2790 = vld [vmem:[#allocation2 + $0x1640] sm:$0xff]
    %v2791 = vld [vmem:[#allocation2 + $0x1648] sm:$0xff]
    %v2792 = vld [vmem:[#allocation2 + $0x1650] sm:$0xff]
    %v2793 = vld [vmem:[#allocation2 + $0x1658] sm:$0xff]
    %v2794 = vld [vmem:[#allocation2 + $0x1660] sm:$0xff]
    %v2795 = vld [vmem:[#allocation2 + $0x1668] sm:$0xff]
    %v2796 = vld [vmem:[#allocation2 + $0x1670] sm:$0xff]
    %v2797 = vld [vmem:[#allocation2 + $0x1678] sm:$0xff]
    %v2798 = vld [vmem:[#allocation2 + $0x1680] sm:$0xff]
    %v2799 = vld [vmem:[#allocation2 + $0x1688] sm:$0xff]
    %v2800 = vld [vmem:[#allocation2 + $0x1690] sm:$0xff]
    %v2801 = vld [vmem:[#allocation2 + $0x1698] sm:$0xff]
    %v2802 = vld [vmem:[#allocation2 + $0x16a0] sm:$0xff]
    %v2803 = vld [vmem:[#allocation2 + $0x16a8] sm:$0xff]
    %v2804 = vld [vmem:[#allocation2 + $0x16b0] sm:$0xff]
    %v2805 = vld [vmem:[#allocation2 + $0x16b8] sm:$0xff]
    %v2806 = vld [vmem:[#allocation2 + $0x16c0] sm:$0xff]
    %v2807 = vld [vmem:[#allocation2 + $0x16c8] sm:$0xff]
    %v2808 = vld [vmem:[#allocation2 + $0x16d0] sm:$0xff]
    %v2809 = vld [vmem:[#allocation2 + $0x16d8] sm:$0xff]
    %v2810 = vld [vmem:[#allocation2 + $0x16e0] sm:$0xff]
    %v2811 = vld [vmem:[#allocation2 + $0x16e8] sm:$0xff]
    %v2812 = vld [vmem:[#allocation2 + $0x16f0] sm:$0xff]
    %v2813 = vld [vmem:[#allocation2 + $0x16f8] sm:$0xff]
    %v2814 = vld [vmem:[#allocation2 + $0x1700] sm:$0xff]
    %v2815 = vld [vmem:[#allocation2 + $0x1708] sm:$0xff]
    %v2816 = vld [vmem:[#allocation2 + $0x1710] sm:$0xff]
    %v2817 = vld [vmem:[#allocation2 + $0x1718] sm:$0xff]
    %v2818 = vld [vmem:[#allocation2 + $0x1720] sm:$0xff]
    %v2819 = vld [vmem:[#allocation2 + $0x1728] sm:$0xff]
    %v2820 = vld [vmem:[#allocation2 + $0x1730] sm:$0xff]
    %v2821 = vld [vmem:[#allocation2 + $0x1738] sm:$0xff]
    %v2822 = vld [vmem:[#allocation2 + $0x1740] sm:$0xff]
    %v2823 = vld [vmem:[#allocation2 + $0x1748] sm:$0xff]
    %v2824 = vld [vmem:[#allocation2 + $0x1750] sm:$0xff]
    %v2825 = vld [vmem:[#allocation2 + $0x1758] sm:$0xff]
    %v2826 = vld [vmem:[#allocation2 + $0x1760] sm:$0xff]
    %v2827 = vld [vmem:[#allocation2 + $0x1768] sm:$0xff]
    %v2828 = vld [vmem:[#allocation2 + $0x1770] sm:$0xff]
    %v2829 = vld [vmem:[#allocation2 + $0x1778] sm:$0xff]
    %v2830 = vld [vmem:[#allocation2 + $0x1780] sm:$0xff]
    %v2831 = vld [vmem:[#allocation2 + $0x1788] sm:$0xff]
    %v2832 = vld [vmem:[#allocation2 + $0x1790] sm:$0xff]
    %v2833 = vld [vmem:[#allocation2 + $0x1798] sm:$0xff]
    %v2834 = vld [vmem:[#allocation2 + $0x17a0] sm:$0xff]
    %v2835 = vld [vmem:[#allocation2 + $0x17a8] sm:$0xff]
    %v2836 = vld [vmem:[#allocation2 + $0x17b0] sm:$0xff]
    %v2837 = vld [vmem:[#allocation2 + $0x17b8] sm:$0xff]
    %v2838 = vld [vmem:[#allocation2 + $0x17c0] sm:$0xff]
    %v2839 = vld [vmem:[#allocation2 + $0x17c8] sm:$0xff]
    %v2840 = vld [vmem:[#allocation2 + $0x17d0] sm:$0xff]
    %v2841 = vld [vmem:[#allocation2 + $0x17d8] sm:$0xff]
    %v2842 = vld [vmem:[#allocation2 + $0x17e0] sm:$0xff]
    %v2843 = vld [vmem:[#allocation2 + $0x17e8] sm:$0xff]
    %v2844 = vld [vmem:[#allocation2 + $0x17f0] sm:$0xff]
    %v2845 = vld [vmem:[#allocation2 + $0x17f8] sm:$0xff]
    %v2847 = vlaneseq
    %v2848 = vshrl.u32 %v2847, 7
    %v2849 = vsub.s32 0, %v2848
    %v2850 = vrot.slane %v209, %v2849
    %v2851 = vlaneseq
    %v2852 = vshrl.u32 %v2851, 7
    %v2853 = vsub.s32 1, %v2852
    %v2854 = vrot.slane %v209, %v2853
    %v2855 = vlaneseq
    %v2856 = vshrl.u32 %v2855, 7
    %v2857 = vsub.s32 2, %v2856
    %v2858 = vrot.slane %v209, %v2857
    %v2859 = vlaneseq
    %v2860 = vshrl.u32 %v2859, 7
    %v2861 = vsub.s32 3, %v2860
    %v2862 = vrot.slane %v209, %v2861
    %v2863 = vlaneseq
    %v2864 = vshrl.u32 %v2863, 7
    %v2865 = vsub.s32 4, %v2864
    %v2866 = vrot.slane %v209, %v2865
    %v2867 = vlaneseq
    %v2868 = vshrl.u32 %v2867, 7
    %v2869 = vsub.s32 5, %v2868
    %v2870 = vrot.slane %v209, %v2869
    %2877 = vmatprep.subr.bf16.mxu0 %v2559
    %2878 = vmatpush1.bf16.msra.mxu0 %v2558
    %2879 = vmatprep.subr.bf16.mxu0 %v2565
    %2880 = vmatpush1.bf16.msra.mxu0 %v2564
    %2881 = vmatprep.subr.bf16.mxu0 %v2571
    %2882 = vmatpush1.bf16.msra.mxu0 %v2570
    %2883 = vmatprep.subr.bf16.mxu0 %v2577
    %2884 = vmatpush1.bf16.msra.mxu0 %v2576
    %2885 = vmatprep.subr.bf16.mxu0 %v2583
    %2886 = vmatpush1.bf16.msra.mxu0 %v2582
    %2887 = vmatprep.subr.bf16.mxu0 %v2589
    %2888 = vmatpush1.bf16.msra.mxu0 %v2588
    %2889 = vmatprep.subr.bf16.mxu0 %v2595
    %2890 = vmatpush1.bf16.msra.mxu0 %v2594
    %2891 = vmatprep.subr.bf16.mxu0 %v2601
    %2892 = vmatpush1.bf16.msra.mxu0 %v2600
    %2893 = vmatprep.subr.bf16.mxu0 %v2607
    %2894 = vmatpush1.bf16.msra.mxu0 %v2606
    %2895 = vmatprep.subr.bf16.mxu0 %v2613
    %2896 = vmatpush1.bf16.msra.mxu0 %v2612
    %2897 = vmatprep.subr.bf16.mxu0 %v2619
    %2898 = vmatpush1.bf16.msra.mxu0 %v2618
    %2899 = vmatprep.subr.bf16.mxu0 %v2625
    %2900 = vmatpush1.bf16.msra.mxu0 %v2624
    %2901 = vmatprep.subr.bf16.mxu0 %v2631
    %2902 = vmatpush1.bf16.msra.mxu0 %v2630
    %2903 = vmatprep.subr.bf16.mxu0 %v2637
    %2904 = vmatpush1.bf16.msra.mxu0 %v2636
    %2905 = vmatprep.subr.bf16.mxu0 %v2643
    %2906 = vmatpush1.bf16.msra.mxu0 %v2642
    %2907 = vmatprep.subr.bf16.mxu0 %v2649
    %2908 = vmatpush1.bf16.msra.mxu0 %v2648
    %2909 = vmatprep.mubr.bf16.mxu0 %v2553
    %2910 = vmatmul.mubr.bf16.gmra.mrb[0].mxu0 %v2552
    %v2911 = vpop.f32.mrb[0].mxu0
    %v2912 = vadd.f32 %v2850, %v2911
    %v2913 = vpop.f32.mrb[0].mxu0
    %v2914 = vadd.f32 %v2854, %v2913
    %v2915 = vpop.f32.mrb[0].mxu0
    %v2916 = vpop.f32.mrb[0].mxu0
    %2917 = vdwg.mxu0
    %2918 = vmatprep.subr.bf16.mxu0 %v2655
    %2919 = vmatpush1.bf16.msra.mxu0 %v2654
    %2920 = vmatprep.subr.bf16.mxu0 %v2661
    %2921 = vmatpush1.bf16.msra.mxu0 %v2660
    %2922 = vmatprep.subr.bf16.mxu0 %v2667
    %2923 = vmatpush1.bf16.msra.mxu0 %v2666
    %2924 = vmatprep.subr.bf16.mxu0 %v2673
    %2925 = vmatpush1.bf16.msra.mxu0 %v2672
    %2926 = vmatprep.subr.bf16.mxu0 %v2679
    %2927 = vmatpush1.bf16.msra.mxu0 %v2678
    %2928 = vmatprep.subr.bf16.mxu0 %v2685
    %2929 = vmatpush1.bf16.msra.mxu0 %v2684
    %2930 = vmatprep.subr.bf16.mxu0 %v2691
    %2931 = vmatpush1.bf16.msra.mxu0 %v2690
    %2932 = vmatprep.subr.bf16.mxu0 %v2697
    %2933 = vmatpush1.bf16.msra.mxu0 %v2696
    %2934 = vmatprep.subr.bf16.mxu0 %v2703
    %2935 = vmatpush1.bf16.msra.mxu0 %v2702
    %2936 = vmatprep.subr.bf16.mxu0 %v2709
    %2937 = vmatpush1.bf16.msra.mxu0 %v2708
    %2938 = vmatprep.subr.bf16.mxu0 %v2715
    %2939 = vmatpush1.bf16.msra.mxu0 %v2714
    %2940 = vmatprep.subr.bf16.mxu0 %v2721
    %2941 = vmatpush1.bf16.msra.mxu0 %v2720
    %2942 = vmatprep.subr.bf16.mxu0 %v2727
    %2943 = vmatpush1.bf16.msra.mxu0 %v2726
    %2944 = vmatprep.subr.bf16.mxu0 %v2733
    %2945 = vmatpush1.bf16.msra.mxu0 %v2732
    %2946 = vmatprep.subr.bf16.mxu0 %v2739
    %2947 = vmatpush1.bf16.msra.mxu0 %v2738
    %2948 = vmatprep.subr.bf16.mxu0 %v2745
    %2949 = vmatpush1.bf16.msra.mxu0 %v2744
    %2950 = vmatprep.mubr.bf16.mxu0 %v2555
    %2951 = vmatmul.mubr.bf16.gmra.mrb[0].mxu0 %v2554
    %v2952 = vpop.f32.mrb[0].mxu0
    %v2953 = vadd.f32 %v2912, %v2952
    %v2954 = vpop.f32.mrb[0].mxu0
    %v2955 = vadd.f32 %v2914, %v2954
    %v2956 = vpop.f32.mrb[0].mxu0
    %v2957 = vpop.f32.mrb[0].mxu0
    %2958 = vdwg.mxu0
    %2959 = vmatprep.subr.bf16.mxu0 %v2751
    %2960 = vmatpush1.bf16.msra.mxu0 %v2750
    %2961 = vmatprep.subr.bf16.mxu0 %v2757
    %2962 = vmatpush1.bf16.msra.mxu0 %v2756
    %2963 = vmatprep.subr.bf16.mxu0 %v2763
    %2964 = vmatpush1.bf16.msra.mxu0 %v2762
    %2965 = vmatprep.subr.bf16.mxu0 %v2769
    %2966 = vmatpush1.bf16.msra.mxu0 %v2768
    %2967 = vmatprep.subr.bf16.mxu0 %v2775
    %2968 = vmatpush1.bf16.msra.mxu0 %v2774
    %2969 = vmatprep.subr.bf16.mxu0 %v2781
    %2970 = vmatpush1.bf16.msra.mxu0 %v2780
    %2971 = vmatprep.subr.bf16.mxu0 %v2787
    %2972 = vmatpush1.bf16.msra.mxu0 %v2786
    %2973 = vmatprep.subr.bf16.mxu0 %v2793
    %2974 = vmatpush1.bf16.msra.mxu0 %v2792
    %2975 = vmatprep.subr.bf16.mxu0 %v2799
    %2976 = vmatpush1.bf16.msra.mxu0 %v2798
    %2977 = vmatprep.subr.bf16.mxu0 %v2805
    %2978 = vmatpush1.bf16.msra.mxu0 %v2804
    %2979 = vmatprep.subr.bf16.mxu0 %v2811
    %2980 = vmatpush1.bf16.msra.mxu0 %v2810
    %2981 = vmatprep.subr.bf16.mxu0 %v2817
    %2982 = vmatpush1.bf16.msra.mxu0 %v2816
    %2983 = vmatprep.subr.bf16.mxu0 %v2823
    %2984 = vmatpush1.bf16.msra.mxu0 %v2822
    %2985 = vmatprep.subr.bf16.mxu0 %v2829
    %2986 = vmatpush1.bf16.msra.mxu0 %v2828
    %2987 = vmatprep.subr.bf16.mxu0 %v2835
    %2988 = vmatpush1.bf16.msra.mxu0 %v2834
    %2989 = vmatprep.subr.bf16.mxu0 %v2841
    %2990 = vmatpush1.bf16.msra.mxu0 %v2840
    %2991 = vmatprep.mubr.bf16.mxu0 %v2557
    %2992 = vmatmul.mubr.bf16.gmra.mrb[0].mxu0 %v2556
    %v2993 = vpop.f32.mrb[0].mxu0
    %v2994 = vadd.f32 %v2953, %v2993
    %v2995 = vpop.f32.mrb[0].mxu0
    %v2996 = vadd.f32 %v2955, %v2995
    %v2997 = vpop.f32.mrb[0].mxu0
    %v2998 = vpop.f32.mrb[0].mxu0
    %2999 = vdwg.mxu0
    %3000 = vmatprep.subr.bf16.mxu0 %v2561
    %3001 = vmatpush1.bf16.msra.mxu0 %v2560
    %3002 = vmatprep.subr.bf16.mxu0 %v2567
    %3003 = vmatpush1.bf16.msra.mxu0 %v2566
    %3004 = vmatprep.subr.bf16.mxu0 %v2573
    %3005 = vmatpush1.bf16.msra.mxu0 %v2572
    %3006 = vmatprep.subr.bf16.mxu0 %v2579
    %3007 = vmatpush1.bf16.msra.mxu0 %v2578
    %3008 = vmatprep.subr.bf16.mxu0 %v2585
    %3009 = vmatpush1.bf16.msra.mxu0 %v2584
    %3010 = vmatprep.subr.bf16.mxu0 %v2591
    %3011 = vmatpush1.bf16.msra.mxu0 %v2590
    %3012 = vmatprep.subr.bf16.mxu0 %v2597
    %3013 = vmatpush1.bf16.msra.mxu0 %v2596
    %3014 = vmatprep.subr.bf16.mxu0 %v2603
    %3015 = vmatpush1.bf16.msra.mxu0 %v2602
    %3016 = vmatprep.subr.bf16.mxu0 %v2609
    %3017 = vmatpush1.bf16.msra.mxu0 %v2608
    %3018 = vmatprep.subr.bf16.mxu0 %v2615
    %3019 = vmatpush1.bf16.msra.mxu0 %v2614
    %3020 = vmatprep.subr.bf16.mxu0 %v2621
    %3021 = vmatpush1.bf16.msra.mxu0 %v2620
    %3022 = vmatprep.subr.bf16.mxu0 %v2627
    %3023 = vmatpush1.bf16.msra.mxu0 %v2626
    %3024 = vmatprep.subr.bf16.mxu0 %v2633
    %3025 = vmatpush1.bf16.msra.mxu0 %v2632
    %3026 = vmatprep.subr.bf16.mxu0 %v2639
    %3027 = vmatpush1.bf16.msra.mxu0 %v2638
    %3028 = vmatprep.subr.bf16.mxu0 %v2645
    %3029 = vmatpush1.bf16.msra.mxu0 %v2644
    %3030 = vmatprep.subr.bf16.mxu0 %v2651
    %3031 = vmatpush1.bf16.msra.mxu0 %v2650
    %3032 = vmatprep.mubr.bf16.mxu0 %v2553
    %3033 = vmatmul.mubr.bf16.gmra.mrb[0].mxu0 %v2552
    %v3034 = vpop.f32.mrb[0].mxu0
    %v3035 = vadd.f32 %v2858, %v3034
    %v3036 = vpop.f32.mrb[0].mxu0
    %v3037 = vadd.f32 %v2862, %v3036
    %v3038 = vpop.f32.mrb[0].mxu0
    %v3039 = vpop.f32.mrb[0].mxu0
    %3040 = vdwg.mxu0
    %3041 = vmatprep.subr.bf16.mxu0 %v2657
    %3042 = vmatpush1.bf16.msra.mxu0 %v2656
    %3043 = vmatprep.subr.bf16.mxu0 %v2663
    %3044 = vmatpush1.bf16.msra.mxu0 %v2662
    %3045 = vmatprep.subr.bf16.mxu0 %v2669
    %3046 = vmatpush1.bf16.msra.mxu0 %v2668
    %3047 = vmatprep.subr.bf16.mxu0 %v2675
    %3048 = vmatpush1.bf16.msra.mxu0 %v2674
    %3049 = vmatprep.subr.bf16.mxu0 %v2681
    %3050 = vmatpush1.bf16.msra.mxu0 %v2680
    %3051 = vmatprep.subr.bf16.mxu0 %v2687
    %3052 = vmatpush1.bf16.msra.mxu0 %v2686
    %3053 = vmatprep.subr.bf16.mxu0 %v2693
    %3054 = vmatpush1.bf16.msra.mxu0 %v2692
    %3055 = vmatprep.subr.bf16.mxu0 %v2699
    %3056 = vmatpush1.bf16.msra.mxu0 %v2698
    %3057 = vmatprep.subr.bf16.mxu0 %v2705
    %3058 = vmatpush1.bf16.msra.mxu0 %v2704
    %3059 = vmatprep.subr.bf16.mxu0 %v2711
    %3060 = vmatpush1.bf16.msra.mxu0 %v2710
    %3061 = vmatprep.subr.bf16.mxu0 %v2717
    %3062 = vmatpush1.bf16.msra.mxu0 %v2716
    %3063 = vmatprep.subr.bf16.mxu0 %v2723
    %3064 = vmatpush1.bf16.msra.mxu0 %v2722
    %3065 = vmatprep.subr.bf16.mxu0 %v2729
    %3066 = vmatpush1.bf16.msra.mxu0 %v2728
    %3067 = vmatprep.subr.bf16.mxu0 %v2735
    %3068 = vmatpush1.bf16.msra.mxu0 %v2734
    %3069 = vmatprep.subr.bf16.mxu0 %v2741
    %3070 = vmatpush1.bf16.msra.mxu0 %v2740
    %3071 = vmatprep.subr.bf16.mxu0 %v2747
    %3072 = vmatpush1.bf16.msra.mxu0 %v2746
    %3073 = vmatprep.mubr.bf16.mxu0 %v2555
    %3074 = vmatmul.mubr.bf16.gmra.mrb[0].mxu0 %v2554
    %v3075 = vpop.f32.mrb[0].mxu0
    %v3076 = vadd.f32 %v3035, %v3075
    %v3077 = vpop.f32.mrb[0].mxu0
    %v3078 = vadd.f32 %v3037, %v3077
    %v3079 = vpop.f32.mrb[0].mxu0
    %v3080 = vpop.f32.mrb[0].mxu0
    %3081 = vdwg.mxu0
    %3082 = vmatprep.subr.bf16.mxu0 %v2753
    %3083 = vmatpush1.bf16.msra.mxu0 %v2752
    %3084 = vmatprep.subr.bf16.mxu0 %v2759
    %3085 = vmatpush1.bf16.msra.mxu0 %v2758
    %3086 = vmatprep.subr.bf16.mxu0 %v2765
    %3087 = vmatpush1.bf16.msra.mxu0 %v2764
    %3088 = vmatprep.subr.bf16.mxu0 %v2771
    %3089 = vmatpush1.bf16.msra.mxu0 %v2770
    %3090 = vmatprep.subr.bf16.mxu0 %v2777
    %3091 = vmatpush1.bf16.msra.mxu0 %v2776
    %3092 = vmatprep.subr.bf16.mxu0 %v2783
    %3093 = vmatpush1.bf16.msra.mxu0 %v2782
    %3094 = vmatprep.subr.bf16.mxu0 %v2789
    %3095 = vmatpush1.bf16.msra.mxu0 %v2788
    %3096 = vmatprep.subr.bf16.mxu0 %v2795
    %3097 = vmatpush1.bf16.msra.mxu0 %v2794
    %3098 = vmatprep.subr.bf16.mxu0 %v2801
    %3099 = vmatpush1.bf16.msra.mxu0 %v2800
    %3100 = vmatprep.subr.bf16.mxu0 %v2807
    %3101 = vmatpush1.bf16.msra.mxu0 %v2806
    %3102 = vmatprep.subr.bf16.mxu0 %v2813
    %3103 = vmatpush1.bf16.msra.mxu0 %v2812
    %3104 = vmatprep.subr.bf16.mxu0 %v2819
    %3105 = vmatpush1.bf16.msra.mxu0 %v2818
    %3106 = vmatprep.subr.bf16.mxu0 %v2825
    %3107 = vmatpush1.bf16.msra.mxu0 %v2824
    %3108 = vmatprep.subr.bf16.mxu0 %v2831
    %3109 = vmatpush1.bf16.msra.mxu0 %v2830
    %3110 = vmatprep.subr.bf16.mxu0 %v2837
    %3111 = vmatpush1.bf16.msra.mxu0 %v2836
    %3112 = vmatprep.subr.bf16.mxu0 %v2843
    %3113 = vmatpush1.bf16.msra.mxu0 %v2842
    %3114 = vmatprep.mubr.bf16.mxu0 %v2557
    %3115 = vmatmul.mubr.bf16.gmra.mrb[0].mxu0 %v2556
    %v3116 = vpop.f32.mrb[0].mxu0
    %v3117 = vadd.f32 %v3076, %v3116
    %v3118 = vpop.f32.mrb[0].mxu0
    %v3119 = vadd.f32 %v3078, %v3118
    %v3120 = vpop.f32.mrb[0].mxu0
    %v3121 = vpop.f32.mrb[0].mxu0
    %3122 = vdwg.mxu0
    %3123 = vmatprep.subr.bf16.mxu0 %v2563
    %3124 = vmatpush1.bf16.msra.mxu0 %v2562
    %3125 = vmatprep.subr.bf16.mxu0 %v2569
    %3126 = vmatpush1.bf16.msra.mxu0 %v2568
    %3127 = vmatprep.subr.bf16.mxu0 %v2575
    %3128 = vmatpush1.bf16.msra.mxu0 %v2574
    %3129 = vmatprep.subr.bf16.mxu0 %v2581
    %3130 = vmatpush1.bf16.msra.mxu0 %v2580
    %3131 = vmatprep.subr.bf16.mxu0 %v2587
    %3132 = vmatpush1.bf16.msra.mxu0 %v2586
    %3133 = vmatprep.subr.bf16.mxu0 %v2593
    %3134 = vmatpush1.bf16.msra.mxu0 %v2592
    %3135 = vmatprep.subr.bf16.mxu0 %v2599
    %3136 = vmatpush1.bf16.msra.mxu0 %v2598
    %3137 = vmatprep.subr.bf16.mxu0 %v2605
    %3138 = vmatpush1.bf16.msra.mxu0 %v2604
    %3139 = vmatprep.subr.bf16.mxu0 %v2611
    %3140 = vmatpush1.bf16.msra.mxu0 %v2610
    %3141 = vmatprep.subr.bf16.mxu0 %v2617
    %3142 = vmatpush1.bf16.msra.mxu0 %v2616
    %3143 = vmatprep.subr.bf16.mxu0 %v2623
    %3144 = vmatpush1.bf16.msra.mxu0 %v2622
    %3145 = vmatprep.subr.bf16.mxu0 %v2629
    %3146 = vmatpush1.bf16.msra.mxu0 %v2628
    %3147 = vmatprep.subr.bf16.mxu0 %v2635
    %3148 = vmatpush1.bf16.msra.mxu0 %v2634
    %3149 = vmatprep.subr.bf16.mxu0 %v2641
    %3150 = vmatpush1.bf16.msra.mxu0 %v2640
    %3151 = vmatprep.subr.bf16.mxu0 %v2647
    %3152 = vmatpush1.bf16.msra.mxu0 %v2646
    %3153 = vmatprep.subr.bf16.mxu0 %v2653
    %3154 = vmatpush1.bf16.msra.mxu0 %v2652
    %3155 = vmatprep.mubr.bf16.mxu0 %v2553
    %3156 = vmatmul.mubr.bf16.gmra.mrb[0].mxu0 %v2552
    %v3157 = vpop.f32.mrb[0].mxu0
    %v3158 = vadd.f32 %v2866, %v3157
    %v3159 = vpop.f32.mrb[0].mxu0
    %v3160 = vadd.f32 %v2870, %v3159
    %v3161 = vpop.f32.mrb[0].mxu0
    %v3162 = vpop.f32.mrb[0].mxu0
    %3163 = vdwg.mxu0
    %3164 = vmatprep.subr.bf16.mxu0 %v2659
    %3165 = vmatpush1.bf16.msra.mxu0 %v2658
    %3166 = vmatprep.subr.bf16.mxu0 %v2665
    %3167 = vmatpush1.bf16.msra.mxu0 %v2664
    %3168 = vmatprep.subr.bf16.mxu0 %v2671
    %3169 = vmatpush1.bf16.msra.mxu0 %v2670
    %3170 = vmatprep.subr.bf16.mxu0 %v2677
    %3171 = vmatpush1.bf16.msra.mxu0 %v2676
    %3172 = vmatprep.subr.bf16.mxu0 %v2683
    %3173 = vmatpush1.bf16.msra.mxu0 %v2682
    %3174 = vmatprep.subr.bf16.mxu0 %v2689
    %3175 = vmatpush1.bf16.msra.mxu0 %v2688
    %3176 = vmatprep.subr.bf16.mxu0 %v2695
    %3177 = vmatpush1.bf16.msra.mxu0 %v2694
    %3178 = vmatprep.subr.bf16.mxu0 %v2701
    %3179 = vmatpush1.bf16.msra.mxu0 %v2700
    %3180 = vmatprep.subr.bf16.mxu0 %v2707
    %3181 = vmatpush1.bf16.msra.mxu0 %v2706
    %3182 = vmatprep.subr.bf16.mxu0 %v2713
    %3183 = vmatpush1.bf16.msra.mxu0 %v2712
    %3184 = vmatprep.subr.bf16.mxu0 %v2719
    %3185 = vmatpush1.bf16.msra.mxu0 %v2718
    %3186 = vmatprep.subr.bf16.mxu0 %v2725
    %3187 = vmatpush1.bf16.msra.mxu0 %v2724
    %3188 = vmatprep.subr.bf16.mxu0 %v2731
    %3189 = vmatpush1.bf16.msra.mxu0 %v2730
    %3190 = vmatprep.subr.bf16.mxu0 %v2737
    %3191 = vmatpush1.bf16.msra.mxu0 %v2736
    %3192 = vmatprep.subr.bf16.mxu0 %v2743
    %3193 = vmatpush1.bf16.msra.mxu0 %v2742
    %3194 = vmatprep.subr.bf16.mxu0 %v2749
    %3195 = vmatpush1.bf16.msra.mxu0 %v2748
    %3196 = vmatprep.mubr.bf16.mxu0 %v2555
    %3197 = vmatmul.mubr.bf16.gmra.mrb[0].mxu0 %v2554
    %v3198 = vpop.f32.mrb[0].mxu0
    %v3199 = vadd.f32 %v3158, %v3198
    %v3200 = vpop.f32.mrb[0].mxu0
    %v3201 = vadd.f32 %v3160, %v3200
    %v3202 = vpop.f32.mrb[0].mxu0
    %v3203 = vpop.f32.mrb[0].mxu0
    %3204 = vdwg.mxu0
    %3205 = vmatprep.subr.bf16.mxu0 %v2755
    %3206 = vmatpush1.bf16.msra.mxu0 %v2754
    %3207 = vmatprep.subr.bf16.mxu0 %v2761
    %3208 = vmatpush1.bf16.msra.mxu0 %v2760
    %3209 = vmatprep.subr.bf16.mxu0 %v2767
    %3210 = vmatpush1.bf16.msra.mxu0 %v2766
    %3211 = vmatprep.subr.bf16.mxu0 %v2773
    %3212 = vmatpush1.bf16.msra.mxu0 %v2772
    %3213 = vmatprep.subr.bf16.mxu0 %v2779
    %3214 = vmatpush1.bf16.msra.mxu0 %v2778
    %3215 = vmatprep.subr.bf16.mxu0 %v2785
    %3216 = vmatpush1.bf16.msra.mxu0 %v2784
    %3217 = vmatprep.subr.bf16.mxu0 %v2791
    %3218 = vmatpush1.bf16.msra.mxu0 %v2790
    %3219 = vmatprep.subr.bf16.mxu0 %v2797
    %3220 = vmatpush1.bf16.msra.mxu0 %v2796
    %3221 = vmatprep.subr.bf16.mxu0 %v2803
    %3222 = vmatpush1.bf16.msra.mxu0 %v2802
    %3223 = vmatprep.subr.bf16.mxu0 %v2809
    %3224 = vmatpush1.bf16.msra.mxu0 %v2808
    %3225 = vmatprep.subr.bf16.mxu0 %v2815
    %3226 = vmatpush1.bf16.msra.mxu0 %v2814
    %3227 = vmatprep.subr.bf16.mxu0 %v2821
    %3228 = vmatpush1.bf16.msra.mxu0 %v2820
    %3229 = vmatprep.subr.bf16.mxu0 %v2827
    %3230 = vmatpush1.bf16.msra.mxu0 %v2826
    %3231 = vmatprep.subr.bf16.mxu0 %v2833
    %3232 = vmatpush1.bf16.msra.mxu0 %v2832
    %3233 = vmatprep.subr.bf16.mxu0 %v2839
    %3234 = vmatpush1.bf16.msra.mxu0 %v2838
    %3235 = vmatprep.subr.bf16.mxu0 %v2845
    %3236 = vmatpush1.bf16.msra.mxu0 %v2844
    %3237 = vmatprep.mubr.bf16.mxu0 %v2557
    %3238 = vmatmul.mubr.bf16.gmra.mrb[0].mxu0 %v2556
    %v3239 = vpop.f32.mrb[0].mxu0
    %v3240 = vadd.f32 %v3199, %v3239
    %v3241 = vpop.f32.mrb[0].mxu0
    %v3242 = vadd.f32 %v3201, %v3241
    %v3243 = vpop.f32.mrb[0].mxu0
    %v3244 = vpop.f32.mrb[0].mxu0
    %3245 = vdwg.mxu0
    %v3246 = vadd.f32 %v2994, %v2996
    %v3247 = vadd.f32 %v3246, %v3117
    %v3248 = vadd.f32 %v3247, %v3119
    %v3249 = vadd.f32 %v3248, %v3240
    %v3250 = vadd.f32 %v3249, %v3242
    %3251 = vadd.xlane.f32.xlu0 %v3250
    %v3252 = vpop.xlane.xlu0 %3251
    %v3253 = vrcp.pop 768.0
    %v3254 = vmul.f32 %v3252, %v3253
    %v3255 = vmul.f32 %v2994, %v2994
    %v3256 = vmul.f32 %v2996, %v2996
    %v3257 = vmul.f32 %v3117, %v3117
    %v3258 = vmul.f32 %v3119, %v3119
    %v3259 = vmul.f32 %v3240, %v3240
    %v3260 = vmul.f32 %v3242, %v3242
    %v3261 = vadd.f32 %v3255, %v3256
    %v3262 = vadd.f32 %v3261, %v3257
    %v3263 = vadd.f32 %v3262, %v3258
    %v3264 = vadd.f32 %v3263, %v3259
    %v3265 = vadd.f32 %v3264, %v3260
    %3266 = vadd.xlane.f32.xlu0 %v3265
    %v3267 = vpop.xlane.xlu0 %3266
    %v3268 = vmul.f32 %v3267, %v3253
    %v3269 = vmul.f32 %v3254, %v3254
    %v3270 = vsub.f32 %v3268, %v3269
    %v3271 = vmax.f32 %v3270, 0.0
    %v3272 = vsub.f32 %v2994, %v3254
    %v3273 = vsub.f32 %v2996, %v3254
    %v3274 = vsub.f32 %v3117, %v3254
    %v3275 = vsub.f32 %v3119, %v3254
    %v3276 = vsub.f32 %v3240, %v3254
    %v3277 = vsub.f32 %v3242, %v3254
    %v3278 = vadd.f32 %v3271, 1e-05
    %v3279 = vrsqrt.pop %v3278
    %v3280 = vmul.f32 %v3272, %v3279
    %v3281 = vmul.f32 %v3273, %v3279
    %v3282 = vmul.f32 %v3274, %v3279
    %v3283 = vmul.f32 %v3275, %v3279
    %v3284 = vmul.f32 %v3276, %v3279
    %v3285 = vmul.f32 %v3277, %v3279
    %v3287 = vlaneseq
    %v3288 = vshrl.u32 %v3287, 7
    %v3289 = vsub.s32 0, %v3288
    %v3290 = vrot.slane %v213, %v3289
    %v3291 = vlaneseq
    %v3292 = vshrl.u32 %v3291, 7
    %v3293 = vsub.s32 1, %v3292
    %v3294 = vrot.slane %v213, %v3293
    %v3295 = vlaneseq
    %v3296 = vshrl.u32 %v3295, 7
    %v3297 = vsub.s32 2, %v3296
    %v3298 = vrot.slane %v213, %v3297
    %v3299 = vlaneseq
    %v3300 = vshrl.u32 %v3299, 7
    %v3301 = vsub.s32 3, %v3300
    %v3302 = vrot.slane %v213, %v3301
    %v3303 = vlaneseq
    %v3304 = vshrl.u32 %v3303, 7
    %v3305 = vsub.s32 4, %v3304
    %v3306 = vrot.slane %v213, %v3305
    %v3307 = vlaneseq
    %v3308 = vshrl.u32 %v3307, 7
    %v3309 = vsub.s32 5, %v3308
    %v3310 = vrot.slane %v213, %v3309
    %v3317 = vmul.f32 %v3280, %v3290
    %v3318 = vmul.f32 %v3281, %v3294
    %v3319 = vmul.f32 %v3282, %v3298
    %v3320 = vmul.f32 %v3283, %v3302
    %v3321 = vmul.f32 %v3284, %v3306
    %v3322 = vmul.f32 %v3285, %v3310
    %v3324 = vlaneseq
    %v3325 = vshrl.u32 %v3324, 7
    %v3326 = vsub.s32 0, %v3325
    %v3327 = vrot.slane %v217, %v3326
    %v3328 = vlaneseq
    %v3329 = vshrl.u32 %v3328, 7
    %v3330 = vsub.s32 1, %v3329
    %v3331 = vrot.slane %v217, %v3330
    %v3332 = vlaneseq
    %v3333 = vshrl.u32 %v3332, 7
    %v3334 = vsub.s32 2, %v3333
    %v3335 = vrot.slane %v217, %v3334
    %v3336 = vlaneseq
    %v3337 = vshrl.u32 %v3336, 7
    %v3338 = vsub.s32 3, %v3337
    %v3339 = vrot.slane %v217, %v3338
    %v3340 = vlaneseq
    %v3341 = vshrl.u32 %v3340, 7
    %v3342 = vsub.s32 4, %v3341
    %v3343 = vrot.slane %v217, %v3342
    %v3344 = vlaneseq
    %v3345 = vshrl.u32 %v3344, 7
    %v3346 = vsub.s32 5, %v3345
    %v3347 = vrot.slane %v217, %v3346
    %v3354 = vadd.f32 %v3317, %v3327
    %v3355 = vadd.f32 %v3318, %v3331
    %v3356 = vadd.f32 %v3319, %v3335
    %v3357 = vadd.f32 %v3320, %v3339
    %v3358 = vadd.f32 %v3321, %v3343
    %v3359 = vadd.f32 %v3322, %v3347
    %v3360 = vmax.f32 %v3354, 0.0
    %v3361 = vmax.f32 %v3355, 0.0
    %v3362 = vmax.f32 %v3356, 0.0
    %v3363 = vmax.f32 %v3357, 0.0
    %v3364 = vmax.f32 %v3358, 0.0
    %v3365 = vmax.f32 %v3359, 0.0
    %s3366 = sshll.u32 %s2549, 4
    %3367 = dma.done %s114, %s3366
    %v3368 = vpack.c.bf16 %v3360, %v3360
    %v3369 = vpack.c.bf16 %v3361, %v3361
    %v3370 = vpack.c.bf16 %v3362, %v3362
    %v3371 = vpack.c.bf16 %v3363, %v3363
    %v3372 = vpack.c.bf16 %v3364, %v3364
    %v3373 = vpack.c.bf16 %v3365, %v3365
    %v3374 = vld [vmem:[#allocation2 + $0x1800] sm:$0xff]
    %v3375 = vld [vmem:[#allocation2 + $0x1808] sm:$0xff]
    %v3376 = vld [vmem:[#allocation2 + $0x1810] sm:$0xff]
    %v3377 = vld [vmem:[#allocation2 + $0x1818] sm:$0xff]
    %v3378 = vld [vmem:[#allocation2 + $0x1820] sm:$0xff]
    %v3379 = vld [vmem:[#allocation2 + $0x1828] sm:$0xff]
    %v3380 = vld [vmem:[#allocation2 + $0x1830] sm:$0xff]
    %v3381 = vld [vmem:[#allocation2 + $0x1838] sm:$0xff]
    %v3382 = vld [vmem:[#allocation2 + $0x1840] sm:$0xff]
    %v3383 = vld [vmem:[#allocation2 + $0x1848] sm:$0xff]
    %v3384 = vld [vmem:[#allocation2 + $0x1850] sm:$0xff]
    %v3385 = vld [vmem:[#allocation2 + $0x1858] sm:$0xff]
    %v3386 = vld [vmem:[#allocation2 + $0x1860] sm:$0xff]
    %v3387 = vld [vmem:[#allocation2 + $0x1868] sm:$0xff]
    %v3388 = vld [vmem:[#allocation2 + $0x1870] sm:$0xff]
    %v3389 = vld [vmem:[#allocation2 + $0x1878] sm:$0xff]
    %v3390 = vld [vmem:[#allocation2 + $0x1880] sm:$0xff]
    %v3391 = vld [vmem:[#allocation2 + $0x1888] sm:$0xff]
    %v3392 = vld [vmem:[#allocation2 + $0x1890] sm:$0xff]
    %v3393 = vld [vmem:[#allocation2 + $0x1898] sm:$0xff]
    %v3394 = vld [vmem:[#allocation2 + $0x18a0] sm:$0xff]
    %v3395 = vld [vmem:[#allocation2 + $0x18a8] sm:$0xff]
    %v3396 = vld [vmem:[#allocation2 + $0x18b0] sm:$0xff]
    %v3397 = vld [vmem:[#allocation2 + $0x18b8] sm:$0xff]
    %v3398 = vld [vmem:[#allocation2 + $0x18c0] sm:$0xff]
    %v3399 = vld [vmem:[#allocation2 + $0x18c8] sm:$0xff]
    %v3400 = vld [vmem:[#allocation2 + $0x18d0] sm:$0xff]
    %v3401 = vld [vmem:[#allocation2 + $0x18d8] sm:$0xff]
    %v3402 = vld [vmem:[#allocation2 + $0x18e0] sm:$0xff]
    %v3403 = vld [vmem:[#allocation2 + $0x18e8] sm:$0xff]
    %v3404 = vld [vmem:[#allocation2 + $0x18f0] sm:$0xff]
    %v3405 = vld [vmem:[#allocation2 + $0x18f8] sm:$0xff]
    %v3406 = vld [vmem:[#allocation2 + $0x1900] sm:$0xff]
    %v3407 = vld [vmem:[#allocation2 + $0x1908] sm:$0xff]
    %v3408 = vld [vmem:[#allocation2 + $0x1910] sm:$0xff]
    %v3409 = vld [vmem:[#allocation2 + $0x1918] sm:$0xff]
    %v3410 = vld [vmem:[#allocation2 + $0x1920] sm:$0xff]
    %v3411 = vld [vmem:[#allocation2 + $0x1928] sm:$0xff]
    %v3412 = vld [vmem:[#allocation2 + $0x1930] sm:$0xff]
    %v3413 = vld [vmem:[#allocation2 + $0x1938] sm:$0xff]
    %v3414 = vld [vmem:[#allocation2 + $0x1940] sm:$0xff]
    %v3415 = vld [vmem:[#allocation2 + $0x1948] sm:$0xff]
    %v3416 = vld [vmem:[#allocation2 + $0x1950] sm:$0xff]
    %v3417 = vld [vmem:[#allocation2 + $0x1958] sm:$0xff]
    %v3418 = vld [vmem:[#allocation2 + $0x1960] sm:$0xff]
    %v3419 = vld [vmem:[#allocation2 + $0x1968] sm:$0xff]
    %v3420 = vld [vmem:[#allocation2 + $0x1970] sm:$0xff]
    %v3421 = vld [vmem:[#allocation2 + $0x1978] sm:$0xff]
    %v3422 = vld [vmem:[#allocation2 + $0x1980] sm:$0xff]
    %v3423 = vld [vmem:[#allocation2 + $0x1988] sm:$0xff]
    %v3424 = vld [vmem:[#allocation2 + $0x1990] sm:$0xff]
    %v3425 = vld [vmem:[#allocation2 + $0x1998] sm:$0xff]
    %v3426 = vld [vmem:[#allocation2 + $0x19a0] sm:$0xff]
    %v3427 = vld [vmem:[#allocation2 + $0x19a8] sm:$0xff]
    %v3428 = vld [vmem:[#allocation2 + $0x19b0] sm:$0xff]
    %v3429 = vld [vmem:[#allocation2 + $0x19b8] sm:$0xff]
    %v3430 = vld [vmem:[#allocation2 + $0x19c0] sm:$0xff]
    %v3431 = vld [vmem:[#allocation2 + $0x19c8] sm:$0xff]
    %v3432 = vld [vmem:[#allocation2 + $0x19d0] sm:$0xff]
    %v3433 = vld [vmem:[#allocation2 + $0x19d8] sm:$0xff]
    %v3434 = vld [vmem:[#allocation2 + $0x19e0] sm:$0xff]
    %v3435 = vld [vmem:[#allocation2 + $0x19e8] sm:$0xff]
    %v3436 = vld [vmem:[#allocation2 + $0x19f0] sm:$0xff]
    %v3437 = vld [vmem:[#allocation2 + $0x19f8] sm:$0xff]
    %v3438 = vld [vmem:[#allocation2 + $0x1a00] sm:$0xff]
    %v3439 = vld [vmem:[#allocation2 + $0x1a08] sm:$0xff]
    %v3440 = vld [vmem:[#allocation2 + $0x1a10] sm:$0xff]
    %v3441 = vld [vmem:[#allocation2 + $0x1a18] sm:$0xff]
    %v3442 = vld [vmem:[#allocation2 + $0x1a20] sm:$0xff]
    %v3443 = vld [vmem:[#allocation2 + $0x1a28] sm:$0xff]
    %v3444 = vld [vmem:[#allocation2 + $0x1a30] sm:$0xff]
    %v3445 = vld [vmem:[#allocation2 + $0x1a38] sm:$0xff]
    %v3446 = vld [vmem:[#allocation2 + $0x1a40] sm:$0xff]
    %v3447 = vld [vmem:[#allocation2 + $0x1a48] sm:$0xff]
    %v3448 = vld [vmem:[#allocation2 + $0x1a50] sm:$0xff]
    %v3449 = vld [vmem:[#allocation2 + $0x1a58] sm:$0xff]
    %v3450 = vld [vmem:[#allocation2 + $0x1a60] sm:$0xff]
    %v3451 = vld [vmem:[#allocation2 + $0x1a68] sm:$0xff]
    %v3452 = vld [vmem:[#allocation2 + $0x1a70] sm:$0xff]
    %v3453 = vld [vmem:[#allocation2 + $0x1a78] sm:$0xff]
    %v3454 = vld [vmem:[#allocation2 + $0x1a80] sm:$0xff]
    %v3455 = vld [vmem:[#allocation2 + $0x1a88] sm:$0xff]
    %v3456 = vld [vmem:[#allocation2 + $0x1a90] sm:$0xff]
    %v3457 = vld [vmem:[#allocation2 + $0x1a98] sm:$0xff]
    %v3458 = vld [vmem:[#allocation2 + $0x1aa0] sm:$0xff]
    %v3459 = vld [vmem:[#allocation2 + $0x1aa8] sm:$0xff]
    %v3460 = vld [vmem:[#allocation2 + $0x1ab0] sm:$0xff]
    %v3461 = vld [vmem:[#allocation2 + $0x1ab8] sm:$0xff]
    %v3462 = vld [vmem:[#allocation2 + $0x1ac0] sm:$0xff]
    %v3463 = vld [vmem:[#allocation2 + $0x1ac8] sm:$0xff]
    %v3464 = vld [vmem:[#allocation2 + $0x1ad0] sm:$0xff]
    %v3465 = vld [vmem:[#allocation2 + $0x1ad8] sm:$0xff]
    %v3466 = vld [vmem:[#allocation2 + $0x1ae0] sm:$0xff]
    %v3467 = vld [vmem:[#allocation2 + $0x1ae8] sm:$0xff]
    %v3468 = vld [vmem:[#allocation2 + $0x1af0] sm:$0xff]
    %v3469 = vld [vmem:[#allocation2 + $0x1af8] sm:$0xff]
    %v3470 = vld [vmem:[#allocation2 + $0x1b00] sm:$0xff]
    %v3471 = vld [vmem:[#allocation2 + $0x1b08] sm:$0xff]
    %v3472 = vld [vmem:[#allocation2 + $0x1b10] sm:$0xff]
    %v3473 = vld [vmem:[#allocation2 + $0x1b18] sm:$0xff]
    %v3474 = vld [vmem:[#allocation2 + $0x1b20] sm:$0xff]
    %v3475 = vld [vmem:[#allocation2 + $0x1b28] sm:$0xff]
    %v3476 = vld [vmem:[#allocation2 + $0x1b30] sm:$0xff]
    %v3477 = vld [vmem:[#allocation2 + $0x1b38] sm:$0xff]
    %v3478 = vld [vmem:[#allocation2 + $0x1b40] sm:$0xff]
    %v3479 = vld [vmem:[#allocation2 + $0x1b48] sm:$0xff]
    %v3480 = vld [vmem:[#allocation2 + $0x1b50] sm:$0xff]
    %v3481 = vld [vmem:[#allocation2 + $0x1b58] sm:$0xff]
    %v3482 = vld [vmem:[#allocation2 + $0x1b60] sm:$0xff]
    %v3483 = vld [vmem:[#allocation2 + $0x1b68] sm:$0xff]
    %v3484 = vld [vmem:[#allocation2 + $0x1b70] sm:$0xff]
    %v3485 = vld [vmem:[#allocation2 + $0x1b78] sm:$0xff]
    %v3486 = vld [vmem:[#allocation2 + $0x1b80] sm:$0xff]
    %v3487 = vld [vmem:[#allocation2 + $0x1b88] sm:$0xff]
    %v3488 = vld [vmem:[#allocation2 + $0x1b90] sm:$0xff]
    %v3489 = vld [vmem:[#allocation2 + $0x1b98] sm:$0xff]
    %v3490 = vld [vmem:[#allocation2 + $0x1ba0] sm:$0xff]
    %v3491 = vld [vmem:[#allocation2 + $0x1ba8] sm:$0xff]
    %v3492 = vld [vmem:[#allocation2 + $0x1bb0] sm:$0xff]
    %v3493 = vld [vmem:[#allocation2 + $0x1bb8] sm:$0xff]
    %v3494 = vld [vmem:[#allocation2 + $0x1bc0] sm:$0xff]
    %v3495 = vld [vmem:[#allocation2 + $0x1bc8] sm:$0xff]
    %v3496 = vld [vmem:[#allocation2 + $0x1bd0] sm:$0xff]
    %v3497 = vld [vmem:[#allocation2 + $0x1bd8] sm:$0xff]
    %v3498 = vld [vmem:[#allocation2 + $0x1be0] sm:$0xff]
    %v3499 = vld [vmem:[#allocation2 + $0x1be8] sm:$0xff]
    %v3500 = vld [vmem:[#allocation2 + $0x1bf0] sm:$0xff]
    %v3501 = vld [vmem:[#allocation2 + $0x1bf8] sm:$0xff]
    %v3502 = vld [vmem:[#allocation2 + $0x1c00] sm:$0xff]
    %v3503 = vld [vmem:[#allocation2 + $0x1c08] sm:$0xff]
    %v3504 = vld [vmem:[#allocation2 + $0x1c10] sm:$0xff]
    %v3505 = vld [vmem:[#allocation2 + $0x1c18] sm:$0xff]
    %v3506 = vld [vmem:[#allocation2 + $0x1c20] sm:$0xff]
    %v3507 = vld [vmem:[#allocation2 + $0x1c28] sm:$0xff]
    %v3508 = vld [vmem:[#allocation2 + $0x1c30] sm:$0xff]
    %v3509 = vld [vmem:[#allocation2 + $0x1c38] sm:$0xff]
    %v3510 = vld [vmem:[#allocation2 + $0x1c40] sm:$0xff]
    %v3511 = vld [vmem:[#allocation2 + $0x1c48] sm:$0xff]
    %v3512 = vld [vmem:[#allocation2 + $0x1c50] sm:$0xff]
    %v3513 = vld [vmem:[#allocation2 + $0x1c58] sm:$0xff]
    %v3514 = vld [vmem:[#allocation2 + $0x1c60] sm:$0xff]
    %v3515 = vld [vmem:[#allocation2 + $0x1c68] sm:$0xff]
    %v3516 = vld [vmem:[#allocation2 + $0x1c70] sm:$0xff]
    %v3517 = vld [vmem:[#allocation2 + $0x1c78] sm:$0xff]
    %v3518 = vld [vmem:[#allocation2 + $0x1c80] sm:$0xff]
    %v3519 = vld [vmem:[#allocation2 + $0x1c88] sm:$0xff]
    %v3520 = vld [vmem:[#allocation2 + $0x1c90] sm:$0xff]
    %v3521 = vld [vmem:[#allocation2 + $0x1c98] sm:$0xff]
    %v3522 = vld [vmem:[#allocation2 + $0x1ca0] sm:$0xff]
    %v3523 = vld [vmem:[#allocation2 + $0x1ca8] sm:$0xff]
    %v3524 = vld [vmem:[#allocation2 + $0x1cb0] sm:$0xff]
    %v3525 = vld [vmem:[#allocation2 + $0x1cb8] sm:$0xff]
    %v3526 = vld [vmem:[#allocation2 + $0x1cc0] sm:$0xff]
    %v3527 = vld [vmem:[#allocation2 + $0x1cc8] sm:$0xff]
    %v3528 = vld [vmem:[#allocation2 + $0x1cd0] sm:$0xff]
    %v3529 = vld [vmem:[#allocation2 + $0x1cd8] sm:$0xff]
    %v3530 = vld [vmem:[#allocation2 + $0x1ce0] sm:$0xff]
    %v3531 = vld [vmem:[#allocation2 + $0x1ce8] sm:$0xff]
    %v3532 = vld [vmem:[#allocation2 + $0x1cf0] sm:$0xff]
    %v3533 = vld [vmem:[#allocation2 + $0x1cf8] sm:$0xff]
    %v3534 = vld [vmem:[#allocation2 + $0x1d00] sm:$0xff]
    %v3535 = vld [vmem:[#allocation2 + $0x1d08] sm:$0xff]
    %v3536 = vld [vmem:[#allocation2 + $0x1d10] sm:$0xff]
    %v3537 = vld [vmem:[#allocation2 + $0x1d18] sm:$0xff]
    %v3538 = vld [vmem:[#allocation2 + $0x1d20] sm:$0xff]
    %v3539 = vld [vmem:[#allocation2 + $0x1d28] sm:$0xff]
    %v3540 = vld [vmem:[#allocation2 + $0x1d30] sm:$0xff]
    %v3541 = vld [vmem:[#allocation2 + $0x1d38] sm:$0xff]
    %v3542 = vld [vmem:[#allocation2 + $0x1d40] sm:$0xff]
    %v3543 = vld [vmem:[#allocation2 + $0x1d48] sm:$0xff]
    %v3544 = vld [vmem:[#allocation2 + $0x1d50] sm:$0xff]
    %v3545 = vld [vmem:[#allocation2 + $0x1d58] sm:$0xff]
    %v3546 = vld [vmem:[#allocation2 + $0x1d60] sm:$0xff]
    %v3547 = vld [vmem:[#allocation2 + $0x1d68] sm:$0xff]
    %v3548 = vld [vmem:[#allocation2 + $0x1d70] sm:$0xff]
    %v3549 = vld [vmem:[#allocation2 + $0x1d78] sm:$0xff]
    %v3550 = vld [vmem:[#allocation2 + $0x1d80] sm:$0xff]
    %v3551 = vld [vmem:[#allocation2 + $0x1d88] sm:$0xff]
    %v3552 = vld [vmem:[#allocation2 + $0x1d90] sm:$0xff]
    %v3553 = vld [vmem:[#allocation2 + $0x1d98] sm:$0xff]
    %v3554 = vld [vmem:[#allocation2 + $0x1da0] sm:$0xff]
    %v3555 = vld [vmem:[#allocation2 + $0x1da8] sm:$0xff]
    %v3556 = vld [vmem:[#allocation2 + $0x1db0] sm:$0xff]
    %v3557 = vld [vmem:[#allocation2 + $0x1db8] sm:$0xff]
    %v3558 = vld [vmem:[#allocation2 + $0x1dc0] sm:$0xff]
    %v3559 = vld [vmem:[#allocation2 + $0x1dc8] sm:$0xff]
    %v3560 = vld [vmem:[#allocation2 + $0x1dd0] sm:$0xff]
    %v3561 = vld [vmem:[#allocation2 + $0x1dd8] sm:$0xff]
    %v3562 = vld [vmem:[#allocation2 + $0x1de0] sm:$0xff]
    %v3563 = vld [vmem:[#allocation2 + $0x1de8] sm:$0xff]
    %v3564 = vld [vmem:[#allocation2 + $0x1df0] sm:$0xff]
    %v3565 = vld [vmem:[#allocation2 + $0x1df8] sm:$0xff]
    %v3566 = vld [vmem:[#allocation2 + $0x1e00] sm:$0xff]
    %v3567 = vld [vmem:[#allocation2 + $0x1e08] sm:$0xff]
    %v3568 = vld [vmem:[#allocation2 + $0x1e10] sm:$0xff]
    %v3569 = vld [vmem:[#allocation2 + $0x1e18] sm:$0xff]
    %v3570 = vld [vmem:[#allocation2 + $0x1e20] sm:$0xff]
    %v3571 = vld [vmem:[#allocation2 + $0x1e28] sm:$0xff]
    %v3572 = vld [vmem:[#allocation2 + $0x1e30] sm:$0xff]
    %v3573 = vld [vmem:[#allocation2 + $0x1e38] sm:$0xff]
    %v3574 = vld [vmem:[#allocation2 + $0x1e40] sm:$0xff]
    %v3575 = vld [vmem:[#allocation2 + $0x1e48] sm:$0xff]
    %v3576 = vld [vmem:[#allocation2 + $0x1e50] sm:$0xff]
    %v3577 = vld [vmem:[#allocation2 + $0x1e58] sm:$0xff]
    %v3578 = vld [vmem:[#allocation2 + $0x1e60] sm:$0xff]
    %v3579 = vld [vmem:[#allocation2 + $0x1e68] sm:$0xff]
    %v3580 = vld [vmem:[#allocation2 + $0x1e70] sm:$0xff]
    %v3581 = vld [vmem:[#allocation2 + $0x1e78] sm:$0xff]
    %v3582 = vld [vmem:[#allocation2 + $0x1e80] sm:$0xff]
    %v3583 = vld [vmem:[#allocation2 + $0x1e88] sm:$0xff]
    %v3584 = vld [vmem:[#allocation2 + $0x1e90] sm:$0xff]
    %v3585 = vld [vmem:[#allocation2 + $0x1e98] sm:$0xff]
    %v3586 = vld [vmem:[#allocation2 + $0x1ea0] sm:$0xff]
    %v3587 = vld [vmem:[#allocation2 + $0x1ea8] sm:$0xff]
    %v3588 = vld [vmem:[#allocation2 + $0x1eb0] sm:$0xff]
    %v3589 = vld [vmem:[#allocation2 + $0x1eb8] sm:$0xff]
    %v3590 = vld [vmem:[#allocation2 + $0x1ec0] sm:$0xff]
    %v3591 = vld [vmem:[#allocation2 + $0x1ec8] sm:$0xff]
    %v3592 = vld [vmem:[#allocation2 + $0x1ed0] sm:$0xff]
    %v3593 = vld [vmem:[#allocation2 + $0x1ed8] sm:$0xff]
    %v3594 = vld [vmem:[#allocation2 + $0x1ee0] sm:$0xff]
    %v3595 = vld [vmem:[#allocation2 + $0x1ee8] sm:$0xff]
    %v3596 = vld [vmem:[#allocation2 + $0x1ef0] sm:$0xff]
    %v3597 = vld [vmem:[#allocation2 + $0x1ef8] sm:$0xff]
    %v3598 = vld [vmem:[#allocation2 + $0x1f00] sm:$0xff]
    %v3599 = vld [vmem:[#allocation2 + $0x1f08] sm:$0xff]
    %v3600 = vld [vmem:[#allocation2 + $0x1f10] sm:$0xff]
    %v3601 = vld [vmem:[#allocation2 + $0x1f18] sm:$0xff]
    %v3602 = vld [vmem:[#allocation2 + $0x1f20] sm:$0xff]
    %v3603 = vld [vmem:[#allocation2 + $0x1f28] sm:$0xff]
    %v3604 = vld [vmem:[#allocation2 + $0x1f30] sm:$0xff]
    %v3605 = vld [vmem:[#allocation2 + $0x1f38] sm:$0xff]
    %v3606 = vld [vmem:[#allocation2 + $0x1f40] sm:$0xff]
    %v3607 = vld [vmem:[#allocation2 + $0x1f48] sm:$0xff]
    %v3608 = vld [vmem:[#allocation2 + $0x1f50] sm:$0xff]
    %v3609 = vld [vmem:[#allocation2 + $0x1f58] sm:$0xff]
    %v3610 = vld [vmem:[#allocation2 + $0x1f60] sm:$0xff]
    %v3611 = vld [vmem:[#allocation2 + $0x1f68] sm:$0xff]
    %v3612 = vld [vmem:[#allocation2 + $0x1f70] sm:$0xff]
    %v3613 = vld [vmem:[#allocation2 + $0x1f78] sm:$0xff]
    %v3614 = vld [vmem:[#allocation2 + $0x1f80] sm:$0xff]
    %v3615 = vld [vmem:[#allocation2 + $0x1f88] sm:$0xff]
    %v3616 = vld [vmem:[#allocation2 + $0x1f90] sm:$0xff]
    %v3617 = vld [vmem:[#allocation2 + $0x1f98] sm:$0xff]
    %v3618 = vld [vmem:[#allocation2 + $0x1fa0] sm:$0xff]
    %v3619 = vld [vmem:[#allocation2 + $0x1fa8] sm:$0xff]
    %v3620 = vld [vmem:[#allocation2 + $0x1fb0] sm:$0xff]
    %v3621 = vld [vmem:[#allocation2 + $0x1fb8] sm:$0xff]
    %v3622 = vld [vmem:[#allocation2 + $0x1fc0] sm:$0xff]
    %v3623 = vld [vmem:[#allocation2 + $0x1fc8] sm:$0xff]
    %v3624 = vld [vmem:[#allocation2 + $0x1fd0] sm:$0xff]
    %v3625 = vld [vmem:[#allocation2 + $0x1fd8] sm:$0xff]
    %v3626 = vld [vmem:[#allocation2 + $0x1fe0] sm:$0xff]
    %v3627 = vld [vmem:[#allocation2 + $0x1fe8] sm:$0xff]
    %v3628 = vld [vmem:[#allocation2 + $0x1ff0] sm:$0xff]
    %v3629 = vld [vmem:[#allocation2 + $0x1ff8] sm:$0xff]
    %v3630 = vld [vmem:[#allocation2 + $0x2000] sm:$0xff]
    %v3631 = vld [vmem:[#allocation2 + $0x2008] sm:$0xff]
    %v3632 = vld [vmem:[#allocation2 + $0x2010] sm:$0xff]
    %v3633 = vld [vmem:[#allocation2 + $0x2018] sm:$0xff]
    %v3634 = vld [vmem:[#allocation2 + $0x2020] sm:$0xff]
    %v3635 = vld [vmem:[#allocation2 + $0x2028] sm:$0xff]
    %v3636 = vld [vmem:[#allocation2 + $0x2030] sm:$0xff]
    %v3637 = vld [vmem:[#allocation2 + $0x2038] sm:$0xff]
    %v3638 = vld [vmem:[#allocation2 + $0x2040] sm:$0xff]
    %v3639 = vld [vmem:[#allocation2 + $0x2048] sm:$0xff]
    %v3640 = vld [vmem:[#allocation2 + $0x2050] sm:$0xff]
    %v3641 = vld [vmem:[#allocation2 + $0x2058] sm:$0xff]
    %v3642 = vld [vmem:[#allocation2 + $0x2060] sm:$0xff]
    %v3643 = vld [vmem:[#allocation2 + $0x2068] sm:$0xff]
    %v3644 = vld [vmem:[#allocation2 + $0x2070] sm:$0xff]
    %v3645 = vld [vmem:[#allocation2 + $0x2078] sm:$0xff]
    %v3646 = vld [vmem:[#allocation2 + $0x2080] sm:$0xff]
    %v3647 = vld [vmem:[#allocation2 + $0x2088] sm:$0xff]
    %v3648 = vld [vmem:[#allocation2 + $0x2090] sm:$0xff]
    %v3649 = vld [vmem:[#allocation2 + $0x2098] sm:$0xff]
    %v3650 = vld [vmem:[#allocation2 + $0x20a0] sm:$0xff]
    %v3651 = vld [vmem:[#allocation2 + $0x20a8] sm:$0xff]
    %v3652 = vld [vmem:[#allocation2 + $0x20b0] sm:$0xff]
    %v3653 = vld [vmem:[#allocation2 + $0x20b8] sm:$0xff]
    %v3654 = vld [vmem:[#allocation2 + $0x20c0] sm:$0xff]
    %v3655 = vld [vmem:[#allocation2 + $0x20c8] sm:$0xff]
    %v3656 = vld [vmem:[#allocation2 + $0x20d0] sm:$0xff]
    %v3657 = vld [vmem:[#allocation2 + $0x20d8] sm:$0xff]
    %v3658 = vld [vmem:[#allocation2 + $0x20e0] sm:$0xff]
    %v3659 = vld [vmem:[#allocation2 + $0x20e8] sm:$0xff]
    %v3660 = vld [vmem:[#allocation2 + $0x20f0] sm:$0xff]
    %v3661 = vld [vmem:[#allocation2 + $0x20f8] sm:$0xff]
    %v3663 = vlaneseq
    %v3664 = vshrl.u32 %v3663, 7
    %v3665 = vsub.s32 0, %v3664
    %v3666 = vrot.slane %v221, %v3665
    %v3667 = vlaneseq
    %v3668 = vshrl.u32 %v3667, 7
    %v3669 = vsub.s32 1, %v3668
    %v3670 = vrot.slane %v221, %v3669
    %v3671 = vlaneseq
    %v3672 = vshrl.u32 %v3671, 7
    %v3673 = vsub.s32 2, %v3672
    %v3674 = vrot.slane %v221, %v3673
    %v3675 = vlaneseq
    %v3676 = vshrl.u32 %v3675, 7
    %v3677 = vsub.s32 3, %v3676
    %v3678 = vrot.slane %v221, %v3677
    %v3679 = vlaneseq
    %v3680 = vshrl.u32 %v3679, 7
    %v3681 = vsub.s32 4, %v3680
    %v3682 = vrot.slane %v221, %v3681
    %v3683 = vlaneseq
    %v3684 = vshrl.u32 %v3683, 7
    %v3685 = vsub.s32 5, %v3684
    %v3686 = vrot.slane %v221, %v3685
    %3693 = vmatprep.subr.bf16.mxu0 %v3375
    %3694 = vmatpush1.bf16.msra.mxu0 %v3374
    %3695 = vmatprep.subr.bf16.mxu0 %v3381
    %3696 = vmatpush1.bf16.msra.mxu0 %v3380
    %3697 = vmatprep.subr.bf16.mxu0 %v3387
    %3698 = vmatpush1.bf16.msra.mxu0 %v3386
    %3699 = vmatprep.subr.bf16.mxu0 %v3393
    %3700 = vmatpush1.bf16.msra.mxu0 %v3392
    %3701 = vmatprep.subr.bf16.mxu0 %v3399
    %3702 = vmatpush1.bf16.msra.mxu0 %v3398
    %3703 = vmatprep.subr.bf16.mxu0 %v3405
    %3704 = vmatpush1.bf16.msra.mxu0 %v3404
    %3705 = vmatprep.subr.bf16.mxu0 %v3411
    %3706 = vmatpush1.bf16.msra.mxu0 %v3410
    %3707 = vmatprep.subr.bf16.mxu0 %v3417
    %3708 = vmatpush1.bf16.msra.mxu0 %v3416
    %3709 = vmatprep.subr.bf16.mxu0 %v3423
    %3710 = vmatpush1.bf16.msra.mxu0 %v3422
    %3711 = vmatprep.subr.bf16.mxu0 %v3429
    %3712 = vmatpush1.bf16.msra.mxu0 %v3428
    %3713 = vmatprep.subr.bf16.mxu0 %v3435
    %3714 = vmatpush1.bf16.msra.mxu0 %v3434
    %3715 = vmatprep.subr.bf16.mxu0 %v3441
    %3716 = vmatpush1.bf16.msra.mxu0 %v3440
    %3717 = vmatprep.subr.bf16.mxu0 %v3447
    %3718 = vmatpush1.bf16.msra.mxu0 %v3446
    %3719 = vmatprep.subr.bf16.mxu0 %v3453
    %3720 = vmatpush1.bf16.msra.mxu0 %v3452
    %3721 = vmatprep.subr.bf16.mxu0 %v3459
    %3722 = vmatpush1.bf16.msra.mxu0 %v3458
    %3723 = vmatprep.subr.bf16.mxu0 %v3465
    %3724 = vmatpush1.bf16.msra.mxu0 %v3464
    %3725 = vmatprep.mubr.bf16.mxu0 %v3369
    %3726 = vmatmul.mubr.bf16.gmra.mrb[0].mxu0 %v3368
    %v3727 = vpop.f32.mrb[0].mxu0
    %v3728 = vadd.f32 %v3666, %v3727
    %v3729 = vpop.f32.mrb[0].mxu0
    %v3730 = vadd.f32 %v3670, %v3729
    %v3731 = vpop.f32.mrb[0].mxu0
    %v3732 = vpop.f32.mrb[0].mxu0
    %3733 = vdwg.mxu0
    %3734 = vmatprep.subr.bf16.mxu0 %v3471
    %3735 = vmatpush1.bf16.msra.mxu0 %v3470
    %3736 = vmatprep.subr.bf16.mxu0 %v3477
    %3737 = vmatpush1.bf16.msra.mxu0 %v3476
    %3738 = vmatprep.subr.bf16.mxu0 %v3483
    %3739 = vmatpush1.bf16.msra.mxu0 %v3482
    %3740 = vmatprep.subr.bf16.mxu0 %v3489
    %3741 = vmatpush1.bf16.msra.mxu0 %v3488
    %3742 = vmatprep.subr.bf16.mxu0 %v3495
    %3743 = vmatpush1.bf16.msra.mxu0 %v3494
    %3744 = vmatprep.subr.bf16.mxu0 %v3501
    %3745 = vmatpush1.bf16.msra.mxu0 %v3500
    %3746 = vmatprep.subr.bf16.mxu0 %v3507
    %3747 = vmatpush1.bf16.msra.mxu0 %v3506
    %3748 = vmatprep.subr.bf16.mxu0 %v3513
    %3749 = vmatpush1.bf16.msra.mxu0 %v3512
    %3750 = vmatprep.subr.bf16.mxu0 %v3519
    %3751 = vmatpush1.bf16.msra.mxu0 %v3518
    %3752 = vmatprep.subr.bf16.mxu0 %v3525
    %3753 = vmatpush1.bf16.msra.mxu0 %v3524
    %3754 = vmatprep.subr.bf16.mxu0 %v3531
    %3755 = vmatpush1.bf16.msra.mxu0 %v3530
    %3756 = vmatprep.subr.bf16.mxu0 %v3537
    %3757 = vmatpush1.bf16.msra.mxu0 %v3536
    %3758 = vmatprep.subr.bf16.mxu0 %v3543
    %3759 = vmatpush1.bf16.msra.mxu0 %v3542
    %3760 = vmatprep.subr.bf16.mxu0 %v3549
    %3761 = vmatpush1.bf16.msra.mxu0 %v3548
    %3762 = vmatprep.subr.bf16.mxu0 %v3555
    %3763 = vmatpush1.bf16.msra.mxu0 %v3554
    %3764 = vmatprep.subr.bf16.mxu0 %v3561
    %3765 = vmatpush1.bf16.msra.mxu0 %v3560
    %3766 = vmatprep.mubr.bf16.mxu0 %v3371
    %3767 = vmatmul.mubr.bf16.gmra.mrb[0].mxu0 %v3370
    %v3768 = vpop.f32.mrb[0].mxu0
    %v3769 = vadd.f32 %v3728, %v3768
    %v3770 = vpop.f32.mrb[0].mxu0
    %v3771 = vadd.f32 %v3730, %v3770
    %v3772 = vpop.f32.mrb[0].mxu0
    %v3773 = vpop.f32.mrb[0].mxu0
    %3774 = vdwg.mxu0
    %3775 = vmatprep.subr.bf16.mxu0 %v3567
    %3776 = vmatpush1.bf16.msra.mxu0 %v3566
    %3777 = vmatprep.subr.bf16.mxu0 %v3573
    %3778 = vmatpush1.bf16.msra.mxu0 %v3572
    %3779 = vmatprep.subr.bf16.mxu0 %v3579
    %3780 = vmatpush1.bf16.msra.mxu0 %v3578
    %3781 = vmatprep.subr.bf16.mxu0 %v3585
    %3782 = vmatpush1.bf16.msra.mxu0 %v3584
    %3783 = vmatprep.subr.bf16.mxu0 %v3591
    %3784 = vmatpush1.bf16.msra.mxu0 %v3590
    %3785 = vmatprep.subr.bf16.mxu0 %v3597
    %3786 = vmatpush1.bf16.msra.mxu0 %v3596
    %3787 = vmatprep.subr.bf16.mxu0 %v3603
    %3788 = vmatpush1.bf16.msra.mxu0 %v3602
    %3789 = vmatprep.subr.bf16.mxu0 %v3609
    %3790 = vmatpush1.bf16.msra.mxu0 %v3608
    %3791 = vmatprep.subr.bf16.mxu0 %v3615
    %3792 = vmatpush1.bf16.msra.mxu0 %v3614
    %3793 = vmatprep.subr.bf16.mxu0 %v3621
    %3794 = vmatpush1.bf16.msra.mxu0 %v3620
    %3795 = vmatprep.subr.bf16.mxu0 %v3627
    %3796 = vmatpush1.bf16.msra.mxu0 %v3626
    %3797 = vmatprep.subr.bf16.mxu0 %v3633
    %3798 = vmatpush1.bf16.msra.mxu0 %v3632
    %3799 = vmatprep.subr.bf16.mxu0 %v3639
    %3800 = vmatpush1.bf16.msra.mxu0 %v3638
    %3801 = vmatprep.subr.bf16.mxu0 %v3645
    %3802 = vmatpush1.bf16.msra.mxu0 %v3644
    %3803 = vmatprep.subr.bf16.mxu0 %v3651
    %3804 = vmatpush1.bf16.msra.mxu0 %v3650
    %3805 = vmatprep.subr.bf16.mxu0 %v3657
    %3806 = vmatpush1.bf16.msra.mxu0 %v3656
    %3807 = vmatprep.mubr.bf16.mxu0 %v3373
    %3808 = vmatmul.mubr.bf16.gmra.mrb[0].mxu0 %v3372
    %v3809 = vpop.f32.mrb[0].mxu0
    %v3810 = vadd.f32 %v3769, %v3809
    %v3811 = vpop.f32.mrb[0].mxu0
    %v3812 = vadd.f32 %v3771, %v3811
    %v3813 = vpop.f32.mrb[0].mxu0
    %v3814 = vpop.f32.mrb[0].mxu0
    %3815 = vdwg.mxu0
    %3816 = vmatprep.subr.bf16.mxu0 %v3377
    %3817 = vmatpush1.bf16.msra.mxu0 %v3376
    %3818 = vmatprep.subr.bf16.mxu0 %v3383
    %3819 = vmatpush1.bf16.msra.mxu0 %v3382
    %3820 = vmatprep.subr.bf16.mxu0 %v3389
    %3821 = vmatpush1.bf16.msra.mxu0 %v3388
    %3822 = vmatprep.subr.bf16.mxu0 %v3395
    %3823 = vmatpush1.bf16.msra.mxu0 %v3394
    %3824 = vmatprep.subr.bf16.mxu0 %v3401
    %3825 = vmatpush1.bf16.msra.mxu0 %v3400
    %3826 = vmatprep.subr.bf16.mxu0 %v3407
    %3827 = vmatpush1.bf16.msra.mxu0 %v3406
    %3828 = vmatprep.subr.bf16.mxu0 %v3413
    %3829 = vmatpush1.bf16.msra.mxu0 %v3412
    %3830 = vmatprep.subr.bf16.mxu0 %v3419
    %3831 = vmatpush1.bf16.msra.mxu0 %v3418
    %3832 = vmatprep.subr.bf16.mxu0 %v3425
    %3833 = vmatpush1.bf16.msra.mxu0 %v3424
    %3834 = vmatprep.subr.bf16.mxu0 %v3431
    %3835 = vmatpush1.bf16.msra.mxu0 %v3430
    %3836 = vmatprep.subr.bf16.mxu0 %v3437
    %3837 = vmatpush1.bf16.msra.mxu0 %v3436
    %3838 = vmatprep.subr.bf16.mxu0 %v3443
    %3839 = vmatpush1.bf16.msra.mxu0 %v3442
    %3840 = vmatprep.subr.bf16.mxu0 %v3449
    %3841 = vmatpush1.bf16.msra.mxu0 %v3448
    %3842 = vmatprep.subr.bf16.mxu0 %v3455
    %3843 = vmatpush1.bf16.msra.mxu0 %v3454
    %3844 = vmatprep.subr.bf16.mxu0 %v3461
    %3845 = vmatpush1.bf16.msra.mxu0 %v3460
    %3846 = vmatprep.subr.bf16.mxu0 %v3467
    %3847 = vmatpush1.bf16.msra.mxu0 %v3466
    %3848 = vmatprep.mubr.bf16.mxu0 %v3369
    %3849 = vmatmul.mubr.bf16.gmra.mrb[0].mxu0 %v3368
    %v3850 = vpop.f32.mrb[0].mxu0
    %v3851 = vadd.f32 %v3674, %v3850
    %v3852 = vpop.f32.mrb[0].mxu0
    %v3853 = vadd.f32 %v3678, %v3852
    %v3854 = vpop.f32.mrb[0].mxu0
    %v3855 = vpop.f32.mrb[0].mxu0
    %3856 = vdwg.mxu0
    %3857 = vmatprep.subr.bf16.mxu0 %v3473
    %3858 = vmatpush1.bf16.msra.mxu0 %v3472
    %3859 = vmatprep.subr.bf16.mxu0 %v3479
    %3860 = vmatpush1.bf16.msra.mxu0 %v3478
    %3861 = vmatprep.subr.bf16.mxu0 %v3485
    %3862 = vmatpush1.bf16.msra.mxu0 %v3484
    %3863 = vmatprep.subr.bf16.mxu0 %v3491
    %3864 = vmatpush1.bf16.msra.mxu0 %v3490
    %3865 = vmatprep.subr.bf16.mxu0 %v3497
    %3866 = vmatpush1.bf16.msra.mxu0 %v3496
    %3867 = vmatprep.subr.bf16.mxu0 %v3503
    %3868 = vmatpush1.bf16.msra.mxu0 %v3502
    %3869 = vmatprep.subr.bf16.mxu0 %v3509
    %3870 = vmatpush1.bf16.msra.mxu0 %v3508
    %3871 = vmatprep.subr.bf16.mxu0 %v3515
    %3872 = vmatpush1.bf16.msra.mxu0 %v3514
    %3873 = vmatprep.subr.bf16.mxu0 %v3521
    %3874 = vmatpush1.bf16.msra.mxu0 %v3520
    %3875 = vmatprep.subr.bf16.mxu0 %v3527
    %3876 = vmatpush1.bf16.msra.mxu0 %v3526
    %3877 = vmatprep.subr.bf16.mxu0 %v3533
    %3878 = vmatpush1.bf16.msra.mxu0 %v3532
    %3879 = vmatprep.subr.bf16.mxu0 %v3539
    %3880 = vmatpush1.bf16.msra.mxu0 %v3538
    %3881 = vmatprep.subr.bf16.mxu0 %v3545
    %3882 = vmatpush1.bf16.msra.mxu0 %v3544
    %3883 = vmatprep.subr.bf16.mxu0 %v3551
    %3884 = vmatpush1.bf16.msra.mxu0 %v3550
    %3885 = vmatprep.subr.bf16.mxu0 %v3557
    %3886 = vmatpush1.bf16.msra.mxu0 %v3556
    %3887 = vmatprep.subr.bf16.mxu0 %v3563
    %3888 = vmatpush1.bf16.msra.mxu0 %v3562
    %3889 = vmatprep.mubr.bf16.mxu0 %v3371
    %3890 = vmatmul.mubr.bf16.gmra.mrb[0].mxu0 %v3370
    %v3891 = vpop.f32.mrb[0].mxu0
    %v3892 = vadd.f32 %v3851, %v3891
    %v3893 = vpop.f32.mrb[0].mxu0
    %v3894 = vadd.f32 %v3853, %v3893
    %v3895 = vpop.f32.mrb[0].mxu0
    %v3896 = vpop.f32.mrb[0].mxu0
    %3897 = vdwg.mxu0
    %3898 = vmatprep.subr.bf16.mxu0 %v3569
    %3899 = vmatpush1.bf16.msra.mxu0 %v3568
    %3900 = vmatprep.subr.bf16.mxu0 %v3575
    %3901 = vmatpush1.bf16.msra.mxu0 %v3574
    %3902 = vmatprep.subr.bf16.mxu0 %v3581
    %3903 = vmatpush1.bf16.msra.mxu0 %v3580
    %3904 = vmatprep.subr.bf16.mxu0 %v3587
    %3905 = vmatpush1.bf16.msra.mxu0 %v3586
    %3906 = vmatprep.subr.bf16.mxu0 %v3593
    %3907 = vmatpush1.bf16.msra.mxu0 %v3592
    %3908 = vmatprep.subr.bf16.mxu0 %v3599
    %3909 = vmatpush1.bf16.msra.mxu0 %v3598
    %3910 = vmatprep.subr.bf16.mxu0 %v3605
    %3911 = vmatpush1.bf16.msra.mxu0 %v3604
    %3912 = vmatprep.subr.bf16.mxu0 %v3611
    %3913 = vmatpush1.bf16.msra.mxu0 %v3610
    %3914 = vmatprep.subr.bf16.mxu0 %v3617
    %3915 = vmatpush1.bf16.msra.mxu0 %v3616
    %3916 = vmatprep.subr.bf16.mxu0 %v3623
    %3917 = vmatpush1.bf16.msra.mxu0 %v3622
    %3918 = vmatprep.subr.bf16.mxu0 %v3629
    %3919 = vmatpush1.bf16.msra.mxu0 %v3628
    %3920 = vmatprep.subr.bf16.mxu0 %v3635
    %3921 = vmatpush1.bf16.msra.mxu0 %v3634
    %3922 = vmatprep.subr.bf16.mxu0 %v3641
    %3923 = vmatpush1.bf16.msra.mxu0 %v3640
    %3924 = vmatprep.subr.bf16.mxu0 %v3647
    %3925 = vmatpush1.bf16.msra.mxu0 %v3646
    %3926 = vmatprep.subr.bf16.mxu0 %v3653
    %3927 = vmatpush1.bf16.msra.mxu0 %v3652
    %3928 = vmatprep.subr.bf16.mxu0 %v3659
    %3929 = vmatpush1.bf16.msra.mxu0 %v3658
    %3930 = vmatprep.mubr.bf16.mxu0 %v3373
    %3931 = vmatmul.mubr.bf16.gmra.mrb[0].mxu0 %v3372
    %v3932 = vpop.f32.mrb[0].mxu0
    %v3933 = vadd.f32 %v3892, %v3932
    %v3934 = vpop.f32.mrb[0].mxu0
    %v3935 = vadd.f32 %v3894, %v3934
    %v3936 = vpop.f32.mrb[0].mxu0
    %v3937 = vpop.f32.mrb[0].mxu0
    %3938 = vdwg.mxu0
    %3939 = vmatprep.subr.bf16.mxu0 %v3379
    %3940 = vmatpush1.bf16.msra.mxu0 %v3378
    %3941 = vmatprep.subr.bf16.mxu0 %v3385
    %3942 = vmatpush1.bf16.msra.mxu0 %v3384
    %3943 = vmatprep.subr.bf16.mxu0 %v3391
    %3944 = vmatpush1.bf16.msra.mxu0 %v3390
    %3945 = vmatprep.subr.bf16.mxu0 %v3397
    %3946 = vmatpush1.bf16.msra.mxu0 %v3396
    %3947 = vmatprep.subr.bf16.mxu0 %v3403
    %3948 = vmatpush1.bf16.msra.mxu0 %v3402
    %3949 = vmatprep.subr.bf16.mxu0 %v3409
    %3950 = vmatpush1.bf16.msra.mxu0 %v3408
    %3951 = vmatprep.subr.bf16.mxu0 %v3415
    %3952 = vmatpush1.bf16.msra.mxu0 %v3414
    %3953 = vmatprep.subr.bf16.mxu0 %v3421
    %3954 = vmatpush1.bf16.msra.mxu0 %v3420
    %3955 = vmatprep.subr.bf16.mxu0 %v3427
    %3956 = vmatpush1.bf16.msra.mxu0 %v3426
    %3957 = vmatprep.subr.bf16.mxu0 %v3433
    %3958 = vmatpush1.bf16.msra.mxu0 %v3432
    %3959 = vmatprep.subr.bf16.mxu0 %v3439
    %3960 = vmatpush1.bf16.msra.mxu0 %v3438
    %3961 = vmatprep.subr.bf16.mxu0 %v3445
    %3962 = vmatpush1.bf16.msra.mxu0 %v3444
    %3963 = vmatprep.subr.bf16.mxu0 %v3451
    %3964 = vmatpush1.bf16.msra.mxu0 %v3450
    %3965 = vmatprep.subr.bf16.mxu0 %v3457
    %3966 = vmatpush1.bf16.msra.mxu0 %v3456
    %3967 = vmatprep.subr.bf16.mxu0 %v3463
    %3968 = vmatpush1.bf16.msra.mxu0 %v3462
    %3969 = vmatprep.subr.bf16.mxu0 %v3469
    %3970 = vmatpush1.bf16.msra.mxu0 %v3468
    %3971 = vmatprep.mubr.bf16.mxu0 %v3369
    %3972 = vmatmul.mubr.bf16.gmra.mrb[0].mxu0 %v3368
    %v3973 = vpop.f32.mrb[0].mxu0
    %v3974 = vadd.f32 %v3682, %v3973
    %v3975 = vpop.f32.mrb[0].mxu0
    %v3976 = vadd.f32 %v3686, %v3975
    %v3977 = vpop.f32.mrb[0].mxu0
    %v3978 = vpop.f32.mrb[0].mxu0
    %3979 = vdwg.mxu0
    %3980 = vmatprep.subr.bf16.mxu0 %v3475
    %3981 = vmatpush1.bf16.msra.mxu0 %v3474
    %3982 = vmatprep.subr.bf16.mxu0 %v3481
    %3983 = vmatpush1.bf16.msra.mxu0 %v3480
    %3984 = vmatprep.subr.bf16.mxu0 %v3487
    %3985 = vmatpush1.bf16.msra.mxu0 %v3486
    %3986 = vmatprep.subr.bf16.mxu0 %v3493
    %3987 = vmatpush1.bf16.msra.mxu0 %v3492
    %3988 = vmatprep.subr.bf16.mxu0 %v3499
    %3989 = vmatpush1.bf16.msra.mxu0 %v3498
    %3990 = vmatprep.subr.bf16.mxu0 %v3505
    %3991 = vmatpush1.bf16.msra.mxu0 %v3504
    %3992 = vmatprep.subr.bf16.mxu0 %v3511
    %3993 = vmatpush1.bf16.msra.mxu0 %v3510
    %3994 = vmatprep.subr.bf16.mxu0 %v3517
    %3995 = vmatpush1.bf16.msra.mxu0 %v3516
    %3996 = vmatprep.subr.bf16.mxu0 %v3523
    %3997 = vmatpush1.bf16.msra.mxu0 %v3522
    %3998 = vmatprep.subr.bf16.mxu0 %v3529
    %3999 = vmatpush1.bf16.msra.mxu0 %v3528
    %4000 = vmatprep.subr.bf16.mxu0 %v3535
    %4001 = vmatpush1.bf16.msra.mxu0 %v3534
    %4002 = vmatprep.subr.bf16.mxu0 %v3541
    %4003 = vmatpush1.bf16.msra.mxu0 %v3540
    %4004 = vmatprep.subr.bf16.mxu0 %v3547
    %4005 = vmatpush1.bf16.msra.mxu0 %v3546
    %4006 = vmatprep.subr.bf16.mxu0 %v3553
    %4007 = vmatpush1.bf16.msra.mxu0 %v3552
    %4008 = vmatprep.subr.bf16.mxu0 %v3559
    %4009 = vmatpush1.bf16.msra.mxu0 %v3558
    %4010 = vmatprep.subr.bf16.mxu0 %v3565
    %4011 = vmatpush1.bf16.msra.mxu0 %v3564
    %4012 = vmatprep.mubr.bf16.mxu0 %v3371
    %4013 = vmatmul.mubr.bf16.gmra.mrb[0].mxu0 %v3370
    %v4014 = vpop.f32.mrb[0].mxu0
    %v4015 = vadd.f32 %v3974, %v4014
    %v4016 = vpop.f32.mrb[0].mxu0
    %v4017 = vadd.f32 %v3976, %v4016
    %v4018 = vpop.f32.mrb[0].mxu0
    %v4019 = vpop.f32.mrb[0].mxu0
    %4020 = vdwg.mxu0
    %4021 = vmatprep.subr.bf16.mxu0 %v3571
    %4022 = vmatpush1.bf16.msra.mxu0 %v3570
    %4023 = vmatprep.subr.bf16.mxu0 %v3577
    %4024 = vmatpush1.bf16.msra.mxu0 %v3576
    %4025 = vmatprep.subr.bf16.mxu0 %v3583
    %4026 = vmatpush1.bf16.msra.mxu0 %v3582
    %4027 = vmatprep.subr.bf16.mxu0 %v3589
    %4028 = vmatpush1.bf16.msra.mxu0 %v3588
    %4029 = vmatprep.subr.bf16.mxu0 %v3595
    %4030 = vmatpush1.bf16.msra.mxu0 %v3594
    %4031 = vmatprep.subr.bf16.mxu0 %v3601
    %4032 = vmatpush1.bf16.msra.mxu0 %v3600
    %4033 = vmatprep.subr.bf16.mxu0 %v3607
    %4034 = vmatpush1.bf16.msra.mxu0 %v3606
    %4035 = vmatprep.subr.bf16.mxu0 %v3613
    %4036 = vmatpush1.bf16.msra.mxu0 %v3612
    %4037 = vmatprep.subr.bf16.mxu0 %v3619
    %4038 = vmatpush1.bf16.msra.mxu0 %v3618
    %4039 = vmatprep.subr.bf16.mxu0 %v3625
    %4040 = vmatpush1.bf16.msra.mxu0 %v3624
    %4041 = vmatprep.subr.bf16.mxu0 %v3631
    %4042 = vmatpush1.bf16.msra.mxu0 %v3630
    %4043 = vmatprep.subr.bf16.mxu0 %v3637
    %4044 = vmatpush1.bf16.msra.mxu0 %v3636
    %4045 = vmatprep.subr.bf16.mxu0 %v3643
    %4046 = vmatpush1.bf16.msra.mxu0 %v3642
    %4047 = vmatprep.subr.bf16.mxu0 %v3649
    %4048 = vmatpush1.bf16.msra.mxu0 %v3648
    %4049 = vmatprep.subr.bf16.mxu0 %v3655
    %4050 = vmatpush1.bf16.msra.mxu0 %v3654
    %4051 = vmatprep.subr.bf16.mxu0 %v3661
    %4052 = vmatpush1.bf16.msra.mxu0 %v3660
    %4053 = vmatprep.mubr.bf16.mxu0 %v3373
    %4054 = vmatmul.mubr.bf16.gmra.mrb[0].mxu0 %v3372
    %v4055 = vpop.f32.mrb[0].mxu0
    %v4056 = vadd.f32 %v4015, %v4055
    %v4057 = vpop.f32.mrb[0].mxu0
    %v4058 = vadd.f32 %v4017, %v4057
    %v4059 = vpop.f32.mrb[0].mxu0
    %v4060 = vpop.f32.mrb[0].mxu0
    %4061 = vdwg.mxu0
    %s4062 = smul.u32 4, 192
    %s4063 = smul.u32 %s4062, 6
    %s4064 = sshll.u32 %s4063, 4
    %4065 = dma.done %s151, %s4064
    %v4066 = vpack.c.bf16 %v1598, %v1598
    %v4067 = vpack.c.bf16 %v1600, %v1600
    %v4068 = vpack.c.bf16 %v1680, %v1680
    %v4069 = vpack.c.bf16 %v1682, %v1682
    %v4070 = vpack.c.bf16 %v1762, %v1762
    %v4071 = vpack.c.bf16 %v1764, %v1764
    %v4072 = vld [vmem:[#allocation2 + $0x2100] sm:$0xff]
    %v4073 = vld [vmem:[#allocation2 + $0x2108] sm:$0xff]
    %v4074 = vld [vmem:[#allocation2 + $0x2110] sm:$0xff]
    %v4075 = vld [vmem:[#allocation2 + $0x2118] sm:$0xff]
    %v4076 = vld [vmem:[#allocation2 + $0x2120] sm:$0xff]
    %v4077 = vld [vmem:[#allocation2 + $0x2128] sm:$0xff]
    %v4078 = vld [vmem:[#allocation2 + $0x2130] sm:$0xff]
    %v4079 = vld [vmem:[#allocation2 + $0x2138] sm:$0xff]
    %v4080 = vld [vmem:[#allocation2 + $0x2140] sm:$0xff]
    %v4081 = vld [vmem:[#allocation2 + $0x2148] sm:$0xff]
    %v4082 = vld [vmem:[#allocation2 + $0x2150] sm:$0xff]
    %v4083 = vld [vmem:[#allocation2 + $0x2158] sm:$0xff]
    %v4084 = vld [vmem:[#allocation2 + $0x2160] sm:$0xff]
    %v4085 = vld [vmem:[#allocation2 + $0x2168] sm:$0xff]
    %v4086 = vld [vmem:[#allocation2 + $0x2170] sm:$0xff]
    %v4087 = vld [vmem:[#allocation2 + $0x2178] sm:$0xff]
    %v4088 = vld [vmem:[#allocation2 + $0x2180] sm:$0xff]
    %v4089 = vld [vmem:[#allocation2 + $0x2188] sm:$0xff]
    %v4090 = vld [vmem:[#allocation2 + $0x2190] sm:$0xff]
    %v4091 = vld [vmem:[#allocation2 + $0x2198] sm:$0xff]
    %v4092 = vld [vmem:[#allocation2 + $0x21a0] sm:$0xff]
    %v4093 = vld [vmem:[#allocation2 + $0x21a8] sm:$0xff]
    %v4094 = vld [vmem:[#allocation2 + $0x21b0] sm:$0xff]
    %v4095 = vld [vmem:[#allocation2 + $0x21b8] sm:$0xff]
    %v4096 = vld [vmem:[#allocation2 + $0x21c0] sm:$0xff]
    %v4097 = vld [vmem:[#allocation2 + $0x21c8] sm:$0xff]
    %v4098 = vld [vmem:[#allocation2 + $0x21d0] sm:$0xff]
    %v4099 = vld [vmem:[#allocation2 + $0x21d8] sm:$0xff]
    %v4100 = vld [vmem:[#allocation2 + $0x21e0] sm:$0xff]
    %v4101 = vld [vmem:[#allocation2 + $0x21e8] sm:$0xff]
    %v4102 = vld [vmem:[#allocation2 + $0x21f0] sm:$0xff]
    %v4103 = vld [vmem:[#allocation2 + $0x21f8] sm:$0xff]
    %v4104 = vld [vmem:[#allocation2 + $0x2200] sm:$0xff]
    %v4105 = vld [vmem:[#allocation2 + $0x2208] sm:$0xff]
    %v4106 = vld [vmem:[#allocation2 + $0x2210] sm:$0xff]
    %v4107 = vld [vmem:[#allocation2 + $0x2218] sm:$0xff]
    %v4108 = vld [vmem:[#allocation2 + $0x2220] sm:$0xff]
    %v4109 = vld [vmem:[#allocation2 + $0x2228] sm:$0xff]
    %v4110 = vld [vmem:[#allocation2 + $0x2230] sm:$0xff]
    %v4111 = vld [vmem:[#allocation2 + $0x2238] sm:$0xff]
    %v4112 = vld [vmem:[#allocation2 + $0x2240] sm:$0xff]
    %v4113 = vld [vmem:[#allocation2 + $0x2248] sm:$0xff]
    %v4114 = vld [vmem:[#allocation2 + $0x2250] sm:$0xff]
    %v4115 = vld [vmem:[#allocation2 + $0x2258] sm:$0xff]
    %v4116 = vld [vmem:[#allocation2 + $0x2260] sm:$0xff]
    %v4117 = vld [vmem:[#allocation2 + $0x2268] sm:$0xff]
    %v4118 = vld [vmem:[#allocation2 + $0x2270] sm:$0xff]
    %v4119 = vld [vmem:[#allocation2 + $0x2278] sm:$0xff]
    %v4120 = vld [vmem:[#allocation2 + $0x2280] sm:$0xff]
    %v4121 = vld [vmem:[#allocation2 + $0x2288] sm:$0xff]
    %v4122 = vld [vmem:[#allocation2 + $0x2290] sm:$0xff]
    %v4123 = vld [vmem:[#allocation2 + $0x2298] sm:$0xff]
    %v4124 = vld [vmem:[#allocation2 + $0x22a0] sm:$0xff]
    %v4125 = vld [vmem:[#allocation2 + $0x22a8] sm:$0xff]
    %v4126 = vld [vmem:[#allocation2 + $0x22b0] sm:$0xff]
    %v4127 = vld [vmem:[#allocation2 + $0x22b8] sm:$0xff]
    %v4128 = vld [vmem:[#allocation2 + $0x22c0] sm:$0xff]
    %v4129 = vld [vmem:[#allocation2 + $0x22c8] sm:$0xff]
    %v4130 = vld [vmem:[#allocation2 + $0x22d0] sm:$0xff]
    %v4131 = vld [vmem:[#allocation2 + $0x22d8] sm:$0xff]
    %v4132 = vld [vmem:[#allocation2 + $0x22e0] sm:$0xff]
    %v4133 = vld [vmem:[#allocation2 + $0x22e8] sm:$0xff]
    %v4134 = vld [vmem:[#allocation2 + $0x22f0] sm:$0xff]
    %v4135 = vld [vmem:[#allocation2 + $0x22f8] sm:$0xff]
    %v4136 = vld [vmem:[#allocation2 + $0x2300] sm:$0xff]
    %v4137 = vld [vmem:[#allocation2 + $0x2308] sm:$0xff]
    %v4138 = vld [vmem:[#allocation2 + $0x2310] sm:$0xff]
    %v4139 = vld [vmem:[#allocation2 + $0x2318] sm:$0xff]
    %v4140 = vld [vmem:[#allocation2 + $0x2320] sm:$0xff]
    %v4141 = vld [vmem:[#allocation2 + $0x2328] sm:$0xff]
    %v4142 = vld [vmem:[#allocation2 + $0x2330] sm:$0xff]
    %v4143 = vld [vmem:[#allocation2 + $0x2338] sm:$0xff]
    %v4144 = vld [vmem:[#allocation2 + $0x2340] sm:$0xff]
    %v4145 = vld [vmem:[#allocation2 + $0x2348] sm:$0xff]
    %v4146 = vld [vmem:[#allocation2 + $0x2350] sm:$0xff]
    %v4147 = vld [vmem:[#allocation2 + $0x2358] sm:$0xff]
    %v4148 = vld [vmem:[#allocation2 + $0x2360] sm:$0xff]
    %v4149 = vld [vmem:[#allocation2 + $0x2368] sm:$0xff]
    %v4150 = vld [vmem:[#allocation2 + $0x2370] sm:$0xff]
    %v4151 = vld [vmem:[#allocation2 + $0x2378] sm:$0xff]
    %v4152 = vld [vmem:[#allocation2 + $0x2380] sm:$0xff]
    %v4153 = vld [vmem:[#allocation2 + $0x2388] sm:$0xff]
    %v4154 = vld [vmem:[#allocation2 + $0x2390] sm:$0xff]
    %v4155 = vld [vmem:[#allocation2 + $0x2398] sm:$0xff]
    %v4156 = vld [vmem:[#allocation2 + $0x23a0] sm:$0xff]
    %v4157 = vld [vmem:[#allocation2 + $0x23a8] sm:$0xff]
    %v4158 = vld [vmem:[#allocation2 + $0x23b0] sm:$0xff]
    %v4159 = vld [vmem:[#allocation2 + $0x23b8] sm:$0xff]
    %v4160 = vld [vmem:[#allocation2 + $0x23c0] sm:$0xff]
    %v4161 = vld [vmem:[#allocation2 + $0x23c8] sm:$0xff]
    %v4162 = vld [vmem:[#allocation2 + $0x23d0] sm:$0xff]
    %v4163 = vld [vmem:[#allocation2 + $0x23d8] sm:$0xff]
    %v4164 = vld [vmem:[#allocation2 + $0x23e0] sm:$0xff]
    %v4165 = vld [vmem:[#allocation2 + $0x23e8] sm:$0xff]
    %v4166 = vld [vmem:[#allocation2 + $0x23f0] sm:$0xff]
    %v4167 = vld [vmem:[#allocation2 + $0x23f8] sm:$0xff]
    %v4168 = vld [vmem:[#allocation2 + $0x2400] sm:$0xff]
    %v4169 = vld [vmem:[#allocation2 + $0x2408] sm:$0xff]
    %v4170 = vld [vmem:[#allocation2 + $0x2410] sm:$0xff]
    %v4171 = vld [vmem:[#allocation2 + $0x2418] sm:$0xff]
    %v4172 = vld [vmem:[#allocation2 + $0x2420] sm:$0xff]
    %v4173 = vld [vmem:[#allocation2 + $0x2428] sm:$0xff]
    %v4174 = vld [vmem:[#allocation2 + $0x2430] sm:$0xff]
    %v4175 = vld [vmem:[#allocation2 + $0x2438] sm:$0xff]
    %v4176 = vld [vmem:[#allocation2 + $0x2440] sm:$0xff]
    %v4177 = vld [vmem:[#allocation2 + $0x2448] sm:$0xff]
    %v4178 = vld [vmem:[#allocation2 + $0x2450] sm:$0xff]
    %v4179 = vld [vmem:[#allocation2 + $0x2458] sm:$0xff]
    %v4180 = vld [vmem:[#allocation2 + $0x2460] sm:$0xff]
    %v4181 = vld [vmem:[#allocation2 + $0x2468] sm:$0xff]
    %v4182 = vld [vmem:[#allocation2 + $0x2470] sm:$0xff]
    %v4183 = vld [vmem:[#allocation2 + $0x2478] sm:$0xff]
    %v4184 = vld [vmem:[#allocation2 + $0x2480] sm:$0xff]
    %v4185 = vld [vmem:[#allocation2 + $0x2488] sm:$0xff]
    %v4186 = vld [vmem:[#allocation2 + $0x2490] sm:$0xff]
    %v4187 = vld [vmem:[#allocation2 + $0x2498] sm:$0xff]
    %v4188 = vld [vmem:[#allocation2 + $0x24a0] sm:$0xff]
    %v4189 = vld [vmem:[#allocation2 + $0x24a8] sm:$0xff]
    %v4190 = vld [vmem:[#allocation2 + $0x24b0] sm:$0xff]
    %v4191 = vld [vmem:[#allocation2 + $0x24b8] sm:$0xff]
    %v4192 = vld [vmem:[#allocation2 + $0x24c0] sm:$0xff]
    %v4193 = vld [vmem:[#allocation2 + $0x24c8] sm:$0xff]
    %v4194 = vld [vmem:[#allocation2 + $0x24d0] sm:$0xff]
    %v4195 = vld [vmem:[#allocation2 + $0x24d8] sm:$0xff]
    %v4196 = vld [vmem:[#allocation2 + $0x24e0] sm:$0xff]
    %v4197 = vld [vmem:[#allocation2 + $0x24e8] sm:$0xff]
    %v4198 = vld [vmem:[#allocation2 + $0x24f0] sm:$0xff]
    %v4199 = vld [vmem:[#allocation2 + $0x24f8] sm:$0xff]
    %v4200 = vld [vmem:[#allocation2 + $0x2500] sm:$0xff]
    %v4201 = vld [vmem:[#allocation2 + $0x2508] sm:$0xff]
    %v4202 = vld [vmem:[#allocation2 + $0x2510] sm:$0xff]
    %v4203 = vld [vmem:[#allocation2 + $0x2518] sm:$0xff]
    %v4204 = vld [vmem:[#allocation2 + $0x2520] sm:$0xff]
    %v4205 = vld [vmem:[#allocation2 + $0x2528] sm:$0xff]
    %v4206 = vld [vmem:[#allocation2 + $0x2530] sm:$0xff]
    %v4207 = vld [vmem:[#allocation2 + $0x2538] sm:$0xff]
    %v4208 = vld [vmem:[#allocation2 + $0x2540] sm:$0xff]
    %v4209 = vld [vmem:[#allocation2 + $0x2548] sm:$0xff]
    %v4210 = vld [vmem:[#allocation2 + $0x2550] sm:$0xff]
    %v4211 = vld [vmem:[#allocation2 + $0x2558] sm:$0xff]
    %v4212 = vld [vmem:[#allocation2 + $0x2560] sm:$0xff]
    %v4213 = vld [vmem:[#allocation2 + $0x2568] sm:$0xff]
    %v4214 = vld [vmem:[#allocation2 + $0x2570] sm:$0xff]
    %v4215 = vld [vmem:[#allocation2 + $0x2578] sm:$0xff]
    %v4216 = vld [vmem:[#allocation2 + $0x2580] sm:$0xff]
    %v4217 = vld [vmem:[#allocation2 + $0x2588] sm:$0xff]
    %v4218 = vld [vmem:[#allocation2 + $0x2590] sm:$0xff]
    %v4219 = vld [vmem:[#allocation2 + $0x2598] sm:$0xff]
    %v4220 = vld [vmem:[#allocation2 + $0x25a0] sm:$0xff]
    %v4221 = vld [vmem:[#allocation2 + $0x25a8] sm:$0xff]
    %v4222 = vld [vmem:[#allocation2 + $0x25b0] sm:$0xff]
    %v4223 = vld [vmem:[#allocation2 + $0x25b8] sm:$0xff]
    %v4224 = vld [vmem:[#allocation2 + $0x25c0] sm:$0xff]
    %v4225 = vld [vmem:[#allocation2 + $0x25c8] sm:$0xff]
    %v4226 = vld [vmem:[#allocation2 + $0x25d0] sm:$0xff]
    %v4227 = vld [vmem:[#allocation2 + $0x25d8] sm:$0xff]
    %v4228 = vld [vmem:[#allocation2 + $0x25e0] sm:$0xff]
    %v4229 = vld [vmem:[#allocation2 + $0x25e8] sm:$0xff]
    %v4230 = vld [vmem:[#allocation2 + $0x25f0] sm:$0xff]
    %v4231 = vld [vmem:[#allocation2 + $0x25f8] sm:$0xff]
    %v4232 = vld [vmem:[#allocation2 + $0x2600] sm:$0xff]
    %v4233 = vld [vmem:[#allocation2 + $0x2608] sm:$0xff]
    %v4234 = vld [vmem:[#allocation2 + $0x2610] sm:$0xff]
    %v4235 = vld [vmem:[#allocation2 + $0x2618] sm:$0xff]
    %v4236 = vld [vmem:[#allocation2 + $0x2620] sm:$0xff]
    %v4237 = vld [vmem:[#allocation2 + $0x2628] sm:$0xff]
    %v4238 = vld [vmem:[#allocation2 + $0x2630] sm:$0xff]
    %v4239 = vld [vmem:[#allocation2 + $0x2638] sm:$0xff]
    %v4240 = vld [vmem:[#allocation2 + $0x2640] sm:$0xff]
    %v4241 = vld [vmem:[#allocation2 + $0x2648] sm:$0xff]
    %v4242 = vld [vmem:[#allocation2 + $0x2650] sm:$0xff]
    %v4243 = vld [vmem:[#allocation2 + $0x2658] sm:$0xff]
    %v4244 = vld [vmem:[#allocation2 + $0x2660] sm:$0xff]
    %v4245 = vld [vmem:[#allocation2 + $0x2668] sm:$0xff]
    %v4246 = vld [vmem:[#allocation2 + $0x2670] sm:$0xff]
    %v4247 = vld [vmem:[#allocation2 + $0x2678] sm:$0xff]
    %v4248 = vld [vmem:[#allocation2 + $0x2680] sm:$0xff]
    %v4249 = vld [vmem:[#allocation2 + $0x2688] sm:$0xff]
    %v4250 = vld [vmem:[#allocation2 + $0x2690] sm:$0xff]
    %v4251 = vld [vmem:[#allocation2 + $0x2698] sm:$0xff]
    %v4252 = vld [vmem:[#allocation2 + $0x26a0] sm:$0xff]
    %v4253 = vld [vmem:[#allocation2 + $0x26a8] sm:$0xff]
    %v4254 = vld [vmem:[#allocation2 + $0x26b0] sm:$0xff]
    %v4255 = vld [vmem:[#allocation2 + $0x26b8] sm:$0xff]
    %v4256 = vld [vmem:[#allocation2 + $0x26c0] sm:$0xff]
    %v4257 = vld [vmem:[#allocation2 + $0x26c8] sm:$0xff]
    %v4258 = vld [vmem:[#allocation2 + $0x26d0] sm:$0xff]
    %v4259 = vld [vmem:[#allocation2 + $0x26d8] sm:$0xff]
    %v4260 = vld [vmem:[#allocation2 + $0x26e0] sm:$0xff]
    %v4261 = vld [vmem:[#allocation2 + $0x26e8] sm:$0xff]
    %v4262 = vld [vmem:[#allocation2 + $0x26f0] sm:$0xff]
    %v4263 = vld [vmem:[#allocation2 + $0x26f8] sm:$0xff]
    %v4264 = vld [vmem:[#allocation2 + $0x2700] sm:$0xff]
    %v4265 = vld [vmem:[#allocation2 + $0x2708] sm:$0xff]
    %v4266 = vld [vmem:[#allocation2 + $0x2710] sm:$0xff]
    %v4267 = vld [vmem:[#allocation2 + $0x2718] sm:$0xff]
    %v4268 = vld [vmem:[#allocation2 + $0x2720] sm:$0xff]
    %v4269 = vld [vmem:[#allocation2 + $0x2728] sm:$0xff]
    %v4270 = vld [vmem:[#allocation2 + $0x2730] sm:$0xff]
    %v4271 = vld [vmem:[#allocation2 + $0x2738] sm:$0xff]
    %v4272 = vld [vmem:[#allocation2 + $0x2740] sm:$0xff]
    %v4273 = vld [vmem:[#allocation2 + $0x2748] sm:$0xff]
    %v4274 = vld [vmem:[#allocation2 + $0x2750] sm:$0xff]
    %v4275 = vld [vmem:[#allocation2 + $0x2758] sm:$0xff]
    %v4276 = vld [vmem:[#allocation2 + $0x2760] sm:$0xff]
    %v4277 = vld [vmem:[#allocation2 + $0x2768] sm:$0xff]
    %v4278 = vld [vmem:[#allocation2 + $0x2770] sm:$0xff]
    %v4279 = vld [vmem:[#allocation2 + $0x2778] sm:$0xff]
    %v4280 = vld [vmem:[#allocation2 + $0x2780] sm:$0xff]
    %v4281 = vld [vmem:[#allocation2 + $0x2788] sm:$0xff]
    %v4282 = vld [vmem:[#allocation2 + $0x2790] sm:$0xff]
    %v4283 = vld [vmem:[#allocation2 + $0x2798] sm:$0xff]
    %v4284 = vld [vmem:[#allocation2 + $0x27a0] sm:$0xff]
    %v4285 = vld [vmem:[#allocation2 + $0x27a8] sm:$0xff]
    %v4286 = vld [vmem:[#allocation2 + $0x27b0] sm:$0xff]
    %v4287 = vld [vmem:[#allocation2 + $0x27b8] sm:$0xff]
    %v4288 = vld [vmem:[#allocation2 + $0x27c0] sm:$0xff]
    %v4289 = vld [vmem:[#allocation2 + $0x27c8] sm:$0xff]
    %v4290 = vld [vmem:[#allocation2 + $0x27d0] sm:$0xff]
    %v4291 = vld [vmem:[#allocation2 + $0x27d8] sm:$0xff]
    %v4292 = vld [vmem:[#allocation2 + $0x27e0] sm:$0xff]
    %v4293 = vld [vmem:[#allocation2 + $0x27e8] sm:$0xff]
    %v4294 = vld [vmem:[#allocation2 + $0x27f0] sm:$0xff]
    %v4295 = vld [vmem:[#allocation2 + $0x27f8] sm:$0xff]
    %v4296 = vld [vmem:[#allocation2 + $0x2800] sm:$0xff]
    %v4297 = vld [vmem:[#allocation2 + $0x2808] sm:$0xff]
    %v4298 = vld [vmem:[#allocation2 + $0x2810] sm:$0xff]
    %v4299 = vld [vmem:[#allocation2 + $0x2818] sm:$0xff]
    %v4300 = vld [vmem:[#allocation2 + $0x2820] sm:$0xff]
    %v4301 = vld [vmem:[#allocation2 + $0x2828] sm:$0xff]
    %v4302 = vld [vmem:[#allocation2 + $0x2830] sm:$0xff]
    %v4303 = vld [vmem:[#allocation2 + $0x2838] sm:$0xff]
    %v4304 = vld [vmem:[#allocation2 + $0x2840] sm:$0xff]
    %v4305 = vld [vmem:[#allocation2 + $0x2848] sm:$0xff]
    %v4306 = vld [vmem:[#allocation2 + $0x2850] sm:$0xff]
    %v4307 = vld [vmem:[#allocation2 + $0x2858] sm:$0xff]
    %v4308 = vld [vmem:[#allocation2 + $0x2860] sm:$0xff]
    %v4309 = vld [vmem:[#allocation2 + $0x2868] sm:$0xff]
    %v4310 = vld [vmem:[#allocation2 + $0x2870] sm:$0xff]
    %v4311 = vld [vmem:[#allocation2 + $0x2878] sm:$0xff]
    %v4312 = vld [vmem:[#allocation2 + $0x2880] sm:$0xff]
    %v4313 = vld [vmem:[#allocation2 + $0x2888] sm:$0xff]
    %v4314 = vld [vmem:[#allocation2 + $0x2890] sm:$0xff]
    %v4315 = vld [vmem:[#allocation2 + $0x2898] sm:$0xff]
    %v4316 = vld [vmem:[#allocation2 + $0x28a0] sm:$0xff]
    %v4317 = vld [vmem:[#allocation2 + $0x28a8] sm:$0xff]
    %v4318 = vld [vmem:[#allocation2 + $0x28b0] sm:$0xff]
    %v4319 = vld [vmem:[#allocation2 + $0x28b8] sm:$0xff]
    %v4320 = vld [vmem:[#allocation2 + $0x28c0] sm:$0xff]
    %v4321 = vld [vmem:[#allocation2 + $0x28c8] sm:$0xff]
    %v4322 = vld [vmem:[#allocation2 + $0x28d0] sm:$0xff]
    %v4323 = vld [vmem:[#allocation2 + $0x28d8] sm:$0xff]
    %v4324 = vld [vmem:[#allocation2 + $0x28e0] sm:$0xff]
    %v4325 = vld [vmem:[#allocation2 + $0x28e8] sm:$0xff]
    %v4326 = vld [vmem:[#allocation2 + $0x28f0] sm:$0xff]
    %v4327 = vld [vmem:[#allocation2 + $0x28f8] sm:$0xff]
    %v4328 = vld [vmem:[#allocation2 + $0x2900] sm:$0xff]
    %v4329 = vld [vmem:[#allocation2 + $0x2908] sm:$0xff]
    %v4330 = vld [vmem:[#allocation2 + $0x2910] sm:$0xff]
    %v4331 = vld [vmem:[#allocation2 + $0x2918] sm:$0xff]
    %v4332 = vld [vmem:[#allocation2 + $0x2920] sm:$0xff]
    %v4333 = vld [vmem:[#allocation2 + $0x2928] sm:$0xff]
    %v4334 = vld [vmem:[#allocation2 + $0x2930] sm:$0xff]
    %v4335 = vld [vmem:[#allocation2 + $0x2938] sm:$0xff]
    %v4336 = vld [vmem:[#allocation2 + $0x2940] sm:$0xff]
    %v4337 = vld [vmem:[#allocation2 + $0x2948] sm:$0xff]
    %v4338 = vld [vmem:[#allocation2 + $0x2950] sm:$0xff]
    %v4339 = vld [vmem:[#allocation2 + $0x2958] sm:$0xff]
    %v4340 = vld [vmem:[#allocation2 + $0x2960] sm:$0xff]
    %v4341 = vld [vmem:[#allocation2 + $0x2968] sm:$0xff]
    %v4342 = vld [vmem:[#allocation2 + $0x2970] sm:$0xff]
    %v4343 = vld [vmem:[#allocation2 + $0x2978] sm:$0xff]
    %v4344 = vld [vmem:[#allocation2 + $0x2980] sm:$0xff]
    %v4345 = vld [vmem:[#allocation2 + $0x2988] sm:$0xff]
    %v4346 = vld [vmem:[#allocation2 + $0x2990] sm:$0xff]
    %v4347 = vld [vmem:[#allocation2 + $0x2998] sm:$0xff]
    %v4348 = vld [vmem:[#allocation2 + $0x29a0] sm:$0xff]
    %v4349 = vld [vmem:[#allocation2 + $0x29a8] sm:$0xff]
    %v4350 = vld [vmem:[#allocation2 + $0x29b0] sm:$0xff]
    %v4351 = vld [vmem:[#allocation2 + $0x29b8] sm:$0xff]
    %v4352 = vld [vmem:[#allocation2 + $0x29c0] sm:$0xff]
    %v4353 = vld [vmem:[#allocation2 + $0x29c8] sm:$0xff]
    %v4354 = vld [vmem:[#allocation2 + $0x29d0] sm:$0xff]
    %v4355 = vld [vmem:[#allocation2 + $0x29d8] sm:$0xff]
    %v4356 = vld [vmem:[#allocation2 + $0x29e0] sm:$0xff]
    %v4357 = vld [vmem:[#allocation2 + $0x29e8] sm:$0xff]
    %v4358 = vld [vmem:[#allocation2 + $0x29f0] sm:$0xff]
    %v4359 = vld [vmem:[#allocation2 + $0x29f8] sm:$0xff]
    %v4360 = vpack.c.bf16 %v3810, %v3810
    %v4361 = vpack.c.bf16 %v3812, %v3812
    %v4362 = vpack.c.bf16 %v3933, %v3933
    %v4363 = vpack.c.bf16 %v3935, %v3935
    %v4364 = vpack.c.bf16 %v4056, %v4056
    %v4365 = vpack.c.bf16 %v4058, %v4058
    %v4366 = vld [vmem:[#allocation2 + $0x2a00] sm:$0xff]
    %v4367 = vld [vmem:[#allocation2 + $0x2a08] sm:$0xff]
    %v4368 = vld [vmem:[#allocation2 + $0x2a10] sm:$0xff]
    %v4369 = vld [vmem:[#allocation2 + $0x2a18] sm:$0xff]
    %v4370 = vld [vmem:[#allocation2 + $0x2a20] sm:$0xff]
    %v4371 = vld [vmem:[#allocation2 + $0x2a28] sm:$0xff]
    %v4372 = vld [vmem:[#allocation2 + $0x2a30] sm:$0xff]
    %v4373 = vld [vmem:[#allocation2 + $0x2a38] sm:$0xff]
    %v4374 = vld [vmem:[#allocation2 + $0x2a40] sm:$0xff]
    %v4375 = vld [vmem:[#allocation2 + $0x2a48] sm:$0xff]
    %v4376 = vld [vmem:[#allocation2 + $0x2a50] sm:$0xff]
    %v4377 = vld [vmem:[#allocation2 + $0x2a58] sm:$0xff]
    %v4378 = vld [vmem:[#allocation2 + $0x2a60] sm:$0xff]
    %v4379 = vld [vmem:[#allocation2 + $0x2a68] sm:$0xff]
    %v4380 = vld [vmem:[#allocation2 + $0x2a70] sm:$0xff]
    %v4381 = vld [vmem:[#allocation2 + $0x2a78] sm:$0xff]
    %v4382 = vld [vmem:[#allocation2 + $0x2a80] sm:$0xff]
    %v4383 = vld [vmem:[#allocation2 + $0x2a88] sm:$0xff]
    %v4384 = vld [vmem:[#allocation2 + $0x2a90] sm:$0xff]
    %v4385 = vld [vmem:[#allocation2 + $0x2a98] sm:$0xff]
    %v4386 = vld [vmem:[#allocation2 + $0x2aa0] sm:$0xff]
    %v4387 = vld [vmem:[#allocation2 + $0x2aa8] sm:$0xff]
    %v4388 = vld [vmem:[#allocation2 + $0x2ab0] sm:$0xff]
    %v4389 = vld [vmem:[#allocation2 + $0x2ab8] sm:$0xff]
    %v4390 = vld [vmem:[#allocation2 + $0x2ac0] sm:$0xff]
    %v4391 = vld [vmem:[#allocation2 + $0x2ac8] sm:$0xff]
    %v4392 = vld [vmem:[#allocation2 + $0x2ad0] sm:$0xff]
    %v4393 = vld [vmem:[#allocation2 + $0x2ad8] sm:$0xff]
    %v4394 = vld [vmem:[#allocation2 + $0x2ae0] sm:$0xff]
    %v4395 = vld [vmem:[#allocation2 + $0x2ae8] sm:$0xff]
    %v4396 = vld [vmem:[#allocation2 + $0x2af0] sm:$0xff]
    %v4397 = vld [vmem:[#allocation2 + $0x2af8] sm:$0xff]
    %v4398 = vld [vmem:[#allocation2 + $0x2b00] sm:$0xff]
    %v4399 = vld [vmem:[#allocation2 + $0x2b08] sm:$0xff]
    %v4400 = vld [vmem:[#allocation2 + $0x2b10] sm:$0xff]
    %v4401 = vld [vmem:[#allocation2 + $0x2b18] sm:$0xff]
    %v4402 = vld [vmem:[#allocation2 + $0x2b20] sm:$0xff]
    %v4403 = vld [vmem:[#allocation2 + $0x2b28] sm:$0xff]
    %v4404 = vld [vmem:[#allocation2 + $0x2b30] sm:$0xff]
    %v4405 = vld [vmem:[#allocation2 + $0x2b38] sm:$0xff]
    %v4406 = vld [vmem:[#allocation2 + $0x2b40] sm:$0xff]
    %v4407 = vld [vmem:[#allocation2 + $0x2b48] sm:$0xff]
    %v4408 = vld [vmem:[#allocation2 + $0x2b50] sm:$0xff]
    %v4409 = vld [vmem:[#allocation2 + $0x2b58] sm:$0xff]
    %v4410 = vld [vmem:[#allocation2 + $0x2b60] sm:$0xff]
    %v4411 = vld [vmem:[#allocation2 + $0x2b68] sm:$0xff]
    %v4412 = vld [vmem:[#allocation2 + $0x2b70] sm:$0xff]
    %v4413 = vld [vmem:[#allocation2 + $0x2b78] sm:$0xff]
    %v4414 = vld [vmem:[#allocation2 + $0x2b80] sm:$0xff]
    %v4415 = vld [vmem:[#allocation2 + $0x2b88] sm:$0xff]
    %v4416 = vld [vmem:[#allocation2 + $0x2b90] sm:$0xff]
    %v4417 = vld [vmem:[#allocation2 + $0x2b98] sm:$0xff]
    %v4418 = vld [vmem:[#allocation2 + $0x2ba0] sm:$0xff]
    %v4419 = vld [vmem:[#allocation2 + $0x2ba8] sm:$0xff]
    %v4420 = vld [vmem:[#allocation2 + $0x2bb0] sm:$0xff]
    %v4421 = vld [vmem:[#allocation2 + $0x2bb8] sm:$0xff]
    %v4422 = vld [vmem:[#allocation2 + $0x2bc0] sm:$0xff]
    %v4423 = vld [vmem:[#allocation2 + $0x2bc8] sm:$0xff]
    %v4424 = vld [vmem:[#allocation2 + $0x2bd0] sm:$0xff]
    %v4425 = vld [vmem:[#allocation2 + $0x2bd8] sm:$0xff]
    %v4426 = vld [vmem:[#allocation2 + $0x2be0] sm:$0xff]
    %v4427 = vld [vmem:[#allocation2 + $0x2be8] sm:$0xff]
    %v4428 = vld [vmem:[#allocation2 + $0x2bf0] sm:$0xff]
    %v4429 = vld [vmem:[#allocation2 + $0x2bf8] sm:$0xff]
    %v4430 = vld [vmem:[#allocation2 + $0x2c00] sm:$0xff]
    %v4431 = vld [vmem:[#allocation2 + $0x2c08] sm:$0xff]
    %v4432 = vld [vmem:[#allocation2 + $0x2c10] sm:$0xff]
    %v4433 = vld [vmem:[#allocation2 + $0x2c18] sm:$0xff]
    %v4434 = vld [vmem:[#allocation2 + $0x2c20] sm:$0xff]
    %v4435 = vld [vmem:[#allocation2 + $0x2c28] sm:$0xff]
    %v4436 = vld [vmem:[#allocation2 + $0x2c30] sm:$0xff]
    %v4437 = vld [vmem:[#allocation2 + $0x2c38] sm:$0xff]
    %v4438 = vld [vmem:[#allocation2 + $0x2c40] sm:$0xff]
    %v4439 = vld [vmem:[#allocation2 + $0x2c48] sm:$0xff]
    %v4440 = vld [vmem:[#allocation2 + $0x2c50] sm:$0xff]
    %v4441 = vld [vmem:[#allocation2 + $0x2c58] sm:$0xff]
    %v4442 = vld [vmem:[#allocation2 + $0x2c60] sm:$0xff]
    %v4443 = vld [vmem:[#allocation2 + $0x2c68] sm:$0xff]
    %v4444 = vld [vmem:[#allocation2 + $0x2c70] sm:$0xff]
    %v4445 = vld [vmem:[#allocation2 + $0x2c78] sm:$0xff]
    %v4446 = vld [vmem:[#allocation2 + $0x2c80] sm:$0xff]
    %v4447 = vld [vmem:[#allocation2 + $0x2c88] sm:$0xff]
    %v4448 = vld [vmem:[#allocation2 + $0x2c90] sm:$0xff]
    %v4449 = vld [vmem:[#allocation2 + $0x2c98] sm:$0xff]
    %v4450 = vld [vmem:[#allocation2 + $0x2ca0] sm:$0xff]
    %v4451 = vld [vmem:[#allocation2 + $0x2ca8] sm:$0xff]
    %v4452 = vld [vmem:[#allocation2 + $0x2cb0] sm:$0xff]
    %v4453 = vld [vmem:[#allocation2 + $0x2cb8] sm:$0xff]
    %v4454 = vld [vmem:[#allocation2 + $0x2cc0] sm:$0xff]
    %v4455 = vld [vmem:[#allocation2 + $0x2cc8] sm:$0xff]
    %v4456 = vld [vmem:[#allocation2 + $0x2cd0] sm:$0xff]
    %v4457 = vld [vmem:[#allocation2 + $0x2cd8] sm:$0xff]
    %v4458 = vld [vmem:[#allocation2 + $0x2ce0] sm:$0xff]
    %v4459 = vld [vmem:[#allocation2 + $0x2ce8] sm:$0xff]
    %v4460 = vld [vmem:[#allocation2 + $0x2cf0] sm:$0xff]
    %v4461 = vld [vmem:[#allocation2 + $0x2cf8] sm:$0xff]
    %v4462 = vld [vmem:[#allocation2 + $0x2d00] sm:$0xff]
    %v4463 = vld [vmem:[#allocation2 + $0x2d08] sm:$0xff]
    %v4464 = vld [vmem:[#allocation2 + $0x2d10] sm:$0xff]
    %v4465 = vld [vmem:[#allocation2 + $0x2d18] sm:$0xff]
    %v4466 = vld [vmem:[#allocation2 + $0x2d20] sm:$0xff]
    %v4467 = vld [vmem:[#allocation2 + $0x2d28] sm:$0xff]
    %v4468 = vld [vmem:[#allocation2 + $0x2d30] sm:$0xff]
    %v4469 = vld [vmem:[#allocation2 + $0x2d38] sm:$0xff]
    %v4470 = vld [vmem:[#allocation2 + $0x2d40] sm:$0xff]
    %v4471 = vld [vmem:[#allocation2 + $0x2d48] sm:$0xff]
    %v4472 = vld [vmem:[#allocation2 + $0x2d50] sm:$0xff]
    %v4473 = vld [vmem:[#allocation2 + $0x2d58] sm:$0xff]
    %v4474 = vld [vmem:[#allocation2 + $0x2d60] sm:$0xff]
    %v4475 = vld [vmem:[#allocation2 + $0x2d68] sm:$0xff]
    %v4476 = vld [vmem:[#allocation2 + $0x2d70] sm:$0xff]
    %v4477 = vld [vmem:[#allocation2 + $0x2d78] sm:$0xff]
    %v4478 = vld [vmem:[#allocation2 + $0x2d80] sm:$0xff]
    %v4479 = vld [vmem:[#allocation2 + $0x2d88] sm:$0xff]
    %v4480 = vld [vmem:[#allocation2 + $0x2d90] sm:$0xff]
    %v4481 = vld [vmem:[#allocation2 + $0x2d98] sm:$0xff]
    %v4482 = vld [vmem:[#allocation2 + $0x2da0] sm:$0xff]
    %v4483 = vld [vmem:[#allocation2 + $0x2da8] sm:$0xff]
    %v4484 = vld [vmem:[#allocation2 + $0x2db0] sm:$0xff]
    %v4485 = vld [vmem:[#allocation2 + $0x2db8] sm:$0xff]
    %v4486 = vld [vmem:[#allocation2 + $0x2dc0] sm:$0xff]
    %v4487 = vld [vmem:[#allocation2 + $0x2dc8] sm:$0xff]
    %v4488 = vld [vmem:[#allocation2 + $0x2dd0] sm:$0xff]
    %v4489 = vld [vmem:[#allocation2 + $0x2dd8] sm:$0xff]
    %v4490 = vld [vmem:[#allocation2 + $0x2de0] sm:$0xff]
    %v4491 = vld [vmem:[#allocation2 + $0x2de8] sm:$0xff]
    %v4492 = vld [vmem:[#allocation2 + $0x2df0] sm:$0xff]
    %v4493 = vld [vmem:[#allocation2 + $0x2df8] sm:$0xff]
    %v4494 = vld [vmem:[#allocation2 + $0x2e00] sm:$0xff]
    %v4495 = vld [vmem:[#allocation2 + $0x2e08] sm:$0xff]
    %v4496 = vld [vmem:[#allocation2 + $0x2e10] sm:$0xff]
    %v4497 = vld [vmem:[#allocation2 + $0x2e18] sm:$0xff]
    %v4498 = vld [vmem:[#allocation2 + $0x2e20] sm:$0xff]
    %v4499 = vld [vmem:[#allocation2 + $0x2e28] sm:$0xff]
    %v4500 = vld [vmem:[#allocation2 + $0x2e30] sm:$0xff]
    %v4501 = vld [vmem:[#allocation2 + $0x2e38] sm:$0xff]
    %v4502 = vld [vmem:[#allocation2 + $0x2e40] sm:$0xff]
    %v4503 = vld [vmem:[#allocation2 + $0x2e48] sm:$0xff]
    %v4504 = vld [vmem:[#allocation2 + $0x2e50] sm:$0xff]
    %v4505 = vld [vmem:[#allocation2 + $0x2e58] sm:$0xff]
    %v4506 = vld [vmem:[#allocation2 + $0x2e60] sm:$0xff]
    %v4507 = vld [vmem:[#allocation2 + $0x2e68] sm:$0xff]
    %v4508 = vld [vmem:[#allocation2 + $0x2e70] sm:$0xff]
    %v4509 = vld [vmem:[#allocation2 + $0x2e78] sm:$0xff]
    %v4510 = vld [vmem:[#allocation2 + $0x2e80] sm:$0xff]
    %v4511 = vld [vmem:[#allocation2 + $0x2e88] sm:$0xff]
    %v4512 = vld [vmem:[#allocation2 + $0x2e90] sm:$0xff]
    %v4513 = vld [vmem:[#allocation2 + $0x2e98] sm:$0xff]
    %v4514 = vld [vmem:[#allocation2 + $0x2ea0] sm:$0xff]
    %v4515 = vld [vmem:[#allocation2 + $0x2ea8] sm:$0xff]
    %v4516 = vld [vmem:[#allocation2 + $0x2eb0] sm:$0xff]
    %v4517 = vld [vmem:[#allocation2 + $0x2eb8] sm:$0xff]
    %v4518 = vld [vmem:[#allocation2 + $0x2ec0] sm:$0xff]
    %v4519 = vld [vmem:[#allocation2 + $0x2ec8] sm:$0xff]
    %v4520 = vld [vmem:[#allocation2 + $0x2ed0] sm:$0xff]
    %v4521 = vld [vmem:[#allocation2 + $0x2ed8] sm:$0xff]
    %v4522 = vld [vmem:[#allocation2 + $0x2ee0] sm:$0xff]
    %v4523 = vld [vmem:[#allocation2 + $0x2ee8] sm:$0xff]
    %v4524 = vld [vmem:[#allocation2 + $0x2ef0] sm:$0xff]
    %v4525 = vld [vmem:[#allocation2 + $0x2ef8] sm:$0xff]
    %v4526 = vld [vmem:[#allocation2 + $0x2f00] sm:$0xff]
    %v4527 = vld [vmem:[#allocation2 + $0x2f08] sm:$0xff]
    %v4528 = vld [vmem:[#allocation2 + $0x2f10] sm:$0xff]
    %v4529 = vld [vmem:[#allocation2 + $0x2f18] sm:$0xff]
    %v4530 = vld [vmem:[#allocation2 + $0x2f20] sm:$0xff]
    %v4531 = vld [vmem:[#allocation2 + $0x2f28] sm:$0xff]
    %v4532 = vld [vmem:[#allocation2 + $0x2f30] sm:$0xff]
    %v4533 = vld [vmem:[#allocation2 + $0x2f38] sm:$0xff]
    %v4534 = vld [vmem:[#allocation2 + $0x2f40] sm:$0xff]
    %v4535 = vld [vmem:[#allocation2 + $0x2f48] sm:$0xff]
    %v4536 = vld [vmem:[#allocation2 + $0x2f50] sm:$0xff]
    %v4537 = vld [vmem:[#allocation2 + $0x2f58] sm:$0xff]
    %v4538 = vld [vmem:[#allocation2 + $0x2f60] sm:$0xff]
    %v4539 = vld [vmem:[#allocation2 + $0x2f68] sm:$0xff]
    %v4540 = vld [vmem:[#allocation2 + $0x2f70] sm:$0xff]
    %v4541 = vld [vmem:[#allocation2 + $0x2f78] sm:$0xff]
    %v4542 = vld [vmem:[#allocation2 + $0x2f80] sm:$0xff]
    %v4543 = vld [vmem:[#allocation2 + $0x2f88] sm:$0xff]
    %v4544 = vld [vmem:[#allocation2 + $0x2f90] sm:$0xff]
    %v4545 = vld [vmem:[#allocation2 + $0x2f98] sm:$0xff]
    %v4546 = vld [vmem:[#allocation2 + $0x2fa0] sm:$0xff]
    %v4547 = vld [vmem:[#allocation2 + $0x2fa8] sm:$0xff]
    %v4548 = vld [vmem:[#allocation2 + $0x2fb0] sm:$0xff]
    %v4549 = vld [vmem:[#allocation2 + $0x2fb8] sm:$0xff]
    %v4550 = vld [vmem:[#allocation2 + $0x2fc0] sm:$0xff]
    %v4551 = vld [vmem:[#allocation2 + $0x2fc8] sm:$0xff]
    %v4552 = vld [vmem:[#allocation2 + $0x2fd0] sm:$0xff]
    %v4553 = vld [vmem:[#allocation2 + $0x2fd8] sm:$0xff]
    %v4554 = vld [vmem:[#allocation2 + $0x2fe0] sm:$0xff]
    %v4555 = vld [vmem:[#allocation2 + $0x2fe8] sm:$0xff]
    %v4556 = vld [vmem:[#allocation2 + $0x2ff0] sm:$0xff]
    %v4557 = vld [vmem:[#allocation2 + $0x2ff8] sm:$0xff]
    %v4558 = vld [vmem:[#allocation2 + $0x3000] sm:$0xff]
    %v4559 = vld [vmem:[#allocation2 + $0x3008] sm:$0xff]
    %v4560 = vld [vmem:[#allocation2 + $0x3010] sm:$0xff]
    %v4561 = vld [vmem:[#allocation2 + $0x3018] sm:$0xff]
    %v4562 = vld [vmem:[#allocation2 + $0x3020] sm:$0xff]
    %v4563 = vld [vmem:[#allocation2 + $0x3028] sm:$0xff]
    %v4564 = vld [vmem:[#allocation2 + $0x3030] sm:$0xff]
    %v4565 = vld [vmem:[#allocation2 + $0x3038] sm:$0xff]
    %v4566 = vld [vmem:[#allocation2 + $0x3040] sm:$0xff]
    %v4567 = vld [vmem:[#allocation2 + $0x3048] sm:$0xff]
    %v4568 = vld [vmem:[#allocation2 + $0x3050] sm:$0xff]
    %v4569 = vld [vmem:[#allocation2 + $0x3058] sm:$0xff]
    %v4570 = vld [vmem:[#allocation2 + $0x3060] sm:$0xff]
    %v4571 = vld [vmem:[#allocation2 + $0x3068] sm:$0xff]
    %v4572 = vld [vmem:[#allocation2 + $0x3070] sm:$0xff]
    %v4573 = vld [vmem:[#allocation2 + $0x3078] sm:$0xff]
    %v4574 = vld [vmem:[#allocation2 + $0x3080] sm:$0xff]
    %v4575 = vld [vmem:[#allocation2 + $0x3088] sm:$0xff]
    %v4576 = vld [vmem:[#allocation2 + $0x3090] sm:$0xff]
    %v4577 = vld [vmem:[#allocation2 + $0x3098] sm:$0xff]
    %v4578 = vld [vmem:[#allocation2 + $0x30a0] sm:$0xff]
    %v4579 = vld [vmem:[#allocation2 + $0x30a8] sm:$0xff]
    %v4580 = vld [vmem:[#allocation2 + $0x30b0] sm:$0xff]
    %v4581 = vld [vmem:[#allocation2 + $0x30b8] sm:$0xff]
    %v4582 = vld [vmem:[#allocation2 + $0x30c0] sm:$0xff]
    %v4583 = vld [vmem:[#allocation2 + $0x30c8] sm:$0xff]
    %v4584 = vld [vmem:[#allocation2 + $0x30d0] sm:$0xff]
    %v4585 = vld [vmem:[#allocation2 + $0x30d8] sm:$0xff]
    %v4586 = vld [vmem:[#allocation2 + $0x30e0] sm:$0xff]
    %v4587 = vld [vmem:[#allocation2 + $0x30e8] sm:$0xff]
    %v4588 = vld [vmem:[#allocation2 + $0x30f0] sm:$0xff]
    %v4589 = vld [vmem:[#allocation2 + $0x30f8] sm:$0xff]
    %v4590 = vld [vmem:[#allocation2 + $0x3100] sm:$0xff]
    %v4591 = vld [vmem:[#allocation2 + $0x3108] sm:$0xff]
    %v4592 = vld [vmem:[#allocation2 + $0x3110] sm:$0xff]
    %v4593 = vld [vmem:[#allocation2 + $0x3118] sm:$0xff]
    %v4594 = vld [vmem:[#allocation2 + $0x3120] sm:$0xff]
    %v4595 = vld [vmem:[#allocation2 + $0x3128] sm:$0xff]
    %v4596 = vld [vmem:[#allocation2 + $0x3130] sm:$0xff]
    %v4597 = vld [vmem:[#allocation2 + $0x3138] sm:$0xff]
    %v4598 = vld [vmem:[#allocation2 + $0x3140] sm:$0xff]
    %v4599 = vld [vmem:[#allocation2 + $0x3148] sm:$0xff]
    %v4600 = vld [vmem:[#allocation2 + $0x3150] sm:$0xff]
    %v4601 = vld [vmem:[#allocation2 + $0x3158] sm:$0xff]
    %v4602 = vld [vmem:[#allocation2 + $0x3160] sm:$0xff]
    %v4603 = vld [vmem:[#allocation2 + $0x3168] sm:$0xff]
    %v4604 = vld [vmem:[#allocation2 + $0x3170] sm:$0xff]
    %v4605 = vld [vmem:[#allocation2 + $0x3178] sm:$0xff]
    %v4606 = vld [vmem:[#allocation2 + $0x3180] sm:$0xff]
    %v4607 = vld [vmem:[#allocation2 + $0x3188] sm:$0xff]
    %v4608 = vld [vmem:[#allocation2 + $0x3190] sm:$0xff]
    %v4609 = vld [vmem:[#allocation2 + $0x3198] sm:$0xff]
    %v4610 = vld [vmem:[#allocation2 + $0x31a0] sm:$0xff]
    %v4611 = vld [vmem:[#allocation2 + $0x31a8] sm:$0xff]
    %v4612 = vld [vmem:[#allocation2 + $0x31b0] sm:$0xff]
    %v4613 = vld [vmem:[#allocation2 + $0x31b8] sm:$0xff]
    %v4614 = vld [vmem:[#allocation2 + $0x31c0] sm:$0xff]
    %v4615 = vld [vmem:[#allocation2 + $0x31c8] sm:$0xff]
    %v4616 = vld [vmem:[#allocation2 + $0x31d0] sm:$0xff]
    %v4617 = vld [vmem:[#allocation2 + $0x31d8] sm:$0xff]
    %v4618 = vld [vmem:[#allocation2 + $0x31e0] sm:$0xff]
    %v4619 = vld [vmem:[#allocation2 + $0x31e8] sm:$0xff]
    %v4620 = vld [vmem:[#allocation2 + $0x31f0] sm:$0xff]
    %v4621 = vld [vmem:[#allocation2 + $0x31f8] sm:$0xff]
    %v4622 = vld [vmem:[#allocation2 + $0x3200] sm:$0xff]
    %v4623 = vld [vmem:[#allocation2 + $0x3208] sm:$0xff]
    %v4624 = vld [vmem:[#allocation2 + $0x3210] sm:$0xff]
    %v4625 = vld [vmem:[#allocation2 + $0x3218] sm:$0xff]
    %v4626 = vld [vmem:[#allocation2 + $0x3220] sm:$0xff]
    %v4627 = vld [vmem:[#allocation2 + $0x3228] sm:$0xff]
    %v4628 = vld [vmem:[#allocation2 + $0x3230] sm:$0xff]
    %v4629 = vld [vmem:[#allocation2 + $0x3238] sm:$0xff]
    %v4630 = vld [vmem:[#allocation2 + $0x3240] sm:$0xff]
    %v4631 = vld [vmem:[#allocation2 + $0x3248] sm:$0xff]
    %v4632 = vld [vmem:[#allocation2 + $0x3250] sm:$0xff]
    %v4633 = vld [vmem:[#allocation2 + $0x3258] sm:$0xff]
    %v4634 = vld [vmem:[#allocation2 + $0x3260] sm:$0xff]
    %v4635 = vld [vmem:[#allocation2 + $0x3268] sm:$0xff]
    %v4636 = vld [vmem:[#allocation2 + $0x3270] sm:$0xff]
    %v4637 = vld [vmem:[#allocation2 + $0x3278] sm:$0xff]
    %v4638 = vld [vmem:[#allocation2 + $0x3280] sm:$0xff]
    %v4639 = vld [vmem:[#allocation2 + $0x3288] sm:$0xff]
    %v4640 = vld [vmem:[#allocation2 + $0x3290] sm:$0xff]
    %v4641 = vld [vmem:[#allocation2 + $0x3298] sm:$0xff]
    %v4642 = vld [vmem:[#allocation2 + $0x32a0] sm:$0xff]
    %v4643 = vld [vmem:[#allocation2 + $0x32a8] sm:$0xff]
    %v4644 = vld [vmem:[#allocation2 + $0x32b0] sm:$0xff]
    %v4645 = vld [vmem:[#allocation2 + $0x32b8] sm:$0xff]
    %v4646 = vld [vmem:[#allocation2 + $0x32c0] sm:$0xff]
    %v4647 = vld [vmem:[#allocation2 + $0x32c8] sm:$0xff]
    %v4648 = vld [vmem:[#allocation2 + $0x32d0] sm:$0xff]
    %v4649 = vld [vmem:[#allocation2 + $0x32d8] sm:$0xff]
    %v4650 = vld [vmem:[#allocation2 + $0x32e0] sm:$0xff]
    %v4651 = vld [vmem:[#allocation2 + $0x32e8] sm:$0xff]
    %v4652 = vld [vmem:[#allocation2 + $0x32f0] sm:$0xff]
    %v4653 = vld [vmem:[#allocation2 + $0x32f8] sm:$0xff]
    %4654 = vmatprep.subr.bf16.mxu0 %v4367
    %4655 = vmatpush1.bf16.msra.mxu0 %v4366
    %4656 = vmatprep.subr.bf16.mxu0 %v4373
    %4657 = vmatpush1.bf16.msra.mxu0 %v4372
    %4658 = vmatprep.subr.bf16.mxu0 %v4379
    %4659 = vmatpush1.bf16.msra.mxu0 %v4378
    %4660 = vmatprep.subr.bf16.mxu0 %v4385
    %4661 = vmatpush1.bf16.msra.mxu0 %v4384
    %4662 = vmatprep.subr.bf16.mxu0 %v4391
    %4663 = vmatpush1.bf16.msra.mxu0 %v4390
    %4664 = vmatprep.subr.bf16.mxu0 %v4397
    %4665 = vmatpush1.bf16.msra.mxu0 %v4396
    %4666 = vmatprep.subr.bf16.mxu0 %v4403
    %4667 = vmatpush1.bf16.msra.mxu0 %v4402
    %4668 = vmatprep.subr.bf16.mxu0 %v4409
    %4669 = vmatpush1.bf16.msra.mxu0 %v4408
    %4670 = vmatprep.subr.bf16.mxu0 %v4415
    %4671 = vmatpush1.bf16.msra.mxu0 %v4414
    %4672 = vmatprep.subr.bf16.mxu0 %v4421
    %4673 = vmatpush1.bf16.msra.mxu0 %v4420
    %4674 = vmatprep.subr.bf16.mxu0 %v4427
    %4675 = vmatpush1.bf16.msra.mxu0 %v4426
    %4676 = vmatprep.subr.bf16.mxu0 %v4433
    %4677 = vmatpush1.bf16.msra.mxu0 %v4432
    %4678 = vmatprep.subr.bf16.mxu0 %v4439
    %4679 = vmatpush1.bf16.msra.mxu0 %v4438
    %4680 = vmatprep.subr.bf16.mxu0 %v4445
    %4681 = vmatpush1.bf16.msra.mxu0 %v4444
    %4682 = vmatprep.subr.bf16.mxu0 %v4451
    %4683 = vmatpush1.bf16.msra.mxu0 %v4450
    %4684 = vmatprep.subr.bf16.mxu0 %v4457
    %4685 = vmatpush1.bf16.msra.mxu0 %v4456
    %4686 = vmatprep.mubr.bf16.mxu0 %v4361
    %4687 = vmatmul.mubr.bf16.gmra.mrb[0].mxu0 %v4360
    %v4688 = vpop.f32.mrb[0].mxu0
    %v4689 = vadd.f32 0.0, %v4688
    %v4690 = vpop.f32.mrb[0].mxu0
    %v4691 = vadd.f32 0.0, %v4690
    %v4692 = vpop.f32.mrb[0].mxu0
    %v4693 = vpop.f32.mrb[0].mxu0
    %4694 = vdwg.mxu0
    %4695 = vmatprep.subr.bf16.mxu0 %v4463
    %4696 = vmatpush1.bf16.msra.mxu0 %v4462
    %4697 = vmatprep.subr.bf16.mxu0 %v4469
    %4698 = vmatpush1.bf16.msra.mxu0 %v4468
    %4699 = vmatprep.subr.bf16.mxu0 %v4475
    %4700 = vmatpush1.bf16.msra.mxu0 %v4474
    %4701 = vmatprep.subr.bf16.mxu0 %v4481
    %4702 = vmatpush1.bf16.msra.mxu0 %v4480
    %4703 = vmatprep.subr.bf16.mxu0 %v4487
    %4704 = vmatpush1.bf16.msra.mxu0 %v4486
    %4705 = vmatprep.subr.bf16.mxu0 %v4493
    %4706 = vmatpush1.bf16.msra.mxu0 %v4492
    %4707 = vmatprep.subr.bf16.mxu0 %v4499
    %4708 = vmatpush1.bf16.msra.mxu0 %v4498
    %4709 = vmatprep.subr.bf16.mxu0 %v4505
    %4710 = vmatpush1.bf16.msra.mxu0 %v4504
    %4711 = vmatprep.subr.bf16.mxu0 %v4511
    %4712 = vmatpush1.bf16.msra.mxu0 %v4510
    %4713 = vmatprep.subr.bf16.mxu0 %v4517
    %4714 = vmatpush1.bf16.msra.mxu0 %v4516
    %4715 = vmatprep.subr.bf16.mxu0 %v4523
    %4716 = vmatpush1.bf16.msra.mxu0 %v4522
    %4717 = vmatprep.subr.bf16.mxu0 %v4529
    %4718 = vmatpush1.bf16.msra.mxu0 %v4528
    %4719 = vmatprep.subr.bf16.mxu0 %v4535
    %4720 = vmatpush1.bf16.msra.mxu0 %v4534
    %4721 = vmatprep.subr.bf16.mxu0 %v4541
    %4722 = vmatpush1.bf16.msra.mxu0 %v4540
    %4723 = vmatprep.subr.bf16.mxu0 %v4547
    %4724 = vmatpush1.bf16.msra.mxu0 %v4546
    %4725 = vmatprep.subr.bf16.mxu0 %v4553
    %4726 = vmatpush1.bf16.msra.mxu0 %v4552
    %4727 = vmatprep.mubr.bf16.mxu0 %v4363
    %4728 = vmatmul.mubr.bf16.gmra.mrb[0].mxu0 %v4362
    %v4729 = vpop.f32.mrb[0].mxu0
    %v4730 = vadd.f32 %v4689, %v4729
    %v4731 = vpop.f32.mrb[0].mxu0
    %v4732 = vadd.f32 %v4691, %v4731
    %v4733 = vpop.f32.mrb[0].mxu0
    %v4734 = vpop.f32.mrb[0].mxu0
    %4735 = vdwg.mxu0
    %4736 = vmatprep.subr.bf16.mxu0 %v4559
    %4737 = vmatpush1.bf16.msra.mxu0 %v4558
    %4738 = vmatprep.subr.bf16.mxu0 %v4565
    %4739 = vmatpush1.bf16.msra.mxu0 %v4564
    %4740 = vmatprep.subr.bf16.mxu0 %v4571
    %4741 = vmatpush1.bf16.msra.mxu0 %v4570
    %4742 = vmatprep.subr.bf16.mxu0 %v4577
    %4743 = vmatpush1.bf16.msra.mxu0 %v4576
    %4744 = vmatprep.subr.bf16.mxu0 %v4583
    %4745 = vmatpush1.bf16.msra.mxu0 %v4582
    %4746 = vmatprep.subr.bf16.mxu0 %v4589
    %4747 = vmatpush1.bf16.msra.mxu0 %v4588
    %4748 = vmatprep.subr.bf16.mxu0 %v4595
    %4749 = vmatpush1.bf16.msra.mxu0 %v4594
    %4750 = vmatprep.subr.bf16.mxu0 %v4601
    %4751 = vmatpush1.bf16.msra.mxu0 %v4600
    %4752 = vmatprep.subr.bf16.mxu0 %v4607
    %4753 = vmatpush1.bf16.msra.mxu0 %v4606
    %4754 = vmatprep.subr.bf16.mxu0 %v4613
    %4755 = vmatpush1.bf16.msra.mxu0 %v4612
    %4756 = vmatprep.subr.bf16.mxu0 %v4619
    %4757 = vmatpush1.bf16.msra.mxu0 %v4618
    %4758 = vmatprep.subr.bf16.mxu0 %v4625
    %4759 = vmatpush1.bf16.msra.mxu0 %v4624
    %4760 = vmatprep.subr.bf16.mxu0 %v4631
    %4761 = vmatpush1.bf16.msra.mxu0 %v4630
    %4762 = vmatprep.subr.bf16.mxu0 %v4637
    %4763 = vmatpush1.bf16.msra.mxu0 %v4636
    %4764 = vmatprep.subr.bf16.mxu0 %v4643
    %4765 = vmatpush1.bf16.msra.mxu0 %v4642
    %4766 = vmatprep.subr.bf16.mxu0 %v4649
    %4767 = vmatpush1.bf16.msra.mxu0 %v4648
    %4768 = vmatprep.mubr.bf16.mxu0 %v4365
    %4769 = vmatmul.mubr.bf16.gmra.mrb[0].mxu0 %v4364
    %v4770 = vpop.f32.mrb[0].mxu0
    %v4771 = vadd.f32 %v4730, %v4770
    %v4772 = vpop.f32.mrb[0].mxu0
    %v4773 = vadd.f32 %v4732, %v4772
    %v4774 = vpop.f32.mrb[0].mxu0
    %v4775 = vpop.f32.mrb[0].mxu0
    %4776 = vdwg.mxu0
    %4777 = vmatprep.subr.bf16.mxu0 %v4369
    %4778 = vmatpush1.bf16.msra.mxu0 %v4368
    %4779 = vmatprep.subr.bf16.mxu0 %v4375
    %4780 = vmatpush1.bf16.msra.mxu0 %v4374
    %4781 = vmatprep.subr.bf16.mxu0 %v4381
    %4782 = vmatpush1.bf16.msra.mxu0 %v4380
    %4783 = vmatprep.subr.bf16.mxu0 %v4387
    %4784 = vmatpush1.bf16.msra.mxu0 %v4386
    %4785 = vmatprep.subr.bf16.mxu0 %v4393
    %4786 = vmatpush1.bf16.msra.mxu0 %v4392
    %4787 = vmatprep.subr.bf16.mxu0 %v4399
    %4788 = vmatpush1.bf16.msra.mxu0 %v4398
    %4789 = vmatprep.subr.bf16.mxu0 %v4405
    %4790 = vmatpush1.bf16.msra.mxu0 %v4404
    %4791 = vmatprep.subr.bf16.mxu0 %v4411
    %4792 = vmatpush1.bf16.msra.mxu0 %v4410
    %4793 = vmatprep.subr.bf16.mxu0 %v4417
    %4794 = vmatpush1.bf16.msra.mxu0 %v4416
    %4795 = vmatprep.subr.bf16.mxu0 %v4423
    %4796 = vmatpush1.bf16.msra.mxu0 %v4422
    %4797 = vmatprep.subr.bf16.mxu0 %v4429
    %4798 = vmatpush1.bf16.msra.mxu0 %v4428
    %4799 = vmatprep.subr.bf16.mxu0 %v4435
    %4800 = vmatpush1.bf16.msra.mxu0 %v4434
    %4801 = vmatprep.subr.bf16.mxu0 %v4441
    %4802 = vmatpush1.bf16.msra.mxu0 %v4440
    %4803 = vmatprep.subr.bf16.mxu0 %v4447
    %4804 = vmatpush1.bf16.msra.mxu0 %v4446
    %4805 = vmatprep.subr.bf16.mxu0 %v4453
    %4806 = vmatpush1.bf16.msra.mxu0 %v4452
    %4807 = vmatprep.subr.bf16.mxu0 %v4459
    %4808 = vmatpush1.bf16.msra.mxu0 %v4458
    %4809 = vmatprep.mubr.bf16.mxu0 %v4361
    %4810 = vmatmul.mubr.bf16.gmra.mrb[0].mxu0 %v4360
    %v4811 = vpop.f32.mrb[0].mxu0
    %v4812 = vadd.f32 0.0, %v4811
    %v4813 = vpop.f32.mrb[0].mxu0
    %v4814 = vadd.f32 0.0, %v4813
    %v4815 = vpop.f32.mrb[0].mxu0
    %v4816 = vpop.f32.mrb[0].mxu0
    %4817 = vdwg.mxu0
    %4818 = vmatprep.subr.bf16.mxu0 %v4465
    %4819 = vmatpush1.bf16.msra.mxu0 %v4464
    %4820 = vmatprep.subr.bf16.mxu0 %v4471
    %4821 = vmatpush1.bf16.msra.mxu0 %v4470
    %4822 = vmatprep.subr.bf16.mxu0 %v4477
    %4823 = vmatpush1.bf16.msra.mxu0 %v4476
    %4824 = vmatprep.subr.bf16.mxu0 %v4483
    %4825 = vmatpush1.bf16.msra.mxu0 %v4482
    %4826 = vmatprep.subr.bf16.mxu0 %v4489
    %4827 = vmatpush1.bf16.msra.mxu0 %v4488
    %4828 = vmatprep.subr.bf16.mxu0 %v4495
    %4829 = vmatpush1.bf16.msra.mxu0 %v4494
    %4830 = vmatprep.subr.bf16.mxu0 %v4501
    %4831 = vmatpush1.bf16.msra.mxu0 %v4500
    %4832 = vmatprep.subr.bf16.mxu0 %v4507
    %4833 = vmatpush1.bf16.msra.mxu0 %v4506
    %4834 = vmatprep.subr.bf16.mxu0 %v4513
    %4835 = vmatpush1.bf16.msra.mxu0 %v4512
    %4836 = vmatprep.subr.bf16.mxu0 %v4519
    %4837 = vmatpush1.bf16.msra.mxu0 %v4518
    %4838 = vmatprep.subr.bf16.mxu0 %v4525
    %4839 = vmatpush1.bf16.msra.mxu0 %v4524
    %4840 = vmatprep.subr.bf16.mxu0 %v4531
    %4841 = vmatpush1.bf16.msra.mxu0 %v4530
    %4842 = vmatprep.subr.bf16.mxu0 %v4537
    %4843 = vmatpush1.bf16.msra.mxu0 %v4536
    %4844 = vmatprep.subr.bf16.mxu0 %v4543
    %4845 = vmatpush1.bf16.msra.mxu0 %v4542
    %4846 = vmatprep.subr.bf16.mxu0 %v4549
    %4847 = vmatpush1.bf16.msra.mxu0 %v4548
    %4848 = vmatprep.subr.bf16.mxu0 %v4555
    %4849 = vmatpush1.bf16.msra.mxu0 %v4554
    %4850 = vmatprep.mubr.bf16.mxu0 %v4363
    %4851 = vmatmul.mubr.bf16.gmra.mrb[0].mxu0 %v4362
    %v4852 = vpop.f32.mrb[0].mxu0
    %v4853 = vadd.f32 %v4812, %v4852
    %v4854 = vpop.f32.mrb[0].mxu0
    %v4855 = vadd.f32 %v4814, %v4854
    %v4856 = vpop.f32.mrb[0].mxu0
    %v4857 = vpop.f32.mrb[0].mxu0
    %4858 = vdwg.mxu0
    %4859 = vmatprep.subr.bf16.mxu0 %v4561
    %4860 = vmatpush1.bf16.msra.mxu0 %v4560
    %4861 = vmatprep.subr.bf16.mxu0 %v4567
    %4862 = vmatpush1.bf16.msra.mxu0 %v4566
    %4863 = vmatprep.subr.bf16.mxu0 %v4573
    %4864 = vmatpush1.bf16.msra.mxu0 %v4572
    %4865 = vmatprep.subr.bf16.mxu0 %v4579
    %4866 = vmatpush1.bf16.msra.mxu0 %v4578
    %4867 = vmatprep.subr.bf16.mxu0 %v4585
    %4868 = vmatpush1.bf16.msra.mxu0 %v4584
    %4869 = vmatprep.subr.bf16.mxu0 %v4591
    %4870 = vmatpush1.bf16.msra.mxu0 %v4590
    %4871 = vmatprep.subr.bf16.mxu0 %v4597
    %4872 = vmatpush1.bf16.msra.mxu0 %v4596
    %4873 = vmatprep.subr.bf16.mxu0 %v4603
    %4874 = vmatpush1.bf16.msra.mxu0 %v4602
    %4875 = vmatprep.subr.bf16.mxu0 %v4609
    %4876 = vmatpush1.bf16.msra.mxu0 %v4608
    %4877 = vmatprep.subr.bf16.mxu0 %v4615
    %4878 = vmatpush1.bf16.msra.mxu0 %v4614
    %4879 = vmatprep.subr.bf16.mxu0 %v4621
    %4880 = vmatpush1.bf16.msra.mxu0 %v4620
    %4881 = vmatprep.subr.bf16.mxu0 %v4627
    %4882 = vmatpush1.bf16.msra.mxu0 %v4626
    %4883 = vmatprep.subr.bf16.mxu0 %v4633
    %4884 = vmatpush1.bf16.msra.mxu0 %v4632
    %4885 = vmatprep.subr.bf16.mxu0 %v4639
    %4886 = vmatpush1.bf16.msra.mxu0 %v4638
    %4887 = vmatprep.subr.bf16.mxu0 %v4645
    %4888 = vmatpush1.bf16.msra.mxu0 %v4644
    %4889 = vmatprep.subr.bf16.mxu0 %v4651
    %4890 = vmatpush1.bf16.msra.mxu0 %v4650
    %4891 = vmatprep.mubr.bf16.mxu0 %v4365
    %4892 = vmatmul.mubr.bf16.gmra.mrb[0].mxu0 %v4364
    %v4893 = vpop.f32.mrb[0].mxu0
    %v4894 = vadd.f32 %v4853, %v4893
    %v4895 = vpop.f32.mrb[0].mxu0
    %v4896 = vadd.f32 %v4855, %v4895
    %v4897 = vpop.f32.mrb[0].mxu0
    %v4898 = vpop.f32.mrb[0].mxu0
    %4899 = vdwg.mxu0
    %4900 = vmatprep.subr.bf16.mxu0 %v4371
    %4901 = vmatpush1.bf16.msra.mxu0 %v4370
    %4902 = vmatprep.subr.bf16.mxu0 %v4377
    %4903 = vmatpush1.bf16.msra.mxu0 %v4376
    %4904 = vmatprep.subr.bf16.mxu0 %v4383
    %4905 = vmatpush1.bf16.msra.mxu0 %v4382
    %4906 = vmatprep.subr.bf16.mxu0 %v4389
    %4907 = vmatpush1.bf16.msra.mxu0 %v4388
    %4908 = vmatprep.subr.bf16.mxu0 %v4395
    %4909 = vmatpush1.bf16.msra.mxu0 %v4394
    %4910 = vmatprep.subr.bf16.mxu0 %v4401
    %4911 = vmatpush1.bf16.msra.mxu0 %v4400
    %4912 = vmatprep.subr.bf16.mxu0 %v4407
    %4913 = vmatpush1.bf16.msra.mxu0 %v4406
    %4914 = vmatprep.subr.bf16.mxu0 %v4413
    %4915 = vmatpush1.bf16.msra.mxu0 %v4412
    %4916 = vmatprep.subr.bf16.mxu0 %v4419
    %4917 = vmatpush1.bf16.msra.mxu0 %v4418
    %4918 = vmatprep.subr.bf16.mxu0 %v4425
    %4919 = vmatpush1.bf16.msra.mxu0 %v4424
    %4920 = vmatprep.subr.bf16.mxu0 %v4431
    %4921 = vmatpush1.bf16.msra.mxu0 %v4430
    %4922 = vmatprep.subr.bf16.mxu0 %v4437
    %4923 = vmatpush1.bf16.msra.mxu0 %v4436
    %4924 = vmatprep.subr.bf16.mxu0 %v4443
    %4925 = vmatpush1.bf16.msra.mxu0 %v4442
    %4926 = vmatprep.subr.bf16.mxu0 %v4449
    %4927 = vmatpush1.bf16.msra.mxu0 %v4448
    %4928 = vmatprep.subr.bf16.mxu0 %v4455
    %4929 = vmatpush1.bf16.msra.mxu0 %v4454
    %4930 = vmatprep.subr.bf16.mxu0 %v4461
    %4931 = vmatpush1.bf16.msra.mxu0 %v4460
    %4932 = vmatprep.mubr.bf16.mxu0 %v4361
    %4933 = vmatmul.mubr.bf16.gmra.mrb[0].mxu0 %v4360
    %v4934 = vpop.f32.mrb[0].mxu0
    %v4935 = vadd.f32 0.0, %v4934
    %v4936 = vpop.f32.mrb[0].mxu0
    %v4937 = vadd.f32 0.0, %v4936
    %v4938 = vpop.f32.mrb[0].mxu0
    %v4939 = vpop.f32.mrb[0].mxu0
    %4940 = vdwg.mxu0
    %4941 = vmatprep.subr.bf16.mxu0 %v4467
    %4942 = vmatpush1.bf16.msra.mxu0 %v4466
    %4943 = vmatprep.subr.bf16.mxu0 %v4473
    %4944 = vmatpush1.bf16.msra.mxu0 %v4472
    %4945 = vmatprep.subr.bf16.mxu0 %v4479
    %4946 = vmatpush1.bf16.msra.mxu0 %v4478
    %4947 = vmatprep.subr.bf16.mxu0 %v4485
    %4948 = vmatpush1.bf16.msra.mxu0 %v4484
    %4949 = vmatprep.subr.bf16.mxu0 %v4491
    %4950 = vmatpush1.bf16.msra.mxu0 %v4490
    %4951 = vmatprep.subr.bf16.mxu0 %v4497
    %4952 = vmatpush1.bf16.msra.mxu0 %v4496
    %4953 = vmatprep.subr.bf16.mxu0 %v4503
    %4954 = vmatpush1.bf16.msra.mxu0 %v4502
    %4955 = vmatprep.subr.bf16.mxu0 %v4509
    %4956 = vmatpush1.bf16.msra.mxu0 %v4508
    %4957 = vmatprep.subr.bf16.mxu0 %v4515
    %4958 = vmatpush1.bf16.msra.mxu0 %v4514
    %4959 = vmatprep.subr.bf16.mxu0 %v4521
    %4960 = vmatpush1.bf16.msra.mxu0 %v4520
    %4961 = vmatprep.subr.bf16.mxu0 %v4527
    %4962 = vmatpush1.bf16.msra.mxu0 %v4526
    %4963 = vmatprep.subr.bf16.mxu0 %v4533
    %4964 = vmatpush1.bf16.msra.mxu0 %v4532
    %4965 = vmatprep.subr.bf16.mxu0 %v4539
    %4966 = vmatpush1.bf16.msra.mxu0 %v4538
    %4967 = vmatprep.subr.bf16.mxu0 %v4545
    %4968 = vmatpush1.bf16.msra.mxu0 %v4544
    %4969 = vmatprep.subr.bf16.mxu0 %v4551
    %4970 = vmatpush1.bf16.msra.mxu0 %v4550
    %4971 = vmatprep.subr.bf16.mxu0 %v4557
    %4972 = vmatpush1.bf16.msra.mxu0 %v4556
    %4973 = vmatprep.mubr.bf16.mxu0 %v4363
    %4974 = vmatmul.mubr.bf16.gmra.mrb[0].mxu0 %v4362
    %v4975 = vpop.f32.mrb[0].mxu0
    %v4976 = vadd.f32 %v4935, %v4975
    %v4977 = vpop.f32.mrb[0].mxu0
    %v4978 = vadd.f32 %v4937, %v4977
    %v4979 = vpop.f32.mrb[0].mxu0
    %v4980 = vpop.f32.mrb[0].mxu0
    %4981 = vdwg.mxu0
    %4982 = vmatprep.subr.bf16.mxu0 %v4563
    %4983 = vmatpush1.bf16.msra.mxu0 %v4562
    %4984 = vmatprep.subr.bf16.mxu0 %v4569
    %4985 = vmatpush1.bf16.msra.mxu0 %v4568
    %4986 = vmatprep.subr.bf16.mxu0 %v4575
    %4987 = vmatpush1.bf16.msra.mxu0 %v4574
    %4988 = vmatprep.subr.bf16.mxu0 %v4581
    %4989 = vmatpush1.bf16.msra.mxu0 %v4580
    %4990 = vmatprep.subr.bf16.mxu0 %v4587
    %4991 = vmatpush1.bf16.msra.mxu0 %v4586
    %4992 = vmatprep.subr.bf16.mxu0 %v4593
    %4993 = vmatpush1.bf16.msra.mxu0 %v4592
    %4994 = vmatprep.subr.bf16.mxu0 %v4599
    %4995 = vmatpush1.bf16.msra.mxu0 %v4598
    %4996 = vmatprep.subr.bf16.mxu0 %v4605
    %4997 = vmatpush1.bf16.msra.mxu0 %v4604
    %4998 = vmatprep.subr.bf16.mxu0 %v4611
    %4999 = vmatpush1.bf16.msra.mxu0 %v4610
    %5000 = vmatprep.subr.bf16.mxu0 %v4617
    %5001 = vmatpush1.bf16.msra.mxu0 %v4616
    %5002 = vmatprep.subr.bf16.mxu0 %v4623
    %5003 = vmatpush1.bf16.msra.mxu0 %v4622
    %5004 = vmatprep.subr.bf16.mxu0 %v4629
    %5005 = vmatpush1.bf16.msra.mxu0 %v4628
    %5006 = vmatprep.subr.bf16.mxu0 %v4635
    %5007 = vmatpush1.bf16.msra.mxu0 %v4634
    %5008 = vmatprep.subr.bf16.mxu0 %v4641
    %5009 = vmatpush1.bf16.msra.mxu0 %v4640
    %5010 = vmatprep.subr.bf16.mxu0 %v4647
    %5011 = vmatpush1.bf16.msra.mxu0 %v4646
    %5012 = vmatprep.subr.bf16.mxu0 %v4653
    %5013 = vmatpush1.bf16.msra.mxu0 %v4652
    %5014 = vmatprep.mubr.bf16.mxu0 %v4365
    %5015 = vmatmul.mubr.bf16.gmra.mrb[0].mxu0 %v4364
    %v5016 = vpop.f32.mrb[0].mxu0
    %v5017 = vadd.f32 %v4976, %v5016
    %v5018 = vpop.f32.mrb[0].mxu0
    %v5019 = vadd.f32 %v4978, %v5018
    %v5020 = vpop.f32.mrb[0].mxu0
    %v5021 = vpop.f32.mrb[0].mxu0
    %5022 = vdwg.mxu0
    %5023 = vmatprep.subr.bf16.mxu0 %v4073
    %5024 = vmatpush1.bf16.msra.mxu0 %v4072
    %5025 = vmatprep.subr.bf16.mxu0 %v4079
    %5026 = vmatpush1.bf16.msra.mxu0 %v4078
    %5027 = vmatprep.subr.bf16.mxu0 %v4085
    %5028 = vmatpush1.bf16.msra.mxu0 %v4084
    %5029 = vmatprep.subr.bf16.mxu0 %v4091
    %5030 = vmatpush1.bf16.msra.mxu0 %v4090
    %5031 = vmatprep.subr.bf16.mxu0 %v4097
    %5032 = vmatpush1.bf16.msra.mxu0 %v4096
    %5033 = vmatprep.subr.bf16.mxu0 %v4103
    %5034 = vmatpush1.bf16.msra.mxu0 %v4102
    %5035 = vmatprep.subr.bf16.mxu0 %v4109
    %5036 = vmatpush1.bf16.msra.mxu0 %v4108
    %5037 = vmatprep.subr.bf16.mxu0 %v4115
    %5038 = vmatpush1.bf16.msra.mxu0 %v4114
    %5039 = vmatprep.subr.bf16.mxu0 %v4121
    %5040 = vmatpush1.bf16.msra.mxu0 %v4120
    %5041 = vmatprep.subr.bf16.mxu0 %v4127
    %5042 = vmatpush1.bf16.msra.mxu0 %v4126
    %5043 = vmatprep.subr.bf16.mxu0 %v4133
    %5044 = vmatpush1.bf16.msra.mxu0 %v4132
    %5045 = vmatprep.subr.bf16.mxu0 %v4139
    %5046 = vmatpush1.bf16.msra.mxu0 %v4138
    %5047 = vmatprep.subr.bf16.mxu0 %v4145
    %5048 = vmatpush1.bf16.msra.mxu0 %v4144
    %5049 = vmatprep.subr.bf16.mxu0 %v4151
    %5050 = vmatpush1.bf16.msra.mxu0 %v4150
    %5051 = vmatprep.subr.bf16.mxu0 %v4157
    %5052 = vmatpush1.bf16.msra.mxu0 %v4156
    %5053 = vmatprep.subr.bf16.mxu0 %v4163
    %5054 = vmatpush1.bf16.msra.mxu0 %v4162
    %5055 = vmatprep.mubr.bf16.mxu0 %v4067
    %5056 = vmatmul.mubr.bf16.gmra.mrb[0].mxu0 %v4066
    %v5057 = vpop.f32.mrb[0].mxu0
    %v5058 = vadd.f32 %v4771, %v5057
    %v5059 = vpop.f32.mrb[0].mxu0
    %v5060 = vadd.f32 %v4773, %v5059
    %v5061 = vpop.f32.mrb[0].mxu0
    %v5062 = vpop.f32.mrb[0].mxu0
    %5063 = vdwg.mxu0
    %5064 = vmatprep.subr.bf16.mxu0 %v4169
    %5065 = vmatpush1.bf16.msra.mxu0 %v4168
    %5066 = vmatprep.subr.bf16.mxu0 %v4175
    %5067 = vmatpush1.bf16.msra.mxu0 %v4174
    %5068 = vmatprep.subr.bf16.mxu0 %v4181
    %5069 = vmatpush1.bf16.msra.mxu0 %v4180
    %5070 = vmatprep.subr.bf16.mxu0 %v4187
    %5071 = vmatpush1.bf16.msra.mxu0 %v4186
    %5072 = vmatprep.subr.bf16.mxu0 %v4193
    %5073 = vmatpush1.bf16.msra.mxu0 %v4192
    %5074 = vmatprep.subr.bf16.mxu0 %v4199
    %5075 = vmatpush1.bf16.msra.mxu0 %v4198
    %5076 = vmatprep.subr.bf16.mxu0 %v4205
    %5077 = vmatpush1.bf16.msra.mxu0 %v4204
    %5078 = vmatprep.subr.bf16.mxu0 %v4211
    %5079 = vmatpush1.bf16.msra.mxu0 %v4210
    %5080 = vmatprep.subr.bf16.mxu0 %v4217
    %5081 = vmatpush1.bf16.msra.mxu0 %v4216
    %5082 = vmatprep.subr.bf16.mxu0 %v4223
    %5083 = vmatpush1.bf16.msra.mxu0 %v4222
    %5084 = vmatprep.subr.bf16.mxu0 %v4229
    %5085 = vmatpush1.bf16.msra.mxu0 %v4228
    %5086 = vmatprep.subr.bf16.mxu0 %v4235
    %5087 = vmatpush1.bf16.msra.mxu0 %v4234
    %5088 = vmatprep.subr.bf16.mxu0 %v4241
    %5089 = vmatpush1.bf16.msra.mxu0 %v4240
    %5090 = vmatprep.subr.bf16.mxu0 %v4247
    %5091 = vmatpush1.bf16.msra.mxu0 %v4246
    %5092 = vmatprep.subr.bf16.mxu0 %v4253
    %5093 = vmatpush1.bf16.msra.mxu0 %v4252
    %5094 = vmatprep.subr.bf16.mxu0 %v4259
    %5095 = vmatpush1.bf16.msra.mxu0 %v4258
    %5096 = vmatprep.mubr.bf16.mxu0 %v4069
    %5097 = vmatmul.mubr.bf16.gmra.mrb[0].mxu0 %v4068
    %v5098 = vpop.f32.mrb[0].mxu0
    %v5099 = vadd.f32 %v5058, %v5098
    %v5100 = vpop.f32.mrb[0].mxu0
    %v5101 = vadd.f32 %v5060, %v5100
    %v5102 = vpop.f32.mrb[0].mxu0
    %v5103 = vpop.f32.mrb[0].mxu0
    %5104 = vdwg.mxu0
    %5105 = vmatprep.subr.bf16.mxu0 %v4265
    %5106 = vmatpush1.bf16.msra.mxu0 %v4264
    %5107 = vmatprep.subr.bf16.mxu0 %v4271
    %5108 = vmatpush1.bf16.msra.mxu0 %v4270
    %5109 = vmatprep.subr.bf16.mxu0 %v4277
    %5110 = vmatpush1.bf16.msra.mxu0 %v4276
    %5111 = vmatprep.subr.bf16.mxu0 %v4283
    %5112 = vmatpush1.bf16.msra.mxu0 %v4282
    %5113 = vmatprep.subr.bf16.mxu0 %v4289
    %5114 = vmatpush1.bf16.msra.mxu0 %v4288
    %5115 = vmatprep.subr.bf16.mxu0 %v4295
    %5116 = vmatpush1.bf16.msra.mxu0 %v4294
    %5117 = vmatprep.subr.bf16.mxu0 %v4301
    %5118 = vmatpush1.bf16.msra.mxu0 %v4300
    %5119 = vmatprep.subr.bf16.mxu0 %v4307
    %5120 = vmatpush1.bf16.msra.mxu0 %v4306
    %5121 = vmatprep.subr.bf16.mxu0 %v4313
    %5122 = vmatpush1.bf16.msra.mxu0 %v4312
    %5123 = vmatprep.subr.bf16.mxu0 %v4319
    %5124 = vmatpush1.bf16.msra.mxu0 %v4318
    %5125 = vmatprep.subr.bf16.mxu0 %v4325
    %5126 = vmatpush1.bf16.msra.mxu0 %v4324
    %5127 = vmatprep.subr.bf16.mxu0 %v4331
    %5128 = vmatpush1.bf16.msra.mxu0 %v4330
    %5129 = vmatprep.subr.bf16.mxu0 %v4337
    %5130 = vmatpush1.bf16.msra.mxu0 %v4336
    %5131 = vmatprep.subr.bf16.mxu0 %v4343
    %5132 = vmatpush1.bf16.msra.mxu0 %v4342
    %5133 = vmatprep.subr.bf16.mxu0 %v4349
    %5134 = vmatpush1.bf16.msra.mxu0 %v4348
    %5135 = vmatprep.subr.bf16.mxu0 %v4355
    %5136 = vmatpush1.bf16.msra.mxu0 %v4354
    %5137 = vmatprep.mubr.bf16.mxu0 %v4071
    %5138 = vmatmul.mubr.bf16.gmra.mrb[0].mxu0 %v4070
    %v5139 = vpop.f32.mrb[0].mxu0
    %v5140 = vadd.f32 %v5099, %v5139
    %v5141 = vpop.f32.mrb[0].mxu0
    %v5142 = vadd.f32 %v5101, %v5141
    %v5143 = vpop.f32.mrb[0].mxu0
    %v5144 = vpop.f32.mrb[0].mxu0
    %5145 = vdwg.mxu0
    %5146 = vmatprep.subr.bf16.mxu0 %v4075
    %5147 = vmatpush1.bf16.msra.mxu0 %v4074
    %5148 = vmatprep.subr.bf16.mxu0 %v4081
    %5149 = vmatpush1.bf16.msra.mxu0 %v4080
    %5150 = vmatprep.subr.bf16.mxu0 %v4087
    %5151 = vmatpush1.bf16.msra.mxu0 %v4086
    %5152 = vmatprep.subr.bf16.mxu0 %v4093
    %5153 = vmatpush1.bf16.msra.mxu0 %v4092
    %5154 = vmatprep.subr.bf16.mxu0 %v4099
    %5155 = vmatpush1.bf16.msra.mxu0 %v4098
    %5156 = vmatprep.subr.bf16.mxu0 %v4105
    %5157 = vmatpush1.bf16.msra.mxu0 %v4104
    %5158 = vmatprep.subr.bf16.mxu0 %v4111
    %5159 = vmatpush1.bf16.msra.mxu0 %v4110
    %5160 = vmatprep.subr.bf16.mxu0 %v4117
    %5161 = vmatpush1.bf16.msra.mxu0 %v4116
    %5162 = vmatprep.subr.bf16.mxu0 %v4123
    %5163 = vmatpush1.bf16.msra.mxu0 %v4122
    %5164 = vmatprep.subr.bf16.mxu0 %v4129
    %5165 = vmatpush1.bf16.msra.mxu0 %v4128
    %5166 = vmatprep.subr.bf16.mxu0 %v4135
    %5167 = vmatpush1.bf16.msra.mxu0 %v4134
    %5168 = vmatprep.subr.bf16.mxu0 %v4141
    %5169 = vmatpush1.bf16.msra.mxu0 %v4140
    %5170 = vmatprep.subr.bf16.mxu0 %v4147
    %5171 = vmatpush1.bf16.msra.mxu0 %v4146
    %5172 = vmatprep.subr.bf16.mxu0 %v4153
    %5173 = vmatpush1.bf16.msra.mxu0 %v4152
    %5174 = vmatprep.subr.bf16.mxu0 %v4159
    %5175 = vmatpush1.bf16.msra.mxu0 %v4158
    %5176 = vmatprep.subr.bf16.mxu0 %v4165
    %5177 = vmatpush1.bf16.msra.mxu0 %v4164
    %5178 = vmatprep.mubr.bf16.mxu0 %v4067
    %5179 = vmatmul.mubr.bf16.gmra.mrb[0].mxu0 %v4066
    %v5180 = vpop.f32.mrb[0].mxu0
    %v5181 = vadd.f32 %v4894, %v5180
    %v5182 = vpop.f32.mrb[0].mxu0
    %v5183 = vadd.f32 %v4896, %v5182
    %v5184 = vpop.f32.mrb[0].mxu0
    %v5185 = vpop.f32.mrb[0].mxu0
    %5186 = vdwg.mxu0
    %5187 = vmatprep.subr.bf16.mxu0 %v4171
    %5188 = vmatpush1.bf16.msra.mxu0 %v4170
    %5189 = vmatprep.subr.bf16.mxu0 %v4177
    %5190 = vmatpush1.bf16.msra.mxu0 %v4176
    %5191 = vmatprep.subr.bf16.mxu0 %v4183
    %5192 = vmatpush1.bf16.msra.mxu0 %v4182
    %5193 = vmatprep.subr.bf16.mxu0 %v4189
    %5194 = vmatpush1.bf16.msra.mxu0 %v4188
    %5195 = vmatprep.subr.bf16.mxu0 %v4195
    %5196 = vmatpush1.bf16.msra.mxu0 %v4194
    %5197 = vmatprep.subr.bf16.mxu0 %v4201
    %5198 = vmatpush1.bf16.msra.mxu0 %v4200
    %5199 = vmatprep.subr.bf16.mxu0 %v4207
    %5200 = vmatpush1.bf16.msra.mxu0 %v4206
    %5201 = vmatprep.subr.bf16.mxu0 %v4213
    %5202 = vmatpush1.bf16.msra.mxu0 %v4212
    %5203 = vmatprep.subr.bf16.mxu0 %v4219
    %5204 = vmatpush1.bf16.msra.mxu0 %v4218
    %5205 = vmatprep.subr.bf16.mxu0 %v4225
    %5206 = vmatpush1.bf16.msra.mxu0 %v4224
    %5207 = vmatprep.subr.bf16.mxu0 %v4231
    %5208 = vmatpush1.bf16.msra.mxu0 %v4230
    %5209 = vmatprep.subr.bf16.mxu0 %v4237
    %5210 = vmatpush1.bf16.msra.mxu0 %v4236
    %5211 = vmatprep.subr.bf16.mxu0 %v4243
    %5212 = vmatpush1.bf16.msra.mxu0 %v4242
    %5213 = vmatprep.subr.bf16.mxu0 %v4249
    %5214 = vmatpush1.bf16.msra.mxu0 %v4248
    %5215 = vmatprep.subr.bf16.mxu0 %v4255
    %5216 = vmatpush1.bf16.msra.mxu0 %v4254
    %5217 = vmatprep.subr.bf16.mxu0 %v4261
    %5218 = vmatpush1.bf16.msra.mxu0 %v4260
    %5219 = vmatprep.mubr.bf16.mxu0 %v4069
    %5220 = vmatmul.mubr.bf16.gmra.mrb[0].mxu0 %v4068
    %v5221 = vpop.f32.mrb[0].mxu0
    %v5222 = vadd.f32 %v5181, %v5221
    %v5223 = vpop.f32.mrb[0].mxu0
    %v5224 = vadd.f32 %v5183, %v5223
    %v5225 = vpop.f32.mrb[0].mxu0
    %v5226 = vpop.f32.mrb[0].mxu0
    %5227 = vdwg.mxu0
    %5228 = vmatprep.subr.bf16.mxu0 %v4267
    %5229 = vmatpush1.bf16.msra.mxu0 %v4266
    %5230 = vmatprep.subr.bf16.mxu0 %v4273
    %5231 = vmatpush1.bf16.msra.mxu0 %v4272
    %5232 = vmatprep.subr.bf16.mxu0 %v4279
    %5233 = vmatpush1.bf16.msra.mxu0 %v4278
    %5234 = vmatprep.subr.bf16.mxu0 %v4285
    %5235 = vmatpush1.bf16.msra.mxu0 %v4284
    %5236 = vmatprep.subr.bf16.mxu0 %v4291
    %5237 = vmatpush1.bf16.msra.mxu0 %v4290
    %5238 = vmatprep.subr.bf16.mxu0 %v4297
    %5239 = vmatpush1.bf16.msra.mxu0 %v4296
    %5240 = vmatprep.subr.bf16.mxu0 %v4303
    %5241 = vmatpush1.bf16.msra.mxu0 %v4302
    %5242 = vmatprep.subr.bf16.mxu0 %v4309
    %5243 = vmatpush1.bf16.msra.mxu0 %v4308
    %5244 = vmatprep.subr.bf16.mxu0 %v4315
    %5245 = vmatpush1.bf16.msra.mxu0 %v4314
    %5246 = vmatprep.subr.bf16.mxu0 %v4321
    %5247 = vmatpush1.bf16.msra.mxu0 %v4320
    %5248 = vmatprep.subr.bf16.mxu0 %v4327
    %5249 = vmatpush1.bf16.msra.mxu0 %v4326
    %5250 = vmatprep.subr.bf16.mxu0 %v4333
    %5251 = vmatpush1.bf16.msra.mxu0 %v4332
    %5252 = vmatprep.subr.bf16.mxu0 %v4339
    %5253 = vmatpush1.bf16.msra.mxu0 %v4338
    %5254 = vmatprep.subr.bf16.mxu0 %v4345
    %5255 = vmatpush1.bf16.msra.mxu0 %v4344
    %5256 = vmatprep.subr.bf16.mxu0 %v4351
    %5257 = vmatpush1.bf16.msra.mxu0 %v4350
    %5258 = vmatprep.subr.bf16.mxu0 %v4357
    %5259 = vmatpush1.bf16.msra.mxu0 %v4356
    %5260 = vmatprep.mubr.bf16.mxu0 %v4071
    %5261 = vmatmul.mubr.bf16.gmra.mrb[0].mxu0 %v4070
    %v5262 = vpop.f32.mrb[0].mxu0
    %v5263 = vadd.f32 %v5222, %v5262
    %v5264 = vpop.f32.mrb[0].mxu0
    %v5265 = vadd.f32 %v5224, %v5264
    %v5266 = vpop.f32.mrb[0].mxu0
    %v5267 = vpop.f32.mrb[0].mxu0
    %5268 = vdwg.mxu0
    %5269 = vmatprep.subr.bf16.mxu0 %v4077
    %5270 = vmatpush1.bf16.msra.mxu0 %v4076
    %5271 = vmatprep.subr.bf16.mxu0 %v4083
    %5272 = vmatpush1.bf16.msra.mxu0 %v4082
    %5273 = vmatprep.subr.bf16.mxu0 %v4089
    %5274 = vmatpush1.bf16.msra.mxu0 %v4088
    %5275 = vmatprep.subr.bf16.mxu0 %v4095
    %5276 = vmatpush1.bf16.msra.mxu0 %v4094
    %5277 = vmatprep.subr.bf16.mxu0 %v4101
    %5278 = vmatpush1.bf16.msra.mxu0 %v4100
    %5279 = vmatprep.subr.bf16.mxu0 %v4107
    %5280 = vmatpush1.bf16.msra.mxu0 %v4106
    %5281 = vmatprep.subr.bf16.mxu0 %v4113
    %5282 = vmatpush1.bf16.msra.mxu0 %v4112
    %5283 = vmatprep.subr.bf16.mxu0 %v4119
    %5284 = vmatpush1.bf16.msra.mxu0 %v4118
    %5285 = vmatprep.subr.bf16.mxu0 %v4125
    %5286 = vmatpush1.bf16.msra.mxu0 %v4124
    %5287 = vmatprep.subr.bf16.mxu0 %v4131
    %5288 = vmatpush1.bf16.msra.mxu0 %v4130
    %5289 = vmatprep.subr.bf16.mxu0 %v4137
    %5290 = vmatpush1.bf16.msra.mxu0 %v4136
    %5291 = vmatprep.subr.bf16.mxu0 %v4143
    %5292 = vmatpush1.bf16.msra.mxu0 %v4142
    %5293 = vmatprep.subr.bf16.mxu0 %v4149
    %5294 = vmatpush1.bf16.msra.mxu0 %v4148
    %5295 = vmatprep.subr.bf16.mxu0 %v4155
    %5296 = vmatpush1.bf16.msra.mxu0 %v4154
    %5297 = vmatprep.subr.bf16.mxu0 %v4161
    %5298 = vmatpush1.bf16.msra.mxu0 %v4160
    %5299 = vmatprep.subr.bf16.mxu0 %v4167
    %5300 = vmatpush1.bf16.msra.mxu0 %v4166
    %5301 = vmatprep.mubr.bf16.mxu0 %v4067
    %5302 = vmatmul.mubr.bf16.gmra.mrb[0].mxu0 %v4066
    %v5303 = vpop.f32.mrb[0].mxu0
    %v5304 = vadd.f32 %v5017, %v5303
    %v5305 = vpop.f32.mrb[0].mxu0
    %v5306 = vadd.f32 %v5019, %v5305
    %v5307 = vpop.f32.mrb[0].mxu0
    %v5308 = vpop.f32.mrb[0].mxu0
    %5309 = vdwg.mxu0
    %5310 = vmatprep.subr.bf16.mxu0 %v4173
    %5311 = vmatpush1.bf16.msra.mxu0 %v4172
    %5312 = vmatprep.subr.bf16.mxu0 %v4179
    %5313 = vmatpush1.bf16.msra.mxu0 %v4178
    %5314 = vmatprep.subr.bf16.mxu0 %v4185
    %5315 = vmatpush1.bf16.msra.mxu0 %v4184
    %5316 = vmatprep.subr.bf16.mxu0 %v4191
    %5317 = vmatpush1.bf16.msra.mxu0 %v4190
    %5318 = vmatprep.subr.bf16.mxu0 %v4197
    %5319 = vmatpush1.bf16.msra.mxu0 %v4196
    %5320 = vmatprep.subr.bf16.mxu0 %v4203
    %5321 = vmatpush1.bf16.msra.mxu0 %v4202
    %5322 = vmatprep.subr.bf16.mxu0 %v4209
    %5323 = vmatpush1.bf16.msra.mxu0 %v4208
    %5324 = vmatprep.subr.bf16.mxu0 %v4215
    %5325 = vmatpush1.bf16.msra.mxu0 %v4214
    %5326 = vmatprep.subr.bf16.mxu0 %v4221
    %5327 = vmatpush1.bf16.msra.mxu0 %v4220
    %5328 = vmatprep.subr.bf16.mxu0 %v4227
    %5329 = vmatpush1.bf16.msra.mxu0 %v4226
    %5330 = vmatprep.subr.bf16.mxu0 %v4233
    %5331 = vmatpush1.bf16.msra.mxu0 %v4232
    %5332 = vmatprep.subr.bf16.mxu0 %v4239
    %5333 = vmatpush1.bf16.msra.mxu0 %v4238
    %5334 = vmatprep.subr.bf16.mxu0 %v4245
    %5335 = vmatpush1.bf16.msra.mxu0 %v4244
    %5336 = vmatprep.subr.bf16.mxu0 %v4251
    %5337 = vmatpush1.bf16.msra.mxu0 %v4250
    %5338 = vmatprep.subr.bf16.mxu0 %v4257
    %5339 = vmatpush1.bf16.msra.mxu0 %v4256
    %5340 = vmatprep.subr.bf16.mxu0 %v4263
    %5341 = vmatpush1.bf16.msra.mxu0 %v4262
    %5342 = vmatprep.mubr.bf16.mxu0 %v4069
    %5343 = vmatmul.mubr.bf16.gmra.mrb[0].mxu0 %v4068
    %v5344 = vpop.f32.mrb[0].mxu0
    %v5345 = vadd.f32 %v5304, %v5344
    %v5346 = vpop.f32.mrb[0].mxu0
    %v5347 = vadd.f32 %v5306, %v5346
    %v5348 = vpop.f32.mrb[0].mxu0
    %v5349 = vpop.f32.mrb[0].mxu0
    %5350 = vdwg.mxu0
    %5351 = vmatprep.subr.bf16.mxu0 %v4269
    %5352 = vmatpush1.bf16.msra.mxu0 %v4268
    %5353 = vmatprep.subr.bf16.mxu0 %v4275
    %5354 = vmatpush1.bf16.msra.mxu0 %v4274
    %5355 = vmatprep.subr.bf16.mxu0 %v4281
    %5356 = vmatpush1.bf16.msra.mxu0 %v4280
    %5357 = vmatprep.subr.bf16.mxu0 %v4287
    %5358 = vmatpush1.bf16.msra.mxu0 %v4286
    %5359 = vmatprep.subr.bf16.mxu0 %v4293
    %5360 = vmatpush1.bf16.msra.mxu0 %v4292
    %5361 = vmatprep.subr.bf16.mxu0 %v4299
    %5362 = vmatpush1.bf16.msra.mxu0 %v4298
    %5363 = vmatprep.subr.bf16.mxu0 %v4305
    %5364 = vmatpush1.bf16.msra.mxu0 %v4304
    %5365 = vmatprep.subr.bf16.mxu0 %v4311
    %5366 = vmatpush1.bf16.msra.mxu0 %v4310
    %5367 = vmatprep.subr.bf16.mxu0 %v4317
    %5368 = vmatpush1.bf16.msra.mxu0 %v4316
    %5369 = vmatprep.subr.bf16.mxu0 %v4323
    %5370 = vmatpush1.bf16.msra.mxu0 %v4322
    %5371 = vmatprep.subr.bf16.mxu0 %v4329
    %5372 = vmatpush1.bf16.msra.mxu0 %v4328
    %5373 = vmatprep.subr.bf16.mxu0 %v4335
    %5374 = vmatpush1.bf16.msra.mxu0 %v4334
    %5375 = vmatprep.subr.bf16.mxu0 %v4341
    %5376 = vmatpush1.bf16.msra.mxu0 %v4340
    %5377 = vmatprep.subr.bf16.mxu0 %v4347
    %5378 = vmatpush1.bf16.msra.mxu0 %v4346
    %5379 = vmatprep.subr.bf16.mxu0 %v4353
    %5380 = vmatpush1.bf16.msra.mxu0 %v4352
    %5381 = vmatprep.subr.bf16.mxu0 %v4359
    %5382 = vmatpush1.bf16.msra.mxu0 %v4358
    %5383 = vmatprep.mubr.bf16.mxu0 %v4071
    %5384 = vmatmul.mubr.bf16.gmra.mrb[0].mxu0 %v4070
    %v5385 = vpop.f32.mrb[0].mxu0
    %v5386 = vadd.f32 %v5345, %v5385
    %v5387 = vpop.f32.mrb[0].mxu0
    %v5388 = vadd.f32 %v5347, %v5387
    %v5389 = vpop.f32.mrb[0].mxu0
    %v5390 = vpop.f32.mrb[0].mxu0
    %5391 = vdwg.mxu0
    %v5393 = vlaneseq
    %v5394 = vshrl.u32 %v5393, 7
    %v5395 = vsub.s32 0, %v5394
    %v5396 = vrot.slane %v225, %v5395
    %v5397 = vlaneseq
    %v5398 = vshrl.u32 %v5397, 7
    %v5399 = vsub.s32 1, %v5398
    %v5400 = vrot.slane %v225, %v5399
    %v5401 = vlaneseq
    %v5402 = vshrl.u32 %v5401, 7
    %v5403 = vsub.s32 2, %v5402
    %v5404 = vrot.slane %v225, %v5403
    %v5405 = vlaneseq
    %v5406 = vshrl.u32 %v5405, 7
    %v5407 = vsub.s32 3, %v5406
    %v5408 = vrot.slane %v225, %v5407
    %v5409 = vlaneseq
    %v5410 = vshrl.u32 %v5409, 7
    %v5411 = vsub.s32 4, %v5410
    %v5412 = vrot.slane %v225, %v5411
    %v5413 = vlaneseq
    %v5414 = vshrl.u32 %v5413, 7
    %v5415 = vsub.s32 5, %v5414
    %v5416 = vrot.slane %v225, %v5415
    %v5423 = vadd.f32 %v5140, %v5396
    %v5424 = vadd.f32 %v5142, %v5400
    %v5425 = vadd.f32 %v5263, %v5404
    %v5426 = vadd.f32 %v5265, %v5408
    %v5427 = vadd.f32 %v5386, %v5412
    %v5428 = vadd.f32 %v5388, %v5416
    %v5429 = vadd.f32 %v5423, %v5424
    %v5430 = vadd.f32 %v5429, %v5425
    %v5431 = vadd.f32 %v5430, %v5426
    %v5432 = vadd.f32 %v5431, %v5427
    %v5433 = vadd.f32 %v5432, %v5428
    %5434 = vadd.xlane.f32.xlu0 %v5433
    %v5435 = vpop.xlane.xlu0 %5434
    %v5436 = vmul.f32 %v5435, %v3253
    %v5437 = vmul.f32 %v5423, %v5423
    %v5438 = vmul.f32 %v5424, %v5424
    %v5439 = vmul.f32 %v5425, %v5425
    %v5440 = vmul.f32 %v5426, %v5426
    %v5441 = vmul.f32 %v5427, %v5427
    %v5442 = vmul.f32 %v5428, %v5428
    %v5443 = vadd.f32 %v5437, %v5438
    %v5444 = vadd.f32 %v5443, %v5439
    %v5445 = vadd.f32 %v5444, %v5440
    %v5446 = vadd.f32 %v5445, %v5441
    %v5447 = vadd.f32 %v5446, %v5442
    %5448 = vadd.xlane.f32.xlu0 %v5447
    %v5449 = vpop.xlane.xlu0 %5448
    %v5450 = vmul.f32 %v5449, %v3253
    %v5451 = vmul.f32 %v5436, %v5436
    %v5452 = vsub.f32 %v5450, %v5451
    %v5453 = vmax.f32 %v5452, 0.0
    %v5454 = vsub.f32 %v5423, %v5436
    %v5455 = vsub.f32 %v5424, %v5436
    %v5456 = vsub.f32 %v5425, %v5436
    %v5457 = vsub.f32 %v5426, %v5436
    %v5458 = vsub.f32 %v5427, %v5436
    %v5459 = vsub.f32 %v5428, %v5436
    %v5460 = vadd.f32 %v5453, 1e-05
    %v5461 = vrsqrt.pop %v5460
    %v5462 = vmul.f32 %v5454, %v5461
    %v5463 = vmul.f32 %v5455, %v5461
    %v5464 = vmul.f32 %v5456, %v5461
    %v5465 = vmul.f32 %v5457, %v5461
    %v5466 = vmul.f32 %v5458, %v5461
    %v5467 = vmul.f32 %v5459, %v5461
    %v5469 = vlaneseq
    %v5470 = vshrl.u32 %v5469, 7
    %v5471 = vsub.s32 0, %v5470
    %v5472 = vrot.slane %v229, %v5471
    %v5473 = vlaneseq
    %v5474 = vshrl.u32 %v5473, 7
    %v5475 = vsub.s32 1, %v5474
    %v5476 = vrot.slane %v229, %v5475
    %v5477 = vlaneseq
    %v5478 = vshrl.u32 %v5477, 7
    %v5479 = vsub.s32 2, %v5478
    %v5480 = vrot.slane %v229, %v5479
    %v5481 = vlaneseq
    %v5482 = vshrl.u32 %v5481, 7
    %v5483 = vsub.s32 3, %v5482
    %v5484 = vrot.slane %v229, %v5483
    %v5485 = vlaneseq
    %v5486 = vshrl.u32 %v5485, 7
    %v5487 = vsub.s32 4, %v5486
    %v5488 = vrot.slane %v229, %v5487
    %v5489 = vlaneseq
    %v5490 = vshrl.u32 %v5489, 7
    %v5491 = vsub.s32 5, %v5490
    %v5492 = vrot.slane %v229, %v5491
    %v5499 = vmul.f32 %v5462, %v5472
    %v5500 = vmul.f32 %v5463, %v5476
    %v5501 = vmul.f32 %v5464, %v5480
    %v5502 = vmul.f32 %v5465, %v5484
    %v5503 = vmul.f32 %v5466, %v5488
    %v5504 = vmul.f32 %v5467, %v5492
    %v5506 = vlaneseq
    %v5507 = vshrl.u32 %v5506, 7
    %v5508 = vsub.s32 0, %v5507
    %v5509 = vrot.slane %v233, %v5508
    %v5510 = vlaneseq
    %v5511 = vshrl.u32 %v5510, 7
    %v5512 = vsub.s32 1, %v5511
    %v5513 = vrot.slane %v233, %v5512
    %v5514 = vlaneseq
    %v5515 = vshrl.u32 %v5514, 7
    %v5516 = vsub.s32 2, %v5515
    %v5517 = vrot.slane %v233, %v5516
    %v5518 = vlaneseq
    %v5519 = vshrl.u32 %v5518, 7
    %v5520 = vsub.s32 3, %v5519
    %v5521 = vrot.slane %v233, %v5520
    %v5522 = vlaneseq
    %v5523 = vshrl.u32 %v5522, 7
    %v5524 = vsub.s32 4, %v5523
    %v5525 = vrot.slane %v233, %v5524
    %v5526 = vlaneseq
    %v5527 = vshrl.u32 %v5526, 7
    %v5528 = vsub.s32 5, %v5527
    %v5529 = vrot.slane %v233, %v5528
    %v5536 = vadd.f32 %v5499, %v5509
    %v5537 = vadd.f32 %v5500, %v5513
    %v5538 = vadd.f32 %v5501, %v5517
    %v5539 = vadd.f32 %v5502, %v5521
    %v5540 = vadd.f32 %v5503, %v5525
    %v5541 = vadd.f32 %v5504, %v5529
    %v5542 = vadd.f32 %v5536, %v5537
    %v5543 = vadd.f32 %v5542, %v5538
    %v5544 = vadd.f32 %v5543, %v5539
    %v5545 = vadd.f32 %v5544, %v5540
    %v5546 = vadd.f32 %v5545, %v5541
    %5547 = vadd.xlane.f32.xlu0 %v5546
    %v5548 = vpop.xlane.xlu0 %5547
    %v5549 = vmul.f32 %v5548, %v3253
    %v5550 = vmul.f32 %v5536, %v5536
    %v5551 = vmul.f32 %v5537, %v5537
    %v5552 = vmul.f32 %v5538, %v5538
    %v5553 = vmul.f32 %v5539, %v5539
    %v5554 = vmul.f32 %v5540, %v5540
    %v5555 = vmul.f32 %v5541, %v5541
    %v5556 = vadd.f32 %v5550, %v5551
    %v5557 = vadd.f32 %v5556, %v5552
    %v5558 = vadd.f32 %v5557, %v5553
    %v5559 = vadd.f32 %v5558, %v5554
    %v5560 = vadd.f32 %v5559, %v5555
    %5561 = vadd.xlane.f32.xlu0 %v5560
    %v5562 = vpop.xlane.xlu0 %5561
    %v5563 = vmul.f32 %v5562, %v3253
    %v5564 = vmul.f32 %v5549, %v5549
    %v5565 = vsub.f32 %v5563, %v5564
    %v5566 = vmax.f32 %v5565, 0.0
    %v5567 = vsub.f32 %v5536, %v5549
    %v5568 = vsub.f32 %v5537, %v5549
    %v5569 = vsub.f32 %v5538, %v5549
    %v5570 = vsub.f32 %v5539, %v5549
    %v5571 = vsub.f32 %v5540, %v5549
    %v5572 = vsub.f32 %v5541, %v5549
    %v5573 = vadd.f32 %v5566, 1e-05
    %v5574 = vrsqrt.pop %v5573
    %v5575 = vmul.f32 %v5567, %v5574
    %v5576 = vmul.f32 %v5568, %v5574
    %v5577 = vmul.f32 %v5569, %v5574
    %v5578 = vmul.f32 %v5570, %v5574
    %v5579 = vmul.f32 %v5571, %v5574
    %v5580 = vmul.f32 %v5572, %v5574
    %v5582 = vlaneseq
    %v5583 = vshrl.u32 %v5582, 7
    %v5584 = vsub.s32 0, %v5583
    %v5585 = vrot.slane %v237, %v5584
    %v5586 = vlaneseq
    %v5587 = vshrl.u32 %v5586, 7
    %v5588 = vsub.s32 1, %v5587
    %v5589 = vrot.slane %v237, %v5588
    %v5590 = vlaneseq
    %v5591 = vshrl.u32 %v5590, 7
    %v5592 = vsub.s32 2, %v5591
    %v5593 = vrot.slane %v237, %v5592
    %v5594 = vlaneseq
    %v5595 = vshrl.u32 %v5594, 7
    %v5596 = vsub.s32 3, %v5595
    %v5597 = vrot.slane %v237, %v5596
    %v5598 = vlaneseq
    %v5599 = vshrl.u32 %v5598, 7
    %v5600 = vsub.s32 4, %v5599
    %v5601 = vrot.slane %v237, %v5600
    %v5602 = vlaneseq
    %v5603 = vshrl.u32 %v5602, 7
    %v5604 = vsub.s32 5, %v5603
    %v5605 = vrot.slane %v237, %v5604
    %v5612 = vmul.f32 %v5575, %v5585
    %v5613 = vmul.f32 %v5576, %v5589
    %v5614 = vmul.f32 %v5577, %v5593
    %v5615 = vmul.f32 %v5578, %v5597
    %v5616 = vmul.f32 %v5579, %v5601
    %v5617 = vmul.f32 %v5580, %v5605
    %v5619 = vlaneseq
    %v5620 = vshrl.u32 %v5619, 7
    %v5621 = vsub.s32 0, %v5620
    %v5622 = vrot.slane %v241, %v5621
    %v5623 = vlaneseq
    %v5624 = vshrl.u32 %v5623, 7
    %v5625 = vsub.s32 1, %v5624
    %v5626 = vrot.slane %v241, %v5625
    %v5627 = vlaneseq
    %v5628 = vshrl.u32 %v5627, 7
    %v5629 = vsub.s32 2, %v5628
    %v5630 = vrot.slane %v241, %v5629
    %v5631 = vlaneseq
    %v5632 = vshrl.u32 %v5631, 7
    %v5633 = vsub.s32 3, %v5632
    %v5634 = vrot.slane %v241, %v5633
    %v5635 = vlaneseq
    %v5636 = vshrl.u32 %v5635, 7
    %v5637 = vsub.s32 4, %v5636
    %v5638 = vrot.slane %v241, %v5637
    %v5639 = vlaneseq
    %v5640 = vshrl.u32 %v5639, 7
    %v5641 = vsub.s32 5, %v5640
    %v5642 = vrot.slane %v241, %v5641
    %v5649 = vadd.f32 %v5612, %v5622
    %v5650 = vadd.f32 %v5613, %v5626
    %v5651 = vadd.f32 %v5614, %v5630
    %v5652 = vadd.f32 %v5615, %v5634
    %v5653 = vadd.f32 %v5616, %v5638
    %v5654 = vadd.f32 %v5617, %v5642
    %5655 = vst [vmem:[#allocation9] sm:$0xff] %v5649
    %5656 = vst [vmem:[#allocation9 + $0x8] sm:$0xff] %v5650
    %5657 = vst [vmem:[#allocation9 + $0x10] sm:$0xff] %v5651
    %5658 = vst [vmem:[#allocation9 + $0x18] sm:$0xff] %v5652
    %5659 = vst [vmem:[#allocation9 + $0x20] sm:$0xff] %v5653
    %5660 = vst [vmem:[#allocation9 + $0x28] sm:$0xff] %v5654
    // Predicated region
    $region18: #{tpu_custom_call.1} parent=1 // pred_check
      _
    $region19: #{tpu_custom_call.1} parent=1 // pred_check_branch
      %5662 = sbr.rel (0) target = $region21
    $region20: #{tpu_custom_call.1} parent=1 // pred_region
      %s5664 = ssub.s32 768, 768
      %5665 = vsyncadd [#allocation6], %s5664
      %s5667 = sshll.u32 [#allocation9], 4
      %s5668 = int_to_ptr.vmem [resolvable:$true] %s5667
      %5670 = dma.vmem_to_hbm [thread:$0]  %s5668, 768, %s3, [#allocation6]
    $region21: #{tpu_custom_call.1} parent=1 // pred_fallthru
      _
    // Predicated region
    $region22: #{tpu_custom_call.1} parent=1 // pred_check
      _
    $region23: #{tpu_custom_call.1} parent=1 // pred_check_branch
      %5672 = sbr.rel (0) target = $region25
    $region24: #{tpu_custom_call.1} parent=1 // pred_region
      %5673 = dma.done [#allocation6], 768
    $region25: #{tpu_custom_call.1} parent=1 // pred_fallthru
      _
    %5674 = vsyncpa [#allocation5], 1
    %5675 = vsyncpa [#allocation8], 1
    %5676 = vsyncpa [#allocation6], 1
  %5677 = vsyncmov [#allocation3]
  %s5678 = vpop.sfrf %5677
  %p5679 = scmp.eq.s32.totalorder %s5678, 0
  %p5680 = pneg %p5679
  %5682 = shalt.err (%p5680)
  %s5683 = scalar_lea.sflag [#allocation3], 1
  %5684 = vsyncmov %s5683
  %s5685 = vpop.sfrf %5684
  %p5686 = scmp.eq.s32.totalorder %s5685, 0
  %p5687 = pneg %p5686
  %5689 = shalt.err (%p5687)
  %s5690 = scalar_lea.sflag [#allocation3], 2
  %5691 = vsyncmov %s5690
  %s5692 = vpop.sfrf %5691
  %p5693 = scmp.eq.s32.totalorder %s5692, 0
  %p5694 = pneg %p5693
  %5696 = shalt.err (%p5694)
  %s5697 = scalar_lea.sflag [#allocation3], 3
  %5698 = vsyncmov %s5697
  %s5699 = vpop.sfrf %5698
  %p5700 = scmp.eq.s32.totalorder %s5699, 0
  %p5701 = pneg %p5700
  %5703 = shalt.err (%p5701)

</llo_original>
